<compile_context>
chip_gen: v6e
topology: v6e:2x2x1
jax: 0.10.0
libtpu: 0.0.40
codegen_flags: <defaults>
</compile_context>

<pallas_src>
import functools
import math

import jax
import jax.numpy as jnp
from jax.experimental import pallas as pl
from jax.experimental.pallas import tpu as pltpu


def _layer_norm(x, w, b, eps=1e-5):
    mean = jnp.mean(x, axis=-1, keepdims=True)
    var = jnp.mean(jnp.square(x - mean), axis=-1, keepdims=True)
    return (x - mean) * jax.lax.rsqrt(var + eps) * w + b


# ----------------------------------------------------------------------------
# Fused Pallas kernel: one grid step = one encoder layer (for one L-block).
# ----------------------------------------------------------------------------
def tlob_kernel(x_ref, pe_ref, wqkv_ref, wo_ref, w1_ref, w2_ref, slab_ref,
                o_ref, acc_ref, *, nhead):
    B, Lb, D = x_ref.shape
    S = B * Lb                      # rows fed to the projections (128 here)
    FF = w1_ref.shape[1]
    Dh = D // nhead
    scale = 1.0 / math.sqrt(Dh)

    layer = pl.program_id(1)
    last_layer = pl.num_programs(1) - 1

    # Layer 0: fuse the positional-encoding add; rows stay in (b, l) order
    # (no transpose needed -- the attention mask below encodes batch_first=False).
    @pl.when(layer == 0)
    def _():
        acc_ref[...] = (x_ref[...].astype(jnp.float32)
                        + pe_ref[...][None, :, :]).reshape(S, D)

    x2 = acc_ref[...]                                     # (S, D) f32

    # Packed per-layer bias / LayerNorm slab.
    slab = slab_ref[...]                                  # (8, W) f32
    bqkv = slab[0:1, :3 * D]
    bo = slab[1:2, :D]
    b1 = slab[2:3, :FF]
    b2 = slab[3:4, :D]
    ln1w = slab[4:5, :D]
    ln1b = slab[5:6, :D]
    ln2w = slab[6:7, :D]
    ln2b = slab[7:8, :D]

    # --- multi-head self-attention over the batch axis (per position) ------
    qkv = jnp.dot(x2.astype(jnp.bfloat16), wqkv_ref[...],
                  preferred_element_type=jnp.float32) + bqkv
    q = qkv[:, 0:D] * scale
    k = qkv[:, D:2 * D]
    v = qkv[:, 2 * D:3 * D]

    # Rows are ordered (b, l): row i attends to row j iff same position l.
    row = jax.lax.broadcasted_iota(jnp.int32, (S, S), 0)
    col = jax.lax.broadcasted_iota(jnp.int32, (S, S), 1)
    same_pos = (row % Lb) == (col % Lb)

    heads = []
    for h in range(nhead):                                # static 4-head loop
        lo = h * Dh
        qh = q[:, lo:lo + Dh]
        kh = k[:, lo:lo + Dh]
        vh = v[:, lo:lo + Dh]
        s = jax.lax.dot_general(qh, kh, (((1,), (1,)), ((), ())),
                                preferred_element_type=jnp.float32)  # (S, S)
        s = jnp.where(same_pos, s, -1e30)
        s = s - jnp.max(s, axis=-1, keepdims=True)
        p = jnp.exp(s)
        p = p / jnp.sum(p, axis=-1, keepdims=True)        # exact softmax
        heads.append(jnp.dot(p, vh, preferred_element_type=jnp.float32))
    attn = jnp.concatenate(heads, axis=-1)                # (S, D)
    attn = jnp.dot(attn.astype(jnp.bfloat16), wo_ref[...],
                   preferred_element_type=jnp.float32) + bo

    # --- residual + LayerNorm 1 (post-norm) --------------------------------
    y = _layer_norm(x2 + attn, ln1w, ln1b)

    # --- FFN: Linear -> ReLU -> Linear (dropout = eval identity) -----------
    h1 = jnp.maximum(jnp.dot(y.astype(jnp.bfloat16), w1_ref[...],
                             preferred_element_type=jnp.float32) + b1, 0.0)
    ff = jnp.dot(h1.astype(jnp.bfloat16), w2_ref[...],
                 preferred_element_type=jnp.float32) + b2

    # --- residual + LayerNorm 2 ---------------------------------------------
    out = _layer_norm(y + ff, ln2w, ln2b)
    acc_ref[...] = out                                    # carried to next layer

    @pl.when(layer == last_layer)
    def _():
        o_ref[...] = out.reshape(B, Lb, D).astype(o_ref.dtype)


# ----------------------------------------------------------------------------
# Wrapper
# ----------------------------------------------------------------------------
def tlob_forward(x, params, *, nhead):
    """Pallas implementation of TLOB.forward (is_sin_emb=True, eval mode)."""
    B, L, D = x.shape
    layers = params["layers"]
    NL = len(layers)
    FF = layers[0]["w1_t"].shape[1]
    W = max(3 * D, FF, 128)
    W = -(-W // 128) * 128                                # lane-pad slab width

    # Stack per-layer weights with a leading layer dim so the layer grid axis
    # can prefetch layer l+1 weights behind layer l compute.  Big matrices
    # ship as bf16 (kernel is weight-DMA bound); accumulation stays f32.
    wqkv_all = jnp.stack([p["wqkv_t"] for p in layers]).astype(jnp.bfloat16)
    wo_all = jnp.stack([p["wo_t"] for p in layers]).astype(jnp.bfloat16)
    w1_all = jnp.stack([p["w1_t"] for p in layers]).astype(jnp.bfloat16)
    w2_all = jnp.stack([p["w2_t"] for p in layers]).astype(jnp.bfloat16)

    def pack_slab(p):
        rows = [(p["bqkv"], 3 * D), (p["bo"], D), (p["b1"], FF), (p["b2"], D),
                (p["ln1w"], D), (p["ln1b"], D), (p["ln2w"], D), (p["ln2b"], D)]
        slab = jnp.zeros((8, W), jnp.float32)
        for r, (vec, width) in enumerate(rows):
            slab = slab.at[r, :width].set(vec.reshape(-1).astype(jnp.float32))
        return slab

    slab_all = jnp.stack([pack_slab(p) for p in layers])  # (NL, 8, W) f32
    pe = params["pe"].astype(jnp.float32)                  # (L, D)

    # Grid factor along L.  v5e/v6e have a single TensorCore, so splitting L
    # is a sequential loop with ~0.35us/step overhead that also halves MXU row
    # fill -> G=1.  On v7x (2 TCs) the kernel is weight-DMA bound and G=2
    # would re-fetch the full weight set per core, so G=1 is the default there
    # too; flip to 2 only after measuring.
    G = 1
    Lb = L // G
    grid = (G, NL)

    in_specs = [
        pl.BlockSpec((B, Lb, D), lambda i, l: (0, i, 0)),        # x
        pl.BlockSpec((Lb, D), lambda i, l: (i, 0)),              # pe
        pl.BlockSpec((None, D, 3 * D), lambda i, l: (l, 0, 0)),  # wqkv
        pl.BlockSpec((None, D, D), lambda i, l: (l, 0, 0)),      # wo
        pl.BlockSpec((None, D, FF), lambda i, l: (l, 0, 0)),     # w1
        pl.BlockSpec((None, FF, D), lambda i, l: (l, 0, 0)),     # w2
        pl.BlockSpec((None, 8, W), lambda i, l: (l, 0, 0)),      # bias slab
    ]
    out_specs = pl.BlockSpec((B, Lb, D), lambda i, l: (0, i, 0))

    # Advisory cost estimate (FLOPs dominated by the FFN).
    S = B * L
    Dh = D // nhead
    flops = NL * (2 * S * D * 3 * D          # qkv projection
                  + 2 * S * D * D            # output projection
                  + 4 * S * D * FF           # FFN (two matmuls)
                  + 4 * nhead * S * (B * Lb) * Dh)   # masked attention
    transcendentals = NL * (nhead * S * (B * Lb) + 2 * S)
    weight_bytes = sum(int(a.size) * a.dtype.itemsize
                       for a in (wqkv_all, wo_all, w1_all, w2_all, slab_all))
    bytes_accessed = (2 * int(x.size) * x.dtype.itemsize
                      + int(pe.size) * pe.dtype.itemsize + weight_bytes)

    kernel = functools.partial(tlob_kernel, nhead=nhead)
    return pl.pallas_call(
        kernel,
        out_shape=jax.ShapeDtypeStruct((B, L, D), x.dtype),
        grid=grid,
        in_specs=in_specs,
        out_specs=out_specs,
        scratch_shapes=[pltpu.VMEM((B * Lb, D), jnp.float32)],   # resident act
        compiler_params=pltpu.CompilerParams(
            dimension_semantics=("parallel", "arbitrary"),
            vmem_limit_bytes=32 * 1024 * 1024),
        cost_estimate=pl.CostEstimate(flops=int(flops),
                                      transcendentals=int(transcendentals),
                                      bytes_accessed=int(bytes_accessed)),
    )(x, pe, wqkv_all, wo_all, w1_all, w2_all, slab_all)


# ----------------------------------------------------------------------------
# Deterministic parameter construction + numerics-matched pure-JAX reference
# ----------------------------------------------------------------------------
def positional_encoding(seq_len, d_model):
    position = jnp.arange(seq_len, dtype=jnp.float32)[:, None]
    div_term = jnp.exp(jnp.arange(0, d_model, 2, dtype=jnp.float32)
                       * (-math.log(10000.0) / d_model))
    pe = jnp.zeros((seq_len, d_model), jnp.float32)
    pe = pe.at[:, 0::2].set(jnp.sin(position * div_term))
    pe = pe.at[:, 1::2].set(jnp.cos(position * div_term))
    return pe


def init_params(key, d_model, nhead, num_layers, seq_length, dim_ff):
    layers = []
    for i in range(num_layers):
        k = jax.random.fold_in(key, i)
        ks = jax.random.split(k, 10)
        s_d = 1.0 / math.sqrt(d_model)
        s_f = 1.0 / math.sqrt(dim_ff)
        layers.append(dict(
            # weights stored pre-transposed (in_dim, out_dim): kernel does x @ W.
            wqkv_t=jax.random.normal(ks[0], (d_model, 3 * d_model), jnp.float32) * s_d,
            bqkv=jax.random.normal(ks[1], (1, 3 * d_model), jnp.float32) * 0.02,
            wo_t=jax.random.normal(ks[2], (d_model, d_model), jnp.float32) * s_d,
            bo=jax.random.normal(ks[3], (1, d_model), jnp.float32) * 0.02,
            ln1w=1.0 + 0.1 * jax.random.normal(ks[4], (1, d_model), jnp.float32),
            ln1b=0.05 * jax.random.normal(ks[5], (1, d_model), jnp.float32),
            w1_t=jax.random.normal(ks[6], (d_model, dim_ff), jnp.float32) * s_d,
            b1=0.02 * jax.random.normal(ks[7], (1, dim_ff), jnp.float32),
            w2_t=jax.random.normal(ks[8], (dim_ff, d_model), jnp.float32) * s_f,
            b2=0.02 * jax.random.normal(ks[9], (1, d_model), jnp.float32),
            ln2w=jnp.ones((1, d_model), jnp.float32),
            ln2b=jnp.zeros((1, d_model), jnp.float32),
        ))
    return dict(pe=positional_encoding(seq_length, d_model), layers=layers)


def _bf16_dot(a, w):
    """bf16 x bf16 -> f32 matmul, mirroring the kernel's projection numerics."""
    return jax.lax.dot_general(a.astype(jnp.bfloat16), w.astype(jnp.bfloat16),
                               (((a.ndim - 1,), (0,)), ((), ())),
                               preferred_element_type=jnp.float32)


def _ref_layer(x, p, nhead):
    N, S, D = x.shape
    Dh = D // nhead
    qkv = _bf16_dot(x, p["wqkv_t"]) + p["bqkv"]
    q, k, v = jnp.split(qkv, 3, axis=-1)
    q = q.reshape(N, S, nhead, Dh)
    k = k.reshape(N, S, nhead, Dh)
    v = v.reshape(N, S, nhead, Dh)
    scores = jnp.einsum("nqhd,nkhd->nhqk", q, k,
                        precision=jax.lax.Precision.HIGHEST) / math.sqrt(Dh)
    probs = jax.nn.softmax(scores, axis=-1)
    attn = jnp.einsum("nhqk,nkhd->nqhd", probs, v,
                      precision=jax.lax.Precision.HIGHEST).reshape(N, S, D)
    attn = _bf16_dot(attn, p["wo_t"]) + p["bo"]
    y = _layer_norm(x + attn, p["ln1w"], p["ln1b"])
    h1 = jnp.maximum(_bf16_dot(y, p["w1_t"]) + p["b1"], 0.0)
    ff = _bf16_dot(h1, p["w2_t"]) + p["b2"]
    return _layer_norm(y + ff, p["ln2w"], p["ln2b"])


def tlob_reference(x, params, *, nhead):
    x = x + params["pe"][None]
    xt = jnp.transpose(x, (1, 0, 2))        # batch_first=False: (L, B, D)
    for p in params["layers"]:
        xt = _ref_layer(xt, p, nhead)
    return jnp.transpose(xt, (1, 0, 2))


# ----------------------------------------------------------------------------
if __name__ == "__main__":
    # TLOB(d_model=128, nhead=4, num_layers=2, seq_length=16), batch of 8.
    # dim_feedforward keeps the nn.TransformerEncoderLayer default (2048).
    B, L, D, H, NL, FF = 8, 16, 128, 4, 2, 2048

    key = jax.random.PRNGKey(0)
    kx, kp = jax.random.split(key)
    x = jax.random.normal(kx, (B, L, D), jnp.float32)
    params = init_params(kp, D, H, NL, L, FF)

    out = tlob_forward(x, params, nhead=H)
    out = jax.block_until_ready(out)
    assert out.shape == (B, L, D)

    ref = tlob_reference(x, params, nhead=H)
    err = float(jnp.max(jnp.abs(out - ref)))
    # Reference mirrors the kernel's bf16-weight numerics; remaining delta is
    # f32 rounding-order only.
    assert err < 2e-2, f"max abs error too large: {err}"

    print("KERNEL_OK")
</pallas_src>

<mosaic_0001>
module attributes {stable_mosaic.version = 11 : i64} {
  func.func @tlob_kernel(%arg0: i32, %arg1: i32, %arg2: memref<8x16x128xf32, #tpu.memory_space<vmem>>, %arg3: memref<16x128xf32, #tpu.memory_space<vmem>>, %arg4: memref<1x128x384xbf16, #tpu.memory_space<vmem>>, %arg5: memref<1x128x128xbf16, #tpu.memory_space<vmem>>, %arg6: memref<1x128x2048xbf16, #tpu.memory_space<vmem>>, %arg7: memref<1x2048x128xbf16, #tpu.memory_space<vmem>>, %arg8: memref<1x8x2048xf32, #tpu.memory_space<vmem>>, %arg9: memref<8x16x128xf32, #tpu.memory_space<vmem>>, %arg10: memref<128x128xf32, #tpu.memory_space<vmem>>) attributes {dimension_semantics = [#tpu.dimension_semantics<parallel>, #tpu.dimension_semantics<arbitrary>], iteration_bounds = array<i64: 1, 2>, scalar_prefetch = 0 : i64, scratch_operands = 1 : i64, tpu.core_type = #tpu.core_type<tc>, window_params = [{transform_indices = @transform_0, window_bounds = array<i64: 8, 16, 128>}, {transform_indices = @transform_1, window_bounds = array<i64: 16, 128>}, {transform_indices = @transform_2, window_bounds = array<i64: 1, 128, 384>}, {transform_indices = @transform_3, window_bounds = array<i64: 1, 128, 128>}, {transform_indices = @transform_4, window_bounds = array<i64: 1, 128, 2048>}, {transform_indices = @transform_5, window_bounds = array<i64: 1, 2048, 128>}, {transform_indices = @transform_6, window_bounds = array<i64: 1, 8, 2048>}, {transform_indices = @transform_7, window_bounds = array<i64: 8, 16, 128>}]} {
    %c0_i32 = arith.constant 0 : i32
    %0 = arith.cmpi eq, %arg1, %c0_i32 : i32
    %1 = arith.extui %0 : i1 to i32
    %c0_i32_0 = arith.constant 0 : i32
    %2 = arith.cmpi ne, %1, %c0_i32_0 : i32
    scf.if %2 {
      %c0_66 = arith.constant 0 : index
      %c0_67 = arith.constant 0 : index
      %c0_68 = arith.constant 0 : index
      %195 = vector.load %arg2[%c0_66, %c0_67, %c0_68] : memref<8x16x128xf32, #tpu.memory_space<vmem>>, vector<8x16x128xf32>
      %c0_69 = arith.constant 0 : index
      %c0_70 = arith.constant 0 : index
      %196 = vector.load %arg3[%c0_69, %c0_70] : memref<16x128xf32, #tpu.memory_space<vmem>>, vector<16x128xf32>
      %197 = vector.shape_cast %196 : vector<16x128xf32> to vector<1x16x128xf32>
      %198 = vector.broadcast %197 : vector<1x16x128xf32> to vector<8x16x128xf32>
      %199 = arith.addf %195, %198 : vector<8x16x128xf32>
      %200 = vector.shape_cast %199 : vector<8x16x128xf32> to vector<128x128xf32>
      %c0_71 = arith.constant 0 : index
      %c0_72 = arith.constant 0 : index
      %201 = vector.load %arg10[%c0_71, %c0_72] : memref<128x128xf32, #tpu.memory_space<vmem>>, vector<128x128xf32>
      tpu.vector_store %arg10[%c0_71, %c0_72], %200 {strides = array<i32>} : memref<128x128xf32, #tpu.memory_space<vmem>>, vector<128x128xf32>,
    } else {
    }
    %c0 = arith.constant 0 : index
    %c0_1 = arith.constant 0 : index
    %3 = vector.load %arg10[%c0, %c0_1] : memref<128x128xf32, #tpu.memory_space<vmem>>, vector<128x128xf32>
    %c0_2 = arith.constant 0 : index
    %c0_3 = arith.constant 0 : index
    %c0_4 = arith.constant 0 : index
    %4 = vector.load %arg8[%c0_2, %c0_3, %c0_4] : memref<1x8x2048xf32, #tpu.memory_space<vmem>>, vector<1x8x2048xf32>
    %5 = vector.shape_cast %4 : vector<1x8x2048xf32> to vector<8x2048xf32>
    %6 = vector.extract_strided_slice %5 {offsets = [0, 0], sizes = [1, 384], strides = [1, 1]} : vector<8x2048xf32> to vector<1x384xf32>
    %7 = vector.extract_strided_slice %5 {offsets = [1, 0], sizes = [1, 128], strides = [1, 1]} : vector<8x2048xf32> to vector<1x128xf32>
    %8 = vector.extract_strided_slice %5 {offsets = [2, 0], sizes = [1, 2048], strides = [1, 1]} : vector<8x2048xf32> to vector<1x2048xf32>
    %9 = vector.extract_strided_slice %5 {offsets = [3, 0], sizes = [1, 128], strides = [1, 1]} : vector<8x2048xf32> to vector<1x128xf32>
    %10 = vector.extract_strided_slice %5 {offsets = [4, 0], sizes = [1, 128], strides = [1, 1]} : vector<8x2048xf32> to vector<1x128xf32>
    %11 = vector.extract_strided_slice %5 {offsets = [5, 0], sizes = [1, 128], strides = [1, 1]} : vector<8x2048xf32> to vector<1x128xf32>
    %12 = vector.extract_strided_slice %5 {offsets = [6, 0], sizes = [1, 128], strides = [1, 1]} : vector<8x2048xf32> to vector<1x128xf32>
    %13 = vector.extract_strided_slice %5 {offsets = [7, 0], sizes = [1, 128], strides = [1, 1]} : vector<8x2048xf32> to vector<1x128xf32>
    %14 = arith.truncf %3 : vector<128x128xf32> to vector<128x128xbf16>
    %c0_5 = arith.constant 0 : index
    %c0_6 = arith.constant 0 : index
    %c0_7 = arith.constant 0 : index
    %15 = vector.load %arg4[%c0_5, %c0_6, %c0_7] : memref<1x128x384xbf16, #tpu.memory_space<vmem>>, vector<1x128x384xbf16>
    %16 = vector.shape_cast %15 : vector<1x128x384xbf16> to vector<128x384xbf16>
    %cst = arith.constant dense<0.000000e+00> : vector<128x384xf32>
    %17 = tpu.matmul %14, %16, %cst {dimension_numbers = #tpu.dot_dimension_numbers<[1], [0], [0], [1], [0, 0, 1, 1], [], []>} : vector<128x128xbf16>, vector<128x384xbf16>, vector<128x384xf32> -> vector<128x384xf32>
    %18 = vector.broadcast %6 : vector<1x384xf32> to vector<128x384xf32>
    %19 = arith.addf %17, %18 : vector<128x384xf32>
    %20 = vector.extract_strided_slice %19 {offsets = [0, 0], sizes = [128, 128], strides = [1, 1]} : vector<128x384xf32> to vector<128x128xf32>
    %cst_8 = arith.constant 0.176776692 : f32
    %21 = vector.broadcast %cst_8 : f32 to vector<128x128xf32>
    %22 = arith.mulf %20, %21 : vector<128x128xf32>
    %23 = vector.extract_strided_slice %19 {offsets = [0, 128], sizes = [128, 128], strides = [1, 1]} : vector<128x384xf32> to vector<128x128xf32>
    %24 = vector.extract_strided_slice %19 {offsets = [0, 256], sizes = [128, 128], strides = [1, 1]} : vector<128x384xf32> to vector<128x128xf32>
    %25 = tpu.iota {dimensions = array<i32: 0>} : vector<128x128xi32>
    %26 = tpu.iota {dimensions = array<i32: 1>} : vector<128x128xi32>
    %c16_i32 = arith.constant 16 : i32
    %c0_i32_9 = arith.constant 0 : i32
    %27 = arith.cmpi eq, %c16_i32, %c0_i32_9 : i32
    %c1_i32 = arith.constant 1 : i32
    %28 = arith.select %27, %c1_i32, %c16_i32 : i32
    %29 = vector.broadcast %28 : i32 to vector<128x128xi32>
    %30 = arith.remsi %25, %29 : vector<128x128xi32>
    %c0_i32_10 = arith.constant 0 : i32
    %31 = vector.broadcast %c0_i32_10 : i32 to vector<128x128xi32>
    %32 = arith.cmpi ne, %30, %31 : vector<128x128xi32>
    %c0_i32_11 = arith.constant 0 : i32
    %33 = vector.broadcast %c0_i32_11 : i32 to vector<128x128xi32>
    %34 = arith.cmpi slt, %30, %33 : vector<128x128xi32>
    %c0_i32_12 = arith.constant 0 : i32
    %35 = arith.cmpi slt, %28, %c0_i32_12 : i32
    %36 = vector.broadcast %35 : i1 to vector<128x128xi1>
    %37 = vector.broadcast %36 : vector<128x128xi1> to vector<128x128xi1>
    %38 = arith.xori %34, %37 : vector<128x128xi1>
    %39 = arith.andi %38, %32 : vector<128x128xi1>
    %40 = vector.broadcast %28 : i32 to vector<128x128xi32>
    %41 = arith.addi %30, %40 : vector<128x128xi32>
    %42 = arith.select %39, %41, %30 : vector<128x128xi1>, vector<128x128xi32>
    %c16_i32_13 = arith.constant 16 : i32
    %c0_i32_14 = arith.constant 0 : i32
    %43 = arith.cmpi eq, %c16_i32_13, %c0_i32_14 : i32
    %c1_i32_15 = arith.constant 1 : i32
    %44 = arith.select %43, %c1_i32_15, %c16_i32_13 : i32
    %45 = vector.broadcast %44 : i32 to vector<128x128xi32>
    %46 = arith.remsi %26, %45 : vector<128x128xi32>
    %c0_i32_16 = arith.constant 0 : i32
    %47 = vector.broadcast %c0_i32_16 : i32 to vector<128x128xi32>
    %48 = arith.cmpi ne, %46, %47 : vector<128x128xi32>
    %c0_i32_17 = arith.constant 0 : i32
    %49 = vector.broadcast %c0_i32_17 : i32 to vector<128x128xi32>
    %50 = arith.cmpi slt, %46, %49 : vector<128x128xi32>
    %c0_i32_18 = arith.constant 0 : i32
    %51 = arith.cmpi slt, %44, %c0_i32_18 : i32
    %52 = vector.broadcast %51 : i1 to vector<128x128xi1>
    %53 = vector.broadcast %52 : vector<128x128xi1> to vector<128x128xi1>
    %54 = arith.xori %50, %53 : vector<128x128xi1>
    %55 = arith.andi %54, %48 : vector<128x128xi1>
    %56 = vector.broadcast %44 : i32 to vector<128x128xi32>
    %57 = arith.addi %46, %56 : vector<128x128xi32>
    %58 = arith.select %55, %57, %46 : vector<128x128xi1>, vector<128x128xi32>
    %59 = arith.cmpi eq, %42, %58 : vector<128x128xi32>
    %60 = vector.extract_strided_slice %22 {offsets = [0, 0], sizes = [128, 32], strides = [1, 1]} : vector<128x128xf32> to vector<128x32xf32>
    %61 = vector.extract_strided_slice %23 {offsets = [0, 0], sizes = [128, 32], strides = [1, 1]} : vector<128x128xf32> to vector<128x32xf32>
    %62 = vector.extract_strided_slice %24 {offsets = [0, 0], sizes = [128, 32], strides = [1, 1]} : vector<128x128xf32> to vector<128x32xf32>
    %cst_19 = arith.constant dense<0.000000e+00> : vector<128x128xf32>
    %63 = tpu.matmul %60, %61, %cst_19 {dimension_numbers = #tpu.dot_dimension_numbers<[1], [1], [0], [0], [0, 0, 1, 0], [], []>} : vector<128x32xf32>, vector<128x32xf32>, vector<128x128xf32> -> vector<128x128xf32>
    %cst_20 = arith.constant -1.000000e+30 : f32
    %64 = vector.broadcast %cst_20 : f32 to vector<128x128xf32>
    %65 = arith.select %59, %63, %64 : vector<128x128xi1>, vector<128x128xf32>
    %cst_21 = arith.constant dense<0xFF800000> : vector<128xf32>
    %66 = vector.multi_reduction <maximumf>, %65, %cst_21 [1] : vector<128x128xf32> to vector<128xf32>
    %67 = vector.shape_cast %66 : vector<128xf32> to vector<128x1xf32>
    %68 = vector.broadcast %67 : vector<128x1xf32> to vector<128x128xf32>
    %69 = arith.subf %65, %68 : vector<128x128xf32>
    %70 = math.exp %69 : vector<128x128xf32>
    %cst_22 = arith.constant dense<0.000000e+00> : vector<128xf32>
    %71 = vector.multi_reduction <add>, %70, %cst_22 [1] : vector<128x128xf32> to vector<128xf32>
    %72 = vector.shape_cast %71 : vector<128xf32> to vector<128x1xf32>
    %73 = vector.broadcast %72 : vector<128x1xf32> to vector<128x128xf32>
    %74 = arith.divf %70, %73 : vector<128x128xf32>
    %cst_23 = arith.constant dense<0.000000e+00> : vector<128x32xf32>
    %75 = tpu.matmul %74, %62, %cst_23 {dimension_numbers = #tpu.dot_dimension_numbers<[1], [0], [0], [1], [0, 0, 1, 1], [], []>} : vector<128x128xf32>, vector<128x32xf32>, vector<128x32xf32> -> vector<128x32xf32>
    %76 = vector.extract_strided_slice %22 {offsets = [0, 32], sizes = [128, 32], strides = [1, 1]} : vector<128x128xf32> to vector<128x32xf32>
    %77 = vector.extract_strided_slice %23 {offsets = [0, 32], sizes = [128, 32], strides = [1, 1]} : vector<128x128xf32> to vector<128x32xf32>
    %78 = vector.extract_strided_slice %24 {offsets = [0, 32], sizes = [128, 32], strides = [1, 1]} : vector<128x128xf32> to vector<128x32xf32>
    %cst_24 = arith.constant dense<0.000000e+00> : vector<128x128xf32>
    %79 = tpu.matmul %76, %77, %cst_24 {dimension_numbers = #tpu.dot_dimension_numbers<[1], [1], [0], [0], [0, 0, 1, 0], [], []>} : vector<128x32xf32>, vector<128x32xf32>, vector<128x128xf32> -> vector<128x128xf32>
    %cst_25 = arith.constant -1.000000e+30 : f32
    %80 = vector.broadcast %cst_25 : f32 to vector<128x128xf32>
    %81 = arith.select %59, %79, %80 : vector<128x128xi1>, vector<128x128xf32>
    %cst_26 = arith.constant dense<0xFF800000> : vector<128xf32>
    %82 = vector.multi_reduction <maximumf>, %81, %cst_26 [1] : vector<128x128xf32> to vector<128xf32>
    %83 = vector.shape_cast %82 : vector<128xf32> to vector<128x1xf32>
    %84 = vector.broadcast %83 : vector<128x1xf32> to vector<128x128xf32>
    %85 = arith.subf %81, %84 : vector<128x128xf32>
    %86 = math.exp %85 : vector<128x128xf32>
    %cst_27 = arith.constant dense<0.000000e+00> : vector<128xf32>
    %87 = vector.multi_reduction <add>, %86, %cst_27 [1] : vector<128x128xf32> to vector<128xf32>
    %88 = vector.shape_cast %87 : vector<128xf32> to vector<128x1xf32>
    %89 = vector.broadcast %88 : vector<128x1xf32> to vector<128x128xf32>
    %90 = arith.divf %86, %89 : vector<128x128xf32>
    %cst_28 = arith.constant dense<0.000000e+00> : vector<128x32xf32>
    %91 = tpu.matmul %90, %78, %cst_28 {dimension_numbers = #tpu.dot_dimension_numbers<[1], [0], [0], [1], [0, 0, 1, 1], [], []>} : vector<128x128xf32>, vector<128x32xf32>, vector<128x32xf32> -> vector<128x32xf32>
    %92 = vector.extract_strided_slice %22 {offsets = [0, 64], sizes = [128, 32], strides = [1, 1]} : vector<128x128xf32> to vector<128x32xf32>
    %93 = vector.extract_strided_slice %23 {offsets = [0, 64], sizes = [128, 32], strides = [1, 1]} : vector<128x128xf32> to vector<128x32xf32>
    %94 = vector.extract_strided_slice %24 {offsets = [0, 64], sizes = [128, 32], strides = [1, 1]} : vector<128x128xf32> to vector<128x32xf32>
    %cst_29 = arith.constant dense<0.000000e+00> : vector<128x128xf32>
    %95 = tpu.matmul %92, %93, %cst_29 {dimension_numbers = #tpu.dot_dimension_numbers<[1], [1], [0], [0], [0, 0, 1, 0], [], []>} : vector<128x32xf32>, vector<128x32xf32>, vector<128x128xf32> -> vector<128x128xf32>
    %cst_30 = arith.constant -1.000000e+30 : f32
    %96 = vector.broadcast %cst_30 : f32 to vector<128x128xf32>
    %97 = arith.select %59, %95, %96 : vector<128x128xi1>, vector<128x128xf32>
    %cst_31 = arith.constant dense<0xFF800000> : vector<128xf32>
    %98 = vector.multi_reduction <maximumf>, %97, %cst_31 [1] : vector<128x128xf32> to vector<128xf32>
    %99 = vector.shape_cast %98 : vector<128xf32> to vector<128x1xf32>
    %100 = vector.broadcast %99 : vector<128x1xf32> to vector<128x128xf32>
    %101 = arith.subf %97, %100 : vector<128x128xf32>
    %102 = math.exp %101 : vector<128x128xf32>
    %cst_32 = arith.constant dense<0.000000e+00> : vector<128xf32>
    %103 = vector.multi_reduction <add>, %102, %cst_32 [1] : vector<128x128xf32> to vector<128xf32>
    %104 = vector.shape_cast %103 : vector<128xf32> to vector<128x1xf32>
    %105 = vector.broadcast %104 : vector<128x1xf32> to vector<128x128xf32>
    %106 = arith.divf %102, %105 : vector<128x128xf32>
    %cst_33 = arith.constant dense<0.000000e+00> : vector<128x32xf32>
    %107 = tpu.matmul %106, %94, %cst_33 {dimension_numbers = #tpu.dot_dimension_numbers<[1], [0], [0], [1], [0, 0, 1, 1], [], []>} : vector<128x128xf32>, vector<128x32xf32>, vector<128x32xf32> -> vector<128x32xf32>
    %108 = vector.extract_strided_slice %22 {offsets = [0, 96], sizes = [128, 32], strides = [1, 1]} : vector<128x128xf32> to vector<128x32xf32>
    %109 = vector.extract_strided_slice %23 {offsets = [0, 96], sizes = [128, 32], strides = [1, 1]} : vector<128x128xf32> to vector<128x32xf32>
    %110 = vector.extract_strided_slice %24 {offsets = [0, 96], sizes = [128, 32], strides = [1, 1]} : vector<128x128xf32> to vector<128x32xf32>
    %cst_34 = arith.constant dense<0.000000e+00> : vector<128x128xf32>
    %111 = tpu.matmul %108, %109, %cst_34 {dimension_numbers = #tpu.dot_dimension_numbers<[1], [1], [0], [0], [0, 0, 1, 0], [], []>} : vector<128x32xf32>, vector<128x32xf32>, vector<128x128xf32> -> vector<128x128xf32>
    %cst_35 = arith.constant -1.000000e+30 : f32
    %112 = vector.broadcast %cst_35 : f32 to vector<128x128xf32>
    %113 = arith.select %59, %111, %112 : vector<128x128xi1>, vector<128x128xf32>
    %cst_36 = arith.constant dense<0xFF800000> : vector<128xf32>
    %114 = vector.multi_reduction <maximumf>, %113, %cst_36 [1] : vector<128x128xf32> to vector<128xf32>
    %115 = vector.shape_cast %114 : vector<128xf32> to vector<128x1xf32>
    %116 = vector.broadcast %115 : vector<128x1xf32> to vector<128x128xf32>
    %117 = arith.subf %113, %116 : vector<128x128xf32>
    %118 = math.exp %117 : vector<128x128xf32>
    %cst_37 = arith.constant dense<0.000000e+00> : vector<128xf32>
    %119 = vector.multi_reduction <add>, %118, %cst_37 [1] : vector<128x128xf32> to vector<128xf32>
    %120 = vector.shape_cast %119 : vector<128xf32> to vector<128x1xf32>
    %121 = vector.broadcast %120 : vector<128x1xf32> to vector<128x128xf32>
    %122 = arith.divf %118, %121 : vector<128x128xf32>
    %cst_38 = arith.constant dense<0.000000e+00> : vector<128x32xf32>
    %123 = tpu.matmul %122, %110, %cst_38 {dimension_numbers = #tpu.dot_dimension_numbers<[1], [0], [0], [1], [0, 0, 1, 1], [], []>} : vector<128x128xf32>, vector<128x32xf32>, vector<128x32xf32> -> vector<128x32xf32>
    %124 = tpu.concatenate %75, %91, %107, %123 in 1 : vector<128x32xf32>, vector<128x32xf32>, vector<128x32xf32>, vector<128x32xf32> -> vector<128x128xf32>
    %125 = arith.truncf %124 : vector<128x128xf32> to vector<128x128xbf16>
    %c0_39 = arith.constant 0 : index
    %c0_40 = arith.constant 0 : index
    %c0_41 = arith.constant 0 : index
    %126 = vector.load %arg5[%c0_39, %c0_40, %c0_41] : memref<1x128x128xbf16, #tpu.memory_space<vmem>>, vector<1x128x128xbf16>
    %127 = vector.shape_cast %126 : vector<1x128x128xbf16> to vector<128x128xbf16>
    %cst_42 = arith.constant dense<0.000000e+00> : vector<128x128xf32>
    %128 = tpu.matmul %125, %127, %cst_42 {dimension_numbers = #tpu.dot_dimension_numbers<[1], [0], [0], [1], [0, 0, 1, 1], [], []>} : vector<128x128xbf16>, vector<128x128xbf16>, vector<128x128xf32> -> vector<128x128xf32>
    %129 = vector.broadcast %7 : vector<1x128xf32> to vector<128x128xf32>
    %130 = arith.addf %128, %129 : vector<128x128xf32>
    %131 = arith.addf %3, %130 : vector<128x128xf32>
    %cst_43 = arith.constant dense<0.000000e+00> : vector<128xf32>
    %132 = vector.multi_reduction <add>, %131, %cst_43 [1] : vector<128x128xf32> to vector<128xf32>
    %133 = vector.shape_cast %132 : vector<128xf32> to vector<128x1xf32>
    %cst_44 = arith.constant 1.280000e+02 : f32
    %134 = vector.broadcast %cst_44 : f32 to vector<128x1xf32>
    %135 = arith.divf %133, %134 : vector<128x1xf32>
    %136 = vector.broadcast %135 : vector<128x1xf32> to vector<128x128xf32>
    %137 = arith.subf %131, %136 : vector<128x128xf32>
    %138 = arith.mulf %137, %137 : vector<128x128xf32>
    %cst_45 = arith.constant dense<0.000000e+00> : vector<128xf32>
    %139 = vector.multi_reduction <add>, %138, %cst_45 [1] : vector<128x128xf32> to vector<128xf32>
    %140 = vector.shape_cast %139 : vector<128xf32> to vector<128x1xf32>
    %cst_46 = arith.constant 1.280000e+02 : f32
    %141 = vector.broadcast %cst_46 : f32 to vector<128x1xf32>
    %142 = arith.divf %140, %141 : vector<128x1xf32>
    %143 = vector.broadcast %135 : vector<128x1xf32> to vector<128x128xf32>
    %144 = arith.subf %131, %143 : vector<128x128xf32>
    %cst_47 = arith.constant 9.99999974E-6 : f32
    %145 = vector.broadcast %cst_47 : f32 to vector<128x1xf32>
    %146 = arith.addf %142, %145 : vector<128x1xf32>
    %147 = math.rsqrt %146 : vector<128x1xf32>
    %148 = vector.broadcast %147 : vector<128x1xf32> to vector<128x128xf32>
    %149 = arith.mulf %144, %148 : vector<128x128xf32>
    %150 = vector.broadcast %10 : vector<1x128xf32> to vector<128x128xf32>
    %151 = arith.mulf %149, %150 : vector<128x128xf32>
    %152 = vector.broadcast %11 : vector<1x128xf32> to vector<128x128xf32>
    %153 = arith.addf %151, %152 : vector<128x128xf32>
    %154 = arith.truncf %153 : vector<128x128xf32> to vector<128x128xbf16>
    %c0_48 = arith.constant 0 : index
    %c0_49 = arith.constant 0 : index
    %c0_50 = arith.constant 0 : index
    %155 = vector.load %arg6[%c0_48, %c0_49, %c0_50] : memref<1x128x2048xbf16, #tpu.memory_space<vmem>>, vector<1x128x2048xbf16>
    %156 = vector.shape_cast %155 : vector<1x128x2048xbf16> to vector<128x2048xbf16>
    %cst_51 = arith.constant dense<0.000000e+00> : vector<128x2048xf32>
    %157 = tpu.matmul %154, %156, %cst_51 {dimension_numbers = #tpu.dot_dimension_numbers<[1], [0], [0], [1], [0, 0, 1, 1], [], []>} : vector<128x128xbf16>, vector<128x2048xbf16>, vector<128x2048xf32> -> vector<128x2048xf32>
    %158 = vector.broadcast %8 : vector<1x2048xf32> to vector<128x2048xf32>
    %159 = arith.addf %157, %158 : vector<128x2048xf32>
    %cst_52 = arith.constant 0.000000e+00 : f32
    %160 = vector.broadcast %cst_52 : f32 to vector<128x2048xf32>
    %161 = arith.maximumf %159, %160 : vector<128x2048xf32>
    %162 = arith.truncf %161 : vector<128x2048xf32> to vector<128x2048xbf16>
    %c0_53 = arith.constant 0 : index
    %c0_54 = arith.constant 0 : index
    %c0_55 = arith.constant 0 : index
    %163 = vector.load %arg7[%c0_53, %c0_54, %c0_55] : memref<1x2048x128xbf16, #tpu.memory_space<vmem>>, vector<1x2048x128xbf16>
    %164 = vector.shape_cast %163 : vector<1x2048x128xbf16> to vector<2048x128xbf16>
    %cst_56 = arith.constant dense<0.000000e+00> : vector<128x128xf32>
    %165 = tpu.matmul %162, %164, %cst_56 {dimension_numbers = #tpu.dot_dimension_numbers<[1], [0], [0], [1], [0, 0, 1, 1], [], []>} : vector<128x2048xbf16>, vector<2048x128xbf16>, vector<128x128xf32> -> vector<128x128xf32>
    %166 = vector.broadcast %9 : vector<1x128xf32> to vector<128x128xf32>
    %167 = arith.addf %165, %166 : vector<128x128xf32>
    %168 = arith.addf %153, %167 : vector<128x128xf32>
    %cst_57 = arith.constant dense<0.000000e+00> : vector<128xf32>
    %169 = vector.multi_reduction <add>, %168, %cst_57 [1] : vector<128x128xf32> to vector<128xf32>
    %170 = vector.shape_cast %169 : vector<128xf32> to vector<128x1xf32>
    %cst_58 = arith.constant 1.280000e+02 : f32
    %171 = vector.broadcast %cst_58 : f32 to vector<128x1xf32>
    %172 = arith.divf %170, %171 : vector<128x1xf32>
    %173 = vector.broadcast %172 : vector<128x1xf32> to vector<128x128xf32>
    %174 = arith.subf %168, %173 : vector<128x128xf32>
    %175 = arith.mulf %174, %174 : vector<128x128xf32>
    %cst_59 = arith.constant dense<0.000000e+00> : vector<128xf32>
    %176 = vector.multi_reduction <add>, %175, %cst_59 [1] : vector<128x128xf32> to vector<128xf32>
    %177 = vector.shape_cast %176 : vector<128xf32> to vector<128x1xf32>
    %cst_60 = arith.constant 1.280000e+02 : f32
    %178 = vector.broadcast %cst_60 : f32 to vector<128x1xf32>
    %179 = arith.divf %177, %178 : vector<128x1xf32>
    %180 = vector.broadcast %172 : vector<128x1xf32> to vector<128x128xf32>
    %181 = arith.subf %168, %180 : vector<128x128xf32>
    %cst_61 = arith.constant 9.99999974E-6 : f32
    %182 = vector.broadcast %cst_61 : f32 to vector<128x1xf32>
    %183 = arith.addf %179, %182 : vector<128x1xf32>
    %184 = math.rsqrt %183 : vector<128x1xf32>
    %185 = vector.broadcast %184 : vector<128x1xf32> to vector<128x128xf32>
    %186 = arith.mulf %181, %185 : vector<128x128xf32>
    %187 = vector.broadcast %12 : vector<1x128xf32> to vector<128x128xf32>
    %188 = arith.mulf %186, %187 : vector<128x128xf32>
    %189 = vector.broadcast %13 : vector<1x128xf32> to vector<128x128xf32>
    %190 = arith.addf %188, %189 : vector<128x128xf32>
    %c0_62 = arith.constant 0 : index
    %c0_63 = arith.constant 0 : index
    %191 = vector.load %arg10[%c0_62, %c0_63] : memref<128x128xf32, #tpu.memory_space<vmem>>, vector<128x128xf32>
    tpu.vector_store %arg10[%c0_62, %c0_63], %190 {strides = array<i32>} : memref<128x128xf32, #tpu.memory_space<vmem>>, vector<128x128xf32>,
    %c1_i32_64 = arith.constant 1 : i32
    %192 = arith.cmpi eq, %arg1, %c1_i32_64 : i32
    %193 = arith.extui %192 : i1 to i32
    %c0_i32_65 = arith.constant 0 : i32
    %194 = arith.cmpi ne, %193, %c0_i32_65 : i32
    scf.if %194 {
      %195 = vector.shape_cast %190 : vector<128x128xf32> to vector<8x16x128xf32>
      %c0_66 = arith.constant 0 : index
      %c0_67 = arith.constant 0 : index
      %c0_68 = arith.constant 0 : index
      %196 = vector.load %arg9[%c0_66, %c0_67, %c0_68] : memref<8x16x128xf32, #tpu.memory_space<vmem>>, vector<8x16x128xf32>
      tpu.vector_store %arg9[%c0_66, %c0_67, %c0_68], %195 {strides = array<i32>} : memref<8x16x128xf32, #tpu.memory_space<vmem>>, vector<8x16x128xf32>,
    } else {
    }
    return
  }
  func.func @transform_0(%arg0: i32, %arg1: i32) -> (i32, i32, i32) {
    %c0_i32 = arith.constant 0 : i32
    %c0_i32_0 = arith.constant 0 : i32
    %c0_i32_1 = arith.constant 0 : i32
    return %c0_i32, %arg0, %c0_i32_0 : i32, i32, i32
  }
  func.func @transform_1(%arg0: i32, %arg1: i32) -> (i32, i32) {
    %c0_i32 = arith.constant 0 : i32
    %c0_i32_0 = arith.constant 0 : i32
    return %arg0, %c0_i32 : i32, i32
  }
  func.func @transform_2(%arg0: i32, %arg1: i32) -> (i32, i32, i32) {
    %c0_i32 = arith.constant 0 : i32
    %c0_i32_0 = arith.constant 0 : i32
    %c0_i32_1 = arith.constant 0 : i32
    return %arg1, %c0_i32, %c0_i32_0 : i32, i32, i32
  }
  func.func @transform_3(%arg0: i32, %arg1: i32) -> (i32, i32, i32) {
    %c0_i32 = arith.constant 0 : i32
    %c0_i32_0 = arith.constant 0 : i32
    %c0_i32_1 = arith.constant 0 : i32
    return %arg1, %c0_i32, %c0_i32_0 : i32, i32, i32
  }
  func.func @transform_4(%arg0: i32, %arg1: i32) -> (i32, i32, i32) {
    %c0_i32 = arith.constant 0 : i32
    %c0_i32_0 = arith.constant 0 : i32
    %c0_i32_1 = arith.constant 0 : i32
    return %arg1, %c0_i32, %c0_i32_0 : i32, i32, i32
  }
  func.func @transform_5(%arg0: i32, %arg1: i32) -> (i32, i32, i32) {
    %c0_i32 = arith.constant 0 : i32
    %c0_i32_0 = arith.constant 0 : i32
    %c0_i32_1 = arith.constant 0 : i32
    return %arg1, %c0_i32, %c0_i32_0 : i32, i32, i32
  }
  func.func @transform_6(%arg0: i32, %arg1: i32) -> (i32, i32, i32) {
    %c0_i32 = arith.constant 0 : i32
    %c0_i32_0 = arith.constant 0 : i32
    %c0_i32_1 = arith.constant 0 : i32
    return %arg1, %c0_i32, %c0_i32_0 : i32, i32, i32
  }
  func.func @transform_7(%arg0: i32, %arg1: i32) -> (i32, i32, i32) {
    %c0_i32 = arith.constant 0 : i32
    %c0_i32_0 = arith.constant 0 : i32
    %c0_i32_1 = arith.constant 0 : i32
    return %c0_i32, %arg0, %c0_i32_0 : i32, i32, i32
  }
}

</mosaic_0001>

<llo_original>
// kernel: tpu_custom_call.1
$region0: #{tpu_custom_call.1}
  #allocation0 [shape = 'u32[]', space=smem, size = 0x4, offset = 0x4, fixed_abs, tag = 'smem constant byte address 0x4 - core index']
  #allocation1 [shape = 'u32[144,128]{1,0:T(1,128)}', space=vmem, size = 0x12000, scoped, tag = 'internal scratch']
  #allocation2 [shape = 'f32[128,128]{1,0:T(8,128)}', space=vmem, size = 0x10000, scoped, tag = 'scratch operand']
  %s0 = inlined_call_operand.hbm [shape: f32[8,16,128], index: 0, kind: input, shape index: {}]
  %s1 = inlined_call_operand.hbm [shape: f32[16,128], index: 1, kind: input, shape index: {}]
  %s2 = inlined_call_operand.hbm [shape: bf16[2,128,384], index: 2, kind: input, shape index: {}]
  %s3 = inlined_call_operand.hbm [shape: bf16[2,128,128], index: 3, kind: input, shape index: {}]
  %s4 = inlined_call_operand.hbm [shape: bf16[2,128,2048], index: 4, kind: input, shape index: {}]
  %s5 = inlined_call_operand.hbm [shape: bf16[2,2048,128], index: 5, kind: input, shape index: {}]
  %s6 = inlined_call_operand.hbm [shape: f32[2,8,2048], index: 6, kind: input, shape index: {}]
  %s7 = inlined_call_operand.hbm [shape: f32[8,16,128], index: 7, kind: output, shape index: {}]
  %s8 = sld [smem:[#allocation0]]
  $region97: #{tpu_custom_call.1} parent=0
    _
  %s10 = ssub.s32 1, %s8
  %s11 = scalar_select 0, %s10, %s8
  $region1: #{tpu_custom_call.1} parent=0
    #allocation3 [shape = 'u8[65536]{0}', space=vmem, size = 0x10000, scoped, tag = 'input window, operand 0, single buffered']
    #allocation4 [shape = 's32[2]{0}', space=sflag, size = 0x8, scoped, tag = 'scoped memory for tpu_custom_call.1']
    #allocation5 [shape = 's32[2]{0}', space=sflag, size = 0x8, scoped, tag = 'scoped memory for tpu_custom_call.1']
    #allocation6 [shape = 'u8[8192]{0}', space=vmem, size = 0x2000, scoped, tag = 'input window, operand 1, single buffered']
    #allocation7 [shape = 's32[1]{0}', space=sflag, size = 0x4, scoped, tag = 'scoped memory for tpu_custom_call.1']
    #allocation8 [shape = 'u8[196608]{0}', space=vmem, size = 0x30000, scoped, tag = 'input window, operand 2']
    #allocation9 [shape = 'u8[65536]{0}', space=vmem, size = 0x10000, scoped, tag = 'input window, operand 3']
    #allocation10 [shape = 'u8[1048576]{0}', space=vmem, size = 0x100000, scoped, tag = 'input window, operand 4']
    #allocation11 [shape = 'u8[1048576]{0}', space=vmem, size = 0x100000, scoped, tag = 'input window, operand 5']
    #allocation12 [shape = 'u8[131072]{0}', space=vmem, size = 0x20000, scoped, tag = 'input window, operand 6']
    #allocation13 [shape = 'u8[65536]{0}', space=vmem, size = 0x10000, scoped, tag = 'output window, operand 0, single buffered']
    %12 = vsyncpa [#allocation4], 0
    %13 = vsyncpa [#allocation7], 0
    %14 = vsyncpa [#allocation5], 0
    loop: start=0, step=1, limit=4
    $region2: #{tpu_custom_call.1} parent=1 // loop_pre_header
      _
    $region3: #{tpu_custom_call.1} parent=1 // loop_header
      %s16 = sphi 0, %s20
      %p17 = scmp.ge.s32.totalorder %s16, 4
      %s23 = sphi 0, %s35
      %s24 = sphi 0, %s31
      %s25 = sphi 0, %s23
      %s26 = sphi 0, %s24
      %s27 = sphi 0, %s25
      %s28 = sphi 0, %s26
      %s38 = sphi 0, %s40
      %s41 = sphi 0, %s38
      %s42 = sphi 0, %s41
      %s58 = sphi 0, %s42
      %s64 = sphi 0, %s66
      %s67 = sphi 0, %s64
      %s68 = sphi 0, %s67
      %s84 = sphi 0, %s68
      %s90 = sphi 0, %s92
      %s93 = sphi 0, %s90
      %s94 = sphi 0, %s93
      %s110 = sphi 0, %s94
      %s116 = sphi 0, %s118
      %s119 = sphi 0, %s116
      %s120 = sphi 0, %s119
      %s136 = sphi 0, %s120
      %s142 = sphi 0, %s144
      %s145 = sphi 0, %s142
      %s146 = sphi 0, %s145
      %s162 = sphi 0, %s146
      %s168 = sphi 0, %s170
      %s171 = sphi 0, %s168
      %s172 = sphi 0, %s171
      %s188 = sphi 0, %s172
      %s194 = sphi 0, %s196
      %s197 = sphi 0, %s194
      %s198 = sphi 0, %s197
      %s214 = sphi 0, %s198
      %s220 = sphi 0, %s222
      %s223 = sphi 0, %s220
      %s224 = sphi 0, %s223
      %s240 = sphi 0, %s224
    $region4: #{tpu_custom_call.1} parent=1 // loop_header_branch
      %19 = sbr.rel (%p17) target = $region8
    $region5: #{tpu_custom_call.1} parent=1 // loop_body
      %s21 = ssub.s32 %s16, 1
      %s22 = ssub.s32 %s16, 2
      %s29 = sadd.s32 1, %s24
      %p30 = scmp.ge.s32.totalorder %s29, 2
      %s31 = scalar_select %p30, 0, %s29
      %s32 = sadd.s32 1, %s23
      %s33 = scalar_select %p30, %s32, %s23
      %p34 = scmp.ge.s32.totalorder %s33, 1
      %s35 = scalar_select %p34, 0, %s33
      %s36 = ssub.s32 %s23, %s35
      %p37 = scmp.eq.s32.totalorder %s36, 0
      %s39 = sadd.s32 %s38, 1
      %s40 = scalar_select %p37, %s38, %s39
      %p43 = pneg %p37
      %p44 = scmp.eq.s32.totalorder %s16, 1
      %p45 = por %p43, %p44
      %p46 = scmp.ne.s32.totalorder %s38, %s41
      %p47 = scmp.eq.s32.totalorder %s16, 0
      %p48 = por %p46, %p47
      %p49 = scmp.ne.s32.totalorder %s38, %s41
      %p50 = scmp.eq.s32.totalorder %s21, 1
      %p51 = por %p49, %p50
      %p52 = scmp.ne.s32.totalorder %s41, %s42
      %p53 = scmp.eq.s32.totalorder %s21, 0
      %p54 = por %p52, %p53
      %p55 = scmp.ne.s32.totalorder %s41, %s42
      %p56 = scmp.eq.s32.totalorder %s22, 1
      %p57 = por %p55, %p56
      %p59 = scmp.ne.s32.totalorder %s42, %s58
      %p60 = scmp.eq.s32.totalorder %s22, 0
      %p61 = por %p59, %p60
      %s62 = ssub.s32 %s23, %s35
      %p63 = scmp.eq.s32.totalorder %s62, 0
      %s65 = sadd.s32 %s64, 1
      %s66 = scalar_select %p63, %s64, %s65
      %p69 = pneg %p63
      %p70 = scmp.eq.s32.totalorder %s16, 1
      %p71 = por %p69, %p70
      %p72 = scmp.ne.s32.totalorder %s64, %s67
      %p73 = scmp.eq.s32.totalorder %s16, 0
      %p74 = por %p72, %p73
      %p75 = scmp.ne.s32.totalorder %s64, %s67
      %p76 = scmp.eq.s32.totalorder %s21, 1
      %p77 = por %p75, %p76
      %p78 = scmp.ne.s32.totalorder %s67, %s68
      %p79 = scmp.eq.s32.totalorder %s21, 0
      %p80 = por %p78, %p79
      %p81 = scmp.ne.s32.totalorder %s67, %s68
      %p82 = scmp.eq.s32.totalorder %s22, 1
      %p83 = por %p81, %p82
      %p85 = scmp.ne.s32.totalorder %s68, %s84
      %p86 = scmp.eq.s32.totalorder %s22, 0
      %p87 = por %p85, %p86
      %s88 = ssub.s32 %s24, %s31
      %p89 = scmp.eq.s32.totalorder %s88, 0
      %s91 = sadd.s32 %s90, 1
      %s92 = scalar_select %p89, %s90, %s91
      %p95 = pneg %p89
      %p96 = scmp.eq.s32.totalorder %s16, 1
      %p97 = por %p95, %p96
      %p98 = scmp.ne.s32.totalorder %s90, %s93
      %p99 = scmp.eq.s32.totalorder %s16, 0
      %p100 = por %p98, %p99
      %p101 = scmp.ne.s32.totalorder %s90, %s93
      %p102 = scmp.eq.s32.totalorder %s21, 1
      %p103 = por %p101, %p102
      %p104 = scmp.ne.s32.totalorder %s93, %s94
      %p105 = scmp.eq.s32.totalorder %s21, 0
      %p106 = por %p104, %p105
      %p107 = scmp.ne.s32.totalorder %s93, %s94
      %p108 = scmp.eq.s32.totalorder %s22, 1
      %p109 = por %p107, %p108
      %p111 = scmp.ne.s32.totalorder %s94, %s110
      %p112 = scmp.eq.s32.totalorder %s22, 0
      %p113 = por %p111, %p112
      %s114 = ssub.s32 %s24, %s31
      %p115 = scmp.eq.s32.totalorder %s114, 0
      %s117 = sadd.s32 %s116, 1
      %s118 = scalar_select %p115, %s116, %s117
      %p121 = pneg %p115
      %p122 = scmp.eq.s32.totalorder %s16, 1
      %p123 = por %p121, %p122
      %p124 = scmp.ne.s32.totalorder %s116, %s119
      %p125 = scmp.eq.s32.totalorder %s16, 0
      %p126 = por %p124, %p125
      %p127 = scmp.ne.s32.totalorder %s116, %s119
      %p128 = scmp.eq.s32.totalorder %s21, 1
      %p129 = por %p127, %p128
      %p130 = scmp.ne.s32.totalorder %s119, %s120
      %p131 = scmp.eq.s32.totalorder %s21, 0
      %p132 = por %p130, %p131
      %p133 = scmp.ne.s32.totalorder %s119, %s120
      %p134 = scmp.eq.s32.totalorder %s22, 1
      %p135 = por %p133, %p134
      %p137 = scmp.ne.s32.totalorder %s120, %s136
      %p138 = scmp.eq.s32.totalorder %s22, 0
      %p139 = por %p137, %p138
      %s140 = ssub.s32 %s24, %s31
      %p141 = scmp.eq.s32.totalorder %s140, 0
      %s143 = sadd.s32 %s142, 1
      %s144 = scalar_select %p141, %s142, %s143
      %p147 = pneg %p141
      %p148 = scmp.eq.s32.totalorder %s16, 1
      %p149 = por %p147, %p148
      %p150 = scmp.ne.s32.totalorder %s142, %s145
      %p151 = scmp.eq.s32.totalorder %s16, 0
      %p152 = por %p150, %p151
      %p153 = scmp.ne.s32.totalorder %s142, %s145
      %p154 = scmp.eq.s32.totalorder %s21, 1
      %p155 = por %p153, %p154
      %p156 = scmp.ne.s32.totalorder %s145, %s146
      %p157 = scmp.eq.s32.totalorder %s21, 0
      %p158 = por %p156, %p157
      %p159 = scmp.ne.s32.totalorder %s145, %s146
      %p160 = scmp.eq.s32.totalorder %s22, 1
      %p161 = por %p159, %p160
      %p163 = scmp.ne.s32.totalorder %s146, %s162
      %p164 = scmp.eq.s32.totalorder %s22, 0
      %p165 = por %p163, %p164
      %s166 = ssub.s32 %s24, %s31
      %p167 = scmp.eq.s32.totalorder %s166, 0
      %s169 = sadd.s32 %s168, 1
      %s170 = scalar_select %p167, %s168, %s169
      %p173 = pneg %p167
      %p174 = scmp.eq.s32.totalorder %s16, 1
      %p175 = por %p173, %p174
      %p176 = scmp.ne.s32.totalorder %s168, %s171
      %p177 = scmp.eq.s32.totalorder %s16, 0
      %p178 = por %p176, %p177
      %p179 = scmp.ne.s32.totalorder %s168, %s171
      %p180 = scmp.eq.s32.totalorder %s21, 1
      %p181 = por %p179, %p180
      %p182 = scmp.ne.s32.totalorder %s171, %s172
      %p183 = scmp.eq.s32.totalorder %s21, 0
      %p184 = por %p182, %p183
      %p185 = scmp.ne.s32.totalorder %s171, %s172
      %p186 = scmp.eq.s32.totalorder %s22, 1
      %p187 = por %p185, %p186
      %p189 = scmp.ne.s32.totalorder %s172, %s188
      %p190 = scmp.eq.s32.totalorder %s22, 0
      %p191 = por %p189, %p190
      %s192 = ssub.s32 %s24, %s31
      %p193 = scmp.eq.s32.totalorder %s192, 0
      %s195 = sadd.s32 %s194, 1
      %s196 = scalar_select %p193, %s194, %s195
      %p199 = pneg %p193
      %p200 = scmp.eq.s32.totalorder %s16, 1
      %p201 = por %p199, %p200
      %p202 = scmp.ne.s32.totalorder %s194, %s197
      %p203 = scmp.eq.s32.totalorder %s16, 0
      %p204 = por %p202, %p203
      %p205 = scmp.ne.s32.totalorder %s194, %s197
      %p206 = scmp.eq.s32.totalorder %s21, 1
      %p207 = por %p205, %p206
      %p208 = scmp.ne.s32.totalorder %s197, %s198
      %p209 = scmp.eq.s32.totalorder %s21, 0
      %p210 = por %p208, %p209
      %p211 = scmp.ne.s32.totalorder %s197, %s198
      %p212 = scmp.eq.s32.totalorder %s22, 1
      %p213 = por %p211, %p212
      %p215 = scmp.ne.s32.totalorder %s198, %s214
      %p216 = scmp.eq.s32.totalorder %s22, 0
      %p217 = por %p215, %p216
      %s218 = ssub.s32 %s23, %s35
      %p219 = scmp.eq.s32.totalorder %s218, 0
      %s221 = sadd.s32 %s220, 1
      %s222 = scalar_select %p219, %s220, %s221
      %p225 = pneg %p219
      %p226 = scmp.eq.s32.totalorder %s16, 1
      %p227 = por %p225, %p226
      %p228 = scmp.ne.s32.totalorder %s220, %s223
      %p229 = scmp.eq.s32.totalorder %s16, 0
      %p230 = por %p228, %p229
      %p231 = scmp.ne.s32.totalorder %s220, %s223
      %p232 = scmp.eq.s32.totalorder %s21, 1
      %p233 = por %p231, %p232
      %p234 = scmp.ne.s32.totalorder %s223, %s224
      %p235 = scmp.eq.s32.totalorder %s21, 0
      %p236 = por %p234, %p235
      %p237 = scmp.ne.s32.totalorder %s223, %s224
      %p238 = scmp.eq.s32.totalorder %s22, 1
      %p239 = por %p237, %p238
      %p241 = scmp.ne.s32.totalorder %s224, %s240
      %p242 = scmp.eq.s32.totalorder %s22, 0
      %p243 = por %p241, %p242
      %p244 = scmp.le.s32.totalorder 1, %s16
      %p245 = scmp.lt.s32.totalorder %s16, 3
      %p246 = pnand %p244, %p245
      %p247 = pneg %p246
      // Predicated region
      $region9: #{tpu_custom_call.1} parent=5 // pred_check
        _
      $region10: #{tpu_custom_call.1} parent=5 // pred_check_branch
        %249 = sbr.rel (%p246) target = $region12
      $region11: #{tpu_custom_call.1} parent=5 // pred_region
        %s250 = ssub.s32 %s16, 1
        // Predicated region
        $region13: #{tpu_custom_call.1} parent=11 // pred_check
          %p251 = pneg %p54
        $region14: #{tpu_custom_call.1} parent=11 // pred_check_branch
          %253 = sbr.rel (%p251) target = $region16
        $region15: #{tpu_custom_call.1} parent=11 // pred_region
          %s254 = smul.u32 2, %s25
          %s256 = ssub.s32 2048, 2048
          %257 = vsyncadd [#allocation4], %s256
          %s258 = smul.addr %s254, 128
          %s259 = scalar_lea.hbm %s0, %s258
          %s260 = sshll.u32 [#allocation3], 4
          %s261 = int_to_ptr.vmem [resolvable:$true] %s260
          %266 = dma.hbm_to_vmem [thread:$0]  %s259, 2048, %s261, [#allocation4], 128, 128, 8
        $region16: #{tpu_custom_call.1} parent=11 // pred_fallthru
          _
        // Predicated region
        $region17: #{tpu_custom_call.1} parent=11 // pred_check
          %p267 = pneg %p80
        $region18: #{tpu_custom_call.1} parent=11 // pred_check_branch
          %269 = sbr.rel (%p267) target = $region20
        $region19: #{tpu_custom_call.1} parent=11 // pred_region
          %s270 = smul.u32 2, %s25
          %s272 = ssub.s32 256, 256
          %273 = vsyncadd [#allocation7], %s272
          %s274 = smul.addr %s270, 128
          %s275 = scalar_lea.hbm %s1, %s274
          %s276 = sshll.u32 [#allocation6], 4
          %s277 = int_to_ptr.vmem [resolvable:$true] %s276
          %282 = dma.hbm_to_vmem [thread:$0]  %s275, 256, %s277, [#allocation7], 128, 128, 8
        $region20: #{tpu_custom_call.1} parent=11 // pred_fallthru
          _
      $region12: #{tpu_custom_call.1} parent=5 // pred_fallthru
        _
      %p283 = scmp.lt.s32.totalorder %s16, 2
      // Predicated region
      $region21: #{tpu_custom_call.1} parent=5 // pred_check
        %p284 = pneg %p283
      $region22: #{tpu_custom_call.1} parent=5 // pred_check_branch
        %286 = sbr.rel (%p284) target = $region24
      $region23: #{tpu_custom_call.1} parent=5 // pred_region
        // Predicated region
        $region25: #{tpu_custom_call.1} parent=23 // pred_check
          %p287 = pneg %p100
        $region26: #{tpu_custom_call.1} parent=23 // pred_check_branch
          %289 = sbr.rel (%p287) target = $region28
        $region27: #{tpu_custom_call.1} parent=23 // pred_region
          %s290 = sand.u32 %s16, 1
          %s291 = scalar_lea.sflag [#allocation4], %s290
          %s292 = sand.u32 %s90, 1
          %s293 = smul.addr %s292, 192
          %s294 = scalar_lea.vmem [#allocation8], %s293
          %s296 = ssub.s32 3072, 3072
          %297 = vsyncadd %s291, %s296
          %s298 = smul.addr %s24, 48
          %s299 = smul.addr %s298, 64
          %s300 = scalar_lea.hbm %s2, %s299
          %s301 = sshll.u32 %s294, 4
          %s302 = int_to_ptr.vmem [resolvable:$true] %s301
          %307 = dma.hbm_to_vmem [thread:$0]  %s300, 3072, %s302, %s291, 192, 192, 12
        $region28: #{tpu_custom_call.1} parent=23 // pred_fallthru
          _
        // Predicated region
        $region29: #{tpu_custom_call.1} parent=23 // pred_check
          %p308 = pneg %p126
        $region30: #{tpu_custom_call.1} parent=23 // pred_check_branch
          %310 = sbr.rel (%p308) target = $region32
        $region31: #{tpu_custom_call.1} parent=23 // pred_region
          %s311 = sand.u32 %s16, 1
          %s312 = scalar_lea.sflag [#allocation4], %s311
          %s313 = sand.u32 %s116, 1
          %s314 = smul.addr %s313, 64
          %s315 = scalar_lea.vmem [#allocation9], %s314
          %s317 = ssub.s32 1024, 1024
          %318 = vsyncadd %s312, %s317
          %s319 = smul.addr %s24, 16
          %s320 = smul.addr %s319, 64
          %s321 = scalar_lea.hbm %s3, %s320
          %s322 = sshll.u32 %s315, 4
          %s323 = int_to_ptr.vmem [resolvable:$true] %s322
          %328 = dma.hbm_to_vmem [thread:$0]  %s321, 1024, %s323, %s312, 64, 64, 4
        $region32: #{tpu_custom_call.1} parent=23 // pred_fallthru
          _
        // Predicated region
        $region33: #{tpu_custom_call.1} parent=23 // pred_check
          %p329 = pneg %p152
        $region34: #{tpu_custom_call.1} parent=23 // pred_check_branch
          %331 = sbr.rel (%p329) target = $region36
        $region35: #{tpu_custom_call.1} parent=23 // pred_region
          %s332 = sand.u32 %s16, 1
          %s333 = scalar_lea.sflag [#allocation4], %s332
          %s334 = sand.u32 %s142, 1
          %s335 = smul.addr %s334, 1024
          %s336 = scalar_lea.vmem [#allocation10], %s335
          %s338 = ssub.s32 16384, 16384
          %339 = vsyncadd %s333, %s338
          %s340 = smul.addr %s24, 256
          %s341 = smul.addr %s340, 64
          %s342 = scalar_lea.hbm %s4, %s341
          %s343 = sshll.u32 %s336, 4
          %s344 = int_to_ptr.vmem [resolvable:$true] %s343
          %349 = dma.hbm_to_vmem [thread:$0]  %s342, 16384, %s344, %s333, 1024, 1024, 64
        $region36: #{tpu_custom_call.1} parent=23 // pred_fallthru
          _
        // Predicated region
        $region37: #{tpu_custom_call.1} parent=23 // pred_check
          %p350 = pneg %p178
        $region38: #{tpu_custom_call.1} parent=23 // pred_check_branch
          %352 = sbr.rel (%p350) target = $region40
        $region39: #{tpu_custom_call.1} parent=23 // pred_region
          %s353 = sand.u32 %s16, 1
          %s354 = scalar_lea.sflag [#allocation4], %s353
          %s355 = sand.u32 %s168, 1
          %s356 = smul.addr %s355, 1024
          %s357 = scalar_lea.vmem [#allocation11], %s356
          %s359 = ssub.s32 16384, 16384
          %360 = vsyncadd %s354, %s359
          %s361 = smul.addr %s24, 256
          %s362 = smul.addr %s361, 64
          %s363 = scalar_lea.hbm %s5, %s362
          %s364 = sshll.u32 %s357, 4
          %s365 = int_to_ptr.vmem [resolvable:$true] %s364
          %370 = dma.hbm_to_vmem [thread:$0]  %s363, 16384, %s365, %s354, 64, 64, 4
        $region40: #{tpu_custom_call.1} parent=23 // pred_fallthru
          _
        // Predicated region
        $region41: #{tpu_custom_call.1} parent=23 // pred_check
          %p371 = pneg %p204
        $region42: #{tpu_custom_call.1} parent=23 // pred_check_branch
          %373 = sbr.rel (%p371) target = $region44
        $region43: #{tpu_custom_call.1} parent=23 // pred_region
          %s374 = sand.u32 %s16, 1
          %s375 = scalar_lea.sflag [#allocation4], %s374
          %s376 = sand.u32 %s194, 1
          %s377 = smul.addr %s376, 128
          %s378 = scalar_lea.vmem [#allocation12], %s377
          %s380 = ssub.s32 2048, 2048
          %381 = vsyncadd %s375, %s380
          %s382 = smul.addr %s24, 16
          %s383 = smul.addr %s382, 128
          %s384 = scalar_lea.hbm %s6, %s383
          %s386 = sshll.u32 %s378, 4
          %s387 = int_to_ptr.vmem [resolvable:$true] %s386
          %389 = dma.hbm_to_vmem [thread:$0]  %s384, 2048, %s387, %s375
        $region44: #{tpu_custom_call.1} parent=23 // pred_fallthru
          _
      $region24: #{tpu_custom_call.1} parent=5 // pred_fallthru
        _
      %p390 = scmp.le.s32.totalorder 1, %s16
      %p391 = scmp.lt.s32.totalorder %s16, 3
      %p392 = pnand %p390, %p391
      %p393 = pneg %p392
      // Predicated region
      $region45: #{tpu_custom_call.1} parent=5 // pred_check
        _
      $region46: #{tpu_custom_call.1} parent=5 // pred_check_branch
        %395 = sbr.rel (%p392) target = $region48
      $region47: #{tpu_custom_call.1} parent=5 // pred_region
        %s396 = ssub.s32 %s16, 1
        // Predicated region
        $region49: #{tpu_custom_call.1} parent=47 // pred_check
          %p397 = pneg %p54
        $region50: #{tpu_custom_call.1} parent=47 // pred_check_branch
          %399 = sbr.rel (%p397) target = $region52
        $region51: #{tpu_custom_call.1} parent=47 // pred_region
          %400 = dma.done [#allocation4], 2048
        $region52: #{tpu_custom_call.1} parent=47 // pred_fallthru
          _
        // Predicated region
        $region53: #{tpu_custom_call.1} parent=47 // pred_check
          %p401 = pneg %p80
        $region54: #{tpu_custom_call.1} parent=47 // pred_check_branch
          %403 = sbr.rel (%p401) target = $region56
        $region55: #{tpu_custom_call.1} parent=47 // pred_region
          %404 = dma.done [#allocation7], 256
        $region56: #{tpu_custom_call.1} parent=47 // pred_fallthru
          _
        %s405 = sand.u32 %s21, 1
        %s406 = scalar_lea.sflag [#allocation4], %s405
        %s407 = sand.u32 %s93, 1
        %s408 = smul.addr %s407, 192
        %s409 = scalar_lea.vmem [#allocation8], %s408
        // Predicated region
        $region57: #{tpu_custom_call.1} parent=47 // pred_check
          %p410 = pneg %p106
        $region58: #{tpu_custom_call.1} parent=47 // pred_check_branch
          %412 = sbr.rel (%p410) target = $region60
        $region59: #{tpu_custom_call.1} parent=47 // pred_region
          %413 = dma.done %s406, 3072
        $region60: #{tpu_custom_call.1} parent=47 // pred_fallthru
          _
        %s414 = sand.u32 %s21, 1
        %s415 = scalar_lea.sflag [#allocation4], %s414
        %s416 = sand.u32 %s119, 1
        %s417 = smul.addr %s416, 64
        %s418 = scalar_lea.vmem [#allocation9], %s417
        // Predicated region
        $region61: #{tpu_custom_call.1} parent=47 // pred_check
          %p419 = pneg %p132
        $region62: #{tpu_custom_call.1} parent=47 // pred_check_branch
          %421 = sbr.rel (%p419) target = $region64
        $region63: #{tpu_custom_call.1} parent=47 // pred_region
          %422 = dma.done %s415, 1024
        $region64: #{tpu_custom_call.1} parent=47 // pred_fallthru
          _
        %s423 = sand.u32 %s21, 1
        %s424 = scalar_lea.sflag [#allocation4], %s423
        %s425 = sand.u32 %s145, 1
        %s426 = smul.addr %s425, 1024
        %s427 = scalar_lea.vmem [#allocation10], %s426
        // Predicated region
        $region65: #{tpu_custom_call.1} parent=47 // pred_check
          %p428 = pneg %p158
        $region66: #{tpu_custom_call.1} parent=47 // pred_check_branch
          %430 = sbr.rel (%p428) target = $region68
        $region67: #{tpu_custom_call.1} parent=47 // pred_region
          %431 = dma.done %s424, 16384
        $region68: #{tpu_custom_call.1} parent=47 // pred_fallthru
          _
        %s432 = sand.u32 %s21, 1
        %s433 = scalar_lea.sflag [#allocation4], %s432
        %s434 = sand.u32 %s171, 1
        %s435 = smul.addr %s434, 1024
        %s436 = scalar_lea.vmem [#allocation11], %s435
        // Predicated region
        $region69: #{tpu_custom_call.1} parent=47 // pred_check
          %p437 = pneg %p184
        $region70: #{tpu_custom_call.1} parent=47 // pred_check_branch
          %439 = sbr.rel (%p437) target = $region72
        $region71: #{tpu_custom_call.1} parent=47 // pred_region
          %440 = dma.done %s433, 16384
        $region72: #{tpu_custom_call.1} parent=47 // pred_fallthru
          _
        %s441 = sand.u32 %s21, 1
        %s442 = scalar_lea.sflag [#allocation4], %s441
        %s443 = sand.u32 %s197, 1
        %s444 = smul.addr %s443, 128
        %s445 = scalar_lea.vmem [#allocation12], %s444
        // Predicated region
        $region73: #{tpu_custom_call.1} parent=47 // pred_check
          %p446 = pneg %p210
        $region74: #{tpu_custom_call.1} parent=47 // pred_check_branch
          %448 = sbr.rel (%p446) target = $region76
        $region75: #{tpu_custom_call.1} parent=47 // pred_region
          %449 = dma.done %s442, 2048
        $region76: #{tpu_custom_call.1} parent=47 // pred_fallthru
          _
        %p450 = pneg %p54
        %p451 = pneg %p51
        %p452 = pneg %p80
        %p453 = pneg %p77
        %s454 = sand.u32 %s21, 1
        %s455 = scalar_lea.sflag [#allocation4], %s454
        %s456 = sand.u32 %s93, 1
        %s457 = smul.addr %s456, 192
        %s458 = scalar_lea.vmem [#allocation8], %s457
        %p459 = pneg %p106
        %p460 = pneg %p103
        %s461 = sand.u32 %s21, 1
        %s462 = scalar_lea.sflag [#allocation4], %s461
        %s463 = sand.u32 %s119, 1
        %s464 = smul.addr %s463, 64
        %s465 = scalar_lea.vmem [#allocation9], %s464
        %p466 = pneg %p132
        %p467 = pneg %p129
        %s468 = sand.u32 %s21, 1
        %s469 = scalar_lea.sflag [#allocation4], %s468
        %s470 = sand.u32 %s145, 1
        %s471 = smul.addr %s470, 1024
        %s472 = scalar_lea.vmem [#allocation10], %s471
        %p473 = pneg %p158
        %p474 = pneg %p155
        %s475 = sand.u32 %s21, 1
        %s476 = scalar_lea.sflag [#allocation4], %s475
        %s477 = sand.u32 %s171, 1
        %s478 = smul.addr %s477, 1024
        %s479 = scalar_lea.vmem [#allocation11], %s478
        %p480 = pneg %p184
        %p481 = pneg %p181
        %s482 = sand.u32 %s21, 1
        %s483 = scalar_lea.sflag [#allocation4], %s482
        %s484 = sand.u32 %s197, 1
        %s485 = smul.addr %s484, 128
        %s486 = scalar_lea.vmem [#allocation12], %s485
        %p487 = pneg %p210
        %p488 = pneg %p207
        %p489 = pneg %p236
        %p490 = pneg %p233
        %s491 = smul.u32 2, %s25
        %s492 = smul.u32 2, %s25
        %s493 = smul.u32 2, %s25
        %p495 = scmp.eq.s32.totalorder %s26, 0
        // Predicated region
        $region77: #{tpu_custom_call.1} parent=47 // pred_check
          %p496 = pneg %p495
        $region78: #{tpu_custom_call.1} parent=47 // pred_check_branch
          %498 = sbr.rel (%p496) target = $region80
        $region79: #{tpu_custom_call.1} parent=47 // pred_region
          %v499 = vld [vmem:[#allocation3] sm:$0xff]
          %v500 = vld [vmem:[#allocation3 + $0x8] sm:$0xff]
          %v501 = vld [vmem:[#allocation3 + $0x10] sm:$0xff]
          %v502 = vld [vmem:[#allocation3 + $0x18] sm:$0xff]
          %v503 = vld [vmem:[#allocation3 + $0x20] sm:$0xff]
          %v504 = vld [vmem:[#allocation3 + $0x28] sm:$0xff]
          %v505 = vld [vmem:[#allocation3 + $0x30] sm:$0xff]
          %v506 = vld [vmem:[#allocation3 + $0x38] sm:$0xff]
          %v507 = vld [vmem:[#allocation3 + $0x40] sm:$0xff]
          %v508 = vld [vmem:[#allocation3 + $0x48] sm:$0xff]
          %v509 = vld [vmem:[#allocation3 + $0x50] sm:$0xff]
          %v510 = vld [vmem:[#allocation3 + $0x58] sm:$0xff]
          %v511 = vld [vmem:[#allocation3 + $0x60] sm:$0xff]
          %v512 = vld [vmem:[#allocation3 + $0x68] sm:$0xff]
          %v513 = vld [vmem:[#allocation3 + $0x70] sm:$0xff]
          %v514 = vld [vmem:[#allocation3 + $0x78] sm:$0xff]
          %v515 = vld [vmem:[#allocation6] sm:$0xff]
          %v516 = vld [vmem:[#allocation6 + $0x8] sm:$0xff]
          %v517 = vadd.f32 %v499, %v515
          %v518 = vadd.f32 %v500, %v516
          %v519 = vadd.f32 %v501, %v515
          %v520 = vadd.f32 %v502, %v516
          %v521 = vadd.f32 %v503, %v515
          %v522 = vadd.f32 %v504, %v516
          %v523 = vadd.f32 %v505, %v515
          %v524 = vadd.f32 %v506, %v516
          %v525 = vadd.f32 %v507, %v515
          %v526 = vadd.f32 %v508, %v516
          %v527 = vadd.f32 %v509, %v515
          %v528 = vadd.f32 %v510, %v516
          %v529 = vadd.f32 %v511, %v515
          %v530 = vadd.f32 %v512, %v516
          %v531 = vadd.f32 %v513, %v515
          %v532 = vadd.f32 %v514, %v516
          %533 = vst [vmem:[#allocation2] sm:$0xff] %v517
          %534 = vst [vmem:[#allocation2 + $0x8] sm:$0xff] %v518
          %535 = vst [vmem:[#allocation2 + $0x10] sm:$0xff] %v519
          %536 = vst [vmem:[#allocation2 + $0x18] sm:$0xff] %v520
          %537 = vst [vmem:[#allocation2 + $0x20] sm:$0xff] %v521
          %538 = vst [vmem:[#allocation2 + $0x28] sm:$0xff] %v522
          %539 = vst [vmem:[#allocation2 + $0x30] sm:$0xff] %v523
          %540 = vst [vmem:[#allocation2 + $0x38] sm:$0xff] %v524
          %541 = vst [vmem:[#allocation2 + $0x40] sm:$0xff] %v525
          %542 = vst [vmem:[#allocation2 + $0x48] sm:$0xff] %v526
          %543 = vst [vmem:[#allocation2 + $0x50] sm:$0xff] %v527
          %544 = vst [vmem:[#allocation2 + $0x58] sm:$0xff] %v528
          %545 = vst [vmem:[#allocation2 + $0x60] sm:$0xff] %v529
          %546 = vst [vmem:[#allocation2 + $0x68] sm:$0xff] %v530
          %547 = vst [vmem:[#allocation2 + $0x70] sm:$0xff] %v531
          %548 = vst [vmem:[#allocation2 + $0x78] sm:$0xff] %v532
        $region80: #{tpu_custom_call.1} parent=47 // pred_fallthru
          _
        %v549 = vld [vmem:[#allocation2] sm:$0xff]
        %v550 = vld [vmem:[#allocation2 + $0x8] sm:$0xff]
        %v551 = vld [vmem:[#allocation2 + $0x10] sm:$0xff]
        %v552 = vld [vmem:[#allocation2 + $0x18] sm:$0xff]
        %v553 = vld [vmem:[#allocation2 + $0x20] sm:$0xff]
        %v554 = vld [vmem:[#allocation2 + $0x28] sm:$0xff]
        %v555 = vld [vmem:[#allocation2 + $0x30] sm:$0xff]
        %v556 = vld [vmem:[#allocation2 + $0x38] sm:$0xff]
        %v557 = vld [vmem:[#allocation2 + $0x40] sm:$0xff]
        %v558 = vld [vmem:[#allocation2 + $0x48] sm:$0xff]
        %v559 = vld [vmem:[#allocation2 + $0x50] sm:$0xff]
        %v560 = vld [vmem:[#allocation2 + $0x58] sm:$0xff]
        %v561 = vld [vmem:[#allocation2 + $0x60] sm:$0xff]
        %v562 = vld [vmem:[#allocation2 + $0x68] sm:$0xff]
        %v563 = vld [vmem:[#allocation2 + $0x70] sm:$0xff]
        %v564 = vld [vmem:[#allocation2 + $0x78] sm:$0xff]
        %v565 = vld [vmem:[%s445] sm:$0xff]
        %v566 = vld [vmem:[%s445 + $0x8] sm:$0xff]
        %v567 = vld [vmem:[%s445 + $0x10] sm:$0xff]
        %v568 = vld [vmem:[%s445 + $0x18] sm:$0xff]
        %v569 = vld [vmem:[%s445 + $0x20] sm:$0xff]
        %v570 = vld [vmem:[%s445 + $0x28] sm:$0xff]
        %v571 = vld [vmem:[%s445 + $0x30] sm:$0xff]
        %v572 = vld [vmem:[%s445 + $0x38] sm:$0xff]
        %v573 = vld [vmem:[%s445 + $0x40] sm:$0xff]
        %v574 = vld [vmem:[%s445 + $0x48] sm:$0xff]
        %v575 = vld [vmem:[%s445 + $0x50] sm:$0xff]
        %v576 = vld [vmem:[%s445 + $0x58] sm:$0xff]
        %v577 = vld [vmem:[%s445 + $0x60] sm:$0xff]
        %v578 = vld [vmem:[%s445 + $0x68] sm:$0xff]
        %v579 = vld [vmem:[%s445 + $0x70] sm:$0xff]
        %v580 = vld [vmem:[%s445 + $0x78] sm:$0xff]
        %v581 = vpack.c.bf16 %v550, %v549
        %v582 = vpack.c.bf16 %v552, %v551
        %v583 = vpack.c.bf16 %v554, %v553
        %v584 = vpack.c.bf16 %v556, %v555
        %v585 = vpack.c.bf16 %v558, %v557
        %v586 = vpack.c.bf16 %v560, %v559
        %v587 = vpack.c.bf16 %v562, %v561
        %v588 = vpack.c.bf16 %v564, %v563
        %v589 = vld [vmem:[%s409] sm:$0xff]
        %v590 = vld [vmem:[%s409 + $0x8] sm:$0xf]
        %v591 = vld [vmem:[%s409 + $0xc] sm:$0xff]
        %v592 = vld [vmem:[%s409 + $0x14] sm:$0xf]
        %v593 = vld [vmem:[%s409 + $0x18] sm:$0xff]
        %v594 = vld [vmem:[%s409 + $0x20] sm:$0xf]
        %v595 = vld [vmem:[%s409 + $0x24] sm:$0xff]
        %v596 = vld [vmem:[%s409 + $0x2c] sm:$0xf]
        %v597 = vld [vmem:[%s409 + $0x30] sm:$0xff]
        %v598 = vld [vmem:[%s409 + $0x38] sm:$0xf]
        %v599 = vld [vmem:[%s409 + $0x3c] sm:$0xff]
        %v600 = vld [vmem:[%s409 + $0x44] sm:$0xf]
        %v601 = vld [vmem:[%s409 + $0x48] sm:$0xff]
        %v602 = vld [vmem:[%s409 + $0x50] sm:$0xf]
        %v603 = vld [vmem:[%s409 + $0x54] sm:$0xff]
        %v604 = vld [vmem:[%s409 + $0x5c] sm:$0xf]
        %v605 = vld [vmem:[%s409 + $0x60] sm:$0xff]
        %v606 = vld [vmem:[%s409 + $0x68] sm:$0xf]
        %v607 = vld [vmem:[%s409 + $0x6c] sm:$0xff]
        %v608 = vld [vmem:[%s409 + $0x74] sm:$0xf]
        %v609 = vld [vmem:[%s409 + $0x78] sm:$0xff]
        %v610 = vld [vmem:[%s409 + $0x80] sm:$0xf]
        %v611 = vld [vmem:[%s409 + $0x84] sm:$0xff]
        %v612 = vld [vmem:[%s409 + $0x8c] sm:$0xf]
        %v613 = vld [vmem:[%s409 + $0x90] sm:$0xff]
        %v614 = vld [vmem:[%s409 + $0x98] sm:$0xf]
        %v615 = vld [vmem:[%s409 + $0x9c] sm:$0xff]
        %v616 = vld [vmem:[%s409 + $0xa4] sm:$0xf]
        %v617 = vld [vmem:[%s409 + $0xa8] sm:$0xff]
        %v618 = vld [vmem:[%s409 + $0xb0] sm:$0xf]
        %v619 = vld [vmem:[%s409 + $0xb4] sm:$0xff]
        %v620 = vld [vmem:[%s409 + $0xbc] sm:$0xf]
        %v621 = vlaneseq
        %v622 = vshrl.u32 %v621, 7
        %v623 = vsub.s32 0, %v622
        %v624 = vrot.slane %v565, %v623
        %v625 = vlaneseq
        %v626 = vshrl.u32 %v625, 7
        %v627 = vsub.s32 0, %v626
        %v628 = vrot.slane %v566, %v627
        %v629 = vlaneseq
        %v630 = vshrl.u32 %v629, 7
        %v631 = vsub.s32 0, %v630
        %v632 = vrot.slane %v567, %v631
        %v665 = vunpack.c.l.b16 %v589
        %v666 = vunpack.c.h.b16 %v589
        %v667 = vunpack.c.l.b16 %v590
        %v668 = vunpack.c.l.b16 %v591
        %v669 = vunpack.c.h.b16 %v591
        %v670 = vunpack.c.l.b16 %v592
        %v671 = vunpack.c.l.b16 %v593
        %v672 = vunpack.c.h.b16 %v593
        %v673 = vunpack.c.l.b16 %v594
        %v674 = vunpack.c.l.b16 %v595
        %v675 = vunpack.c.h.b16 %v595
        %v676 = vunpack.c.l.b16 %v596
        %v677 = vunpack.c.l.b16 %v597
        %v678 = vunpack.c.h.b16 %v597
        %v679 = vunpack.c.l.b16 %v598
        %v680 = vunpack.c.l.b16 %v599
        %v681 = vunpack.c.h.b16 %v599
        %v682 = vunpack.c.l.b16 %v600
        %v683 = vunpack.c.l.b16 %v601
        %v684 = vunpack.c.h.b16 %v601
        %v685 = vunpack.c.l.b16 %v602
        %v686 = vunpack.c.l.b16 %v603
        %v687 = vunpack.c.h.b16 %v603
        %v688 = vunpack.c.l.b16 %v604
        %v689 = vunpack.c.l.b16 %v605
        %v690 = vunpack.c.h.b16 %v605
        %v691 = vunpack.c.l.b16 %v606
        %v692 = vunpack.c.l.b16 %v607
        %v693 = vunpack.c.h.b16 %v607
        %v694 = vunpack.c.l.b16 %v608
        %v695 = vunpack.c.l.b16 %v609
        %v696 = vunpack.c.h.b16 %v609
        %v697 = vunpack.c.l.b16 %v610
        %v698 = vunpack.c.l.b16 %v611
        %v699 = vunpack.c.h.b16 %v611
        %v700 = vunpack.c.l.b16 %v612
        %v701 = vunpack.c.l.b16 %v613
        %v702 = vunpack.c.h.b16 %v613
        %v703 = vunpack.c.l.b16 %v614
        %v704 = vunpack.c.l.b16 %v615
        %v705 = vunpack.c.h.b16 %v615
        %v706 = vunpack.c.l.b16 %v616
        %v707 = vunpack.c.l.b16 %v617
        %v708 = vunpack.c.h.b16 %v617
        %v709 = vunpack.c.l.b16 %v618
        %v710 = vunpack.c.l.b16 %v619
        %v711 = vunpack.c.h.b16 %v619
        %v712 = vunpack.c.l.b16 %v620
        %v713 = vpack.c.b16 %v668, %v665
        %v714 = vpack.c.b16 %v669, %v666
        %v715 = vpack.c.b16 %v670, %v667
        %v716 = vpack.c.b16 %v674, %v671
        %v717 = vpack.c.b16 %v675, %v672
        %v718 = vpack.c.b16 %v676, %v673
        %v719 = vpack.c.b16 %v680, %v677
        %v720 = vpack.c.b16 %v681, %v678
        %v721 = vpack.c.b16 %v682, %v679
        %v722 = vpack.c.b16 %v686, %v683
        %v723 = vpack.c.b16 %v687, %v684
        %v724 = vpack.c.b16 %v688, %v685
        %v725 = vpack.c.b16 %v692, %v689
        %v726 = vpack.c.b16 %v693, %v690
        %v727 = vpack.c.b16 %v694, %v691
        %v728 = vpack.c.b16 %v698, %v695
        %v729 = vpack.c.b16 %v699, %v696
        %v730 = vpack.c.b16 %v700, %v697
        %v731 = vpack.c.b16 %v704, %v701
        %v732 = vpack.c.b16 %v705, %v702
        %v733 = vpack.c.b16 %v706, %v703
        %v734 = vpack.c.b16 %v710, %v707
        %v735 = vpack.c.b16 %v711, %v708
        %v736 = vpack.c.b16 %v712, %v709
        %761 = vmatprep.subr.bf16.mxu0 %v735
        %762 = vmatpush1.bf16.msra.mxu0 %v734
        %763 = vmatprep.subr.bf16.mxu0 %v732
        %764 = vmatpush1.bf16.msra.mxu0 %v731
        %765 = vmatprep.subr.bf16.mxu0 %v729
        %766 = vmatpush1.bf16.msra.mxu0 %v728
        %767 = vmatprep.subr.bf16.mxu0 %v726
        %768 = vmatpush1.bf16.msra.mxu0 %v725
        %769 = vmatprep.subr.bf16.mxu0 %v723
        %770 = vmatpush1.bf16.msra.mxu0 %v722
        %771 = vmatprep.subr.bf16.mxu0 %v720
        %772 = vmatpush1.bf16.msra.mxu0 %v719
        %773 = vmatprep.subr.bf16.mxu0 %v717
        %774 = vmatpush1.bf16.msra.mxu0 %v716
        %775 = vmatprep.subr.bf16.mxu0 %v714
        %776 = vmatpush1.bf16.msra.mxu0 %v713
        %777 = vmatprep.subr.bf16.mxu0 0
        %778 = vmatpush2.bf16.msra.mxu0 0
        %779 = vmatprep.subr.bf16.mxu0 0
        %780 = vmatpush2.bf16.msra.mxu0 0
        %781 = vmatprep.subr.bf16.mxu0 0
        %782 = vmatpush2.bf16.msra.mxu0 0
        %783 = vmatprep.subr.bf16.mxu0 0
        %784 = vmatpush2.bf16.msra.mxu0 0
        %785 = vmatprep.subr.bf16.mxu0 0
        %786 = vmatpush2.bf16.msra.mxu0 0
        %787 = vmatprep.subr.bf16.mxu0 0
        %788 = vmatpush2.bf16.msra.mxu0 0
        %789 = vmatprep.subr.bf16.mxu0 0
        %790 = vmatpush2.bf16.msra.mxu0 0
        %791 = vmatprep.subr.bf16.mxu0 0
        %792 = vmatpush2.bf16.msra.mxu0 0
        %793 = vmatprep.mubr.bf16.mxu0 0
        %794 = vmatmul.mubr.bf16.gmra.mxu0 %v581
        %v795 = vpop.f32.mrf.mxu0
        %v796 = vadd.f32 %v624, %v795
        %v797 = vpop.f32.mrf.mxu0
        %v798 = vadd.f32 %v628, %v797
        %v799 = vpop.f32.mrf.mxu0
        %v800 = vadd.f32 %v624, %v799
        %v801 = vpop.f32.mrf.mxu0
        %v802 = vadd.f32 %v628, %v801
        %803 = vmatprep.mubr.bf16.mxu0 0
        %804 = vmatmul.mubr.bf16.gmra.mxu0 %v582
        %v805 = vpop.f32.mrf.mxu0
        %v806 = vadd.f32 %v624, %v805
        %v807 = vpop.f32.mrf.mxu0
        %v808 = vadd.f32 %v628, %v807
        %v809 = vpop.f32.mrf.mxu0
        %v810 = vadd.f32 %v624, %v809
        %v811 = vpop.f32.mrf.mxu0
        %v812 = vadd.f32 %v628, %v811
        %813 = vmatprep.mubr.bf16.mxu0 0
        %814 = vmatmul.mubr.bf16.gmra.mxu0 %v583
        %v815 = vpop.f32.mrf.mxu0
        %v816 = vadd.f32 %v624, %v815
        %v817 = vpop.f32.mrf.mxu0
        %v818 = vadd.f32 %v628, %v817
        %v819 = vpop.f32.mrf.mxu0
        %v820 = vadd.f32 %v624, %v819
        %v821 = vpop.f32.mrf.mxu0
        %v822 = vadd.f32 %v628, %v821
        %823 = vmatprep.mubr.bf16.mxu0 0
        %824 = vmatmul.mubr.bf16.gmra.mxu0 %v584
        %v825 = vpop.f32.mrf.mxu0
        %v826 = vadd.f32 %v624, %v825
        %v827 = vpop.f32.mrf.mxu0
        %v828 = vadd.f32 %v628, %v827
        %v829 = vpop.f32.mrf.mxu0
        %v830 = vadd.f32 %v624, %v829
        %v831 = vpop.f32.mrf.mxu0
        %v832 = vadd.f32 %v628, %v831
        %833 = vmatprep.mubr.bf16.mxu0 0
        %834 = vmatmul.mubr.bf16.gmra.mxu0 %v585
        %v835 = vpop.f32.mrf.mxu0
        %v836 = vadd.f32 %v624, %v835
        %v837 = vpop.f32.mrf.mxu0
        %v838 = vadd.f32 %v628, %v837
        %v839 = vpop.f32.mrf.mxu0
        %v840 = vadd.f32 %v624, %v839
        %v841 = vpop.f32.mrf.mxu0
        %v842 = vadd.f32 %v628, %v841
        %843 = vmatprep.mubr.bf16.mxu0 0
        %844 = vmatmul.mubr.bf16.gmra.mxu0 %v586
        %v845 = vpop.f32.mrf.mxu0
        %v846 = vadd.f32 %v624, %v845
        %v847 = vpop.f32.mrf.mxu0
        %v848 = vadd.f32 %v628, %v847
        %v849 = vpop.f32.mrf.mxu0
        %v850 = vadd.f32 %v624, %v849
        %v851 = vpop.f32.mrf.mxu0
        %v852 = vadd.f32 %v628, %v851
        %853 = vmatprep.mubr.bf16.mxu0 0
        %854 = vmatmul.mubr.bf16.gmra.mxu0 %v587
        %v855 = vpop.f32.mrf.mxu0
        %v856 = vadd.f32 %v624, %v855
        %v857 = vpop.f32.mrf.mxu0
        %v858 = vadd.f32 %v628, %v857
        %v859 = vpop.f32.mrf.mxu0
        %v860 = vadd.f32 %v624, %v859
        %v861 = vpop.f32.mrf.mxu0
        %v862 = vadd.f32 %v628, %v861
        %863 = vmatprep.mubr.bf16.mxu0 0
        %864 = vmatmul.mubr.bf16.gmra.mxu0 %v588
        %v865 = vpop.f32.mrf.mxu0
        %v866 = vadd.f32 %v624, %v865
        %v867 = vpop.f32.mrf.mxu0
        %v868 = vadd.f32 %v628, %v867
        %v869 = vpop.f32.mrf.mxu0
        %v870 = vadd.f32 %v624, %v869
        %v871 = vpop.f32.mrf.mxu0
        %v872 = vadd.f32 %v628, %v871
        %873 = vdwg.mxu0
        %874 = vmatprep.subr.bf16.mxu0 0
        %875 = vmatpush1.bf16.msra.mxu0 %v736
        %876 = vmatprep.subr.bf16.mxu0 0
        %877 = vmatpush1.bf16.msra.mxu0 %v733
        %878 = vmatprep.subr.bf16.mxu0 0
        %879 = vmatpush1.bf16.msra.mxu0 %v730
        %880 = vmatprep.subr.bf16.mxu0 0
        %881 = vmatpush1.bf16.msra.mxu0 %v727
        %882 = vmatprep.subr.bf16.mxu0 0
        %883 = vmatpush1.bf16.msra.mxu0 %v724
        %884 = vmatprep.subr.bf16.mxu0 0
        %885 = vmatpush1.bf16.msra.mxu0 %v721
        %886 = vmatprep.subr.bf16.mxu0 0
        %887 = vmatpush1.bf16.msra.mxu0 %v718
        %888 = vmatprep.subr.bf16.mxu0 0
        %889 = vmatpush1.bf16.msra.mxu0 %v715
        %890 = vmatprep.subr.bf16.mxu0 0
        %891 = vmatpush2.bf16.msra.mxu0 0
        %892 = vmatprep.subr.bf16.mxu0 0
        %893 = vmatpush2.bf16.msra.mxu0 0
        %894 = vmatprep.subr.bf16.mxu0 0
        %895 = vmatpush2.bf16.msra.mxu0 0
        %896 = vmatprep.subr.bf16.mxu0 0
        %897 = vmatpush2.bf16.msra.mxu0 0
        %898 = vmatprep.subr.bf16.mxu0 0
        %899 = vmatpush2.bf16.msra.mxu0 0
        %900 = vmatprep.subr.bf16.mxu0 0
        %901 = vmatpush2.bf16.msra.mxu0 0
        %902 = vmatprep.subr.bf16.mxu0 0
        %903 = vmatpush2.bf16.msra.mxu0 0
        %904 = vmatprep.subr.bf16.mxu0 0
        %905 = vmatpush2.bf16.msra.mxu0 0
        %906 = vmatprep.mubr.bf16.mxu0 0
        %907 = vmatmul.mubr.bf16.gmra.mxu0 %v581
        %v908 = vpop.f32.mrf.mxu0
        %v909 = vadd.f32 %v632, %v908
        %v910 = vpop.f32.mrf.mxu0
        %v911 = vpop.f32.mrf.mxu0
        %v912 = vadd.f32 %v632, %v911
        %v913 = vpop.f32.mrf.mxu0
        %914 = vmatprep.mubr.bf16.mxu0 0
        %915 = vmatmul.mubr.bf16.gmra.mxu0 %v582
        %v916 = vpop.f32.mrf.mxu0
        %v917 = vadd.f32 %v632, %v916
        %v918 = vpop.f32.mrf.mxu0
        %v919 = vpop.f32.mrf.mxu0
        %v920 = vadd.f32 %v632, %v919
        %v921 = vpop.f32.mrf.mxu0
        %922 = vmatprep.mubr.bf16.mxu0 0
        %923 = vmatmul.mubr.bf16.gmra.mxu0 %v583
        %v924 = vpop.f32.mrf.mxu0
        %v925 = vadd.f32 %v632, %v924
        %v926 = vpop.f32.mrf.mxu0
        %v927 = vpop.f32.mrf.mxu0
        %v928 = vadd.f32 %v632, %v927
        %v929 = vpop.f32.mrf.mxu0
        %930 = vmatprep.mubr.bf16.mxu0 0
        %931 = vmatmul.mubr.bf16.gmra.mxu0 %v584
        %v932 = vpop.f32.mrf.mxu0
        %v933 = vadd.f32 %v632, %v932
        %v934 = vpop.f32.mrf.mxu0
        %v935 = vpop.f32.mrf.mxu0
        %v936 = vadd.f32 %v632, %v935
        %v937 = vpop.f32.mrf.mxu0
        %938 = vmatprep.mubr.bf16.mxu0 0
        %939 = vmatmul.mubr.bf16.gmra.mxu0 %v585
        %v940 = vpop.f32.mrf.mxu0
        %v941 = vadd.f32 %v632, %v940
        %v942 = vpop.f32.mrf.mxu0
        %v943 = vpop.f32.mrf.mxu0
        %v944 = vadd.f32 %v632, %v943
        %v945 = vpop.f32.mrf.mxu0
        %946 = vmatprep.mubr.bf16.mxu0 0
        %947 = vmatmul.mubr.bf16.gmra.mxu0 %v586
        %v948 = vpop.f32.mrf.mxu0
        %v949 = vadd.f32 %v632, %v948
        %v950 = vpop.f32.mrf.mxu0
        %v951 = vpop.f32.mrf.mxu0
        %v952 = vadd.f32 %v632, %v951
        %v953 = vpop.f32.mrf.mxu0
        %954 = vmatprep.mubr.bf16.mxu0 0
        %955 = vmatmul.mubr.bf16.gmra.mxu0 %v587
        %v956 = vpop.f32.mrf.mxu0
        %v957 = vadd.f32 %v632, %v956
        %v958 = vpop.f32.mrf.mxu0
        %v959 = vpop.f32.mrf.mxu0
        %v960 = vadd.f32 %v632, %v959
        %v961 = vpop.f32.mrf.mxu0
        %962 = vmatprep.mubr.bf16.mxu0 0
        %963 = vmatmul.mubr.bf16.gmra.mxu0 %v588
        %v964 = vpop.f32.mrf.mxu0
        %v965 = vadd.f32 %v632, %v964
        %v966 = vpop.f32.mrf.mxu0
        %v967 = vpop.f32.mrf.mxu0
        %v968 = vadd.f32 %v632, %v967
        %v969 = vpop.f32.mrf.mxu0
        %970 = vdwg.mxu0
        %v971 = vmul.f32 %v796, 0.17677669
        %v972 = vmul.f32 %v800, 0.17677669
        %v973 = vmul.f32 %v806, 0.17677669
        %v974 = vmul.f32 %v810, 0.17677669
        %v975 = vmul.f32 %v816, 0.17677669
        %v976 = vmul.f32 %v820, 0.17677669
        %v977 = vmul.f32 %v826, 0.17677669
        %v978 = vmul.f32 %v830, 0.17677669
        %v979 = vmul.f32 %v836, 0.17677669
        %v980 = vmul.f32 %v840, 0.17677669
        %v981 = vmul.f32 %v846, 0.17677669
        %v982 = vmul.f32 %v850, 0.17677669
        %v983 = vmul.f32 %v856, 0.17677669
        %v984 = vmul.f32 %v860, 0.17677669
        %v985 = vmul.f32 %v866, 0.17677669
        %v986 = vmul.f32 %v870, 0.17677669
        %v987 = vlaneseq
        %v988 = vshrl.u32 %v987, 7
        %v989 = vadd.s32 %v988, 8
        %v990 = vadd.s32 %v988, 16
        %v991 = vadd.s32 %v988, 24
        %v992 = vadd.s32 %v988, 32
        %v993 = vadd.s32 %v988, 40
        %v994 = vadd.s32 %v988, 48
        %v995 = vadd.s32 %v988, 56
        %v996 = vadd.s32 %v988, 64
        %v997 = vadd.s32 %v988, 72
        %v998 = vadd.s32 %v988, 80
        %v999 = vadd.s32 %v988, 88
        %v1000 = vadd.s32 %v988, 96
        %v1001 = vadd.s32 %v988, 104
        %v1002 = vadd.s32 %v988, 112
        %v1003 = vadd.s32 %v988, 120
        %v1004 = vlaneseq
        %v1005 = vand.u32 %v1004, 127
        %vm1006 = vcmp.lt.s32.totalorder %v988, 0
        %v1007 = vsub.s32 0, %v988
        %v1008 = vsel %vm1006, %v1007, %v988
        %v1009 = vshrl.u32 %v1008, 4
        %v1010 = vand.u32 %v1008, 15
        %v1011 = vsub.s32 0, %v1010
        %v1012 = vsel %vm1006, %v1011, %v1010
        %vm1013 = vcmp.lt.s32.totalorder %v989, 0
        %v1014 = vsub.s32 0, %v989
        %v1015 = vsel %vm1013, %v1014, %v989
        %v1016 = vshrl.u32 %v1015, 4
        %v1017 = vand.u32 %v1015, 15
        %v1018 = vsub.s32 0, %v1017
        %v1019 = vsel %vm1013, %v1018, %v1017
        %vm1020 = vcmp.lt.s32.totalorder %v990, 0
        %v1021 = vsub.s32 0, %v990
        %v1022 = vsel %vm1020, %v1021, %v990
        %v1023 = vshrl.u32 %v1022, 4
        %v1024 = vand.u32 %v1022, 15
        %v1025 = vsub.s32 0, %v1024
        %v1026 = vsel %vm1020, %v1025, %v1024
        %vm1027 = vcmp.lt.s32.totalorder %v991, 0
        %v1028 = vsub.s32 0, %v991
        %v1029 = vsel %vm1027, %v1028, %v991
        %v1030 = vshrl.u32 %v1029, 4
        %v1031 = vand.u32 %v1029, 15
        %v1032 = vsub.s32 0, %v1031
        %v1033 = vsel %vm1027, %v1032, %v1031
        %vm1034 = vcmp.lt.s32.totalorder %v992, 0
        %v1035 = vsub.s32 0, %v992
        %v1036 = vsel %vm1034, %v1035, %v992
        %v1037 = vshrl.u32 %v1036, 4
        %v1038 = vand.u32 %v1036, 15
        %v1039 = vsub.s32 0, %v1038
        %v1040 = vsel %vm1034, %v1039, %v1038
        %vm1041 = vcmp.lt.s32.totalorder %v993, 0
        %v1042 = vsub.s32 0, %v993
        %v1043 = vsel %vm1041, %v1042, %v993
        %v1044 = vshrl.u32 %v1043, 4
        %v1045 = vand.u32 %v1043, 15
        %v1046 = vsub.s32 0, %v1045
        %v1047 = vsel %vm1041, %v1046, %v1045
        %vm1048 = vcmp.lt.s32.totalorder %v994, 0
        %v1049 = vsub.s32 0, %v994
        %v1050 = vsel %vm1048, %v1049, %v994
        %v1051 = vshrl.u32 %v1050, 4
        %v1052 = vand.u32 %v1050, 15
        %v1053 = vsub.s32 0, %v1052
        %v1054 = vsel %vm1048, %v1053, %v1052
        %vm1055 = vcmp.lt.s32.totalorder %v995, 0
        %v1056 = vsub.s32 0, %v995
        %v1057 = vsel %vm1055, %v1056, %v995
        %v1058 = vshrl.u32 %v1057, 4
        %v1059 = vand.u32 %v1057, 15
        %v1060 = vsub.s32 0, %v1059
        %v1061 = vsel %vm1055, %v1060, %v1059
        %vm1062 = vcmp.lt.s32.totalorder %v996, 0
        %v1063 = vsub.s32 0, %v996
        %v1064 = vsel %vm1062, %v1063, %v996
        %v1065 = vshrl.u32 %v1064, 4
        %v1066 = vand.u32 %v1064, 15
        %v1067 = vsub.s32 0, %v1066
        %v1068 = vsel %vm1062, %v1067, %v1066
        %vm1069 = vcmp.lt.s32.totalorder %v997, 0
        %v1070 = vsub.s32 0, %v997
        %v1071 = vsel %vm1069, %v1070, %v997
        %v1072 = vshrl.u32 %v1071, 4
        %v1073 = vand.u32 %v1071, 15
        %v1074 = vsub.s32 0, %v1073
        %v1075 = vsel %vm1069, %v1074, %v1073
        %vm1076 = vcmp.lt.s32.totalorder %v998, 0
        %v1077 = vsub.s32 0, %v998
        %v1078 = vsel %vm1076, %v1077, %v998
        %v1079 = vshrl.u32 %v1078, 4
        %v1080 = vand.u32 %v1078, 15
        %v1081 = vsub.s32 0, %v1080
        %v1082 = vsel %vm1076, %v1081, %v1080
        %vm1083 = vcmp.lt.s32.totalorder %v999, 0
        %v1084 = vsub.s32 0, %v999
        %v1085 = vsel %vm1083, %v1084, %v999
        %v1086 = vshrl.u32 %v1085, 4
        %v1087 = vand.u32 %v1085, 15
        %v1088 = vsub.s32 0, %v1087
        %v1089 = vsel %vm1083, %v1088, %v1087
        %vm1090 = vcmp.lt.s32.totalorder %v1000, 0
        %v1091 = vsub.s32 0, %v1000
        %v1092 = vsel %vm1090, %v1091, %v1000
        %v1093 = vshrl.u32 %v1092, 4
        %v1094 = vand.u32 %v1092, 15
        %v1095 = vsub.s32 0, %v1094
        %v1096 = vsel %vm1090, %v1095, %v1094
        %vm1097 = vcmp.lt.s32.totalorder %v1001, 0
        %v1098 = vsub.s32 0, %v1001
        %v1099 = vsel %vm1097, %v1098, %v1001
        %v1100 = vshrl.u32 %v1099, 4
        %v1101 = vand.u32 %v1099, 15
        %v1102 = vsub.s32 0, %v1101
        %v1103 = vsel %vm1097, %v1102, %v1101
        %vm1104 = vcmp.lt.s32.totalorder %v1002, 0
        %v1105 = vsub.s32 0, %v1002
        %v1106 = vsel %vm1104, %v1105, %v1002
        %v1107 = vshrl.u32 %v1106, 4
        %v1108 = vand.u32 %v1106, 15
        %v1109 = vsub.s32 0, %v1108
        %v1110 = vsel %vm1104, %v1109, %v1108
        %vm1111 = vcmp.lt.s32.totalorder %v1003, 0
        %v1112 = vsub.s32 0, %v1003
        %v1113 = vsel %vm1111, %v1112, %v1003
        %v1114 = vshrl.u32 %v1113, 4
        %v1115 = vand.u32 %v1113, 15
        %v1116 = vsub.s32 0, %v1115
        %v1117 = vsel %vm1111, %v1116, %v1115
        %vm1118 = vcmp.ne.s32.totalorder %v1012, 0
        %vm1119 = vcmp.ne.s32.totalorder %v1019, 0
        %vm1120 = vcmp.ne.s32.totalorder %v1026, 0
        %vm1121 = vcmp.ne.s32.totalorder %v1033, 0
        %vm1122 = vcmp.ne.s32.totalorder %v1040, 0
        %vm1123 = vcmp.ne.s32.totalorder %v1047, 0
        %vm1124 = vcmp.ne.s32.totalorder %v1054, 0
        %vm1125 = vcmp.ne.s32.totalorder %v1061, 0
        %vm1126 = vcmp.ne.s32.totalorder %v1068, 0
        %vm1127 = vcmp.ne.s32.totalorder %v1075, 0
        %vm1128 = vcmp.ne.s32.totalorder %v1082, 0
        %vm1129 = vcmp.ne.s32.totalorder %v1089, 0
        %vm1130 = vcmp.ne.s32.totalorder %v1096, 0
        %vm1131 = vcmp.ne.s32.totalorder %v1103, 0
        %vm1132 = vcmp.ne.s32.totalorder %v1110, 0
        %vm1133 = vcmp.ne.s32.totalorder %v1117, 0
        %vm1134 = vcmp.lt.s32.totalorder %v1012, 0
        %vm1135 = vcmp.lt.s32.totalorder %v1019, 0
        %vm1136 = vcmp.lt.s32.totalorder %v1026, 0
        %vm1137 = vcmp.lt.s32.totalorder %v1033, 0
        %vm1138 = vcmp.lt.s32.totalorder %v1040, 0
        %vm1139 = vcmp.lt.s32.totalorder %v1047, 0
        %vm1140 = vcmp.lt.s32.totalorder %v1054, 0
        %vm1141 = vcmp.lt.s32.totalorder %v1061, 0
        %vm1142 = vcmp.lt.s32.totalorder %v1068, 0
        %vm1143 = vcmp.lt.s32.totalorder %v1075, 0
        %vm1144 = vcmp.lt.s32.totalorder %v1082, 0
        %vm1145 = vcmp.lt.s32.totalorder %v1089, 0
        %vm1146 = vcmp.lt.s32.totalorder %v1096, 0
        %vm1147 = vcmp.lt.s32.totalorder %v1103, 0
        %vm1148 = vcmp.lt.s32.totalorder %v1110, 0
        %vm1149 = vcmp.lt.s32.totalorder %v1117, 0
        %vm1150 = vmand %vm1134, %vm1118
        %vm1151 = vmand %vm1135, %vm1119
        %vm1152 = vmand %vm1136, %vm1120
        %vm1153 = vmand %vm1137, %vm1121
        %vm1154 = vmand %vm1138, %vm1122
        %vm1155 = vmand %vm1139, %vm1123
        %vm1156 = vmand %vm1140, %vm1124
        %vm1157 = vmand %vm1141, %vm1125
        %vm1158 = vmand %vm1142, %vm1126
        %vm1159 = vmand %vm1143, %vm1127
        %vm1160 = vmand %vm1144, %vm1128
        %vm1161 = vmand %vm1145, %vm1129
        %vm1162 = vmand %vm1146, %vm1130
        %vm1163 = vmand %vm1147, %vm1131
        %vm1164 = vmand %vm1148, %vm1132
        %vm1165 = vmand %vm1149, %vm1133
        %v1166 = vadd.s32 %v1012, 16
        %v1167 = vadd.s32 %v1019, 16
        %v1168 = vadd.s32 %v1026, 16
        %v1169 = vadd.s32 %v1033, 16
        %v1170 = vadd.s32 %v1040, 16
        %v1171 = vadd.s32 %v1047, 16
        %v1172 = vadd.s32 %v1054, 16
        %v1173 = vadd.s32 %v1061, 16
        %v1174 = vadd.s32 %v1068, 16
        %v1175 = vadd.s32 %v1075, 16
        %v1176 = vadd.s32 %v1082, 16
        %v1177 = vadd.s32 %v1089, 16
        %v1178 = vadd.s32 %v1096, 16
        %v1179 = vadd.s32 %v1103, 16
        %v1180 = vadd.s32 %v1110, 16
        %v1181 = vadd.s32 %v1117, 16
        %v1182 = vsel %vm1150, %v1166, %v1012
        %v1183 = vsel %vm1151, %v1167, %v1019
        %v1184 = vsel %vm1152, %v1168, %v1026
        %v1185 = vsel %vm1153, %v1169, %v1033
        %v1186 = vsel %vm1154, %v1170, %v1040
        %v1187 = vsel %vm1155, %v1171, %v1047
        %v1188 = vsel %vm1156, %v1172, %v1054
        %v1189 = vsel %vm1157, %v1173, %v1061
        %v1190 = vsel %vm1158, %v1174, %v1068
        %v1191 = vsel %vm1159, %v1175, %v1075
        %v1192 = vsel %vm1160, %v1176, %v1082
        %v1193 = vsel %vm1161, %v1177, %v1089
        %v1194 = vsel %vm1162, %v1178, %v1096
        %v1195 = vsel %vm1163, %v1179, %v1103
        %v1196 = vsel %vm1164, %v1180, %v1110
        %v1197 = vsel %vm1165, %v1181, %v1117
        %vm1198 = vcmp.lt.s32.totalorder %v1005, 0
        %v1199 = vsub.s32 0, %v1005
        %v1200 = vsel %vm1198, %v1199, %v1005
        %v1201 = vshrl.u32 %v1200, 4
        %v1202 = vand.u32 %v1200, 15
        %v1203 = vsub.s32 0, %v1202
        %v1204 = vsel %vm1198, %v1203, %v1202
        %vm1205 = vcmp.ne.s32.totalorder %v1204, 0
        %vm1206 = vcmp.lt.s32.totalorder %v1204, 0
        %vm1207 = vmand %vm1206, %vm1205
        %v1208 = vadd.s32 %v1204, 16
        %v1209 = vsel %vm1207, %v1208, %v1204
        %vm1210 = vcmp.eq.s32.totalorder %v1182, %v1209
        %vm1211 = vcmp.eq.s32.totalorder %v1183, %v1209
        %vm1212 = vcmp.eq.s32.totalorder %v1184, %v1209
        %vm1213 = vcmp.eq.s32.totalorder %v1185, %v1209
        %vm1214 = vcmp.eq.s32.totalorder %v1186, %v1209
        %vm1215 = vcmp.eq.s32.totalorder %v1187, %v1209
        %vm1216 = vcmp.eq.s32.totalorder %v1188, %v1209
        %vm1217 = vcmp.eq.s32.totalorder %v1189, %v1209
        %vm1218 = vcmp.eq.s32.totalorder %v1190, %v1209
        %vm1219 = vcmp.eq.s32.totalorder %v1191, %v1209
        %vm1220 = vcmp.eq.s32.totalorder %v1192, %v1209
        %vm1221 = vcmp.eq.s32.totalorder %v1193, %v1209
        %vm1222 = vcmp.eq.s32.totalorder %v1194, %v1209
        %vm1223 = vcmp.eq.s32.totalorder %v1195, %v1209
        %vm1224 = vcmp.eq.s32.totalorder %v1196, %v1209
        %vm1225 = vcmp.eq.s32.totalorder %v1197, %v1209
        %vm1226 = vcmask 261120
        %v1228 = vsel %vm1226, %v971, 0
        %v1231 = vsel %vm1226, %v972, 0
        %v1234 = vsel %vm1226, %v973, 0
        %v1237 = vsel %vm1226, %v974, 0
        %v1240 = vsel %vm1226, %v975, 0
        %v1243 = vsel %vm1226, %v976, 0
        %v1246 = vsel %vm1226, %v977, 0
        %v1249 = vsel %vm1226, %v978, 0
        %v1252 = vsel %vm1226, %v979, 0
        %v1255 = vsel %vm1226, %v980, 0
        %v1258 = vsel %vm1226, %v981, 0
        %v1261 = vsel %vm1226, %v982, 0
        %v1264 = vsel %vm1226, %v983, 0
        %v1267 = vsel %vm1226, %v984, 0
        %v1270 = vsel %vm1226, %v985, 0
        %v1273 = vsel %vm1226, %v986, 0
        %v1276 = vsel %vm1226, %v798, 0
        %v1279 = vsel %vm1226, %v802, 0
        %v1282 = vsel %vm1226, %v808, 0
        %v1285 = vsel %vm1226, %v812, 0
        %v1288 = vsel %vm1226, %v818, 0
        %v1291 = vsel %vm1226, %v822, 0
        %v1294 = vsel %vm1226, %v828, 0
        %v1297 = vsel %vm1226, %v832, 0
        %v1300 = vsel %vm1226, %v838, 0
        %v1303 = vsel %vm1226, %v842, 0
        %v1306 = vsel %vm1226, %v848, 0
        %v1309 = vsel %vm1226, %v852, 0
        %v1312 = vsel %vm1226, %v858, 0
        %v1315 = vsel %vm1226, %v862, 0
        %v1318 = vsel %vm1226, %v868, 0
        %v1321 = vsel %vm1226, %v872, 0
        %1323 = vmatprep.subr.mxu0 0.0
        %1324 = vmatpush1.xpose.msra.mxu0 %v1321
        %1325 = vmatprep.subr.mxu0 0.0
        %1326 = vmatpush1.xpose.msra.mxu0 %v1318
        %1327 = vmatprep.subr.mxu0 0.0
        %1328 = vmatpush1.xpose.msra.mxu0 %v1315
        %1329 = vmatprep.subr.mxu0 0.0
        %1330 = vmatpush1.xpose.msra.mxu0 %v1312
        %1331 = vmatprep.subr.mxu0 0.0
        %1332 = vmatpush1.xpose.msra.mxu0 %v1309
        %1333 = vmatprep.subr.mxu0 0.0
        %1334 = vmatpush1.xpose.msra.mxu0 %v1306
        %1335 = vmatprep.subr.mxu0 0.0
        %1336 = vmatpush1.xpose.msra.mxu0 %v1303
        %1337 = vmatprep.subr.mxu0 0.0
        %1338 = vmatpush1.xpose.msra.mxu0 %v1300
        %1339 = vmatprep.subr.mxu0 0.0
        %1340 = vmatpush1.xpose.msra.mxu0 %v1297
        %1341 = vmatprep.subr.mxu0 0.0
        %1342 = vmatpush1.xpose.msra.mxu0 %v1294
        %1343 = vmatprep.subr.mxu0 0.0
        %1344 = vmatpush1.xpose.msra.mxu0 %v1291
        %1345 = vmatprep.subr.mxu0 0.0
        %1346 = vmatpush1.xpose.msra.mxu0 %v1288
        %1347 = vmatprep.subr.mxu0 0.0
        %1348 = vmatpush1.xpose.msra.mxu0 %v1285
        %1349 = vmatprep.subr.mxu0 0.0
        %1350 = vmatpush1.xpose.msra.mxu0 %v1282
        %1351 = vmatprep.subr.mxu0 0.0
        %1352 = vmatpush1.xpose.msra.mxu0 %v1279
        %1353 = vmatprep.subr.mxu0 0.0
        %1354 = vmatpush1.xpose.msra.mxu0 %v1276
        %1355 = vmatprep.subr.mxu0 0.0
        %1356 = vmatpush2.xpose.msra.mxu0 0.0
        %1357 = vmatprep.subr.mxu0 0.0
        %1358 = vmatpush2.xpose.msra.mxu0 0.0
        %1359 = vmatprep.subr.mxu0 0.0
        %1360 = vmatpush2.xpose.msra.mxu0 0.0
        %1361 = vmatprep.subr.mxu0 0.0
        %1362 = vmatpush2.xpose.msra.mxu0 0.0
        %1363 = vmatprep.subr.mxu0 0.0
        %1364 = vmatpush2.xpose.msra.mxu0 0.0
        %1365 = vmatprep.subr.mxu0 0.0
        %1366 = vmatpush2.xpose.msra.mxu0 0.0
        %1367 = vmatprep.subr.mxu0 0.0
        %1368 = vmatpush2.xpose.msra.mxu0 0.0
        %1369 = vmatprep.subr.mxu0 0.0
        %1370 = vmatpush2.xpose.msra.mxu0 0.0
        %1371 = vmatprep.subr.mxu0 0.0
        %1372 = vmatpush2.xpose.msra.mxu0 0.0
        %1373 = vmatprep.subr.mxu0 0.0
        %1374 = vmatpush2.xpose.msra.mxu0 0.0
        %1375 = vmatprep.subr.mxu0 0.0
        %1376 = vmatpush2.xpose.msra.mxu0 0.0
        %1377 = vmatprep.subr.mxu0 0.0
        %1378 = vmatpush2.xpose.msra.mxu0 0.0
        %1379 = vmatprep.subr.mxu0 0.0
        %1380 = vmatpush2.xpose.msra.mxu0 0.0
        %1381 = vmatprep.subr.mxu0 0.0
        %1382 = vmatpush2.xpose.msra.mxu0 0.0
        %1383 = vmatprep.subr.mxu0 0.0
        %1384 = vmatpush2.xpose.msra.mxu0 0.0
        %1385 = vmatprep.subr.mxu0 0.0
        %1386 = vmatpush2.xpose.msra.mxu0 0.0
        %1387 = vmatprep.mubr.f32.mxu0 0.0
        %1388 = vmatmul.mubr.f32.gmra.mxu0 %v1228
        %v1389 = vpop.f32.mrf.mxu0
        %v1390 = vadd.f32 0.0, %v1389
        %v1391 = vpop.f32.mrf.mxu0
        %1392 = vmatprep.mubr.f32.mxu0 0.0
        %1393 = vmatmul.mubr.f32.gmra.mxu0 %v1231
        %v1394 = vpop.f32.mrf.mxu0
        %v1395 = vadd.f32 0.0, %v1394
        %v1396 = vpop.f32.mrf.mxu0
        %1397 = vmatprep.mubr.f32.mxu0 0.0
        %1398 = vmatmul.mubr.f32.gmra.mxu0 %v1234
        %v1399 = vpop.f32.mrf.mxu0
        %v1400 = vadd.f32 0.0, %v1399
        %v1401 = vpop.f32.mrf.mxu0
        %1402 = vmatprep.mubr.f32.mxu0 0.0
        %1403 = vmatmul.mubr.f32.gmra.mxu0 %v1237
        %v1404 = vpop.f32.mrf.mxu0
        %v1405 = vadd.f32 0.0, %v1404
        %v1406 = vpop.f32.mrf.mxu0
        %1407 = vmatprep.mubr.f32.mxu0 0.0
        %1408 = vmatmul.mubr.f32.gmra.mxu0 %v1240
        %v1409 = vpop.f32.mrf.mxu0
        %v1410 = vadd.f32 0.0, %v1409
        %v1411 = vpop.f32.mrf.mxu0
        %1412 = vmatprep.mubr.f32.mxu0 0.0
        %1413 = vmatmul.mubr.f32.gmra.mxu0 %v1243
        %v1414 = vpop.f32.mrf.mxu0
        %v1415 = vadd.f32 0.0, %v1414
        %v1416 = vpop.f32.mrf.mxu0
        %1417 = vmatprep.mubr.f32.mxu0 0.0
        %1418 = vmatmul.mubr.f32.gmra.mxu0 %v1246
        %v1419 = vpop.f32.mrf.mxu0
        %v1420 = vadd.f32 0.0, %v1419
        %v1421 = vpop.f32.mrf.mxu0
        %1422 = vmatprep.mubr.f32.mxu0 0.0
        %1423 = vmatmul.mubr.f32.gmra.mxu0 %v1249
        %v1424 = vpop.f32.mrf.mxu0
        %v1425 = vadd.f32 0.0, %v1424
        %v1426 = vpop.f32.mrf.mxu0
        %1427 = vmatprep.mubr.f32.mxu0 0.0
        %1428 = vmatmul.mubr.f32.gmra.mxu0 %v1252
        %v1429 = vpop.f32.mrf.mxu0
        %v1430 = vadd.f32 0.0, %v1429
        %v1431 = vpop.f32.mrf.mxu0
        %1432 = vmatprep.mubr.f32.mxu0 0.0
        %1433 = vmatmul.mubr.f32.gmra.mxu0 %v1255
        %v1434 = vpop.f32.mrf.mxu0
        %v1435 = vadd.f32 0.0, %v1434
        %v1436 = vpop.f32.mrf.mxu0
        %1437 = vmatprep.mubr.f32.mxu0 0.0
        %1438 = vmatmul.mubr.f32.gmra.mxu0 %v1258
        %v1439 = vpop.f32.mrf.mxu0
        %v1440 = vadd.f32 0.0, %v1439
        %v1441 = vpop.f32.mrf.mxu0
        %1442 = vmatprep.mubr.f32.mxu0 0.0
        %1443 = vmatmul.mubr.f32.gmra.mxu0 %v1261
        %v1444 = vpop.f32.mrf.mxu0
        %v1445 = vadd.f32 0.0, %v1444
        %v1446 = vpop.f32.mrf.mxu0
        %1447 = vmatprep.mubr.f32.mxu0 0.0
        %1448 = vmatmul.mubr.f32.gmra.mxu0 %v1264
        %v1449 = vpop.f32.mrf.mxu0
        %v1450 = vadd.f32 0.0, %v1449
        %v1451 = vpop.f32.mrf.mxu0
        %1452 = vmatprep.mubr.f32.mxu0 0.0
        %1453 = vmatmul.mubr.f32.gmra.mxu0 %v1267
        %v1454 = vpop.f32.mrf.mxu0
        %v1455 = vadd.f32 0.0, %v1454
        %v1456 = vpop.f32.mrf.mxu0
        %1457 = vmatprep.mubr.f32.mxu0 0.0
        %1458 = vmatmul.mubr.f32.gmra.mxu0 %v1270
        %v1459 = vpop.f32.mrf.mxu0
        %v1460 = vadd.f32 0.0, %v1459
        %v1461 = vpop.f32.mrf.mxu0
        %1462 = vmatprep.mubr.f32.mxu0 0.0
        %1463 = vmatmul.mubr.f32.gmra.mxu0 %v1273
        %v1464 = vpop.f32.mrf.mxu0
        %v1465 = vadd.f32 0.0, %v1464
        %v1466 = vpop.f32.mrf.mxu0
        %1467 = vdwg.mxu0
        %v1468 = vsel %vm1210, %v1390, -1e+30
        %v1469 = vsel %vm1211, %v1395, -1e+30
        %v1470 = vsel %vm1212, %v1400, -1e+30
        %v1471 = vsel %vm1213, %v1405, -1e+30
        %v1472 = vsel %vm1214, %v1410, -1e+30
        %v1473 = vsel %vm1215, %v1415, -1e+30
        %v1474 = vsel %vm1216, %v1420, -1e+30
        %v1475 = vsel %vm1217, %v1425, -1e+30
        %v1476 = vsel %vm1218, %v1430, -1e+30
        %v1477 = vsel %vm1219, %v1435, -1e+30
        %v1478 = vsel %vm1220, %v1440, -1e+30
        %v1479 = vsel %vm1221, %v1445, -1e+30
        %v1480 = vsel %vm1222, %v1450, -1e+30
        %v1481 = vsel %vm1223, %v1455, -1e+30
        %v1482 = vsel %vm1224, %v1460, -1e+30
        %v1483 = vsel %vm1225, %v1465, -1e+30
        %1484 = vmax.xlane.f32.xlu0 %v1468
        %v1485 = vpop.xlane.xlu0 %1484
        %1486 = vmax.xlane.f32.xlu0 %v1469
        %v1487 = vpop.xlane.xlu0 %1486
        %1488 = vmax.xlane.f32.xlu0 %v1470
        %v1489 = vpop.xlane.xlu0 %1488
        %1490 = vmax.xlane.f32.xlu0 %v1471
        %v1491 = vpop.xlane.xlu0 %1490
        %1492 = vmax.xlane.f32.xlu0 %v1472
        %v1493 = vpop.xlane.xlu0 %1492
        %1494 = vmax.xlane.f32.xlu0 %v1473
        %v1495 = vpop.xlane.xlu0 %1494
        %1496 = vmax.xlane.f32.xlu0 %v1474
        %v1497 = vpop.xlane.xlu0 %1496
        %1498 = vmax.xlane.f32.xlu0 %v1475
        %v1499 = vpop.xlane.xlu0 %1498
        %1500 = vmax.xlane.f32.xlu0 %v1476
        %v1501 = vpop.xlane.xlu0 %1500
        %1502 = vmax.xlane.f32.xlu0 %v1477
        %v1503 = vpop.xlane.xlu0 %1502
        %1504 = vmax.xlane.f32.xlu0 %v1478
        %v1505 = vpop.xlane.xlu0 %1504
        %1506 = vmax.xlane.f32.xlu0 %v1479
        %v1507 = vpop.xlane.xlu0 %1506
        %1508 = vmax.xlane.f32.xlu0 %v1480
        %v1509 = vpop.xlane.xlu0 %1508
        %1510 = vmax.xlane.f32.xlu0 %v1481
        %v1511 = vpop.xlane.xlu0 %1510
        %1512 = vmax.xlane.f32.xlu0 %v1482
        %v1513 = vpop.xlane.xlu0 %1512
        %1514 = vmax.xlane.f32.xlu0 %v1483
        %v1515 = vpop.xlane.xlu0 %1514
        %v1516 = vsub.f32 %v1468, %v1485
        %v1517 = vsub.f32 %v1469, %v1487
        %v1518 = vsub.f32 %v1470, %v1489
        %v1519 = vsub.f32 %v1471, %v1491
        %v1520 = vsub.f32 %v1472, %v1493
        %v1521 = vsub.f32 %v1473, %v1495
        %v1522 = vsub.f32 %v1474, %v1497
        %v1523 = vsub.f32 %v1475, %v1499
        %v1524 = vsub.f32 %v1476, %v1501
        %v1525 = vsub.f32 %v1477, %v1503
        %v1526 = vsub.f32 %v1478, %v1505
        %v1527 = vsub.f32 %v1479, %v1507
        %v1528 = vsub.f32 %v1480, %v1509
        %v1529 = vsub.f32 %v1481, %v1511
        %v1530 = vsub.f32 %v1482, %v1513
        %v1531 = vsub.f32 %v1483, %v1515
        %v1532 = vmul.f32 %v1516, 1.442695
        %v1533 = vpow.pop %v1532
        %v1534 = vmul.f32 %v1517, 1.442695
        %v1535 = vpow.pop %v1534
        %v1536 = vmul.f32 %v1518, 1.442695
        %v1537 = vpow.pop %v1536
        %v1538 = vmul.f32 %v1519, 1.442695
        %v1539 = vpow.pop %v1538
        %v1540 = vmul.f32 %v1520, 1.442695
        %v1541 = vpow.pop %v1540
        %v1542 = vmul.f32 %v1521, 1.442695
        %v1543 = vpow.pop %v1542
        %v1544 = vmul.f32 %v1522, 1.442695
        %v1545 = vpow.pop %v1544
        %v1546 = vmul.f32 %v1523, 1.442695
        %v1547 = vpow.pop %v1546
        %v1548 = vmul.f32 %v1524, 1.442695
        %v1549 = vpow.pop %v1548
        %v1550 = vmul.f32 %v1525, 1.442695
        %v1551 = vpow.pop %v1550
        %v1552 = vmul.f32 %v1526, 1.442695
        %v1553 = vpow.pop %v1552
        %v1554 = vmul.f32 %v1527, 1.442695
        %v1555 = vpow.pop %v1554
        %v1556 = vmul.f32 %v1528, 1.442695
        %v1557 = vpow.pop %v1556
        %v1558 = vmul.f32 %v1529, 1.442695
        %v1559 = vpow.pop %v1558
        %v1560 = vmul.f32 %v1530, 1.442695
        %v1561 = vpow.pop %v1560
        %v1562 = vmul.f32 %v1531, 1.442695
        %v1563 = vpow.pop %v1562
        %1564 = vadd.xlane.f32.xlu0 %v1533
        %v1565 = vpop.xlane.xlu0 %1564
        %1566 = vadd.xlane.f32.xlu0 %v1535
        %v1567 = vpop.xlane.xlu0 %1566
        %1568 = vadd.xlane.f32.xlu0 %v1537
        %v1569 = vpop.xlane.xlu0 %1568
        %1570 = vadd.xlane.f32.xlu0 %v1539
        %v1571 = vpop.xlane.xlu0 %1570
        %1572 = vadd.xlane.f32.xlu0 %v1541
        %v1573 = vpop.xlane.xlu0 %1572
        %1574 = vadd.xlane.f32.xlu0 %v1543
        %v1575 = vpop.xlane.xlu0 %1574
        %1576 = vadd.xlane.f32.xlu0 %v1545
        %v1577 = vpop.xlane.xlu0 %1576
        %1578 = vadd.xlane.f32.xlu0 %v1547
        %v1579 = vpop.xlane.xlu0 %1578
        %1580 = vadd.xlane.f32.xlu0 %v1549
        %v1581 = vpop.xlane.xlu0 %1580
        %1582 = vadd.xlane.f32.xlu0 %v1551
        %v1583 = vpop.xlane.xlu0 %1582
        %1584 = vadd.xlane.f32.xlu0 %v1553
        %v1585 = vpop.xlane.xlu0 %1584
        %1586 = vadd.xlane.f32.xlu0 %v1555
        %v1587 = vpop.xlane.xlu0 %1586
        %1588 = vadd.xlane.f32.xlu0 %v1557
        %v1589 = vpop.xlane.xlu0 %1588
        %1590 = vadd.xlane.f32.xlu0 %v1559
        %v1591 = vpop.xlane.xlu0 %1590
        %1592 = vadd.xlane.f32.xlu0 %v1561
        %v1593 = vpop.xlane.xlu0 %1592
        %1594 = vadd.xlane.f32.xlu0 %v1563
        %v1595 = vpop.xlane.xlu0 %1594
        %v1596 = vrcp.pop %v1565
        %v1597 = vmul.f32 %v1533, %v1596
        %v1598 = vrcp.pop %v1567
        %v1599 = vmul.f32 %v1535, %v1598
        %v1600 = vrcp.pop %v1569
        %v1601 = vmul.f32 %v1537, %v1600
        %v1602 = vrcp.pop %v1571
        %v1603 = vmul.f32 %v1539, %v1602
        %v1604 = vrcp.pop %v1573
        %v1605 = vmul.f32 %v1541, %v1604
        %v1606 = vrcp.pop %v1575
        %v1607 = vmul.f32 %v1543, %v1606
        %v1608 = vrcp.pop %v1577
        %v1609 = vmul.f32 %v1545, %v1608
        %v1610 = vrcp.pop %v1579
        %v1611 = vmul.f32 %v1547, %v1610
        %v1612 = vrcp.pop %v1581
        %v1613 = vmul.f32 %v1549, %v1612
        %v1614 = vrcp.pop %v1583
        %v1615 = vmul.f32 %v1551, %v1614
        %v1616 = vrcp.pop %v1585
        %v1617 = vmul.f32 %v1553, %v1616
        %v1618 = vrcp.pop %v1587
        %v1619 = vmul.f32 %v1555, %v1618
        %v1620 = vrcp.pop %v1589
        %v1621 = vmul.f32 %v1557, %v1620
        %v1622 = vrcp.pop %v1591
        %v1623 = vmul.f32 %v1559, %v1622
        %v1624 = vrcp.pop %v1593
        %v1625 = vmul.f32 %v1561, %v1624
        %v1626 = vrcp.pop %v1595
        %v1627 = vmul.f32 %v1563, %v1626
        %1628 = vmatprep.subr.mxu0 0.0
        %1629 = vmatpush1.msra.mxu0 %v968
        %1630 = vmatprep.subr.mxu0 0.0
        %1631 = vmatpush1.msra.mxu0 %v965
        %1632 = vmatprep.subr.mxu0 0.0
        %1633 = vmatpush1.msra.mxu0 %v960
        %1634 = vmatprep.subr.mxu0 0.0
        %1635 = vmatpush1.msra.mxu0 %v957
        %1636 = vmatprep.subr.mxu0 0.0
        %1637 = vmatpush1.msra.mxu0 %v952
        %1638 = vmatprep.subr.mxu0 0.0
        %1639 = vmatpush1.msra.mxu0 %v949
        %1640 = vmatprep.subr.mxu0 0.0
        %1641 = vmatpush1.msra.mxu0 %v944
        %1642 = vmatprep.subr.mxu0 0.0
        %1643 = vmatpush1.msra.mxu0 %v941
        %1644 = vmatprep.subr.mxu0 0.0
        %1645 = vmatpush1.msra.mxu0 %v936
        %1646 = vmatprep.subr.mxu0 0.0
        %1647 = vmatpush1.msra.mxu0 %v933
        %1648 = vmatprep.subr.mxu0 0.0
        %1649 = vmatpush1.msra.mxu0 %v928
        %1650 = vmatprep.subr.mxu0 0.0
        %1651 = vmatpush1.msra.mxu0 %v925
        %1652 = vmatprep.subr.mxu0 0.0
        %1653 = vmatpush1.msra.mxu0 %v920
        %1654 = vmatprep.subr.mxu0 0.0
        %1655 = vmatpush1.msra.mxu0 %v917
        %1656 = vmatprep.subr.mxu0 0.0
        %1657 = vmatpush1.msra.mxu0 %v912
        %1658 = vmatprep.subr.mxu0 0.0
        %1659 = vmatpush1.msra.mxu0 %v909
        %1660 = vmatprep.subr.mxu0 0.0
        %1661 = vmatpush2.msra.mxu0 0.0
        %1662 = vmatprep.subr.mxu0 0.0
        %1663 = vmatpush2.msra.mxu0 0.0
        %1664 = vmatprep.subr.mxu0 0.0
        %1665 = vmatpush2.msra.mxu0 0.0
        %1666 = vmatprep.subr.mxu0 0.0
        %1667 = vmatpush2.msra.mxu0 0.0
        %1668 = vmatprep.subr.mxu0 0.0
        %1669 = vmatpush2.msra.mxu0 0.0
        %1670 = vmatprep.subr.mxu0 0.0
        %1671 = vmatpush2.msra.mxu0 0.0
        %1672 = vmatprep.subr.mxu0 0.0
        %1673 = vmatpush2.msra.mxu0 0.0
        %1674 = vmatprep.subr.mxu0 0.0
        %1675 = vmatpush2.msra.mxu0 0.0
        %1676 = vmatprep.subr.mxu0 0.0
        %1677 = vmatpush2.msra.mxu0 0.0
        %1678 = vmatprep.subr.mxu0 0.0
        %1679 = vmatpush2.msra.mxu0 0.0
        %1680 = vmatprep.subr.mxu0 0.0
        %1681 = vmatpush2.msra.mxu0 0.0
        %1682 = vmatprep.subr.mxu0 0.0
        %1683 = vmatpush2.msra.mxu0 0.0
        %1684 = vmatprep.subr.mxu0 0.0
        %1685 = vmatpush2.msra.mxu0 0.0
        %1686 = vmatprep.subr.mxu0 0.0
        %1687 = vmatpush2.msra.mxu0 0.0
        %1688 = vmatprep.subr.mxu0 0.0
        %1689 = vmatpush2.msra.mxu0 0.0
        %1690 = vmatprep.subr.mxu0 0.0
        %1691 = vmatpush2.msra.mxu0 0.0
        %1692 = vmatprep.mubr.f32.mxu0 0.0
        %1693 = vmatmul.mubr.f32.gmra.mxu0 %v1597
        %v1694 = vpop.f32.mrf.mxu0
        %v1695 = vadd.f32 0.0, %v1694
        %v1696 = vpop.f32.mrf.mxu0
        %1697 = vmatprep.mubr.f32.mxu0 0.0
        %1698 = vmatmul.mubr.f32.gmra.mxu0 %v1599
        %v1699 = vpop.f32.mrf.mxu0
        %v1700 = vadd.f32 0.0, %v1699
        %v1701 = vpop.f32.mrf.mxu0
        %1702 = vmatprep.mubr.f32.mxu0 0.0
        %1703 = vmatmul.mubr.f32.gmra.mxu0 %v1601
        %v1704 = vpop.f32.mrf.mxu0
        %v1705 = vadd.f32 0.0, %v1704
        %v1706 = vpop.f32.mrf.mxu0
        %1707 = vmatprep.mubr.f32.mxu0 0.0
        %1708 = vmatmul.mubr.f32.gmra.mxu0 %v1603
        %v1709 = vpop.f32.mrf.mxu0
        %v1710 = vadd.f32 0.0, %v1709
        %v1711 = vpop.f32.mrf.mxu0
        %1712 = vmatprep.mubr.f32.mxu0 0.0
        %1713 = vmatmul.mubr.f32.gmra.mxu0 %v1605
        %v1714 = vpop.f32.mrf.mxu0
        %v1715 = vadd.f32 0.0, %v1714
        %v1716 = vpop.f32.mrf.mxu0
        %1717 = vmatprep.mubr.f32.mxu0 0.0
        %1718 = vmatmul.mubr.f32.gmra.mxu0 %v1607
        %v1719 = vpop.f32.mrf.mxu0
        %v1720 = vadd.f32 0.0, %v1719
        %v1721 = vpop.f32.mrf.mxu0
        %1722 = vmatprep.mubr.f32.mxu0 0.0
        %1723 = vmatmul.mubr.f32.gmra.mxu0 %v1609
        %v1724 = vpop.f32.mrf.mxu0
        %v1725 = vadd.f32 0.0, %v1724
        %v1726 = vpop.f32.mrf.mxu0
        %1727 = vmatprep.mubr.f32.mxu0 0.0
        %1728 = vmatmul.mubr.f32.gmra.mxu0 %v1611
        %v1729 = vpop.f32.mrf.mxu0
        %v1730 = vadd.f32 0.0, %v1729
        %v1731 = vpop.f32.mrf.mxu0
        %1732 = vmatprep.mubr.f32.mxu0 0.0
        %1733 = vmatmul.mubr.f32.gmra.mxu0 %v1613
        %v1734 = vpop.f32.mrf.mxu0
        %v1735 = vadd.f32 0.0, %v1734
        %v1736 = vpop.f32.mrf.mxu0
        %1737 = vmatprep.mubr.f32.mxu0 0.0
        %1738 = vmatmul.mubr.f32.gmra.mxu0 %v1615
        %v1739 = vpop.f32.mrf.mxu0
        %v1740 = vadd.f32 0.0, %v1739
        %v1741 = vpop.f32.mrf.mxu0
        %1742 = vmatprep.mubr.f32.mxu0 0.0
        %1743 = vmatmul.mubr.f32.gmra.mxu0 %v1617
        %v1744 = vpop.f32.mrf.mxu0
        %v1745 = vadd.f32 0.0, %v1744
        %v1746 = vpop.f32.mrf.mxu0
        %1747 = vmatprep.mubr.f32.mxu0 0.0
        %1748 = vmatmul.mubr.f32.gmra.mxu0 %v1619
        %v1749 = vpop.f32.mrf.mxu0
        %v1750 = vadd.f32 0.0, %v1749
        %v1751 = vpop.f32.mrf.mxu0
        %1752 = vmatprep.mubr.f32.mxu0 0.0
        %1753 = vmatmul.mubr.f32.gmra.mxu0 %v1621
        %v1754 = vpop.f32.mrf.mxu0
        %v1755 = vadd.f32 0.0, %v1754
        %v1756 = vpop.f32.mrf.mxu0
        %1757 = vmatprep.mubr.f32.mxu0 0.0
        %1758 = vmatmul.mubr.f32.gmra.mxu0 %v1623
        %v1759 = vpop.f32.mrf.mxu0
        %v1760 = vadd.f32 0.0, %v1759
        %v1761 = vpop.f32.mrf.mxu0
        %1762 = vmatprep.mubr.f32.mxu0 0.0
        %1763 = vmatmul.mubr.f32.gmra.mxu0 %v1625
        %v1764 = vpop.f32.mrf.mxu0
        %v1765 = vadd.f32 0.0, %v1764
        %v1766 = vpop.f32.mrf.mxu0
        %1767 = vmatprep.mubr.f32.mxu0 0.0
        %1768 = vmatmul.mubr.f32.gmra.mxu0 %v1627
        %v1769 = vpop.f32.mrf.mxu0
        %v1770 = vadd.f32 0.0, %v1769
        %v1771 = vpop.f32.mrf.mxu0
        %1772 = vdwg.mxu0
        %1773 = vrot.lane.b32.xlu0 %v971, 96
        %v1774 = vpop.permute.xlu0 %1773
        %1775 = vrot.lane.b32.xlu0 %v972, 96
        %v1776 = vpop.permute.xlu0 %1775
        %1777 = vrot.lane.b32.xlu0 %v973, 96
        %v1778 = vpop.permute.xlu0 %1777
        %1779 = vrot.lane.b32.xlu0 %v974, 96
        %v1780 = vpop.permute.xlu0 %1779
        %1781 = vrot.lane.b32.xlu0 %v975, 96
        %v1782 = vpop.permute.xlu0 %1781
        %1783 = vrot.lane.b32.xlu0 %v976, 96
        %v1784 = vpop.permute.xlu0 %1783
        %1785 = vrot.lane.b32.xlu0 %v977, 96
        %v1786 = vpop.permute.xlu0 %1785
        %1787 = vrot.lane.b32.xlu0 %v978, 96
        %v1788 = vpop.permute.xlu0 %1787
        %1789 = vrot.lane.b32.xlu0 %v979, 96
        %v1790 = vpop.permute.xlu0 %1789
        %1791 = vrot.lane.b32.xlu0 %v980, 96
        %v1792 = vpop.permute.xlu0 %1791
        %1793 = vrot.lane.b32.xlu0 %v981, 96
        %v1794 = vpop.permute.xlu0 %1793
        %1795 = vrot.lane.b32.xlu0 %v982, 96
        %v1796 = vpop.permute.xlu0 %1795
        %1797 = vrot.lane.b32.xlu0 %v983, 96
        %v1798 = vpop.permute.xlu0 %1797
        %1799 = vrot.lane.b32.xlu0 %v984, 96
        %v1800 = vpop.permute.xlu0 %1799
        %1801 = vrot.lane.b32.xlu0 %v985, 96
        %v1802 = vpop.permute.xlu0 %1801
        %1803 = vrot.lane.b32.xlu0 %v986, 96
        %v1804 = vpop.permute.xlu0 %1803
        %1805 = vrot.lane.b32.xlu0 %v798, 96
        %v1806 = vpop.permute.xlu0 %1805
        %1807 = vrot.lane.b32.xlu0 %v802, 96
        %v1808 = vpop.permute.xlu0 %1807
        %1809 = vrot.lane.b32.xlu0 %v808, 96
        %v1810 = vpop.permute.xlu0 %1809
        %1811 = vrot.lane.b32.xlu0 %v812, 96
        %v1812 = vpop.permute.xlu0 %1811
        %1813 = vrot.lane.b32.xlu0 %v818, 96
        %v1814 = vpop.permute.xlu0 %1813
        %1815 = vrot.lane.b32.xlu0 %v822, 96
        %v1816 = vpop.permute.xlu0 %1815
        %1817 = vrot.lane.b32.xlu0 %v828, 96
        %v1818 = vpop.permute.xlu0 %1817
        %1819 = vrot.lane.b32.xlu0 %v832, 96
        %v1820 = vpop.permute.xlu0 %1819
        %1821 = vrot.lane.b32.xlu0 %v838, 96
        %v1822 = vpop.permute.xlu0 %1821
        %1823 = vrot.lane.b32.xlu0 %v842, 96
        %v1824 = vpop.permute.xlu0 %1823
        %1825 = vrot.lane.b32.xlu0 %v848, 96
        %v1826 = vpop.permute.xlu0 %1825
        %1827 = vrot.lane.b32.xlu0 %v852, 96
        %v1828 = vpop.permute.xlu0 %1827
        %1829 = vrot.lane.b32.xlu0 %v858, 96
        %v1830 = vpop.permute.xlu0 %1829
        %1831 = vrot.lane.b32.xlu0 %v862, 96
        %v1832 = vpop.permute.xlu0 %1831
        %1833 = vrot.lane.b32.xlu0 %v868, 96
        %v1834 = vpop.permute.xlu0 %1833
        %1835 = vrot.lane.b32.xlu0 %v872, 96
        %v1836 = vpop.permute.xlu0 %1835
        %v1837 = vsel %vm1226, %v1774, 0
        %v1839 = vsel %vm1226, %v1776, 0
        %v1841 = vsel %vm1226, %v1778, 0
        %v1843 = vsel %vm1226, %v1780, 0
        %v1845 = vsel %vm1226, %v1782, 0
        %v1847 = vsel %vm1226, %v1784, 0
        %v1849 = vsel %vm1226, %v1786, 0
        %v1851 = vsel %vm1226, %v1788, 0
        %v1853 = vsel %vm1226, %v1790, 0
        %v1855 = vsel %vm1226, %v1792, 0
        %v1857 = vsel %vm1226, %v1794, 0
        %v1859 = vsel %vm1226, %v1796, 0
        %v1861 = vsel %vm1226, %v1798, 0
        %v1863 = vsel %vm1226, %v1800, 0
        %v1865 = vsel %vm1226, %v1802, 0
        %v1867 = vsel %vm1226, %v1804, 0
        %v1869 = vsel %vm1226, %v1806, 0
        %v1871 = vsel %vm1226, %v1808, 0
        %v1873 = vsel %vm1226, %v1810, 0
        %v1875 = vsel %vm1226, %v1812, 0
        %v1877 = vsel %vm1226, %v1814, 0
        %v1879 = vsel %vm1226, %v1816, 0
        %v1881 = vsel %vm1226, %v1818, 0
        %v1883 = vsel %vm1226, %v1820, 0
        %v1885 = vsel %vm1226, %v1822, 0
        %v1887 = vsel %vm1226, %v1824, 0
        %v1889 = vsel %vm1226, %v1826, 0
        %v1891 = vsel %vm1226, %v1828, 0
        %v1893 = vsel %vm1226, %v1830, 0
        %v1895 = vsel %vm1226, %v1832, 0
        %v1897 = vsel %vm1226, %v1834, 0
        %v1899 = vsel %vm1226, %v1836, 0
        %1901 = vmatprep.subr.mxu0 0.0
        %1902 = vmatpush1.xpose.msra.mxu0 %v1899
        %1903 = vmatprep.subr.mxu0 0.0
        %1904 = vmatpush1.xpose.msra.mxu0 %v1897
        %1905 = vmatprep.subr.mxu0 0.0
        %1906 = vmatpush1.xpose.msra.mxu0 %v1895
        %1907 = vmatprep.subr.mxu0 0.0
        %1908 = vmatpush1.xpose.msra.mxu0 %v1893
        %1909 = vmatprep.subr.mxu0 0.0
        %1910 = vmatpush1.xpose.msra.mxu0 %v1891
        %1911 = vmatprep.subr.mxu0 0.0
        %1912 = vmatpush1.xpose.msra.mxu0 %v1889
        %1913 = vmatprep.subr.mxu0 0.0
        %1914 = vmatpush1.xpose.msra.mxu0 %v1887
        %1915 = vmatprep.subr.mxu0 0.0
        %1916 = vmatpush1.xpose.msra.mxu0 %v1885
        %1917 = vmatprep.subr.mxu0 0.0
        %1918 = vmatpush1.xpose.msra.mxu0 %v1883
        %1919 = vmatprep.subr.mxu0 0.0
        %1920 = vmatpush1.xpose.msra.mxu0 %v1881
        %1921 = vmatprep.subr.mxu0 0.0
        %1922 = vmatpush1.xpose.msra.mxu0 %v1879
        %1923 = vmatprep.subr.mxu0 0.0
        %1924 = vmatpush1.xpose.msra.mxu0 %v1877
        %1925 = vmatprep.subr.mxu0 0.0
        %1926 = vmatpush1.xpose.msra.mxu0 %v1875
        %1927 = vmatprep.subr.mxu0 0.0
        %1928 = vmatpush1.xpose.msra.mxu0 %v1873
        %1929 = vmatprep.subr.mxu0 0.0
        %1930 = vmatpush1.xpose.msra.mxu0 %v1871
        %1931 = vmatprep.subr.mxu0 0.0
        %1932 = vmatpush1.xpose.msra.mxu0 %v1869
        %1933 = vmatprep.subr.mxu0 0.0
        %1934 = vmatpush2.xpose.msra.mxu0 0.0
        %1935 = vmatprep.subr.mxu0 0.0
        %1936 = vmatpush2.xpose.msra.mxu0 0.0
        %1937 = vmatprep.subr.mxu0 0.0
        %1938 = vmatpush2.xpose.msra.mxu0 0.0
        %1939 = vmatprep.subr.mxu0 0.0
        %1940 = vmatpush2.xpose.msra.mxu0 0.0
        %1941 = vmatprep.subr.mxu0 0.0
        %1942 = vmatpush2.xpose.msra.mxu0 0.0
        %1943 = vmatprep.subr.mxu0 0.0
        %1944 = vmatpush2.xpose.msra.mxu0 0.0
        %1945 = vmatprep.subr.mxu0 0.0
        %1946 = vmatpush2.xpose.msra.mxu0 0.0
        %1947 = vmatprep.subr.mxu0 0.0
        %1948 = vmatpush2.xpose.msra.mxu0 0.0
        %1949 = vmatprep.subr.mxu0 0.0
        %1950 = vmatpush2.xpose.msra.mxu0 0.0
        %1951 = vmatprep.subr.mxu0 0.0
        %1952 = vmatpush2.xpose.msra.mxu0 0.0
        %1953 = vmatprep.subr.mxu0 0.0
        %1954 = vmatpush2.xpose.msra.mxu0 0.0
        %1955 = vmatprep.subr.mxu0 0.0
        %1956 = vmatpush2.xpose.msra.mxu0 0.0
        %1957 = vmatprep.subr.mxu0 0.0
        %1958 = vmatpush2.xpose.msra.mxu0 0.0
        %1959 = vmatprep.subr.mxu0 0.0
        %1960 = vmatpush2.xpose.msra.mxu0 0.0
        %1961 = vmatprep.subr.mxu0 0.0
        %1962 = vmatpush2.xpose.msra.mxu0 0.0
        %1963 = vmatprep.subr.mxu0 0.0
        %1964 = vmatpush2.xpose.msra.mxu0 0.0
        %1965 = vmatprep.mubr.f32.mxu0 0.0
        %1966 = vmatmul.mubr.f32.gmra.mxu0 %v1837
        %v1967 = vpop.f32.mrf.mxu0
        %v1968 = vadd.f32 0.0, %v1967
        %v1969 = vpop.f32.mrf.mxu0
        %1970 = vmatprep.mubr.f32.mxu0 0.0
        %1971 = vmatmul.mubr.f32.gmra.mxu0 %v1839
        %v1972 = vpop.f32.mrf.mxu0
        %v1973 = vadd.f32 0.0, %v1972
        %v1974 = vpop.f32.mrf.mxu0
        %1975 = vmatprep.mubr.f32.mxu0 0.0
        %1976 = vmatmul.mubr.f32.gmra.mxu0 %v1841
        %v1977 = vpop.f32.mrf.mxu0
        %v1978 = vadd.f32 0.0, %v1977
        %v1979 = vpop.f32.mrf.mxu0
        %1980 = vmatprep.mubr.f32.mxu0 0.0
        %1981 = vmatmul.mubr.f32.gmra.mxu0 %v1843
        %v1982 = vpop.f32.mrf.mxu0
        %v1983 = vadd.f32 0.0, %v1982
        %v1984 = vpop.f32.mrf.mxu0
        %1985 = vmatprep.mubr.f32.mxu0 0.0
        %1986 = vmatmul.mubr.f32.gmra.mxu0 %v1845
        %v1987 = vpop.f32.mrf.mxu0
        %v1988 = vadd.f32 0.0, %v1987
        %v1989 = vpop.f32.mrf.mxu0
        %1990 = vmatprep.mubr.f32.mxu0 0.0
        %1991 = vmatmul.mubr.f32.gmra.mxu0 %v1847
        %v1992 = vpop.f32.mrf.mxu0
        %v1993 = vadd.f32 0.0, %v1992
        %v1994 = vpop.f32.mrf.mxu0
        %1995 = vmatprep.mubr.f32.mxu0 0.0
        %1996 = vmatmul.mubr.f32.gmra.mxu0 %v1849
        %v1997 = vpop.f32.mrf.mxu0
        %v1998 = vadd.f32 0.0, %v1997
        %v1999 = vpop.f32.mrf.mxu0
        %2000 = vmatprep.mubr.f32.mxu0 0.0
        %2001 = vmatmul.mubr.f32.gmra.mxu0 %v1851
        %v2002 = vpop.f32.mrf.mxu0
        %v2003 = vadd.f32 0.0, %v2002
        %v2004 = vpop.f32.mrf.mxu0
        %2005 = vmatprep.mubr.f32.mxu0 0.0
        %2006 = vmatmul.mubr.f32.gmra.mxu0 %v1853
        %v2007 = vpop.f32.mrf.mxu0
        %v2008 = vadd.f32 0.0, %v2007
        %v2009 = vpop.f32.mrf.mxu0
        %2010 = vmatprep.mubr.f32.mxu0 0.0
        %2011 = vmatmul.mubr.f32.gmra.mxu0 %v1855
        %v2012 = vpop.f32.mrf.mxu0
        %v2013 = vadd.f32 0.0, %v2012
        %v2014 = vpop.f32.mrf.mxu0
        %2015 = vmatprep.mubr.f32.mxu0 0.0
        %2016 = vmatmul.mubr.f32.gmra.mxu0 %v1857
        %v2017 = vpop.f32.mrf.mxu0
        %v2018 = vadd.f32 0.0, %v2017
        %v2019 = vpop.f32.mrf.mxu0
        %2020 = vmatprep.mubr.f32.mxu0 0.0
        %2021 = vmatmul.mubr.f32.gmra.mxu0 %v1859
        %v2022 = vpop.f32.mrf.mxu0
        %v2023 = vadd.f32 0.0, %v2022
        %v2024 = vpop.f32.mrf.mxu0
        %2025 = vmatprep.mubr.f32.mxu0 0.0
        %2026 = vmatmul.mubr.f32.gmra.mxu0 %v1861
        %v2027 = vpop.f32.mrf.mxu0
        %v2028 = vadd.f32 0.0, %v2027
        %v2029 = vpop.f32.mrf.mxu0
        %2030 = vmatprep.mubr.f32.mxu0 0.0
        %2031 = vmatmul.mubr.f32.gmra.mxu0 %v1863
        %v2032 = vpop.f32.mrf.mxu0
        %v2033 = vadd.f32 0.0, %v2032
        %v2034 = vpop.f32.mrf.mxu0
        %2035 = vmatprep.mubr.f32.mxu0 0.0
        %2036 = vmatmul.mubr.f32.gmra.mxu0 %v1865
        %v2037 = vpop.f32.mrf.mxu0
        %v2038 = vadd.f32 0.0, %v2037
        %v2039 = vpop.f32.mrf.mxu0
        %2040 = vmatprep.mubr.f32.mxu0 0.0
        %2041 = vmatmul.mubr.f32.gmra.mxu0 %v1867
        %v2042 = vpop.f32.mrf.mxu0
        %v2043 = vadd.f32 0.0, %v2042
        %v2044 = vpop.f32.mrf.mxu0
        %2045 = vdwg.mxu0
        %v2046 = vsel %vm1210, %v1968, -1e+30
        %v2047 = vsel %vm1211, %v1973, -1e+30
        %v2048 = vsel %vm1212, %v1978, -1e+30
        %v2049 = vsel %vm1213, %v1983, -1e+30
        %v2050 = vsel %vm1214, %v1988, -1e+30
        %v2051 = vsel %vm1215, %v1993, -1e+30
        %v2052 = vsel %vm1216, %v1998, -1e+30
        %v2053 = vsel %vm1217, %v2003, -1e+30
        %v2054 = vsel %vm1218, %v2008, -1e+30
        %v2055 = vsel %vm1219, %v2013, -1e+30
        %v2056 = vsel %vm1220, %v2018, -1e+30
        %v2057 = vsel %vm1221, %v2023, -1e+30
        %v2058 = vsel %vm1222, %v2028, -1e+30
        %v2059 = vsel %vm1223, %v2033, -1e+30
        %v2060 = vsel %vm1224, %v2038, -1e+30
        %v2061 = vsel %vm1225, %v2043, -1e+30
        %2062 = vmax.xlane.f32.xlu0 %v2046
        %v2063 = vpop.xlane.xlu0 %2062
        %2064 = vmax.xlane.f32.xlu0 %v2047
        %v2065 = vpop.xlane.xlu0 %2064
        %2066 = vmax.xlane.f32.xlu0 %v2048
        %v2067 = vpop.xlane.xlu0 %2066
        %2068 = vmax.xlane.f32.xlu0 %v2049
        %v2069 = vpop.xlane.xlu0 %2068
        %2070 = vmax.xlane.f32.xlu0 %v2050
        %v2071 = vpop.xlane.xlu0 %2070
        %2072 = vmax.xlane.f32.xlu0 %v2051
        %v2073 = vpop.xlane.xlu0 %2072
        %2074 = vmax.xlane.f32.xlu0 %v2052
        %v2075 = vpop.xlane.xlu0 %2074
        %2076 = vmax.xlane.f32.xlu0 %v2053
        %v2077 = vpop.xlane.xlu0 %2076
        %2078 = vmax.xlane.f32.xlu0 %v2054
        %v2079 = vpop.xlane.xlu0 %2078
        %2080 = vmax.xlane.f32.xlu0 %v2055
        %v2081 = vpop.xlane.xlu0 %2080
        %2082 = vmax.xlane.f32.xlu0 %v2056
        %v2083 = vpop.xlane.xlu0 %2082
        %2084 = vmax.xlane.f32.xlu0 %v2057
        %v2085 = vpop.xlane.xlu0 %2084
        %2086 = vmax.xlane.f32.xlu0 %v2058
        %v2087 = vpop.xlane.xlu0 %2086
        %2088 = vmax.xlane.f32.xlu0 %v2059
        %v2089 = vpop.xlane.xlu0 %2088
        %2090 = vmax.xlane.f32.xlu0 %v2060
        %v2091 = vpop.xlane.xlu0 %2090
        %2092 = vmax.xlane.f32.xlu0 %v2061
        %v2093 = vpop.xlane.xlu0 %2092
        %v2094 = vsub.f32 %v2046, %v2063
        %v2095 = vsub.f32 %v2047, %v2065
        %v2096 = vsub.f32 %v2048, %v2067
        %v2097 = vsub.f32 %v2049, %v2069
        %v2098 = vsub.f32 %v2050, %v2071
        %v2099 = vsub.f32 %v2051, %v2073
        %v2100 = vsub.f32 %v2052, %v2075
        %v2101 = vsub.f32 %v2053, %v2077
        %v2102 = vsub.f32 %v2054, %v2079
        %v2103 = vsub.f32 %v2055, %v2081
        %v2104 = vsub.f32 %v2056, %v2083
        %v2105 = vsub.f32 %v2057, %v2085
        %v2106 = vsub.f32 %v2058, %v2087
        %v2107 = vsub.f32 %v2059, %v2089
        %v2108 = vsub.f32 %v2060, %v2091
        %v2109 = vsub.f32 %v2061, %v2093
        %v2110 = vmul.f32 %v2094, 1.442695
        %v2111 = vpow.pop %v2110
        %v2112 = vmul.f32 %v2095, 1.442695
        %v2113 = vpow.pop %v2112
        %v2114 = vmul.f32 %v2096, 1.442695
        %v2115 = vpow.pop %v2114
        %v2116 = vmul.f32 %v2097, 1.442695
        %v2117 = vpow.pop %v2116
        %v2118 = vmul.f32 %v2098, 1.442695
        %v2119 = vpow.pop %v2118
        %v2120 = vmul.f32 %v2099, 1.442695
        %v2121 = vpow.pop %v2120
        %v2122 = vmul.f32 %v2100, 1.442695
        %v2123 = vpow.pop %v2122
        %v2124 = vmul.f32 %v2101, 1.442695
        %v2125 = vpow.pop %v2124
        %v2126 = vmul.f32 %v2102, 1.442695
        %v2127 = vpow.pop %v2126
        %v2128 = vmul.f32 %v2103, 1.442695
        %v2129 = vpow.pop %v2128
        %v2130 = vmul.f32 %v2104, 1.442695
        %v2131 = vpow.pop %v2130
        %v2132 = vmul.f32 %v2105, 1.442695
        %v2133 = vpow.pop %v2132
        %v2134 = vmul.f32 %v2106, 1.442695
        %v2135 = vpow.pop %v2134
        %v2136 = vmul.f32 %v2107, 1.442695
        %v2137 = vpow.pop %v2136
        %v2138 = vmul.f32 %v2108, 1.442695
        %v2139 = vpow.pop %v2138
        %v2140 = vmul.f32 %v2109, 1.442695
        %v2141 = vpow.pop %v2140
        %2142 = vadd.xlane.f32.xlu0 %v2111
        %v2143 = vpop.xlane.xlu0 %2142
        %2144 = vadd.xlane.f32.xlu0 %v2113
        %v2145 = vpop.xlane.xlu0 %2144
        %2146 = vadd.xlane.f32.xlu0 %v2115
        %v2147 = vpop.xlane.xlu0 %2146
        %2148 = vadd.xlane.f32.xlu0 %v2117
        %v2149 = vpop.xlane.xlu0 %2148
        %2150 = vadd.xlane.f32.xlu0 %v2119
        %v2151 = vpop.xlane.xlu0 %2150
        %2152 = vadd.xlane.f32.xlu0 %v2121
        %v2153 = vpop.xlane.xlu0 %2152
        %2154 = vadd.xlane.f32.xlu0 %v2123
        %v2155 = vpop.xlane.xlu0 %2154
        %2156 = vadd.xlane.f32.xlu0 %v2125
        %v2157 = vpop.xlane.xlu0 %2156
        %2158 = vadd.xlane.f32.xlu0 %v2127
        %v2159 = vpop.xlane.xlu0 %2158
        %2160 = vadd.xlane.f32.xlu0 %v2129
        %v2161 = vpop.xlane.xlu0 %2160
        %2162 = vadd.xlane.f32.xlu0 %v2131
        %v2163 = vpop.xlane.xlu0 %2162
        %2164 = vadd.xlane.f32.xlu0 %v2133
        %v2165 = vpop.xlane.xlu0 %2164
        %2166 = vadd.xlane.f32.xlu0 %v2135
        %v2167 = vpop.xlane.xlu0 %2166
        %2168 = vadd.xlane.f32.xlu0 %v2137
        %v2169 = vpop.xlane.xlu0 %2168
        %2170 = vadd.xlane.f32.xlu0 %v2139
        %v2171 = vpop.xlane.xlu0 %2170
        %2172 = vadd.xlane.f32.xlu0 %v2141
        %v2173 = vpop.xlane.xlu0 %2172
        %v2174 = vrcp.pop %v2143
        %v2175 = vmul.f32 %v2111, %v2174
        %v2176 = vrcp.pop %v2145
        %v2177 = vmul.f32 %v2113, %v2176
        %v2178 = vrcp.pop %v2147
        %v2179 = vmul.f32 %v2115, %v2178
        %v2180 = vrcp.pop %v2149
        %v2181 = vmul.f32 %v2117, %v2180
        %v2182 = vrcp.pop %v2151
        %v2183 = vmul.f32 %v2119, %v2182
        %v2184 = vrcp.pop %v2153
        %v2185 = vmul.f32 %v2121, %v2184
        %v2186 = vrcp.pop %v2155
        %v2187 = vmul.f32 %v2123, %v2186
        %v2188 = vrcp.pop %v2157
        %v2189 = vmul.f32 %v2125, %v2188
        %v2190 = vrcp.pop %v2159
        %v2191 = vmul.f32 %v2127, %v2190
        %v2192 = vrcp.pop %v2161
        %v2193 = vmul.f32 %v2129, %v2192
        %v2194 = vrcp.pop %v2163
        %v2195 = vmul.f32 %v2131, %v2194
        %v2196 = vrcp.pop %v2165
        %v2197 = vmul.f32 %v2133, %v2196
        %v2198 = vrcp.pop %v2167
        %v2199 = vmul.f32 %v2135, %v2198
        %v2200 = vrcp.pop %v2169
        %v2201 = vmul.f32 %v2137, %v2200
        %v2202 = vrcp.pop %v2171
        %v2203 = vmul.f32 %v2139, %v2202
        %v2204 = vrcp.pop %v2173
        %v2205 = vmul.f32 %v2141, %v2204
        %2222 = vrot.lane.b32.xlu0 %v909, 96
        %v2223 = vpop.permute.xlu0 %2222
        %2224 = vrot.lane.b32.xlu0 %v912, 96
        %v2225 = vpop.permute.xlu0 %2224
        %2226 = vrot.lane.b32.xlu0 %v917, 96
        %v2227 = vpop.permute.xlu0 %2226
        %2228 = vrot.lane.b32.xlu0 %v920, 96
        %v2229 = vpop.permute.xlu0 %2228
        %2230 = vrot.lane.b32.xlu0 %v925, 96
        %v2231 = vpop.permute.xlu0 %2230
        %2232 = vrot.lane.b32.xlu0 %v928, 96
        %v2233 = vpop.permute.xlu0 %2232
        %2234 = vrot.lane.b32.xlu0 %v933, 96
        %v2235 = vpop.permute.xlu0 %2234
        %2236 = vrot.lane.b32.xlu0 %v936, 96
        %v2237 = vpop.permute.xlu0 %2236
        %2238 = vrot.lane.b32.xlu0 %v941, 96
        %v2239 = vpop.permute.xlu0 %2238
        %2240 = vrot.lane.b32.xlu0 %v944, 96
        %v2241 = vpop.permute.xlu0 %2240
        %2242 = vrot.lane.b32.xlu0 %v949, 96
        %v2243 = vpop.permute.xlu0 %2242
        %2244 = vrot.lane.b32.xlu0 %v952, 96
        %v2245 = vpop.permute.xlu0 %2244
        %2246 = vrot.lane.b32.xlu0 %v957, 96
        %v2247 = vpop.permute.xlu0 %2246
        %2248 = vrot.lane.b32.xlu0 %v960, 96
        %v2249 = vpop.permute.xlu0 %2248
        %2250 = vrot.lane.b32.xlu0 %v965, 96
        %v2251 = vpop.permute.xlu0 %2250
        %2252 = vrot.lane.b32.xlu0 %v968, 96
        %v2253 = vpop.permute.xlu0 %2252
        %2270 = vmatprep.subr.mxu0 0.0
        %2271 = vmatpush1.msra.mxu0 %v2253
        %2272 = vmatprep.subr.mxu0 0.0
        %2273 = vmatpush1.msra.mxu0 %v2251
        %2274 = vmatprep.subr.mxu0 0.0
        %2275 = vmatpush1.msra.mxu0 %v2249
        %2276 = vmatprep.subr.mxu0 0.0
        %2277 = vmatpush1.msra.mxu0 %v2247
        %2278 = vmatprep.subr.mxu0 0.0
        %2279 = vmatpush1.msra.mxu0 %v2245
        %2280 = vmatprep.subr.mxu0 0.0
        %2281 = vmatpush1.msra.mxu0 %v2243
        %2282 = vmatprep.subr.mxu0 0.0
        %2283 = vmatpush1.msra.mxu0 %v2241
        %2284 = vmatprep.subr.mxu0 0.0
        %2285 = vmatpush1.msra.mxu0 %v2239
        %2286 = vmatprep.subr.mxu0 0.0
        %2287 = vmatpush1.msra.mxu0 %v2237
        %2288 = vmatprep.subr.mxu0 0.0
        %2289 = vmatpush1.msra.mxu0 %v2235
        %2290 = vmatprep.subr.mxu0 0.0
        %2291 = vmatpush1.msra.mxu0 %v2233
        %2292 = vmatprep.subr.mxu0 0.0
        %2293 = vmatpush1.msra.mxu0 %v2231
        %2294 = vmatprep.subr.mxu0 0.0
        %2295 = vmatpush1.msra.mxu0 %v2229
        %2296 = vmatprep.subr.mxu0 0.0
        %2297 = vmatpush1.msra.mxu0 %v2227
        %2298 = vmatprep.subr.mxu0 0.0
        %2299 = vmatpush1.msra.mxu0 %v2225
        %2300 = vmatprep.subr.mxu0 0.0
        %2301 = vmatpush1.msra.mxu0 %v2223
        %2302 = vmatprep.subr.mxu0 0.0
        %2303 = vmatpush2.msra.mxu0 0.0
        %2304 = vmatprep.subr.mxu0 0.0
        %2305 = vmatpush2.msra.mxu0 0.0
        %2306 = vmatprep.subr.mxu0 0.0
        %2307 = vmatpush2.msra.mxu0 0.0
        %2308 = vmatprep.subr.mxu0 0.0
        %2309 = vmatpush2.msra.mxu0 0.0
        %2310 = vmatprep.subr.mxu0 0.0
        %2311 = vmatpush2.msra.mxu0 0.0
        %2312 = vmatprep.subr.mxu0 0.0
        %2313 = vmatpush2.msra.mxu0 0.0
        %2314 = vmatprep.subr.mxu0 0.0
        %2315 = vmatpush2.msra.mxu0 0.0
        %2316 = vmatprep.subr.mxu0 0.0
        %2317 = vmatpush2.msra.mxu0 0.0
        %2318 = vmatprep.subr.mxu0 0.0
        %2319 = vmatpush2.msra.mxu0 0.0
        %2320 = vmatprep.subr.mxu0 0.0
        %2321 = vmatpush2.msra.mxu0 0.0
        %2322 = vmatprep.subr.mxu0 0.0
        %2323 = vmatpush2.msra.mxu0 0.0
        %2324 = vmatprep.subr.mxu0 0.0
        %2325 = vmatpush2.msra.mxu0 0.0
        %2326 = vmatprep.subr.mxu0 0.0
        %2327 = vmatpush2.msra.mxu0 0.0
        %2328 = vmatprep.subr.mxu0 0.0
        %2329 = vmatpush2.msra.mxu0 0.0
        %2330 = vmatprep.subr.mxu0 0.0
        %2331 = vmatpush2.msra.mxu0 0.0
        %2332 = vmatprep.subr.mxu0 0.0
        %2333 = vmatpush2.msra.mxu0 0.0
        %2334 = vmatprep.mubr.f32.mxu0 0.0
        %2335 = vmatmul.mubr.f32.gmra.mxu0 %v2175
        %v2336 = vpop.f32.mrf.mxu0
        %v2337 = vadd.f32 0.0, %v2336
        %v2338 = vpop.f32.mrf.mxu0
        %2339 = vmatprep.mubr.f32.mxu0 0.0
        %2340 = vmatmul.mubr.f32.gmra.mxu0 %v2177
        %v2341 = vpop.f32.mrf.mxu0
        %v2342 = vadd.f32 0.0, %v2341
        %v2343 = vpop.f32.mrf.mxu0
        %2344 = vmatprep.mubr.f32.mxu0 0.0
        %2345 = vmatmul.mubr.f32.gmra.mxu0 %v2179
        %v2346 = vpop.f32.mrf.mxu0
        %v2347 = vadd.f32 0.0, %v2346
        %v2348 = vpop.f32.mrf.mxu0
        %2349 = vmatprep.mubr.f32.mxu0 0.0
        %2350 = vmatmul.mubr.f32.gmra.mxu0 %v2181
        %v2351 = vpop.f32.mrf.mxu0
        %v2352 = vadd.f32 0.0, %v2351
        %v2353 = vpop.f32.mrf.mxu0
        %2354 = vmatprep.mubr.f32.mxu0 0.0
        %2355 = vmatmul.mubr.f32.gmra.mxu0 %v2183
        %v2356 = vpop.f32.mrf.mxu0
        %v2357 = vadd.f32 0.0, %v2356
        %v2358 = vpop.f32.mrf.mxu0
        %2359 = vmatprep.mubr.f32.mxu0 0.0
        %2360 = vmatmul.mubr.f32.gmra.mxu0 %v2185
        %v2361 = vpop.f32.mrf.mxu0
        %v2362 = vadd.f32 0.0, %v2361
        %v2363 = vpop.f32.mrf.mxu0
        %2364 = vmatprep.mubr.f32.mxu0 0.0
        %2365 = vmatmul.mubr.f32.gmra.mxu0 %v2187
        %v2366 = vpop.f32.mrf.mxu0
        %v2367 = vadd.f32 0.0, %v2366
        %v2368 = vpop.f32.mrf.mxu0
        %2369 = vmatprep.mubr.f32.mxu0 0.0
        %2370 = vmatmul.mubr.f32.gmra.mxu0 %v2189
        %v2371 = vpop.f32.mrf.mxu0
        %v2372 = vadd.f32 0.0, %v2371
        %v2373 = vpop.f32.mrf.mxu0
        %2374 = vmatprep.mubr.f32.mxu0 0.0
        %2375 = vmatmul.mubr.f32.gmra.mxu0 %v2191
        %v2376 = vpop.f32.mrf.mxu0
        %v2377 = vadd.f32 0.0, %v2376
        %v2378 = vpop.f32.mrf.mxu0
        %2379 = vmatprep.mubr.f32.mxu0 0.0
        %2380 = vmatmul.mubr.f32.gmra.mxu0 %v2193
        %v2381 = vpop.f32.mrf.mxu0
        %v2382 = vadd.f32 0.0, %v2381
        %v2383 = vpop.f32.mrf.mxu0
        %2384 = vmatprep.mubr.f32.mxu0 0.0
        %2385 = vmatmul.mubr.f32.gmra.mxu0 %v2195
        %v2386 = vpop.f32.mrf.mxu0
        %v2387 = vadd.f32 0.0, %v2386
        %v2388 = vpop.f32.mrf.mxu0
        %2389 = vmatprep.mubr.f32.mxu0 0.0
        %2390 = vmatmul.mubr.f32.gmra.mxu0 %v2197
        %v2391 = vpop.f32.mrf.mxu0
        %v2392 = vadd.f32 0.0, %v2391
        %v2393 = vpop.f32.mrf.mxu0
        %2394 = vmatprep.mubr.f32.mxu0 0.0
        %2395 = vmatmul.mubr.f32.gmra.mxu0 %v2199
        %v2396 = vpop.f32.mrf.mxu0
        %v2397 = vadd.f32 0.0, %v2396
        %v2398 = vpop.f32.mrf.mxu0
        %2399 = vmatprep.mubr.f32.mxu0 0.0
        %2400 = vmatmul.mubr.f32.gmra.mxu0 %v2201
        %v2401 = vpop.f32.mrf.mxu0
        %v2402 = vadd.f32 0.0, %v2401
        %v2403 = vpop.f32.mrf.mxu0
        %2404 = vmatprep.mubr.f32.mxu0 0.0
        %2405 = vmatmul.mubr.f32.gmra.mxu0 %v2203
        %v2406 = vpop.f32.mrf.mxu0
        %v2407 = vadd.f32 0.0, %v2406
        %v2408 = vpop.f32.mrf.mxu0
        %2409 = vmatprep.mubr.f32.mxu0 0.0
        %2410 = vmatmul.mubr.f32.gmra.mxu0 %v2205
        %v2411 = vpop.f32.mrf.mxu0
        %v2412 = vadd.f32 0.0, %v2411
        %v2413 = vpop.f32.mrf.mxu0
        %2414 = vdwg.mxu0
        %2415 = vrot.lane.b32.xlu0 %v971, 64
        %v2416 = vpop.permute.xlu0 %2415
        %2417 = vrot.lane.b32.xlu0 %v972, 64
        %v2418 = vpop.permute.xlu0 %2417
        %2419 = vrot.lane.b32.xlu0 %v973, 64
        %v2420 = vpop.permute.xlu0 %2419
        %2421 = vrot.lane.b32.xlu0 %v974, 64
        %v2422 = vpop.permute.xlu0 %2421
        %2423 = vrot.lane.b32.xlu0 %v975, 64
        %v2424 = vpop.permute.xlu0 %2423
        %2425 = vrot.lane.b32.xlu0 %v976, 64
        %v2426 = vpop.permute.xlu0 %2425
        %2427 = vrot.lane.b32.xlu0 %v977, 64
        %v2428 = vpop.permute.xlu0 %2427
        %2429 = vrot.lane.b32.xlu0 %v978, 64
        %v2430 = vpop.permute.xlu0 %2429
        %2431 = vrot.lane.b32.xlu0 %v979, 64
        %v2432 = vpop.permute.xlu0 %2431
        %2433 = vrot.lane.b32.xlu0 %v980, 64
        %v2434 = vpop.permute.xlu0 %2433
        %2435 = vrot.lane.b32.xlu0 %v981, 64
        %v2436 = vpop.permute.xlu0 %2435
        %2437 = vrot.lane.b32.xlu0 %v982, 64
        %v2438 = vpop.permute.xlu0 %2437
        %2439 = vrot.lane.b32.xlu0 %v983, 64
        %v2440 = vpop.permute.xlu0 %2439
        %2441 = vrot.lane.b32.xlu0 %v984, 64
        %v2442 = vpop.permute.xlu0 %2441
        %2443 = vrot.lane.b32.xlu0 %v985, 64
        %v2444 = vpop.permute.xlu0 %2443
        %2445 = vrot.lane.b32.xlu0 %v986, 64
        %v2446 = vpop.permute.xlu0 %2445
        %2447 = vrot.lane.b32.xlu0 %v798, 64
        %v2448 = vpop.permute.xlu0 %2447
        %2449 = vrot.lane.b32.xlu0 %v802, 64
        %v2450 = vpop.permute.xlu0 %2449
        %2451 = vrot.lane.b32.xlu0 %v808, 64
        %v2452 = vpop.permute.xlu0 %2451
        %2453 = vrot.lane.b32.xlu0 %v812, 64
        %v2454 = vpop.permute.xlu0 %2453
        %2455 = vrot.lane.b32.xlu0 %v818, 64
        %v2456 = vpop.permute.xlu0 %2455
        %2457 = vrot.lane.b32.xlu0 %v822, 64
        %v2458 = vpop.permute.xlu0 %2457
        %2459 = vrot.lane.b32.xlu0 %v828, 64
        %v2460 = vpop.permute.xlu0 %2459
        %2461 = vrot.lane.b32.xlu0 %v832, 64
        %v2462 = vpop.permute.xlu0 %2461
        %2463 = vrot.lane.b32.xlu0 %v838, 64
        %v2464 = vpop.permute.xlu0 %2463
        %2465 = vrot.lane.b32.xlu0 %v842, 64
        %v2466 = vpop.permute.xlu0 %2465
        %2467 = vrot.lane.b32.xlu0 %v848, 64
        %v2468 = vpop.permute.xlu0 %2467
        %2469 = vrot.lane.b32.xlu0 %v852, 64
        %v2470 = vpop.permute.xlu0 %2469
        %2471 = vrot.lane.b32.xlu0 %v858, 64
        %v2472 = vpop.permute.xlu0 %2471
        %2473 = vrot.lane.b32.xlu0 %v862, 64
        %v2474 = vpop.permute.xlu0 %2473
        %2475 = vrot.lane.b32.xlu0 %v868, 64
        %v2476 = vpop.permute.xlu0 %2475
        %2477 = vrot.lane.b32.xlu0 %v872, 64
        %v2478 = vpop.permute.xlu0 %2477
        %v2479 = vsel %vm1226, %v2416, 0
        %v2481 = vsel %vm1226, %v2418, 0
        %v2483 = vsel %vm1226, %v2420, 0
        %v2485 = vsel %vm1226, %v2422, 0
        %v2487 = vsel %vm1226, %v2424, 0
        %v2489 = vsel %vm1226, %v2426, 0
        %v2491 = vsel %vm1226, %v2428, 0
        %v2493 = vsel %vm1226, %v2430, 0
        %v2495 = vsel %vm1226, %v2432, 0
        %v2497 = vsel %vm1226, %v2434, 0
        %v2499 = vsel %vm1226, %v2436, 0
        %v2501 = vsel %vm1226, %v2438, 0
        %v2503 = vsel %vm1226, %v2440, 0
        %v2505 = vsel %vm1226, %v2442, 0
        %v2507 = vsel %vm1226, %v2444, 0
        %v2509 = vsel %vm1226, %v2446, 0
        %v2511 = vsel %vm1226, %v2448, 0
        %v2513 = vsel %vm1226, %v2450, 0
        %v2515 = vsel %vm1226, %v2452, 0
        %v2517 = vsel %vm1226, %v2454, 0
        %v2519 = vsel %vm1226, %v2456, 0
        %v2521 = vsel %vm1226, %v2458, 0
        %v2523 = vsel %vm1226, %v2460, 0
        %v2525 = vsel %vm1226, %v2462, 0
        %v2527 = vsel %vm1226, %v2464, 0
        %v2529 = vsel %vm1226, %v2466, 0
        %v2531 = vsel %vm1226, %v2468, 0
        %v2533 = vsel %vm1226, %v2470, 0
        %v2535 = vsel %vm1226, %v2472, 0
        %v2537 = vsel %vm1226, %v2474, 0
        %v2539 = vsel %vm1226, %v2476, 0
        %v2541 = vsel %vm1226, %v2478, 0
        %2543 = vmatprep.subr.mxu0 0.0
        %2544 = vmatpush1.xpose.msra.mxu0 %v2541
        %2545 = vmatprep.subr.mxu0 0.0
        %2546 = vmatpush1.xpose.msra.mxu0 %v2539
        %2547 = vmatprep.subr.mxu0 0.0
        %2548 = vmatpush1.xpose.msra.mxu0 %v2537
        %2549 = vmatprep.subr.mxu0 0.0
        %2550 = vmatpush1.xpose.msra.mxu0 %v2535
        %2551 = vmatprep.subr.mxu0 0.0
        %2552 = vmatpush1.xpose.msra.mxu0 %v2533
        %2553 = vmatprep.subr.mxu0 0.0
        %2554 = vmatpush1.xpose.msra.mxu0 %v2531
        %2555 = vmatprep.subr.mxu0 0.0
        %2556 = vmatpush1.xpose.msra.mxu0 %v2529
        %2557 = vmatprep.subr.mxu0 0.0
        %2558 = vmatpush1.xpose.msra.mxu0 %v2527
        %2559 = vmatprep.subr.mxu0 0.0
        %2560 = vmatpush1.xpose.msra.mxu0 %v2525
        %2561 = vmatprep.subr.mxu0 0.0
        %2562 = vmatpush1.xpose.msra.mxu0 %v2523
        %2563 = vmatprep.subr.mxu0 0.0
        %2564 = vmatpush1.xpose.msra.mxu0 %v2521
        %2565 = vmatprep.subr.mxu0 0.0
        %2566 = vmatpush1.xpose.msra.mxu0 %v2519
        %2567 = vmatprep.subr.mxu0 0.0
        %2568 = vmatpush1.xpose.msra.mxu0 %v2517
        %2569 = vmatprep.subr.mxu0 0.0
        %2570 = vmatpush1.xpose.msra.mxu0 %v2515
        %2571 = vmatprep.subr.mxu0 0.0
        %2572 = vmatpush1.xpose.msra.mxu0 %v2513
        %2573 = vmatprep.subr.mxu0 0.0
        %2574 = vmatpush1.xpose.msra.mxu0 %v2511
        %2575 = vmatprep.subr.mxu0 0.0
        %2576 = vmatpush2.xpose.msra.mxu0 0.0
        %2577 = vmatprep.subr.mxu0 0.0
        %2578 = vmatpush2.xpose.msra.mxu0 0.0
        %2579 = vmatprep.subr.mxu0 0.0
        %2580 = vmatpush2.xpose.msra.mxu0 0.0
        %2581 = vmatprep.subr.mxu0 0.0
        %2582 = vmatpush2.xpose.msra.mxu0 0.0
        %2583 = vmatprep.subr.mxu0 0.0
        %2584 = vmatpush2.xpose.msra.mxu0 0.0
        %2585 = vmatprep.subr.mxu0 0.0
        %2586 = vmatpush2.xpose.msra.mxu0 0.0
        %2587 = vmatprep.subr.mxu0 0.0
        %2588 = vmatpush2.xpose.msra.mxu0 0.0
        %2589 = vmatprep.subr.mxu0 0.0
        %2590 = vmatpush2.xpose.msra.mxu0 0.0
        %2591 = vmatprep.subr.mxu0 0.0
        %2592 = vmatpush2.xpose.msra.mxu0 0.0
        %2593 = vmatprep.subr.mxu0 0.0
        %2594 = vmatpush2.xpose.msra.mxu0 0.0
        %2595 = vmatprep.subr.mxu0 0.0
        %2596 = vmatpush2.xpose.msra.mxu0 0.0
        %2597 = vmatprep.subr.mxu0 0.0
        %2598 = vmatpush2.xpose.msra.mxu0 0.0
        %2599 = vmatprep.subr.mxu0 0.0
        %2600 = vmatpush2.xpose.msra.mxu0 0.0
        %2601 = vmatprep.subr.mxu0 0.0
        %2602 = vmatpush2.xpose.msra.mxu0 0.0
        %2603 = vmatprep.subr.mxu0 0.0
        %2604 = vmatpush2.xpose.msra.mxu0 0.0
        %2605 = vmatprep.subr.mxu0 0.0
        %2606 = vmatpush2.xpose.msra.mxu0 0.0
        %2607 = vmatprep.mubr.f32.mxu0 0.0
        %2608 = vmatmul.mubr.f32.gmra.mxu0 %v2479
        %v2609 = vpop.f32.mrf.mxu0
        %v2610 = vadd.f32 0.0, %v2609
        %v2611 = vpop.f32.mrf.mxu0
        %2612 = vmatprep.mubr.f32.mxu0 0.0
        %2613 = vmatmul.mubr.f32.gmra.mxu0 %v2481
        %v2614 = vpop.f32.mrf.mxu0
        %v2615 = vadd.f32 0.0, %v2614
        %v2616 = vpop.f32.mrf.mxu0
        %2617 = vmatprep.mubr.f32.mxu0 0.0
        %2618 = vmatmul.mubr.f32.gmra.mxu0 %v2483
        %v2619 = vpop.f32.mrf.mxu0
        %v2620 = vadd.f32 0.0, %v2619
        %v2621 = vpop.f32.mrf.mxu0
        %2622 = vmatprep.mubr.f32.mxu0 0.0
        %2623 = vmatmul.mubr.f32.gmra.mxu0 %v2485
        %v2624 = vpop.f32.mrf.mxu0
        %v2625 = vadd.f32 0.0, %v2624
        %v2626 = vpop.f32.mrf.mxu0
        %2627 = vmatprep.mubr.f32.mxu0 0.0
        %2628 = vmatmul.mubr.f32.gmra.mxu0 %v2487
        %v2629 = vpop.f32.mrf.mxu0
        %v2630 = vadd.f32 0.0, %v2629
        %v2631 = vpop.f32.mrf.mxu0
        %2632 = vmatprep.mubr.f32.mxu0 0.0
        %2633 = vmatmul.mubr.f32.gmra.mxu0 %v2489
        %v2634 = vpop.f32.mrf.mxu0
        %v2635 = vadd.f32 0.0, %v2634
        %v2636 = vpop.f32.mrf.mxu0
        %2637 = vmatprep.mubr.f32.mxu0 0.0
        %2638 = vmatmul.mubr.f32.gmra.mxu0 %v2491
        %v2639 = vpop.f32.mrf.mxu0
        %v2640 = vadd.f32 0.0, %v2639
        %v2641 = vpop.f32.mrf.mxu0
        %2642 = vmatprep.mubr.f32.mxu0 0.0
        %2643 = vmatmul.mubr.f32.gmra.mxu0 %v2493
        %v2644 = vpop.f32.mrf.mxu0
        %v2645 = vadd.f32 0.0, %v2644
        %v2646 = vpop.f32.mrf.mxu0
        %2647 = vmatprep.mubr.f32.mxu0 0.0
        %2648 = vmatmul.mubr.f32.gmra.mxu0 %v2495
        %v2649 = vpop.f32.mrf.mxu0
        %v2650 = vadd.f32 0.0, %v2649
        %v2651 = vpop.f32.mrf.mxu0
        %2652 = vmatprep.mubr.f32.mxu0 0.0
        %2653 = vmatmul.mubr.f32.gmra.mxu0 %v2497
        %v2654 = vpop.f32.mrf.mxu0
        %v2655 = vadd.f32 0.0, %v2654
        %v2656 = vpop.f32.mrf.mxu0
        %2657 = vmatprep.mubr.f32.mxu0 0.0
        %2658 = vmatmul.mubr.f32.gmra.mxu0 %v2499
        %v2659 = vpop.f32.mrf.mxu0
        %v2660 = vadd.f32 0.0, %v2659
        %v2661 = vpop.f32.mrf.mxu0
        %2662 = vmatprep.mubr.f32.mxu0 0.0
        %2663 = vmatmul.mubr.f32.gmra.mxu0 %v2501
        %v2664 = vpop.f32.mrf.mxu0
        %v2665 = vadd.f32 0.0, %v2664
        %v2666 = vpop.f32.mrf.mxu0
        %2667 = vmatprep.mubr.f32.mxu0 0.0
        %2668 = vmatmul.mubr.f32.gmra.mxu0 %v2503
        %v2669 = vpop.f32.mrf.mxu0
        %v2670 = vadd.f32 0.0, %v2669
        %v2671 = vpop.f32.mrf.mxu0
        %2672 = vmatprep.mubr.f32.mxu0 0.0
        %2673 = vmatmul.mubr.f32.gmra.mxu0 %v2505
        %v2674 = vpop.f32.mrf.mxu0
        %v2675 = vadd.f32 0.0, %v2674
        %v2676 = vpop.f32.mrf.mxu0
        %2677 = vmatprep.mubr.f32.mxu0 0.0
        %2678 = vmatmul.mubr.f32.gmra.mxu0 %v2507
        %v2679 = vpop.f32.mrf.mxu0
        %v2680 = vadd.f32 0.0, %v2679
        %v2681 = vpop.f32.mrf.mxu0
        %2682 = vmatprep.mubr.f32.mxu0 0.0
        %2683 = vmatmul.mubr.f32.gmra.mxu0 %v2509
        %v2684 = vpop.f32.mrf.mxu0
        %v2685 = vadd.f32 0.0, %v2684
        %v2686 = vpop.f32.mrf.mxu0
        %2687 = vdwg.mxu0
        %v2688 = vsel %vm1210, %v2610, -1e+30
        %v2689 = vsel %vm1211, %v2615, -1e+30
        %v2690 = vsel %vm1212, %v2620, -1e+30
        %v2691 = vsel %vm1213, %v2625, -1e+30
        %v2692 = vsel %vm1214, %v2630, -1e+30
        %v2693 = vsel %vm1215, %v2635, -1e+30
        %v2694 = vsel %vm1216, %v2640, -1e+30
        %v2695 = vsel %vm1217, %v2645, -1e+30
        %v2696 = vsel %vm1218, %v2650, -1e+30
        %v2697 = vsel %vm1219, %v2655, -1e+30
        %v2698 = vsel %vm1220, %v2660, -1e+30
        %v2699 = vsel %vm1221, %v2665, -1e+30
        %v2700 = vsel %vm1222, %v2670, -1e+30
        %v2701 = vsel %vm1223, %v2675, -1e+30
        %v2702 = vsel %vm1224, %v2680, -1e+30
        %v2703 = vsel %vm1225, %v2685, -1e+30
        %2704 = vmax.xlane.f32.xlu0 %v2688
        %v2705 = vpop.xlane.xlu0 %2704
        %2706 = vmax.xlane.f32.xlu0 %v2689
        %v2707 = vpop.xlane.xlu0 %2706
        %2708 = vmax.xlane.f32.xlu0 %v2690
        %v2709 = vpop.xlane.xlu0 %2708
        %2710 = vmax.xlane.f32.xlu0 %v2691
        %v2711 = vpop.xlane.xlu0 %2710
        %2712 = vmax.xlane.f32.xlu0 %v2692
        %v2713 = vpop.xlane.xlu0 %2712
        %2714 = vmax.xlane.f32.xlu0 %v2693
        %v2715 = vpop.xlane.xlu0 %2714
        %2716 = vmax.xlane.f32.xlu0 %v2694
        %v2717 = vpop.xlane.xlu0 %2716
        %2718 = vmax.xlane.f32.xlu0 %v2695
        %v2719 = vpop.xlane.xlu0 %2718
        %2720 = vmax.xlane.f32.xlu0 %v2696
        %v2721 = vpop.xlane.xlu0 %2720
        %2722 = vmax.xlane.f32.xlu0 %v2697
        %v2723 = vpop.xlane.xlu0 %2722
        %2724 = vmax.xlane.f32.xlu0 %v2698
        %v2725 = vpop.xlane.xlu0 %2724
        %2726 = vmax.xlane.f32.xlu0 %v2699
        %v2727 = vpop.xlane.xlu0 %2726
        %2728 = vmax.xlane.f32.xlu0 %v2700
        %v2729 = vpop.xlane.xlu0 %2728
        %2730 = vmax.xlane.f32.xlu0 %v2701
        %v2731 = vpop.xlane.xlu0 %2730
        %2732 = vmax.xlane.f32.xlu0 %v2702
        %v2733 = vpop.xlane.xlu0 %2732
        %2734 = vmax.xlane.f32.xlu0 %v2703
        %v2735 = vpop.xlane.xlu0 %2734
        %v2736 = vsub.f32 %v2688, %v2705
        %v2737 = vsub.f32 %v2689, %v2707
        %v2738 = vsub.f32 %v2690, %v2709
        %v2739 = vsub.f32 %v2691, %v2711
        %v2740 = vsub.f32 %v2692, %v2713
        %v2741 = vsub.f32 %v2693, %v2715
        %v2742 = vsub.f32 %v2694, %v2717
        %v2743 = vsub.f32 %v2695, %v2719
        %v2744 = vsub.f32 %v2696, %v2721
        %v2745 = vsub.f32 %v2697, %v2723
        %v2746 = vsub.f32 %v2698, %v2725
        %v2747 = vsub.f32 %v2699, %v2727
        %v2748 = vsub.f32 %v2700, %v2729
        %v2749 = vsub.f32 %v2701, %v2731
        %v2750 = vsub.f32 %v2702, %v2733
        %v2751 = vsub.f32 %v2703, %v2735
        %v2752 = vmul.f32 %v2736, 1.442695
        %v2753 = vpow.pop %v2752
        %v2754 = vmul.f32 %v2737, 1.442695
        %v2755 = vpow.pop %v2754
        %v2756 = vmul.f32 %v2738, 1.442695
        %v2757 = vpow.pop %v2756
        %v2758 = vmul.f32 %v2739, 1.442695
        %v2759 = vpow.pop %v2758
        %v2760 = vmul.f32 %v2740, 1.442695
        %v2761 = vpow.pop %v2760
        %v2762 = vmul.f32 %v2741, 1.442695
        %v2763 = vpow.pop %v2762
        %v2764 = vmul.f32 %v2742, 1.442695
        %v2765 = vpow.pop %v2764
        %v2766 = vmul.f32 %v2743, 1.442695
        %v2767 = vpow.pop %v2766
        %v2768 = vmul.f32 %v2744, 1.442695
        %v2769 = vpow.pop %v2768
        %v2770 = vmul.f32 %v2745, 1.442695
        %v2771 = vpow.pop %v2770
        %v2772 = vmul.f32 %v2746, 1.442695
        %v2773 = vpow.pop %v2772
        %v2774 = vmul.f32 %v2747, 1.442695
        %v2775 = vpow.pop %v2774
        %v2776 = vmul.f32 %v2748, 1.442695
        %v2777 = vpow.pop %v2776
        %v2778 = vmul.f32 %v2749, 1.442695
        %v2779 = vpow.pop %v2778
        %v2780 = vmul.f32 %v2750, 1.442695
        %v2781 = vpow.pop %v2780
        %v2782 = vmul.f32 %v2751, 1.442695
        %v2783 = vpow.pop %v2782
        %2784 = vadd.xlane.f32.xlu0 %v2753
        %v2785 = vpop.xlane.xlu0 %2784
        %2786 = vadd.xlane.f32.xlu0 %v2755
        %v2787 = vpop.xlane.xlu0 %2786
        %2788 = vadd.xlane.f32.xlu0 %v2757
        %v2789 = vpop.xlane.xlu0 %2788
        %2790 = vadd.xlane.f32.xlu0 %v2759
        %v2791 = vpop.xlane.xlu0 %2790
        %2792 = vadd.xlane.f32.xlu0 %v2761
        %v2793 = vpop.xlane.xlu0 %2792
        %2794 = vadd.xlane.f32.xlu0 %v2763
        %v2795 = vpop.xlane.xlu0 %2794
        %2796 = vadd.xlane.f32.xlu0 %v2765
        %v2797 = vpop.xlane.xlu0 %2796
        %2798 = vadd.xlane.f32.xlu0 %v2767
        %v2799 = vpop.xlane.xlu0 %2798
        %2800 = vadd.xlane.f32.xlu0 %v2769
        %v2801 = vpop.xlane.xlu0 %2800
        %2802 = vadd.xlane.f32.xlu0 %v2771
        %v2803 = vpop.xlane.xlu0 %2802
        %2804 = vadd.xlane.f32.xlu0 %v2773
        %v2805 = vpop.xlane.xlu0 %2804
        %2806 = vadd.xlane.f32.xlu0 %v2775
        %v2807 = vpop.xlane.xlu0 %2806
        %2808 = vadd.xlane.f32.xlu0 %v2777
        %v2809 = vpop.xlane.xlu0 %2808
        %2810 = vadd.xlane.f32.xlu0 %v2779
        %v2811 = vpop.xlane.xlu0 %2810
        %2812 = vadd.xlane.f32.xlu0 %v2781
        %v2813 = vpop.xlane.xlu0 %2812
        %2814 = vadd.xlane.f32.xlu0 %v2783
        %v2815 = vpop.xlane.xlu0 %2814
        %v2816 = vrcp.pop %v2785
        %v2817 = vmul.f32 %v2753, %v2816
        %v2818 = vrcp.pop %v2787
        %v2819 = vmul.f32 %v2755, %v2818
        %v2820 = vrcp.pop %v2789
        %v2821 = vmul.f32 %v2757, %v2820
        %v2822 = vrcp.pop %v2791
        %v2823 = vmul.f32 %v2759, %v2822
        %v2824 = vrcp.pop %v2793
        %v2825 = vmul.f32 %v2761, %v2824
        %v2826 = vrcp.pop %v2795
        %v2827 = vmul.f32 %v2763, %v2826
        %v2828 = vrcp.pop %v2797
        %v2829 = vmul.f32 %v2765, %v2828
        %v2830 = vrcp.pop %v2799
        %v2831 = vmul.f32 %v2767, %v2830
        %v2832 = vrcp.pop %v2801
        %v2833 = vmul.f32 %v2769, %v2832
        %v2834 = vrcp.pop %v2803
        %v2835 = vmul.f32 %v2771, %v2834
        %v2836 = vrcp.pop %v2805
        %v2837 = vmul.f32 %v2773, %v2836
        %v2838 = vrcp.pop %v2807
        %v2839 = vmul.f32 %v2775, %v2838
        %v2840 = vrcp.pop %v2809
        %v2841 = vmul.f32 %v2777, %v2840
        %v2842 = vrcp.pop %v2811
        %v2843 = vmul.f32 %v2779, %v2842
        %v2844 = vrcp.pop %v2813
        %v2845 = vmul.f32 %v2781, %v2844
        %v2846 = vrcp.pop %v2815
        %v2847 = vmul.f32 %v2783, %v2846
        %2848 = vrot.lane.b32.xlu0 %v909, 64
        %v2849 = vpop.permute.xlu0 %2848
        %2850 = vrot.lane.b32.xlu0 %v912, 64
        %v2851 = vpop.permute.xlu0 %2850
        %2852 = vrot.lane.b32.xlu0 %v917, 64
        %v2853 = vpop.permute.xlu0 %2852
        %2854 = vrot.lane.b32.xlu0 %v920, 64
        %v2855 = vpop.permute.xlu0 %2854
        %2856 = vrot.lane.b32.xlu0 %v925, 64
        %v2857 = vpop.permute.xlu0 %2856
        %2858 = vrot.lane.b32.xlu0 %v928, 64
        %v2859 = vpop.permute.xlu0 %2858
        %2860 = vrot.lane.b32.xlu0 %v933, 64
        %v2861 = vpop.permute.xlu0 %2860
        %2862 = vrot.lane.b32.xlu0 %v936, 64
        %v2863 = vpop.permute.xlu0 %2862
        %2864 = vrot.lane.b32.xlu0 %v941, 64
        %v2865 = vpop.permute.xlu0 %2864
        %2866 = vrot.lane.b32.xlu0 %v944, 64
        %v2867 = vpop.permute.xlu0 %2866
        %2868 = vrot.lane.b32.xlu0 %v949, 64
        %v2869 = vpop.permute.xlu0 %2868
        %2870 = vrot.lane.b32.xlu0 %v952, 64
        %v2871 = vpop.permute.xlu0 %2870
        %2872 = vrot.lane.b32.xlu0 %v957, 64
        %v2873 = vpop.permute.xlu0 %2872
        %2874 = vrot.lane.b32.xlu0 %v960, 64
        %v2875 = vpop.permute.xlu0 %2874
        %2876 = vrot.lane.b32.xlu0 %v965, 64
        %v2877 = vpop.permute.xlu0 %2876
        %2878 = vrot.lane.b32.xlu0 %v968, 64
        %v2879 = vpop.permute.xlu0 %2878
        %2896 = vmatprep.subr.mxu0 0.0
        %2897 = vmatpush1.msra.mxu0 %v2879
        %2898 = vmatprep.subr.mxu0 0.0
        %2899 = vmatpush1.msra.mxu0 %v2877
        %2900 = vmatprep.subr.mxu0 0.0
        %2901 = vmatpush1.msra.mxu0 %v2875
        %2902 = vmatprep.subr.mxu0 0.0
        %2903 = vmatpush1.msra.mxu0 %v2873
        %2904 = vmatprep.subr.mxu0 0.0
        %2905 = vmatpush1.msra.mxu0 %v2871
        %2906 = vmatprep.subr.mxu0 0.0
        %2907 = vmatpush1.msra.mxu0 %v2869
        %2908 = vmatprep.subr.mxu0 0.0
        %2909 = vmatpush1.msra.mxu0 %v2867
        %2910 = vmatprep.subr.mxu0 0.0
        %2911 = vmatpush1.msra.mxu0 %v2865
        %2912 = vmatprep.subr.mxu0 0.0
        %2913 = vmatpush1.msra.mxu0 %v2863
        %2914 = vmatprep.subr.mxu0 0.0
        %2915 = vmatpush1.msra.mxu0 %v2861
        %2916 = vmatprep.subr.mxu0 0.0
        %2917 = vmatpush1.msra.mxu0 %v2859
        %2918 = vmatprep.subr.mxu0 0.0
        %2919 = vmatpush1.msra.mxu0 %v2857
        %2920 = vmatprep.subr.mxu0 0.0
        %2921 = vmatpush1.msra.mxu0 %v2855
        %2922 = vmatprep.subr.mxu0 0.0
        %2923 = vmatpush1.msra.mxu0 %v2853
        %2924 = vmatprep.subr.mxu0 0.0
        %2925 = vmatpush1.msra.mxu0 %v2851
        %2926 = vmatprep.subr.mxu0 0.0
        %2927 = vmatpush1.msra.mxu0 %v2849
        %2928 = vmatprep.subr.mxu0 0.0
        %2929 = vmatpush2.msra.mxu0 0.0
        %2930 = vmatprep.subr.mxu0 0.0
        %2931 = vmatpush2.msra.mxu0 0.0
        %2932 = vmatprep.subr.mxu0 0.0
        %2933 = vmatpush2.msra.mxu0 0.0
        %2934 = vmatprep.subr.mxu0 0.0
        %2935 = vmatpush2.msra.mxu0 0.0
        %2936 = vmatprep.subr.mxu0 0.0
        %2937 = vmatpush2.msra.mxu0 0.0
        %2938 = vmatprep.subr.mxu0 0.0
        %2939 = vmatpush2.msra.mxu0 0.0
        %2940 = vmatprep.subr.mxu0 0.0
        %2941 = vmatpush2.msra.mxu0 0.0
        %2942 = vmatprep.subr.mxu0 0.0
        %2943 = vmatpush2.msra.mxu0 0.0
        %2944 = vmatprep.subr.mxu0 0.0
        %2945 = vmatpush2.msra.mxu0 0.0
        %2946 = vmatprep.subr.mxu0 0.0
        %2947 = vmatpush2.msra.mxu0 0.0
        %2948 = vmatprep.subr.mxu0 0.0
        %2949 = vmatpush2.msra.mxu0 0.0
        %2950 = vmatprep.subr.mxu0 0.0
        %2951 = vmatpush2.msra.mxu0 0.0
        %2952 = vmatprep.subr.mxu0 0.0
        %2953 = vmatpush2.msra.mxu0 0.0
        %2954 = vmatprep.subr.mxu0 0.0
        %2955 = vmatpush2.msra.mxu0 0.0
        %2956 = vmatprep.subr.mxu0 0.0
        %2957 = vmatpush2.msra.mxu0 0.0
        %2958 = vmatprep.subr.mxu0 0.0
        %2959 = vmatpush2.msra.mxu0 0.0
        %2960 = vmatprep.mubr.f32.mxu0 0.0
        %2961 = vmatmul.mubr.f32.gmra.mxu0 %v2817
        %v2962 = vpop.f32.mrf.mxu0
        %v2963 = vadd.f32 0.0, %v2962
        %v2964 = vpop.f32.mrf.mxu0
        %2965 = vmatprep.mubr.f32.mxu0 0.0
        %2966 = vmatmul.mubr.f32.gmra.mxu0 %v2819
        %v2967 = vpop.f32.mrf.mxu0
        %v2968 = vadd.f32 0.0, %v2967
        %v2969 = vpop.f32.mrf.mxu0
        %2970 = vmatprep.mubr.f32.mxu0 0.0
        %2971 = vmatmul.mubr.f32.gmra.mxu0 %v2821
        %v2972 = vpop.f32.mrf.mxu0
        %v2973 = vadd.f32 0.0, %v2972
        %v2974 = vpop.f32.mrf.mxu0
        %2975 = vmatprep.mubr.f32.mxu0 0.0
        %2976 = vmatmul.mubr.f32.gmra.mxu0 %v2823
        %v2977 = vpop.f32.mrf.mxu0
        %v2978 = vadd.f32 0.0, %v2977
        %v2979 = vpop.f32.mrf.mxu0
        %2980 = vmatprep.mubr.f32.mxu0 0.0
        %2981 = vmatmul.mubr.f32.gmra.mxu0 %v2825
        %v2982 = vpop.f32.mrf.mxu0
        %v2983 = vadd.f32 0.0, %v2982
        %v2984 = vpop.f32.mrf.mxu0
        %2985 = vmatprep.mubr.f32.mxu0 0.0
        %2986 = vmatmul.mubr.f32.gmra.mxu0 %v2827
        %v2987 = vpop.f32.mrf.mxu0
        %v2988 = vadd.f32 0.0, %v2987
        %v2989 = vpop.f32.mrf.mxu0
        %2990 = vmatprep.mubr.f32.mxu0 0.0
        %2991 = vmatmul.mubr.f32.gmra.mxu0 %v2829
        %v2992 = vpop.f32.mrf.mxu0
        %v2993 = vadd.f32 0.0, %v2992
        %v2994 = vpop.f32.mrf.mxu0
        %2995 = vmatprep.mubr.f32.mxu0 0.0
        %2996 = vmatmul.mubr.f32.gmra.mxu0 %v2831
        %v2997 = vpop.f32.mrf.mxu0
        %v2998 = vadd.f32 0.0, %v2997
        %v2999 = vpop.f32.mrf.mxu0
        %3000 = vmatprep.mubr.f32.mxu0 0.0
        %3001 = vmatmul.mubr.f32.gmra.mxu0 %v2833
        %v3002 = vpop.f32.mrf.mxu0
        %v3003 = vadd.f32 0.0, %v3002
        %v3004 = vpop.f32.mrf.mxu0
        %3005 = vmatprep.mubr.f32.mxu0 0.0
        %3006 = vmatmul.mubr.f32.gmra.mxu0 %v2835
        %v3007 = vpop.f32.mrf.mxu0
        %v3008 = vadd.f32 0.0, %v3007
        %v3009 = vpop.f32.mrf.mxu0
        %3010 = vmatprep.mubr.f32.mxu0 0.0
        %3011 = vmatmul.mubr.f32.gmra.mxu0 %v2837
        %v3012 = vpop.f32.mrf.mxu0
        %v3013 = vadd.f32 0.0, %v3012
        %v3014 = vpop.f32.mrf.mxu0
        %3015 = vmatprep.mubr.f32.mxu0 0.0
        %3016 = vmatmul.mubr.f32.gmra.mxu0 %v2839
        %v3017 = vpop.f32.mrf.mxu0
        %v3018 = vadd.f32 0.0, %v3017
        %v3019 = vpop.f32.mrf.mxu0
        %3020 = vmatprep.mubr.f32.mxu0 0.0
        %3021 = vmatmul.mubr.f32.gmra.mxu0 %v2841
        %v3022 = vpop.f32.mrf.mxu0
        %v3023 = vadd.f32 0.0, %v3022
        %v3024 = vpop.f32.mrf.mxu0
        %3025 = vmatprep.mubr.f32.mxu0 0.0
        %3026 = vmatmul.mubr.f32.gmra.mxu0 %v2843
        %v3027 = vpop.f32.mrf.mxu0
        %v3028 = vadd.f32 0.0, %v3027
        %v3029 = vpop.f32.mrf.mxu0
        %3030 = vmatprep.mubr.f32.mxu0 0.0
        %3031 = vmatmul.mubr.f32.gmra.mxu0 %v2845
        %v3032 = vpop.f32.mrf.mxu0
        %v3033 = vadd.f32 0.0, %v3032
        %v3034 = vpop.f32.mrf.mxu0
        %3035 = vmatprep.mubr.f32.mxu0 0.0
        %3036 = vmatmul.mubr.f32.gmra.mxu0 %v2847
        %v3037 = vpop.f32.mrf.mxu0
        %v3038 = vadd.f32 0.0, %v3037
        %v3039 = vpop.f32.mrf.mxu0
        %3040 = vdwg.mxu0
        %3041 = vrot.lane.b32.xlu0 %v971, 32
        %v3042 = vpop.permute.xlu0 %3041
        %3043 = vrot.lane.b32.xlu0 %v972, 32
        %v3044 = vpop.permute.xlu0 %3043
        %3045 = vrot.lane.b32.xlu0 %v973, 32
        %v3046 = vpop.permute.xlu0 %3045
        %3047 = vrot.lane.b32.xlu0 %v974, 32
        %v3048 = vpop.permute.xlu0 %3047
        %3049 = vrot.lane.b32.xlu0 %v975, 32
        %v3050 = vpop.permute.xlu0 %3049
        %3051 = vrot.lane.b32.xlu0 %v976, 32
        %v3052 = vpop.permute.xlu0 %3051
        %3053 = vrot.lane.b32.xlu0 %v977, 32
        %v3054 = vpop.permute.xlu0 %3053
        %3055 = vrot.lane.b32.xlu0 %v978, 32
        %v3056 = vpop.permute.xlu0 %3055
        %3057 = vrot.lane.b32.xlu0 %v979, 32
        %v3058 = vpop.permute.xlu0 %3057
        %3059 = vrot.lane.b32.xlu0 %v980, 32
        %v3060 = vpop.permute.xlu0 %3059
        %3061 = vrot.lane.b32.xlu0 %v981, 32
        %v3062 = vpop.permute.xlu0 %3061
        %3063 = vrot.lane.b32.xlu0 %v982, 32
        %v3064 = vpop.permute.xlu0 %3063
        %3065 = vrot.lane.b32.xlu0 %v983, 32
        %v3066 = vpop.permute.xlu0 %3065
        %3067 = vrot.lane.b32.xlu0 %v984, 32
        %v3068 = vpop.permute.xlu0 %3067
        %3069 = vrot.lane.b32.xlu0 %v985, 32
        %v3070 = vpop.permute.xlu0 %3069
        %3071 = vrot.lane.b32.xlu0 %v986, 32
        %v3072 = vpop.permute.xlu0 %3071
        %3073 = vrot.lane.b32.xlu0 %v798, 32
        %v3074 = vpop.permute.xlu0 %3073
        %3075 = vrot.lane.b32.xlu0 %v802, 32
        %v3076 = vpop.permute.xlu0 %3075
        %3077 = vrot.lane.b32.xlu0 %v808, 32
        %v3078 = vpop.permute.xlu0 %3077
        %3079 = vrot.lane.b32.xlu0 %v812, 32
        %v3080 = vpop.permute.xlu0 %3079
        %3081 = vrot.lane.b32.xlu0 %v818, 32
        %v3082 = vpop.permute.xlu0 %3081
        %3083 = vrot.lane.b32.xlu0 %v822, 32
        %v3084 = vpop.permute.xlu0 %3083
        %3085 = vrot.lane.b32.xlu0 %v828, 32
        %v3086 = vpop.permute.xlu0 %3085
        %3087 = vrot.lane.b32.xlu0 %v832, 32
        %v3088 = vpop.permute.xlu0 %3087
        %3089 = vrot.lane.b32.xlu0 %v838, 32
        %v3090 = vpop.permute.xlu0 %3089
        %3091 = vrot.lane.b32.xlu0 %v842, 32
        %v3092 = vpop.permute.xlu0 %3091
        %3093 = vrot.lane.b32.xlu0 %v848, 32
        %v3094 = vpop.permute.xlu0 %3093
        %3095 = vrot.lane.b32.xlu0 %v852, 32
        %v3096 = vpop.permute.xlu0 %3095
        %3097 = vrot.lane.b32.xlu0 %v858, 32
        %v3098 = vpop.permute.xlu0 %3097
        %3099 = vrot.lane.b32.xlu0 %v862, 32
        %v3100 = vpop.permute.xlu0 %3099
        %3101 = vrot.lane.b32.xlu0 %v868, 32
        %v3102 = vpop.permute.xlu0 %3101
        %3103 = vrot.lane.b32.xlu0 %v872, 32
        %v3104 = vpop.permute.xlu0 %3103
        %v3105 = vsel %vm1226, %v3042, 0
        %v3107 = vsel %vm1226, %v3044, 0
        %v3109 = vsel %vm1226, %v3046, 0
        %v3111 = vsel %vm1226, %v3048, 0
        %v3113 = vsel %vm1226, %v3050, 0
        %v3115 = vsel %vm1226, %v3052, 0
        %v3117 = vsel %vm1226, %v3054, 0
        %v3119 = vsel %vm1226, %v3056, 0
        %v3121 = vsel %vm1226, %v3058, 0
        %v3123 = vsel %vm1226, %v3060, 0
        %v3125 = vsel %vm1226, %v3062, 0
        %v3127 = vsel %vm1226, %v3064, 0
        %v3129 = vsel %vm1226, %v3066, 0
        %v3131 = vsel %vm1226, %v3068, 0
        %v3133 = vsel %vm1226, %v3070, 0
        %v3135 = vsel %vm1226, %v3072, 0
        %v3137 = vsel %vm1226, %v3074, 0
        %v3139 = vsel %vm1226, %v3076, 0
        %v3141 = vsel %vm1226, %v3078, 0
        %v3143 = vsel %vm1226, %v3080, 0
        %v3145 = vsel %vm1226, %v3082, 0
        %v3147 = vsel %vm1226, %v3084, 0
        %v3149 = vsel %vm1226, %v3086, 0
        %v3151 = vsel %vm1226, %v3088, 0
        %v3153 = vsel %vm1226, %v3090, 0
        %v3155 = vsel %vm1226, %v3092, 0
        %v3157 = vsel %vm1226, %v3094, 0
        %v3159 = vsel %vm1226, %v3096, 0
        %v3161 = vsel %vm1226, %v3098, 0
        %v3163 = vsel %vm1226, %v3100, 0
        %v3165 = vsel %vm1226, %v3102, 0
        %v3167 = vsel %vm1226, %v3104, 0
        %3169 = vmatprep.subr.mxu0 0.0
        %3170 = vmatpush1.xpose.msra.mxu0 %v3167
        %3171 = vmatprep.subr.mxu0 0.0
        %3172 = vmatpush1.xpose.msra.mxu0 %v3165
        %3173 = vmatprep.subr.mxu0 0.0
        %3174 = vmatpush1.xpose.msra.mxu0 %v3163
        %3175 = vmatprep.subr.mxu0 0.0
        %3176 = vmatpush1.xpose.msra.mxu0 %v3161
        %3177 = vmatprep.subr.mxu0 0.0
        %3178 = vmatpush1.xpose.msra.mxu0 %v3159
        %3179 = vmatprep.subr.mxu0 0.0
        %3180 = vmatpush1.xpose.msra.mxu0 %v3157
        %3181 = vmatprep.subr.mxu0 0.0
        %3182 = vmatpush1.xpose.msra.mxu0 %v3155
        %3183 = vmatprep.subr.mxu0 0.0
        %3184 = vmatpush1.xpose.msra.mxu0 %v3153
        %3185 = vmatprep.subr.mxu0 0.0
        %3186 = vmatpush1.xpose.msra.mxu0 %v3151
        %3187 = vmatprep.subr.mxu0 0.0
        %3188 = vmatpush1.xpose.msra.mxu0 %v3149
        %3189 = vmatprep.subr.mxu0 0.0
        %3190 = vmatpush1.xpose.msra.mxu0 %v3147
        %3191 = vmatprep.subr.mxu0 0.0
        %3192 = vmatpush1.xpose.msra.mxu0 %v3145
        %3193 = vmatprep.subr.mxu0 0.0
        %3194 = vmatpush1.xpose.msra.mxu0 %v3143
        %3195 = vmatprep.subr.mxu0 0.0
        %3196 = vmatpush1.xpose.msra.mxu0 %v3141
        %3197 = vmatprep.subr.mxu0 0.0
        %3198 = vmatpush1.xpose.msra.mxu0 %v3139
        %3199 = vmatprep.subr.mxu0 0.0
        %3200 = vmatpush1.xpose.msra.mxu0 %v3137
        %3201 = vmatprep.subr.mxu0 0.0
        %3202 = vmatpush2.xpose.msra.mxu0 0.0
        %3203 = vmatprep.subr.mxu0 0.0
        %3204 = vmatpush2.xpose.msra.mxu0 0.0
        %3205 = vmatprep.subr.mxu0 0.0
        %3206 = vmatpush2.xpose.msra.mxu0 0.0
        %3207 = vmatprep.subr.mxu0 0.0
        %3208 = vmatpush2.xpose.msra.mxu0 0.0
        %3209 = vmatprep.subr.mxu0 0.0
        %3210 = vmatpush2.xpose.msra.mxu0 0.0
        %3211 = vmatprep.subr.mxu0 0.0
        %3212 = vmatpush2.xpose.msra.mxu0 0.0
        %3213 = vmatprep.subr.mxu0 0.0
        %3214 = vmatpush2.xpose.msra.mxu0 0.0
        %3215 = vmatprep.subr.mxu0 0.0
        %3216 = vmatpush2.xpose.msra.mxu0 0.0
        %3217 = vmatprep.subr.mxu0 0.0
        %3218 = vmatpush2.xpose.msra.mxu0 0.0
        %3219 = vmatprep.subr.mxu0 0.0
        %3220 = vmatpush2.xpose.msra.mxu0 0.0
        %3221 = vmatprep.subr.mxu0 0.0
        %3222 = vmatpush2.xpose.msra.mxu0 0.0
        %3223 = vmatprep.subr.mxu0 0.0
        %3224 = vmatpush2.xpose.msra.mxu0 0.0
        %3225 = vmatprep.subr.mxu0 0.0
        %3226 = vmatpush2.xpose.msra.mxu0 0.0
        %3227 = vmatprep.subr.mxu0 0.0
        %3228 = vmatpush2.xpose.msra.mxu0 0.0
        %3229 = vmatprep.subr.mxu0 0.0
        %3230 = vmatpush2.xpose.msra.mxu0 0.0
        %3231 = vmatprep.subr.mxu0 0.0
        %3232 = vmatpush2.xpose.msra.mxu0 0.0
        %3233 = vmatprep.mubr.f32.mxu0 0.0
        %3234 = vmatmul.mubr.f32.gmra.mxu0 %v3105
        %v3235 = vpop.f32.mrf.mxu0
        %v3236 = vadd.f32 0.0, %v3235
        %v3237 = vpop.f32.mrf.mxu0
        %3238 = vmatprep.mubr.f32.mxu0 0.0
        %3239 = vmatmul.mubr.f32.gmra.mxu0 %v3107
        %v3240 = vpop.f32.mrf.mxu0
        %v3241 = vadd.f32 0.0, %v3240
        %v3242 = vpop.f32.mrf.mxu0
        %3243 = vmatprep.mubr.f32.mxu0 0.0
        %3244 = vmatmul.mubr.f32.gmra.mxu0 %v3109
        %v3245 = vpop.f32.mrf.mxu0
        %v3246 = vadd.f32 0.0, %v3245
        %v3247 = vpop.f32.mrf.mxu0
        %3248 = vmatprep.mubr.f32.mxu0 0.0
        %3249 = vmatmul.mubr.f32.gmra.mxu0 %v3111
        %v3250 = vpop.f32.mrf.mxu0
        %v3251 = vadd.f32 0.0, %v3250
        %v3252 = vpop.f32.mrf.mxu0
        %3253 = vmatprep.mubr.f32.mxu0 0.0
        %3254 = vmatmul.mubr.f32.gmra.mxu0 %v3113
        %v3255 = vpop.f32.mrf.mxu0
        %v3256 = vadd.f32 0.0, %v3255
        %v3257 = vpop.f32.mrf.mxu0
        %3258 = vmatprep.mubr.f32.mxu0 0.0
        %3259 = vmatmul.mubr.f32.gmra.mxu0 %v3115
        %v3260 = vpop.f32.mrf.mxu0
        %v3261 = vadd.f32 0.0, %v3260
        %v3262 = vpop.f32.mrf.mxu0
        %3263 = vmatprep.mubr.f32.mxu0 0.0
        %3264 = vmatmul.mubr.f32.gmra.mxu0 %v3117
        %v3265 = vpop.f32.mrf.mxu0
        %v3266 = vadd.f32 0.0, %v3265
        %v3267 = vpop.f32.mrf.mxu0
        %3268 = vmatprep.mubr.f32.mxu0 0.0
        %3269 = vmatmul.mubr.f32.gmra.mxu0 %v3119
        %v3270 = vpop.f32.mrf.mxu0
        %v3271 = vadd.f32 0.0, %v3270
        %v3272 = vpop.f32.mrf.mxu0
        %3273 = vmatprep.mubr.f32.mxu0 0.0
        %3274 = vmatmul.mubr.f32.gmra.mxu0 %v3121
        %v3275 = vpop.f32.mrf.mxu0
        %v3276 = vadd.f32 0.0, %v3275
        %v3277 = vpop.f32.mrf.mxu0
        %3278 = vmatprep.mubr.f32.mxu0 0.0
        %3279 = vmatmul.mubr.f32.gmra.mxu0 %v3123
        %v3280 = vpop.f32.mrf.mxu0
        %v3281 = vadd.f32 0.0, %v3280
        %v3282 = vpop.f32.mrf.mxu0
        %3283 = vmatprep.mubr.f32.mxu0 0.0
        %3284 = vmatmul.mubr.f32.gmra.mxu0 %v3125
        %v3285 = vpop.f32.mrf.mxu0
        %v3286 = vadd.f32 0.0, %v3285
        %v3287 = vpop.f32.mrf.mxu0
        %3288 = vmatprep.mubr.f32.mxu0 0.0
        %3289 = vmatmul.mubr.f32.gmra.mxu0 %v3127
        %v3290 = vpop.f32.mrf.mxu0
        %v3291 = vadd.f32 0.0, %v3290
        %v3292 = vpop.f32.mrf.mxu0
        %3293 = vmatprep.mubr.f32.mxu0 0.0
        %3294 = vmatmul.mubr.f32.gmra.mxu0 %v3129
        %v3295 = vpop.f32.mrf.mxu0
        %v3296 = vadd.f32 0.0, %v3295
        %v3297 = vpop.f32.mrf.mxu0
        %3298 = vmatprep.mubr.f32.mxu0 0.0
        %3299 = vmatmul.mubr.f32.gmra.mxu0 %v3131
        %v3300 = vpop.f32.mrf.mxu0
        %v3301 = vadd.f32 0.0, %v3300
        %v3302 = vpop.f32.mrf.mxu0
        %3303 = vmatprep.mubr.f32.mxu0 0.0
        %3304 = vmatmul.mubr.f32.gmra.mxu0 %v3133
        %v3305 = vpop.f32.mrf.mxu0
        %v3306 = vadd.f32 0.0, %v3305
        %v3307 = vpop.f32.mrf.mxu0
        %3308 = vmatprep.mubr.f32.mxu0 0.0
        %3309 = vmatmul.mubr.f32.gmra.mxu0 %v3135
        %v3310 = vpop.f32.mrf.mxu0
        %v3311 = vadd.f32 0.0, %v3310
        %v3312 = vpop.f32.mrf.mxu0
        %3313 = vdwg.mxu0
        %v3314 = vsel %vm1210, %v3236, -1e+30
        %v3315 = vsel %vm1211, %v3241, -1e+30
        %v3316 = vsel %vm1212, %v3246, -1e+30
        %v3317 = vsel %vm1213, %v3251, -1e+30
        %v3318 = vsel %vm1214, %v3256, -1e+30
        %v3319 = vsel %vm1215, %v3261, -1e+30
        %v3320 = vsel %vm1216, %v3266, -1e+30
        %v3321 = vsel %vm1217, %v3271, -1e+30
        %v3322 = vsel %vm1218, %v3276, -1e+30
        %v3323 = vsel %vm1219, %v3281, -1e+30
        %v3324 = vsel %vm1220, %v3286, -1e+30
        %v3325 = vsel %vm1221, %v3291, -1e+30
        %v3326 = vsel %vm1222, %v3296, -1e+30
        %v3327 = vsel %vm1223, %v3301, -1e+30
        %v3328 = vsel %vm1224, %v3306, -1e+30
        %v3329 = vsel %vm1225, %v3311, -1e+30
        %3330 = vmax.xlane.f32.xlu0 %v3314
        %v3331 = vpop.xlane.xlu0 %3330
        %3332 = vmax.xlane.f32.xlu0 %v3315
        %v3333 = vpop.xlane.xlu0 %3332
        %3334 = vmax.xlane.f32.xlu0 %v3316
        %v3335 = vpop.xlane.xlu0 %3334
        %3336 = vmax.xlane.f32.xlu0 %v3317
        %v3337 = vpop.xlane.xlu0 %3336
        %3338 = vmax.xlane.f32.xlu0 %v3318
        %v3339 = vpop.xlane.xlu0 %3338
        %3340 = vmax.xlane.f32.xlu0 %v3319
        %v3341 = vpop.xlane.xlu0 %3340
        %3342 = vmax.xlane.f32.xlu0 %v3320
        %v3343 = vpop.xlane.xlu0 %3342
        %3344 = vmax.xlane.f32.xlu0 %v3321
        %v3345 = vpop.xlane.xlu0 %3344
        %3346 = vmax.xlane.f32.xlu0 %v3322
        %v3347 = vpop.xlane.xlu0 %3346
        %3348 = vmax.xlane.f32.xlu0 %v3323
        %v3349 = vpop.xlane.xlu0 %3348
        %3350 = vmax.xlane.f32.xlu0 %v3324
        %v3351 = vpop.xlane.xlu0 %3350
        %3352 = vmax.xlane.f32.xlu0 %v3325
        %v3353 = vpop.xlane.xlu0 %3352
        %3354 = vmax.xlane.f32.xlu0 %v3326
        %v3355 = vpop.xlane.xlu0 %3354
        %3356 = vmax.xlane.f32.xlu0 %v3327
        %v3357 = vpop.xlane.xlu0 %3356
        %3358 = vmax.xlane.f32.xlu0 %v3328
        %v3359 = vpop.xlane.xlu0 %3358
        %3360 = vmax.xlane.f32.xlu0 %v3329
        %v3361 = vpop.xlane.xlu0 %3360
        %v3362 = vsub.f32 %v3314, %v3331
        %v3363 = vsub.f32 %v3315, %v3333
        %v3364 = vsub.f32 %v3316, %v3335
        %v3365 = vsub.f32 %v3317, %v3337
        %v3366 = vsub.f32 %v3318, %v3339
        %v3367 = vsub.f32 %v3319, %v3341
        %v3368 = vsub.f32 %v3320, %v3343
        %v3369 = vsub.f32 %v3321, %v3345
        %v3370 = vsub.f32 %v3322, %v3347
        %v3371 = vsub.f32 %v3323, %v3349
        %v3372 = vsub.f32 %v3324, %v3351
        %v3373 = vsub.f32 %v3325, %v3353
        %v3374 = vsub.f32 %v3326, %v3355
        %v3375 = vsub.f32 %v3327, %v3357
        %v3376 = vsub.f32 %v3328, %v3359
        %v3377 = vsub.f32 %v3329, %v3361
        %v3378 = vmul.f32 %v3362, 1.442695
        %v3379 = vpow.pop %v3378
        %v3380 = vmul.f32 %v3363, 1.442695
        %v3381 = vpow.pop %v3380
        %v3382 = vmul.f32 %v3364, 1.442695
        %v3383 = vpow.pop %v3382
        %v3384 = vmul.f32 %v3365, 1.442695
        %v3385 = vpow.pop %v3384
        %v3386 = vmul.f32 %v3366, 1.442695
        %v3387 = vpow.pop %v3386
        %v3388 = vmul.f32 %v3367, 1.442695
        %v3389 = vpow.pop %v3388
        %v3390 = vmul.f32 %v3368, 1.442695
        %v3391 = vpow.pop %v3390
        %v3392 = vmul.f32 %v3369, 1.442695
        %v3393 = vpow.pop %v3392
        %v3394 = vmul.f32 %v3370, 1.442695
        %v3395 = vpow.pop %v3394
        %v3396 = vmul.f32 %v3371, 1.442695
        %v3397 = vpow.pop %v3396
        %v3398 = vmul.f32 %v3372, 1.442695
        %v3399 = vpow.pop %v3398
        %v3400 = vmul.f32 %v3373, 1.442695
        %v3401 = vpow.pop %v3400
        %v3402 = vmul.f32 %v3374, 1.442695
        %v3403 = vpow.pop %v3402
        %v3404 = vmul.f32 %v3375, 1.442695
        %v3405 = vpow.pop %v3404
        %v3406 = vmul.f32 %v3376, 1.442695
        %v3407 = vpow.pop %v3406
        %v3408 = vmul.f32 %v3377, 1.442695
        %v3409 = vpow.pop %v3408
        %3410 = vadd.xlane.f32.xlu0 %v3379
        %v3411 = vpop.xlane.xlu0 %3410
        %3412 = vadd.xlane.f32.xlu0 %v3381
        %v3413 = vpop.xlane.xlu0 %3412
        %3414 = vadd.xlane.f32.xlu0 %v3383
        %v3415 = vpop.xlane.xlu0 %3414
        %3416 = vadd.xlane.f32.xlu0 %v3385
        %v3417 = vpop.xlane.xlu0 %3416
        %3418 = vadd.xlane.f32.xlu0 %v3387
        %v3419 = vpop.xlane.xlu0 %3418
        %3420 = vadd.xlane.f32.xlu0 %v3389
        %v3421 = vpop.xlane.xlu0 %3420
        %3422 = vadd.xlane.f32.xlu0 %v3391
        %v3423 = vpop.xlane.xlu0 %3422
        %3424 = vadd.xlane.f32.xlu0 %v3393
        %v3425 = vpop.xlane.xlu0 %3424
        %3426 = vadd.xlane.f32.xlu0 %v3395
        %v3427 = vpop.xlane.xlu0 %3426
        %3428 = vadd.xlane.f32.xlu0 %v3397
        %v3429 = vpop.xlane.xlu0 %3428
        %3430 = vadd.xlane.f32.xlu0 %v3399
        %v3431 = vpop.xlane.xlu0 %3430
        %3432 = vadd.xlane.f32.xlu0 %v3401
        %v3433 = vpop.xlane.xlu0 %3432
        %3434 = vadd.xlane.f32.xlu0 %v3403
        %v3435 = vpop.xlane.xlu0 %3434
        %3436 = vadd.xlane.f32.xlu0 %v3405
        %v3437 = vpop.xlane.xlu0 %3436
        %3438 = vadd.xlane.f32.xlu0 %v3407
        %v3439 = vpop.xlane.xlu0 %3438
        %3440 = vadd.xlane.f32.xlu0 %v3409
        %v3441 = vpop.xlane.xlu0 %3440
        %v3442 = vrcp.pop %v3411
        %v3443 = vmul.f32 %v3379, %v3442
        %v3444 = vrcp.pop %v3413
        %v3445 = vmul.f32 %v3381, %v3444
        %v3446 = vrcp.pop %v3415
        %v3447 = vmul.f32 %v3383, %v3446
        %v3448 = vrcp.pop %v3417
        %v3449 = vmul.f32 %v3385, %v3448
        %v3450 = vrcp.pop %v3419
        %v3451 = vmul.f32 %v3387, %v3450
        %v3452 = vrcp.pop %v3421
        %v3453 = vmul.f32 %v3389, %v3452
        %v3454 = vrcp.pop %v3423
        %v3455 = vmul.f32 %v3391, %v3454
        %v3456 = vrcp.pop %v3425
        %v3457 = vmul.f32 %v3393, %v3456
        %v3458 = vrcp.pop %v3427
        %v3459 = vmul.f32 %v3395, %v3458
        %v3460 = vrcp.pop %v3429
        %v3461 = vmul.f32 %v3397, %v3460
        %v3462 = vrcp.pop %v3431
        %v3463 = vmul.f32 %v3399, %v3462
        %v3464 = vrcp.pop %v3433
        %v3465 = vmul.f32 %v3401, %v3464
        %v3466 = vrcp.pop %v3435
        %v3467 = vmul.f32 %v3403, %v3466
        %v3468 = vrcp.pop %v3437
        %v3469 = vmul.f32 %v3405, %v3468
        %v3470 = vrcp.pop %v3439
        %v3471 = vmul.f32 %v3407, %v3470
        %v3472 = vrcp.pop %v3441
        %v3473 = vmul.f32 %v3409, %v3472
        %3474 = vrot.lane.b32.xlu0 %v909, 32
        %v3475 = vpop.permute.xlu0 %3474
        %3476 = vrot.lane.b32.xlu0 %v912, 32
        %v3477 = vpop.permute.xlu0 %3476
        %3478 = vrot.lane.b32.xlu0 %v917, 32
        %v3479 = vpop.permute.xlu0 %3478
        %3480 = vrot.lane.b32.xlu0 %v920, 32
        %v3481 = vpop.permute.xlu0 %3480
        %3482 = vrot.lane.b32.xlu0 %v925, 32
        %v3483 = vpop.permute.xlu0 %3482
        %3484 = vrot.lane.b32.xlu0 %v928, 32
        %v3485 = vpop.permute.xlu0 %3484
        %3486 = vrot.lane.b32.xlu0 %v933, 32
        %v3487 = vpop.permute.xlu0 %3486
        %3488 = vrot.lane.b32.xlu0 %v936, 32
        %v3489 = vpop.permute.xlu0 %3488
        %3490 = vrot.lane.b32.xlu0 %v941, 32
        %v3491 = vpop.permute.xlu0 %3490
        %3492 = vrot.lane.b32.xlu0 %v944, 32
        %v3493 = vpop.permute.xlu0 %3492
        %3494 = vrot.lane.b32.xlu0 %v949, 32
        %v3495 = vpop.permute.xlu0 %3494
        %3496 = vrot.lane.b32.xlu0 %v952, 32
        %v3497 = vpop.permute.xlu0 %3496
        %3498 = vrot.lane.b32.xlu0 %v957, 32
        %v3499 = vpop.permute.xlu0 %3498
        %3500 = vrot.lane.b32.xlu0 %v960, 32
        %v3501 = vpop.permute.xlu0 %3500
        %3502 = vrot.lane.b32.xlu0 %v965, 32
        %v3503 = vpop.permute.xlu0 %3502
        %3504 = vrot.lane.b32.xlu0 %v968, 32
        %v3505 = vpop.permute.xlu0 %3504
        %3522 = vmatprep.subr.mxu0 0.0
        %3523 = vmatpush1.msra.mxu0 %v3505
        %3524 = vmatprep.subr.mxu0 0.0
        %3525 = vmatpush1.msra.mxu0 %v3503
        %3526 = vmatprep.subr.mxu0 0.0
        %3527 = vmatpush1.msra.mxu0 %v3501
        %3528 = vmatprep.subr.mxu0 0.0
        %3529 = vmatpush1.msra.mxu0 %v3499
        %3530 = vmatprep.subr.mxu0 0.0
        %3531 = vmatpush1.msra.mxu0 %v3497
        %3532 = vmatprep.subr.mxu0 0.0
        %3533 = vmatpush1.msra.mxu0 %v3495
        %3534 = vmatprep.subr.mxu0 0.0
        %3535 = vmatpush1.msra.mxu0 %v3493
        %3536 = vmatprep.subr.mxu0 0.0
        %3537 = vmatpush1.msra.mxu0 %v3491
        %3538 = vmatprep.subr.mxu0 0.0
        %3539 = vmatpush1.msra.mxu0 %v3489
        %3540 = vmatprep.subr.mxu0 0.0
        %3541 = vmatpush1.msra.mxu0 %v3487
        %3542 = vmatprep.subr.mxu0 0.0
        %3543 = vmatpush1.msra.mxu0 %v3485
        %3544 = vmatprep.subr.mxu0 0.0
        %3545 = vmatpush1.msra.mxu0 %v3483
        %3546 = vmatprep.subr.mxu0 0.0
        %3547 = vmatpush1.msra.mxu0 %v3481
        %3548 = vmatprep.subr.mxu0 0.0
        %3549 = vmatpush1.msra.mxu0 %v3479
        %3550 = vmatprep.subr.mxu0 0.0
        %3551 = vmatpush1.msra.mxu0 %v3477
        %3552 = vmatprep.subr.mxu0 0.0
        %3553 = vmatpush1.msra.mxu0 %v3475
        %3554 = vmatprep.subr.mxu0 0.0
        %3555 = vmatpush2.msra.mxu0 0.0
        %3556 = vmatprep.subr.mxu0 0.0
        %3557 = vmatpush2.msra.mxu0 0.0
        %3558 = vmatprep.subr.mxu0 0.0
        %3559 = vmatpush2.msra.mxu0 0.0
        %3560 = vmatprep.subr.mxu0 0.0
        %3561 = vmatpush2.msra.mxu0 0.0
        %3562 = vmatprep.subr.mxu0 0.0
        %3563 = vmatpush2.msra.mxu0 0.0
        %3564 = vmatprep.subr.mxu0 0.0
        %3565 = vmatpush2.msra.mxu0 0.0
        %3566 = vmatprep.subr.mxu0 0.0
        %3567 = vmatpush2.msra.mxu0 0.0
        %3568 = vmatprep.subr.mxu0 0.0
        %3569 = vmatpush2.msra.mxu0 0.0
        %3570 = vmatprep.subr.mxu0 0.0
        %3571 = vmatpush2.msra.mxu0 0.0
        %3572 = vmatprep.subr.mxu0 0.0
        %3573 = vmatpush2.msra.mxu0 0.0
        %3574 = vmatprep.subr.mxu0 0.0
        %3575 = vmatpush2.msra.mxu0 0.0
        %3576 = vmatprep.subr.mxu0 0.0
        %3577 = vmatpush2.msra.mxu0 0.0
        %3578 = vmatprep.subr.mxu0 0.0
        %3579 = vmatpush2.msra.mxu0 0.0
        %3580 = vmatprep.subr.mxu0 0.0
        %3581 = vmatpush2.msra.mxu0 0.0
        %3582 = vmatprep.subr.mxu0 0.0
        %3583 = vmatpush2.msra.mxu0 0.0
        %3584 = vmatprep.subr.mxu0 0.0
        %3585 = vmatpush2.msra.mxu0 0.0
        %3586 = vmatprep.mubr.f32.mxu0 0.0
        %3587 = vmatmul.mubr.f32.gmra.mxu0 %v3443
        %v3588 = vpop.f32.mrf.mxu0
        %v3589 = vadd.f32 0.0, %v3588
        %v3590 = vpop.f32.mrf.mxu0
        %3591 = vmatprep.mubr.f32.mxu0 0.0
        %3592 = vmatmul.mubr.f32.gmra.mxu0 %v3445
        %v3593 = vpop.f32.mrf.mxu0
        %v3594 = vadd.f32 0.0, %v3593
        %v3595 = vpop.f32.mrf.mxu0
        %3596 = vmatprep.mubr.f32.mxu0 0.0
        %3597 = vmatmul.mubr.f32.gmra.mxu0 %v3447
        %v3598 = vpop.f32.mrf.mxu0
        %v3599 = vadd.f32 0.0, %v3598
        %v3600 = vpop.f32.mrf.mxu0
        %3601 = vmatprep.mubr.f32.mxu0 0.0
        %3602 = vmatmul.mubr.f32.gmra.mxu0 %v3449
        %v3603 = vpop.f32.mrf.mxu0
        %v3604 = vadd.f32 0.0, %v3603
        %v3605 = vpop.f32.mrf.mxu0
        %3606 = vmatprep.mubr.f32.mxu0 0.0
        %3607 = vmatmul.mubr.f32.gmra.mxu0 %v3451
        %v3608 = vpop.f32.mrf.mxu0
        %v3609 = vadd.f32 0.0, %v3608
        %v3610 = vpop.f32.mrf.mxu0
        %3611 = vmatprep.mubr.f32.mxu0 0.0
        %3612 = vmatmul.mubr.f32.gmra.mxu0 %v3453
        %v3613 = vpop.f32.mrf.mxu0
        %v3614 = vadd.f32 0.0, %v3613
        %v3615 = vpop.f32.mrf.mxu0
        %3616 = vmatprep.mubr.f32.mxu0 0.0
        %3617 = vmatmul.mubr.f32.gmra.mxu0 %v3455
        %v3618 = vpop.f32.mrf.mxu0
        %v3619 = vadd.f32 0.0, %v3618
        %v3620 = vpop.f32.mrf.mxu0
        %3621 = vmatprep.mubr.f32.mxu0 0.0
        %3622 = vmatmul.mubr.f32.gmra.mxu0 %v3457
        %v3623 = vpop.f32.mrf.mxu0
        %v3624 = vadd.f32 0.0, %v3623
        %v3625 = vpop.f32.mrf.mxu0
        %3626 = vmatprep.mubr.f32.mxu0 0.0
        %3627 = vmatmul.mubr.f32.gmra.mxu0 %v3459
        %v3628 = vpop.f32.mrf.mxu0
        %v3629 = vadd.f32 0.0, %v3628
        %v3630 = vpop.f32.mrf.mxu0
        %3631 = vmatprep.mubr.f32.mxu0 0.0
        %3632 = vmatmul.mubr.f32.gmra.mxu0 %v3461
        %v3633 = vpop.f32.mrf.mxu0
        %v3634 = vadd.f32 0.0, %v3633
        %v3635 = vpop.f32.mrf.mxu0
        %3636 = vmatprep.mubr.f32.mxu0 0.0
        %3637 = vmatmul.mubr.f32.gmra.mxu0 %v3463
        %v3638 = vpop.f32.mrf.mxu0
        %v3639 = vadd.f32 0.0, %v3638
        %v3640 = vpop.f32.mrf.mxu0
        %3641 = vmatprep.mubr.f32.mxu0 0.0
        %3642 = vmatmul.mubr.f32.gmra.mxu0 %v3465
        %v3643 = vpop.f32.mrf.mxu0
        %v3644 = vadd.f32 0.0, %v3643
        %v3645 = vpop.f32.mrf.mxu0
        %3646 = vmatprep.mubr.f32.mxu0 0.0
        %3647 = vmatmul.mubr.f32.gmra.mxu0 %v3467
        %v3648 = vpop.f32.mrf.mxu0
        %v3649 = vadd.f32 0.0, %v3648
        %v3650 = vpop.f32.mrf.mxu0
        %3651 = vmatprep.mubr.f32.mxu0 0.0
        %3652 = vmatmul.mubr.f32.gmra.mxu0 %v3469
        %v3653 = vpop.f32.mrf.mxu0
        %v3654 = vadd.f32 0.0, %v3653
        %v3655 = vpop.f32.mrf.mxu0
        %3656 = vmatprep.mubr.f32.mxu0 0.0
        %3657 = vmatmul.mubr.f32.gmra.mxu0 %v3471
        %v3658 = vpop.f32.mrf.mxu0
        %v3659 = vadd.f32 0.0, %v3658
        %v3660 = vpop.f32.mrf.mxu0
        %3661 = vmatprep.mubr.f32.mxu0 0.0
        %3662 = vmatmul.mubr.f32.gmra.mxu0 %v3473
        %v3663 = vpop.f32.mrf.mxu0
        %v3664 = vadd.f32 0.0, %v3663
        %v3665 = vpop.f32.mrf.mxu0
        %3666 = vdwg.mxu0
        %3683 = vrot.lane.b32.xlu0 %v2337, 32
        %v3684 = vpop.permute.xlu0 %3683
        %3685 = vrot.lane.b32.xlu0 %v2342, 32
        %v3686 = vpop.permute.xlu0 %3685
        %3687 = vrot.lane.b32.xlu0 %v2347, 32
        %v3688 = vpop.permute.xlu0 %3687
        %3689 = vrot.lane.b32.xlu0 %v2352, 32
        %v3690 = vpop.permute.xlu0 %3689
        %3691 = vrot.lane.b32.xlu0 %v2357, 32
        %v3692 = vpop.permute.xlu0 %3691
        %3693 = vrot.lane.b32.xlu0 %v2362, 32
        %v3694 = vpop.permute.xlu0 %3693
        %3695 = vrot.lane.b32.xlu0 %v2367, 32
        %v3696 = vpop.permute.xlu0 %3695
        %3697 = vrot.lane.b32.xlu0 %v2372, 32
        %v3698 = vpop.permute.xlu0 %3697
        %3699 = vrot.lane.b32.xlu0 %v2377, 32
        %v3700 = vpop.permute.xlu0 %3699
        %3701 = vrot.lane.b32.xlu0 %v2382, 32
        %v3702 = vpop.permute.xlu0 %3701
        %3703 = vrot.lane.b32.xlu0 %v2387, 32
        %v3704 = vpop.permute.xlu0 %3703
        %3705 = vrot.lane.b32.xlu0 %v2392, 32
        %v3706 = vpop.permute.xlu0 %3705
        %3707 = vrot.lane.b32.xlu0 %v2397, 32
        %v3708 = vpop.permute.xlu0 %3707
        %3709 = vrot.lane.b32.xlu0 %v2402, 32
        %v3710 = vpop.permute.xlu0 %3709
        %3711 = vrot.lane.b32.xlu0 %v2407, 32
        %v3712 = vpop.permute.xlu0 %3711
        %3713 = vrot.lane.b32.xlu0 %v2412, 32
        %v3714 = vpop.permute.xlu0 %3713
        %3747 = vrot.lane.b32.xlu0 %v2963, 64
        %v3748 = vpop.permute.xlu0 %3747
        %3749 = vrot.lane.b32.xlu0 %v2968, 64
        %v3750 = vpop.permute.xlu0 %3749
        %3751 = vrot.lane.b32.xlu0 %v2973, 64
        %v3752 = vpop.permute.xlu0 %3751
        %3753 = vrot.lane.b32.xlu0 %v2978, 64
        %v3754 = vpop.permute.xlu0 %3753
        %3755 = vrot.lane.b32.xlu0 %v2983, 64
        %v3756 = vpop.permute.xlu0 %3755
        %3757 = vrot.lane.b32.xlu0 %v2988, 64
        %v3758 = vpop.permute.xlu0 %3757
        %3759 = vrot.lane.b32.xlu0 %v2993, 64
        %v3760 = vpop.permute.xlu0 %3759
        %3761 = vrot.lane.b32.xlu0 %v2998, 64
        %v3762 = vpop.permute.xlu0 %3761
        %3763 = vrot.lane.b32.xlu0 %v3003, 64
        %v3764 = vpop.permute.xlu0 %3763
        %3765 = vrot.lane.b32.xlu0 %v3008, 64
        %v3766 = vpop.permute.xlu0 %3765
        %3767 = vrot.lane.b32.xlu0 %v3013, 64
        %v3768 = vpop.permute.xlu0 %3767
        %3769 = vrot.lane.b32.xlu0 %v3018, 64
        %v3770 = vpop.permute.xlu0 %3769
        %3771 = vrot.lane.b32.xlu0 %v3023, 64
        %v3772 = vpop.permute.xlu0 %3771
        %3773 = vrot.lane.b32.xlu0 %v3028, 64
        %v3774 = vpop.permute.xlu0 %3773
        %3775 = vrot.lane.b32.xlu0 %v3033, 64
        %v3776 = vpop.permute.xlu0 %3775
        %3777 = vrot.lane.b32.xlu0 %v3038, 64
        %v3778 = vpop.permute.xlu0 %3777
        %3811 = vrot.lane.b32.xlu0 %v3589, 96
        %v3812 = vpop.permute.xlu0 %3811
        %3813 = vrot.lane.b32.xlu0 %v3594, 96
        %v3814 = vpop.permute.xlu0 %3813
        %3815 = vrot.lane.b32.xlu0 %v3599, 96
        %v3816 = vpop.permute.xlu0 %3815
        %3817 = vrot.lane.b32.xlu0 %v3604, 96
        %v3818 = vpop.permute.xlu0 %3817
        %3819 = vrot.lane.b32.xlu0 %v3609, 96
        %v3820 = vpop.permute.xlu0 %3819
        %3821 = vrot.lane.b32.xlu0 %v3614, 96
        %v3822 = vpop.permute.xlu0 %3821
        %3823 = vrot.lane.b32.xlu0 %v3619, 96
        %v3824 = vpop.permute.xlu0 %3823
        %3825 = vrot.lane.b32.xlu0 %v3624, 96
        %v3826 = vpop.permute.xlu0 %3825
        %3827 = vrot.lane.b32.xlu0 %v3629, 96
        %v3828 = vpop.permute.xlu0 %3827
        %3829 = vrot.lane.b32.xlu0 %v3634, 96
        %v3830 = vpop.permute.xlu0 %3829
        %3831 = vrot.lane.b32.xlu0 %v3639, 96
        %v3832 = vpop.permute.xlu0 %3831
        %3833 = vrot.lane.b32.xlu0 %v3644, 96
        %v3834 = vpop.permute.xlu0 %3833
        %3835 = vrot.lane.b32.xlu0 %v3649, 96
        %v3836 = vpop.permute.xlu0 %3835
        %3837 = vrot.lane.b32.xlu0 %v3654, 96
        %v3838 = vpop.permute.xlu0 %3837
        %3839 = vrot.lane.b32.xlu0 %v3659, 96
        %v3840 = vpop.permute.xlu0 %3839
        %3841 = vrot.lane.b32.xlu0 %v3664, 96
        %v3842 = vpop.permute.xlu0 %3841
        %v3859 = vsel %vm1226, %v1695, %v3684
        %v3860 = vsel %vm1226, %v1700, %v3686
        %v3861 = vsel %vm1226, %v1705, %v3688
        %v3862 = vsel %vm1226, %v1710, %v3690
        %v3863 = vsel %vm1226, %v1715, %v3692
        %v3864 = vsel %vm1226, %v1720, %v3694
        %v3865 = vsel %vm1226, %v1725, %v3696
        %v3866 = vsel %vm1226, %v1730, %v3698
        %v3867 = vsel %vm1226, %v1735, %v3700
        %v3868 = vsel %vm1226, %v1740, %v3702
        %v3869 = vsel %vm1226, %v1745, %v3704
        %v3870 = vsel %vm1226, %v1750, %v3706
        %v3871 = vsel %vm1226, %v1755, %v3708
        %v3872 = vsel %vm1226, %v1760, %v3710
        %v3873 = vsel %vm1226, %v1765, %v3712
        %v3874 = vsel %vm1226, %v1770, %v3714
        %vm3875 = vcmask 523264
        %v3876 = vsel %vm3875, %v3859, %v3748
        %v3877 = vsel %vm3875, %v3860, %v3750
        %v3878 = vsel %vm3875, %v3861, %v3752
        %v3879 = vsel %vm3875, %v3862, %v3754
        %v3880 = vsel %vm3875, %v3863, %v3756
        %v3881 = vsel %vm3875, %v3864, %v3758
        %v3882 = vsel %vm3875, %v3865, %v3760
        %v3883 = vsel %vm3875, %v3866, %v3762
        %v3884 = vsel %vm3875, %v3867, %v3764
        %v3885 = vsel %vm3875, %v3868, %v3766
        %v3886 = vsel %vm3875, %v3869, %v3768
        %v3887 = vsel %vm3875, %v3870, %v3770
        %v3888 = vsel %vm3875, %v3871, %v3772
        %v3889 = vsel %vm3875, %v3872, %v3774
        %v3890 = vsel %vm3875, %v3873, %v3776
        %v3891 = vsel %vm3875, %v3874, %v3778
        %vm3892 = vcmask 785408
        %v3893 = vsel %vm3892, %v3876, %v3812
        %v3894 = vsel %vm3892, %v3877, %v3814
        %v3895 = vsel %vm3892, %v3878, %v3816
        %v3896 = vsel %vm3892, %v3879, %v3818
        %v3897 = vsel %vm3892, %v3880, %v3820
        %v3898 = vsel %vm3892, %v3881, %v3822
        %v3899 = vsel %vm3892, %v3882, %v3824
        %v3900 = vsel %vm3892, %v3883, %v3826
        %v3901 = vsel %vm3892, %v3884, %v3828
        %v3902 = vsel %vm3892, %v3885, %v3830
        %v3903 = vsel %vm3892, %v3886, %v3832
        %v3904 = vsel %vm3892, %v3887, %v3834
        %v3905 = vsel %vm3892, %v3888, %v3836
        %v3906 = vsel %vm3892, %v3889, %v3838
        %v3907 = vsel %vm3892, %v3890, %v3840
        %v3908 = vsel %vm3892, %v3891, %v3842
        %v3909 = vpack.c.bf16 %v3894, %v3893
        %v3910 = vpack.c.bf16 %v3896, %v3895
        %v3911 = vpack.c.bf16 %v3898, %v3897
        %v3912 = vpack.c.bf16 %v3900, %v3899
        %v3913 = vpack.c.bf16 %v3902, %v3901
        %v3914 = vpack.c.bf16 %v3904, %v3903
        %v3915 = vpack.c.bf16 %v3906, %v3905
        %v3916 = vpack.c.bf16 %v3908, %v3907
        %v3917 = vld [vmem:[%s418] sm:$0xf]
        %v3918 = vld [vmem:[%s418 + $0x4] sm:$0xf]
        %v3919 = vld [vmem:[%s418 + $0x8] sm:$0xf]
        %v3920 = vld [vmem:[%s418 + $0xc] sm:$0xf]
        %v3921 = vld [vmem:[%s418 + $0x10] sm:$0xf]
        %v3922 = vld [vmem:[%s418 + $0x14] sm:$0xf]
        %v3923 = vld [vmem:[%s418 + $0x18] sm:$0xf]
        %v3924 = vld [vmem:[%s418 + $0x1c] sm:$0xf]
        %v3925 = vld [vmem:[%s418 + $0x20] sm:$0xf]
        %v3926 = vld [vmem:[%s418 + $0x24] sm:$0xf]
        %v3927 = vld [vmem:[%s418 + $0x28] sm:$0xf]
        %v3928 = vld [vmem:[%s418 + $0x2c] sm:$0xf]
        %v3929 = vld [vmem:[%s418 + $0x30] sm:$0xf]
        %v3930 = vld [vmem:[%s418 + $0x34] sm:$0xf]
        %v3931 = vld [vmem:[%s418 + $0x38] sm:$0xf]
        %v3932 = vld [vmem:[%s418 + $0x3c] sm:$0xf]
        %v3933 = vlaneseq
        %v3934 = vshrl.u32 %v3933, 7
        %v3935 = vsub.s32 1, %v3934
        %v3936 = vrot.slane %v565, %v3935
        %v3953 = vunpack.c.l.b16 %v3917
        %v3954 = vunpack.c.l.b16 %v3918
        %v3955 = vunpack.c.l.b16 %v3919
        %v3956 = vunpack.c.l.b16 %v3920
        %v3957 = vunpack.c.l.b16 %v3921
        %v3958 = vunpack.c.l.b16 %v3922
        %v3959 = vunpack.c.l.b16 %v3923
        %v3960 = vunpack.c.l.b16 %v3924
        %v3961 = vunpack.c.l.b16 %v3925
        %v3962 = vunpack.c.l.b16 %v3926
        %v3963 = vunpack.c.l.b16 %v3927
        %v3964 = vunpack.c.l.b16 %v3928
        %v3965 = vunpack.c.l.b16 %v3929
        %v3966 = vunpack.c.l.b16 %v3930
        %v3967 = vunpack.c.l.b16 %v3931
        %v3968 = vunpack.c.l.b16 %v3932
        %v3969 = vpack.c.b16 %v3954, %v3953
        %v3970 = vpack.c.b16 %v3956, %v3955
        %v3971 = vpack.c.b16 %v3958, %v3957
        %v3972 = vpack.c.b16 %v3960, %v3959
        %v3973 = vpack.c.b16 %v3962, %v3961
        %v3974 = vpack.c.b16 %v3964, %v3963
        %v3975 = vpack.c.b16 %v3966, %v3965
        %v3976 = vpack.c.b16 %v3968, %v3967
        %3985 = vmatprep.subr.bf16.mxu0 0
        %3986 = vmatpush1.bf16.msra.mxu0 %v3976
        %3987 = vmatprep.subr.bf16.mxu0 0
        %3988 = vmatpush1.bf16.msra.mxu0 %v3975
        %3989 = vmatprep.subr.bf16.mxu0 0
        %3990 = vmatpush1.bf16.msra.mxu0 %v3974
        %3991 = vmatprep.subr.bf16.mxu0 0
        %3992 = vmatpush1.bf16.msra.mxu0 %v3973
        %3993 = vmatprep.subr.bf16.mxu0 0
        %3994 = vmatpush1.bf16.msra.mxu0 %v3972
        %3995 = vmatprep.subr.bf16.mxu0 0
        %3996 = vmatpush1.bf16.msra.mxu0 %v3971
        %3997 = vmatprep.subr.bf16.mxu0 0
        %3998 = vmatpush1.bf16.msra.mxu0 %v3970
        %3999 = vmatprep.subr.bf16.mxu0 0
        %4000 = vmatpush1.bf16.msra.mxu0 %v3969
        %4001 = vmatprep.subr.bf16.mxu0 0
        %4002 = vmatpush2.bf16.msra.mxu0 0
        %4003 = vmatprep.subr.bf16.mxu0 0
        %4004 = vmatpush2.bf16.msra.mxu0 0
        %4005 = vmatprep.subr.bf16.mxu0 0
        %4006 = vmatpush2.bf16.msra.mxu0 0
        %4007 = vmatprep.subr.bf16.mxu0 0
        %4008 = vmatpush2.bf16.msra.mxu0 0
        %4009 = vmatprep.subr.bf16.mxu0 0
        %4010 = vmatpush2.bf16.msra.mxu0 0
        %4011 = vmatprep.subr.bf16.mxu0 0
        %4012 = vmatpush2.bf16.msra.mxu0 0
        %4013 = vmatprep.subr.bf16.mxu0 0
        %4014 = vmatpush2.bf16.msra.mxu0 0
        %4015 = vmatprep.subr.bf16.mxu0 0
        %4016 = vmatpush2.bf16.msra.mxu0 0
        %4017 = vmatprep.mubr.bf16.mxu0 0
        %4018 = vmatmul.mubr.bf16.gmra.mxu0 %v3909
        %v4019 = vpop.f32.mrf.mxu0
        %v4020 = vadd.f32 %v3936, %v4019
        %v4021 = vpop.f32.mrf.mxu0
        %v4022 = vpop.f32.mrf.mxu0
        %v4023 = vadd.f32 %v3936, %v4022
        %v4024 = vpop.f32.mrf.mxu0
        %4025 = vmatprep.mubr.bf16.mxu0 0
        %4026 = vmatmul.mubr.bf16.gmra.mxu0 %v3910
        %v4027 = vpop.f32.mrf.mxu0
        %v4028 = vadd.f32 %v3936, %v4027
        %v4029 = vpop.f32.mrf.mxu0
        %v4030 = vpop.f32.mrf.mxu0
        %v4031 = vadd.f32 %v3936, %v4030
        %v4032 = vpop.f32.mrf.mxu0
        %4033 = vmatprep.mubr.bf16.mxu0 0
        %4034 = vmatmul.mubr.bf16.gmra.mxu0 %v3911
        %v4035 = vpop.f32.mrf.mxu0
        %v4036 = vadd.f32 %v3936, %v4035
        %v4037 = vpop.f32.mrf.mxu0
        %v4038 = vpop.f32.mrf.mxu0
        %v4039 = vadd.f32 %v3936, %v4038
        %v4040 = vpop.f32.mrf.mxu0
        %4041 = vmatprep.mubr.bf16.mxu0 0
        %4042 = vmatmul.mubr.bf16.gmra.mxu0 %v3912
        %v4043 = vpop.f32.mrf.mxu0
        %v4044 = vadd.f32 %v3936, %v4043
        %v4045 = vpop.f32.mrf.mxu0
        %v4046 = vpop.f32.mrf.mxu0
        %v4047 = vadd.f32 %v3936, %v4046
        %v4048 = vpop.f32.mrf.mxu0
        %4049 = vmatprep.mubr.bf16.mxu0 0
        %4050 = vmatmul.mubr.bf16.gmra.mxu0 %v3913
        %v4051 = vpop.f32.mrf.mxu0
        %v4052 = vadd.f32 %v3936, %v4051
        %v4053 = vpop.f32.mrf.mxu0
        %v4054 = vpop.f32.mrf.mxu0
        %v4055 = vadd.f32 %v3936, %v4054
        %v4056 = vpop.f32.mrf.mxu0
        %4057 = vmatprep.mubr.bf16.mxu0 0
        %4058 = vmatmul.mubr.bf16.gmra.mxu0 %v3914
        %v4059 = vpop.f32.mrf.mxu0
        %v4060 = vadd.f32 %v3936, %v4059
        %v4061 = vpop.f32.mrf.mxu0
        %v4062 = vpop.f32.mrf.mxu0
        %v4063 = vadd.f32 %v3936, %v4062
        %v4064 = vpop.f32.mrf.mxu0
        %4065 = vmatprep.mubr.bf16.mxu0 0
        %4066 = vmatmul.mubr.bf16.gmra.mxu0 %v3915
        %v4067 = vpop.f32.mrf.mxu0
        %v4068 = vadd.f32 %v3936, %v4067
        %v4069 = vpop.f32.mrf.mxu0
        %v4070 = vpop.f32.mrf.mxu0
        %v4071 = vadd.f32 %v3936, %v4070
        %v4072 = vpop.f32.mrf.mxu0
        %4073 = vmatprep.mubr.bf16.mxu0 0
        %4074 = vmatmul.mubr.bf16.gmra.mxu0 %v3916
        %v4075 = vpop.f32.mrf.mxu0
        %v4076 = vadd.f32 %v3936, %v4075
        %v4077 = vpop.f32.mrf.mxu0
        %v4078 = vpop.f32.mrf.mxu0
        %v4079 = vadd.f32 %v3936, %v4078
        %v4080 = vpop.f32.mrf.mxu0
        %4081 = vdwg.mxu0
        %v4082 = vadd.f32 %v549, %v4020
        %v4083 = vadd.f32 %v550, %v4023
        %v4084 = vadd.f32 %v551, %v4028
        %v4085 = vadd.f32 %v552, %v4031
        %v4086 = vadd.f32 %v553, %v4036
        %v4087 = vadd.f32 %v554, %v4039
        %v4088 = vadd.f32 %v555, %v4044
        %v4089 = vadd.f32 %v556, %v4047
        %v4090 = vadd.f32 %v557, %v4052
        %v4091 = vadd.f32 %v558, %v4055
        %v4092 = vadd.f32 %v559, %v4060
        %v4093 = vadd.f32 %v560, %v4063
        %v4094 = vadd.f32 %v561, %v4068
        %v4095 = vadd.f32 %v562, %v4071
        %v4096 = vadd.f32 %v563, %v4076
        %v4097 = vadd.f32 %v564, %v4079
        %4098 = vadd.xlane.f32.xlu0 %v4082
        %v4099 = vpop.xlane.xlu0 %4098
        %4100 = vadd.xlane.f32.xlu0 %v4083
        %v4101 = vpop.xlane.xlu0 %4100
        %4102 = vadd.xlane.f32.xlu0 %v4084
        %v4103 = vpop.xlane.xlu0 %4102
        %4104 = vadd.xlane.f32.xlu0 %v4085
        %v4105 = vpop.xlane.xlu0 %4104
        %4106 = vadd.xlane.f32.xlu0 %v4086
        %v4107 = vpop.xlane.xlu0 %4106
        %4108 = vadd.xlane.f32.xlu0 %v4087
        %v4109 = vpop.xlane.xlu0 %4108
        %4110 = vadd.xlane.f32.xlu0 %v4088
        %v4111 = vpop.xlane.xlu0 %4110
        %4112 = vadd.xlane.f32.xlu0 %v4089
        %v4113 = vpop.xlane.xlu0 %4112
        %4114 = vadd.xlane.f32.xlu0 %v4090
        %v4115 = vpop.xlane.xlu0 %4114
        %4116 = vadd.xlane.f32.xlu0 %v4091
        %v4117 = vpop.xlane.xlu0 %4116
        %4118 = vadd.xlane.f32.xlu0 %v4092
        %v4119 = vpop.xlane.xlu0 %4118
        %4120 = vadd.xlane.f32.xlu0 %v4093
        %v4121 = vpop.xlane.xlu0 %4120
        %4122 = vadd.xlane.f32.xlu0 %v4094
        %v4123 = vpop.xlane.xlu0 %4122
        %4124 = vadd.xlane.f32.xlu0 %v4095
        %v4125 = vpop.xlane.xlu0 %4124
        %4126 = vadd.xlane.f32.xlu0 %v4096
        %v4127 = vpop.xlane.xlu0 %4126
        %4128 = vadd.xlane.f32.xlu0 %v4097
        %v4129 = vpop.xlane.xlu0 %4128
        %v4130 = vrcp.pop 128.0
        %v4131 = vmul.f32 %v4099, %v4130
        %v4132 = vmul.f32 %v4101, %v4130
        %v4133 = vmul.f32 %v4103, %v4130
        %v4134 = vmul.f32 %v4105, %v4130
        %v4135 = vmul.f32 %v4107, %v4130
        %v4136 = vmul.f32 %v4109, %v4130
        %v4137 = vmul.f32 %v4111, %v4130
        %v4138 = vmul.f32 %v4113, %v4130
        %v4139 = vmul.f32 %v4115, %v4130
        %v4140 = vmul.f32 %v4117, %v4130
        %v4141 = vmul.f32 %v4119, %v4130
        %v4142 = vmul.f32 %v4121, %v4130
        %v4143 = vmul.f32 %v4123, %v4130
        %v4144 = vmul.f32 %v4125, %v4130
        %v4145 = vmul.f32 %v4127, %v4130
        %v4146 = vmul.f32 %v4129, %v4130
        %v4147 = vsub.f32 %v4082, %v4131
        %v4148 = vsub.f32 %v4083, %v4132
        %v4149 = vsub.f32 %v4084, %v4133
        %v4150 = vsub.f32 %v4085, %v4134
        %v4151 = vsub.f32 %v4086, %v4135
        %v4152 = vsub.f32 %v4087, %v4136
        %v4153 = vsub.f32 %v4088, %v4137
        %v4154 = vsub.f32 %v4089, %v4138
        %v4155 = vsub.f32 %v4090, %v4139
        %v4156 = vsub.f32 %v4091, %v4140
        %v4157 = vsub.f32 %v4092, %v4141
        %v4158 = vsub.f32 %v4093, %v4142
        %v4159 = vsub.f32 %v4094, %v4143
        %v4160 = vsub.f32 %v4095, %v4144
        %v4161 = vsub.f32 %v4096, %v4145
        %v4162 = vsub.f32 %v4097, %v4146
        %v4163 = vmul.f32 %v4147, %v4147
        %v4164 = vmul.f32 %v4148, %v4148
        %v4165 = vmul.f32 %v4149, %v4149
        %v4166 = vmul.f32 %v4150, %v4150
        %v4167 = vmul.f32 %v4151, %v4151
        %v4168 = vmul.f32 %v4152, %v4152
        %v4169 = vmul.f32 %v4153, %v4153
        %v4170 = vmul.f32 %v4154, %v4154
        %v4171 = vmul.f32 %v4155, %v4155
        %v4172 = vmul.f32 %v4156, %v4156
        %v4173 = vmul.f32 %v4157, %v4157
        %v4174 = vmul.f32 %v4158, %v4158
        %v4175 = vmul.f32 %v4159, %v4159
        %v4176 = vmul.f32 %v4160, %v4160
        %v4177 = vmul.f32 %v4161, %v4161
        %v4178 = vmul.f32 %v4162, %v4162
        %4179 = vadd.xlane.f32.xlu0 %v4163
        %v4180 = vpop.xlane.xlu0 %4179
        %4181 = vadd.xlane.f32.xlu0 %v4164
        %v4182 = vpop.xlane.xlu0 %4181
        %4183 = vadd.xlane.f32.xlu0 %v4165
        %v4184 = vpop.xlane.xlu0 %4183
        %4185 = vadd.xlane.f32.xlu0 %v4166
        %v4186 = vpop.xlane.xlu0 %4185
        %4187 = vadd.xlane.f32.xlu0 %v4167
        %v4188 = vpop.xlane.xlu0 %4187
        %4189 = vadd.xlane.f32.xlu0 %v4168
        %v4190 = vpop.xlane.xlu0 %4189
        %4191 = vadd.xlane.f32.xlu0 %v4169
        %v4192 = vpop.xlane.xlu0 %4191
        %4193 = vadd.xlane.f32.xlu0 %v4170
        %v4194 = vpop.xlane.xlu0 %4193
        %4195 = vadd.xlane.f32.xlu0 %v4171
        %v4196 = vpop.xlane.xlu0 %4195
        %4197 = vadd.xlane.f32.xlu0 %v4172
        %v4198 = vpop.xlane.xlu0 %4197
        %4199 = vadd.xlane.f32.xlu0 %v4173
        %v4200 = vpop.xlane.xlu0 %4199
        %4201 = vadd.xlane.f32.xlu0 %v4174
        %v4202 = vpop.xlane.xlu0 %4201
        %4203 = vadd.xlane.f32.xlu0 %v4175
        %v4204 = vpop.xlane.xlu0 %4203
        %4205 = vadd.xlane.f32.xlu0 %v4176
        %v4206 = vpop.xlane.xlu0 %4205
        %4207 = vadd.xlane.f32.xlu0 %v4177
        %v4208 = vpop.xlane.xlu0 %4207
        %4209 = vadd.xlane.f32.xlu0 %v4178
        %v4210 = vpop.xlane.xlu0 %4209
        %v4211 = vmul.f32 %v4180, %v4130
        %v4212 = vmul.f32 %v4182, %v4130
        %v4213 = vmul.f32 %v4184, %v4130
        %v4214 = vmul.f32 %v4186, %v4130
        %v4215 = vmul.f32 %v4188, %v4130
        %v4216 = vmul.f32 %v4190, %v4130
        %v4217 = vmul.f32 %v4192, %v4130
        %v4218 = vmul.f32 %v4194, %v4130
        %v4219 = vmul.f32 %v4196, %v4130
        %v4220 = vmul.f32 %v4198, %v4130
        %v4221 = vmul.f32 %v4200, %v4130
        %v4222 = vmul.f32 %v4202, %v4130
        %v4223 = vmul.f32 %v4204, %v4130
        %v4224 = vmul.f32 %v4206, %v4130
        %v4225 = vmul.f32 %v4208, %v4130
        %v4226 = vmul.f32 %v4210, %v4130
        %v4227 = vadd.f32 %v4211, 1e-05
        %v4228 = vadd.f32 %v4212, 1e-05
        %v4229 = vadd.f32 %v4213, 1e-05
        %v4230 = vadd.f32 %v4214, 1e-05
        %v4231 = vadd.f32 %v4215, 1e-05
        %v4232 = vadd.f32 %v4216, 1e-05
        %v4233 = vadd.f32 %v4217, 1e-05
        %v4234 = vadd.f32 %v4218, 1e-05
        %v4235 = vadd.f32 %v4219, 1e-05
        %v4236 = vadd.f32 %v4220, 1e-05
        %v4237 = vadd.f32 %v4221, 1e-05
        %v4238 = vadd.f32 %v4222, 1e-05
        %v4239 = vadd.f32 %v4223, 1e-05
        %v4240 = vadd.f32 %v4224, 1e-05
        %v4241 = vadd.f32 %v4225, 1e-05
        %v4242 = vadd.f32 %v4226, 1e-05
        %v4243 = vrsqrt.pop %v4227
        %v4244 = vrsqrt.pop %v4228
        %v4245 = vrsqrt.pop %v4229
        %v4246 = vrsqrt.pop %v4230
        %v4247 = vrsqrt.pop %v4231
        %v4248 = vrsqrt.pop %v4232
        %v4249 = vrsqrt.pop %v4233
        %v4250 = vrsqrt.pop %v4234
        %v4251 = vrsqrt.pop %v4235
        %v4252 = vrsqrt.pop %v4236
        %v4253 = vrsqrt.pop %v4237
        %v4254 = vrsqrt.pop %v4238
        %v4255 = vrsqrt.pop %v4239
        %v4256 = vrsqrt.pop %v4240
        %v4257 = vrsqrt.pop %v4241
        %v4258 = vrsqrt.pop %v4242
        %v4259 = vmul.f32 %v4147, %v4243
        %v4260 = vmul.f32 %v4148, %v4244
        %v4261 = vmul.f32 %v4149, %v4245
        %v4262 = vmul.f32 %v4150, %v4246
        %v4263 = vmul.f32 %v4151, %v4247
        %v4264 = vmul.f32 %v4152, %v4248
        %v4265 = vmul.f32 %v4153, %v4249
        %v4266 = vmul.f32 %v4154, %v4250
        %v4267 = vmul.f32 %v4155, %v4251
        %v4268 = vmul.f32 %v4156, %v4252
        %v4269 = vmul.f32 %v4157, %v4253
        %v4270 = vmul.f32 %v4158, %v4254
        %v4271 = vmul.f32 %v4159, %v4255
        %v4272 = vmul.f32 %v4160, %v4256
        %v4273 = vmul.f32 %v4161, %v4257
        %v4274 = vmul.f32 %v4162, %v4258
        %v4275 = vlaneseq
        %v4276 = vshrl.u32 %v4275, 7
        %v4277 = vsub.s32 4, %v4276
        %v4278 = vrot.slane %v565, %v4277
        %v4279 = vmul.f32 %v4259, %v4278
        %v4280 = vmul.f32 %v4260, %v4278
        %v4281 = vmul.f32 %v4261, %v4278
        %v4282 = vmul.f32 %v4262, %v4278
        %v4283 = vmul.f32 %v4263, %v4278
        %v4284 = vmul.f32 %v4264, %v4278
        %v4285 = vmul.f32 %v4265, %v4278
        %v4286 = vmul.f32 %v4266, %v4278
        %v4287 = vmul.f32 %v4267, %v4278
        %v4288 = vmul.f32 %v4268, %v4278
        %v4289 = vmul.f32 %v4269, %v4278
        %v4290 = vmul.f32 %v4270, %v4278
        %v4291 = vmul.f32 %v4271, %v4278
        %v4292 = vmul.f32 %v4272, %v4278
        %v4293 = vmul.f32 %v4273, %v4278
        %v4294 = vmul.f32 %v4274, %v4278
        %v4295 = vlaneseq
        %v4296 = vshrl.u32 %v4295, 7
        %v4297 = vsub.s32 5, %v4296
        %v4298 = vrot.slane %v565, %v4297
        %v4299 = vadd.f32 %v4279, %v4298
        %v4300 = vadd.f32 %v4280, %v4298
        %v4301 = vadd.f32 %v4281, %v4298
        %v4302 = vadd.f32 %v4282, %v4298
        %v4303 = vadd.f32 %v4283, %v4298
        %v4304 = vadd.f32 %v4284, %v4298
        %v4305 = vadd.f32 %v4285, %v4298
        %v4306 = vadd.f32 %v4286, %v4298
        %v4307 = vadd.f32 %v4287, %v4298
        %v4308 = vadd.f32 %v4288, %v4298
        %v4309 = vadd.f32 %v4289, %v4298
        %v4310 = vadd.f32 %v4290, %v4298
        %v4311 = vadd.f32 %v4291, %v4298
        %v4312 = vadd.f32 %v4292, %v4298
        %v4313 = vadd.f32 %v4293, %v4298
        %v4314 = vadd.f32 %v4294, %v4298
        %v4315 = vpack.c.bf16 %v4300, %v4299
        %v4316 = vpack.c.bf16 %v4302, %v4301
        %v4317 = vpack.c.bf16 %v4304, %v4303
        %v4318 = vpack.c.bf16 %v4306, %v4305
        %v4319 = vpack.c.bf16 %v4308, %v4307
        %v4320 = vpack.c.bf16 %v4310, %v4309
        %v4321 = vpack.c.bf16 %v4312, %v4311
        %v4322 = vpack.c.bf16 %v4314, %v4313
        %v4323 = vld [vmem:[%s427] sm:$0xff]
        %v4324 = vld [vmem:[%s427 + $0x8] sm:$0xff]
        %v4325 = vld [vmem:[%s427 + $0x10] sm:$0xff]
        %v4326 = vld [vmem:[%s427 + $0x18] sm:$0xff]
        %v4327 = vld [vmem:[%s427 + $0x20] sm:$0xff]
        %v4328 = vld [vmem:[%s427 + $0x28] sm:$0xff]
        %v4329 = vld [vmem:[%s427 + $0x30] sm:$0xff]
        %v4330 = vld [vmem:[%s427 + $0x38] sm:$0xff]
        %v4331 = vld [vmem:[%s427 + $0x40] sm:$0xff]
        %v4332 = vld [vmem:[%s427 + $0x48] sm:$0xff]
        %v4333 = vld [vmem:[%s427 + $0x50] sm:$0xff]
        %v4334 = vld [vmem:[%s427 + $0x58] sm:$0xff]
        %v4335 = vld [vmem:[%s427 + $0x60] sm:$0xff]
        %v4336 = vld [vmem:[%s427 + $0x68] sm:$0xff]
        %v4337 = vld [vmem:[%s427 + $0x70] sm:$0xff]
        %v4338 = vld [vmem:[%s427 + $0x78] sm:$0xff]
        %v4339 = vld [vmem:[%s427 + $0x80] sm:$0xff]
        %v4340 = vld [vmem:[%s427 + $0x88] sm:$0xff]
        %v4341 = vld [vmem:[%s427 + $0x90] sm:$0xff]
        %v4342 = vld [vmem:[%s427 + $0x98] sm:$0xff]
        %v4343 = vld [vmem:[%s427 + $0xa0] sm:$0xff]
        %v4344 = vld [vmem:[%s427 + $0xa8] sm:$0xff]
        %v4345 = vld [vmem:[%s427 + $0xb0] sm:$0xff]
        %v4346 = vld [vmem:[%s427 + $0xb8] sm:$0xff]
        %v4347 = vld [vmem:[%s427 + $0xc0] sm:$0xff]
        %v4348 = vld [vmem:[%s427 + $0xc8] sm:$0xff]
        %v4349 = vld [vmem:[%s427 + $0xd0] sm:$0xff]
        %v4350 = vld [vmem:[%s427 + $0xd8] sm:$0xff]
        %v4351 = vld [vmem:[%s427 + $0xe0] sm:$0xff]
        %v4352 = vld [vmem:[%s427 + $0xe8] sm:$0xff]
        %v4353 = vld [vmem:[%s427 + $0xf0] sm:$0xff]
        %v4354 = vld [vmem:[%s427 + $0xf8] sm:$0xff]
        %v4355 = vld [vmem:[%s427 + $0x100] sm:$0xff]
        %v4356 = vld [vmem:[%s427 + $0x108] sm:$0xff]
        %v4357 = vld [vmem:[%s427 + $0x110] sm:$0xff]
        %v4358 = vld [vmem:[%s427 + $0x118] sm:$0xff]
        %v4359 = vld [vmem:[%s427 + $0x120] sm:$0xff]
        %v4360 = vld [vmem:[%s427 + $0x128] sm:$0xff]
        %v4361 = vld [vmem:[%s427 + $0x130] sm:$0xff]
        %v4362 = vld [vmem:[%s427 + $0x138] sm:$0xff]
        %v4363 = vld [vmem:[%s427 + $0x140] sm:$0xff]
        %v4364 = vld [vmem:[%s427 + $0x148] sm:$0xff]
        %v4365 = vld [vmem:[%s427 + $0x150] sm:$0xff]
        %v4366 = vld [vmem:[%s427 + $0x158] sm:$0xff]
        %v4367 = vld [vmem:[%s427 + $0x160] sm:$0xff]
        %v4368 = vld [vmem:[%s427 + $0x168] sm:$0xff]
        %v4369 = vld [vmem:[%s427 + $0x170] sm:$0xff]
        %v4370 = vld [vmem:[%s427 + $0x178] sm:$0xff]
        %v4371 = vld [vmem:[%s427 + $0x180] sm:$0xff]
        %v4372 = vld [vmem:[%s427 + $0x188] sm:$0xff]
        %v4373 = vld [vmem:[%s427 + $0x190] sm:$0xff]
        %v4374 = vld [vmem:[%s427 + $0x198] sm:$0xff]
        %v4375 = vld [vmem:[%s427 + $0x1a0] sm:$0xff]
        %v4376 = vld [vmem:[%s427 + $0x1a8] sm:$0xff]
        %v4377 = vld [vmem:[%s427 + $0x1b0] sm:$0xff]
        %v4378 = vld [vmem:[%s427 + $0x1b8] sm:$0xff]
        %v4379 = vld [vmem:[%s427 + $0x1c0] sm:$0xff]
        %v4380 = vld [vmem:[%s427 + $0x1c8] sm:$0xff]
        %v4381 = vld [vmem:[%s427 + $0x1d0] sm:$0xff]
        %v4382 = vld [vmem:[%s427 + $0x1d8] sm:$0xff]
        %v4383 = vld [vmem:[%s427 + $0x1e0] sm:$0xff]
        %v4384 = vld [vmem:[%s427 + $0x1e8] sm:$0xff]
        %v4385 = vld [vmem:[%s427 + $0x1f0] sm:$0xff]
        %v4386 = vld [vmem:[%s427 + $0x1f8] sm:$0xff]
        %v4387 = vld [vmem:[%s427 + $0x200] sm:$0xff]
        %v4388 = vld [vmem:[%s427 + $0x208] sm:$0xff]
        %v4389 = vld [vmem:[%s427 + $0x210] sm:$0xff]
        %v4390 = vld [vmem:[%s427 + $0x218] sm:$0xff]
        %v4391 = vld [vmem:[%s427 + $0x220] sm:$0xff]
        %v4392 = vld [vmem:[%s427 + $0x228] sm:$0xff]
        %v4393 = vld [vmem:[%s427 + $0x230] sm:$0xff]
        %v4394 = vld [vmem:[%s427 + $0x238] sm:$0xff]
        %v4395 = vld [vmem:[%s427 + $0x240] sm:$0xff]
        %v4396 = vld [vmem:[%s427 + $0x248] sm:$0xff]
        %v4397 = vld [vmem:[%s427 + $0x250] sm:$0xff]
        %v4398 = vld [vmem:[%s427 + $0x258] sm:$0xff]
        %v4399 = vld [vmem:[%s427 + $0x260] sm:$0xff]
        %v4400 = vld [vmem:[%s427 + $0x268] sm:$0xff]
        %v4401 = vld [vmem:[%s427 + $0x270] sm:$0xff]
        %v4402 = vld [vmem:[%s427 + $0x278] sm:$0xff]
        %v4403 = vld [vmem:[%s427 + $0x280] sm:$0xff]
        %v4404 = vld [vmem:[%s427 + $0x288] sm:$0xff]
        %v4405 = vld [vmem:[%s427 + $0x290] sm:$0xff]
        %v4406 = vld [vmem:[%s427 + $0x298] sm:$0xff]
        %v4407 = vld [vmem:[%s427 + $0x2a0] sm:$0xff]
        %v4408 = vld [vmem:[%s427 + $0x2a8] sm:$0xff]
        %v4409 = vld [vmem:[%s427 + $0x2b0] sm:$0xff]
        %v4410 = vld [vmem:[%s427 + $0x2b8] sm:$0xff]
        %v4411 = vld [vmem:[%s427 + $0x2c0] sm:$0xff]
        %v4412 = vld [vmem:[%s427 + $0x2c8] sm:$0xff]
        %v4413 = vld [vmem:[%s427 + $0x2d0] sm:$0xff]
        %v4414 = vld [vmem:[%s427 + $0x2d8] sm:$0xff]
        %v4415 = vld [vmem:[%s427 + $0x2e0] sm:$0xff]
        %v4416 = vld [vmem:[%s427 + $0x2e8] sm:$0xff]
        %v4417 = vld [vmem:[%s427 + $0x2f0] sm:$0xff]
        %v4418 = vld [vmem:[%s427 + $0x2f8] sm:$0xff]
        %v4419 = vld [vmem:[%s427 + $0x300] sm:$0xff]
        %v4420 = vld [vmem:[%s427 + $0x308] sm:$0xff]
        %v4421 = vld [vmem:[%s427 + $0x310] sm:$0xff]
        %v4422 = vld [vmem:[%s427 + $0x318] sm:$0xff]
        %v4423 = vld [vmem:[%s427 + $0x320] sm:$0xff]
        %v4424 = vld [vmem:[%s427 + $0x328] sm:$0xff]
        %v4425 = vld [vmem:[%s427 + $0x330] sm:$0xff]
        %v4426 = vld [vmem:[%s427 + $0x338] sm:$0xff]
        %v4427 = vld [vmem:[%s427 + $0x340] sm:$0xff]
        %v4428 = vld [vmem:[%s427 + $0x348] sm:$0xff]
        %v4429 = vld [vmem:[%s427 + $0x350] sm:$0xff]
        %v4430 = vld [vmem:[%s427 + $0x358] sm:$0xff]
        %v4431 = vld [vmem:[%s427 + $0x360] sm:$0xff]
        %v4432 = vld [vmem:[%s427 + $0x368] sm:$0xff]
        %v4433 = vld [vmem:[%s427 + $0x370] sm:$0xff]
        %v4434 = vld [vmem:[%s427 + $0x378] sm:$0xff]
        %v4435 = vld [vmem:[%s427 + $0x380] sm:$0xff]
        %v4436 = vld [vmem:[%s427 + $0x388] sm:$0xff]
        %v4437 = vld [vmem:[%s427 + $0x390] sm:$0xff]
        %v4438 = vld [vmem:[%s427 + $0x398] sm:$0xff]
        %v4439 = vld [vmem:[%s427 + $0x3a0] sm:$0xff]
        %v4440 = vld [vmem:[%s427 + $0x3a8] sm:$0xff]
        %v4441 = vld [vmem:[%s427 + $0x3b0] sm:$0xff]
        %v4442 = vld [vmem:[%s427 + $0x3b8] sm:$0xff]
        %v4443 = vld [vmem:[%s427 + $0x3c0] sm:$0xff]
        %v4444 = vld [vmem:[%s427 + $0x3c8] sm:$0xff]
        %v4445 = vld [vmem:[%s427 + $0x3d0] sm:$0xff]
        %v4446 = vld [vmem:[%s427 + $0x3d8] sm:$0xff]
        %v4447 = vld [vmem:[%s427 + $0x3e0] sm:$0xff]
        %v4448 = vld [vmem:[%s427 + $0x3e8] sm:$0xff]
        %v4449 = vld [vmem:[%s427 + $0x3f0] sm:$0xff]
        %v4450 = vld [vmem:[%s427 + $0x3f8] sm:$0xff]
        %v4451 = vlaneseq
        %v4452 = vshrl.u32 %v4451, 7
        %v4453 = vsub.s32 2, %v4452
        %v4454 = vrot.slane %v565, %v4453
        %v4455 = vlaneseq
        %v4456 = vshrl.u32 %v4455, 7
        %v4457 = vsub.s32 2, %v4456
        %v4458 = vrot.slane %v566, %v4457
        %v4459 = vlaneseq
        %v4460 = vshrl.u32 %v4459, 7
        %v4461 = vsub.s32 2, %v4460
        %v4462 = vrot.slane %v567, %v4461
        %v4463 = vlaneseq
        %v4464 = vshrl.u32 %v4463, 7
        %v4465 = vsub.s32 2, %v4464
        %v4466 = vrot.slane %v568, %v4465
        %v4467 = vlaneseq
        %v4468 = vshrl.u32 %v4467, 7
        %v4469 = vsub.s32 2, %v4468
        %v4470 = vrot.slane %v569, %v4469
        %v4471 = vlaneseq
        %v4472 = vshrl.u32 %v4471, 7
        %v4473 = vsub.s32 2, %v4472
        %v4474 = vrot.slane %v570, %v4473
        %v4475 = vlaneseq
        %v4476 = vshrl.u32 %v4475, 7
        %v4477 = vsub.s32 2, %v4476
        %v4478 = vrot.slane %v571, %v4477
        %v4479 = vlaneseq
        %v4480 = vshrl.u32 %v4479, 7
        %v4481 = vsub.s32 2, %v4480
        %v4482 = vrot.slane %v572, %v4481
        %v4483 = vlaneseq
        %v4484 = vshrl.u32 %v4483, 7
        %v4485 = vsub.s32 2, %v4484
        %v4486 = vrot.slane %v573, %v4485
        %v4487 = vlaneseq
        %v4488 = vshrl.u32 %v4487, 7
        %v4489 = vsub.s32 2, %v4488
        %v4490 = vrot.slane %v574, %v4489
        %v4491 = vlaneseq
        %v4492 = vshrl.u32 %v4491, 7
        %v4493 = vsub.s32 2, %v4492
        %v4494 = vrot.slane %v575, %v4493
        %v4495 = vlaneseq
        %v4496 = vshrl.u32 %v4495, 7
        %v4497 = vsub.s32 2, %v4496
        %v4498 = vrot.slane %v576, %v4497
        %v4499 = vlaneseq
        %v4500 = vshrl.u32 %v4499, 7
        %v4501 = vsub.s32 2, %v4500
        %v4502 = vrot.slane %v577, %v4501
        %v4503 = vlaneseq
        %v4504 = vshrl.u32 %v4503, 7
        %v4505 = vsub.s32 2, %v4504
        %v4506 = vrot.slane %v578, %v4505
        %v4507 = vlaneseq
        %v4508 = vshrl.u32 %v4507, 7
        %v4509 = vsub.s32 2, %v4508
        %v4510 = vrot.slane %v579, %v4509
        %v4511 = vlaneseq
        %v4512 = vshrl.u32 %v4511, 7
        %v4513 = vsub.s32 2, %v4512
        %v4514 = vrot.slane %v580, %v4513
        %v4643 = vunpack.c.l.b16 %v4323
        %v4644 = vunpack.c.h.b16 %v4323
        %v4645 = vunpack.c.l.b16 %v4324
        %v4646 = vunpack.c.h.b16 %v4324
        %v4647 = vunpack.c.l.b16 %v4325
        %v4648 = vunpack.c.h.b16 %v4325
        %v4649 = vunpack.c.l.b16 %v4326
        %v4650 = vunpack.c.h.b16 %v4326
        %v4651 = vunpack.c.l.b16 %v4327
        %v4652 = vunpack.c.h.b16 %v4327
        %v4653 = vunpack.c.l.b16 %v4328
        %v4654 = vunpack.c.h.b16 %v4328
        %v4655 = vunpack.c.l.b16 %v4329
        %v4656 = vunpack.c.h.b16 %v4329
        %v4657 = vunpack.c.l.b16 %v4330
        %v4658 = vunpack.c.h.b16 %v4330
        %v4659 = vunpack.c.l.b16 %v4331
        %v4660 = vunpack.c.h.b16 %v4331
        %v4661 = vunpack.c.l.b16 %v4332
        %v4662 = vunpack.c.h.b16 %v4332
        %v4663 = vunpack.c.l.b16 %v4333
        %v4664 = vunpack.c.h.b16 %v4333
        %v4665 = vunpack.c.l.b16 %v4334
        %v4666 = vunpack.c.h.b16 %v4334
        %v4667 = vunpack.c.l.b16 %v4335
        %v4668 = vunpack.c.h.b16 %v4335
        %v4669 = vunpack.c.l.b16 %v4336
        %v4670 = vunpack.c.h.b16 %v4336
        %v4671 = vunpack.c.l.b16 %v4337
        %v4672 = vunpack.c.h.b16 %v4337
        %v4673 = vunpack.c.l.b16 %v4338
        %v4674 = vunpack.c.h.b16 %v4338
        %v4675 = vunpack.c.l.b16 %v4339
        %v4676 = vunpack.c.h.b16 %v4339
        %v4677 = vunpack.c.l.b16 %v4340
        %v4678 = vunpack.c.h.b16 %v4340
        %v4679 = vunpack.c.l.b16 %v4341
        %v4680 = vunpack.c.h.b16 %v4341
        %v4681 = vunpack.c.l.b16 %v4342
        %v4682 = vunpack.c.h.b16 %v4342
        %v4683 = vunpack.c.l.b16 %v4343
        %v4684 = vunpack.c.h.b16 %v4343
        %v4685 = vunpack.c.l.b16 %v4344
        %v4686 = vunpack.c.h.b16 %v4344
        %v4687 = vunpack.c.l.b16 %v4345
        %v4688 = vunpack.c.h.b16 %v4345
        %v4689 = vunpack.c.l.b16 %v4346
        %v4690 = vunpack.c.h.b16 %v4346
        %v4691 = vunpack.c.l.b16 %v4347
        %v4692 = vunpack.c.h.b16 %v4347
        %v4693 = vunpack.c.l.b16 %v4348
        %v4694 = vunpack.c.h.b16 %v4348
        %v4695 = vunpack.c.l.b16 %v4349
        %v4696 = vunpack.c.h.b16 %v4349
        %v4697 = vunpack.c.l.b16 %v4350
        %v4698 = vunpack.c.h.b16 %v4350
        %v4699 = vunpack.c.l.b16 %v4351
        %v4700 = vunpack.c.h.b16 %v4351
        %v4701 = vunpack.c.l.b16 %v4352
        %v4702 = vunpack.c.h.b16 %v4352
        %v4703 = vunpack.c.l.b16 %v4353
        %v4704 = vunpack.c.h.b16 %v4353
        %v4705 = vunpack.c.l.b16 %v4354
        %v4706 = vunpack.c.h.b16 %v4354
        %v4707 = vunpack.c.l.b16 %v4355
        %v4708 = vunpack.c.h.b16 %v4355
        %v4709 = vunpack.c.l.b16 %v4356
        %v4710 = vunpack.c.h.b16 %v4356
        %v4711 = vunpack.c.l.b16 %v4357
        %v4712 = vunpack.c.h.b16 %v4357
        %v4713 = vunpack.c.l.b16 %v4358
        %v4714 = vunpack.c.h.b16 %v4358
        %v4715 = vunpack.c.l.b16 %v4359
        %v4716 = vunpack.c.h.b16 %v4359
        %v4717 = vunpack.c.l.b16 %v4360
        %v4718 = vunpack.c.h.b16 %v4360
        %v4719 = vunpack.c.l.b16 %v4361
        %v4720 = vunpack.c.h.b16 %v4361
        %v4721 = vunpack.c.l.b16 %v4362
        %v4722 = vunpack.c.h.b16 %v4362
        %v4723 = vunpack.c.l.b16 %v4363
        %v4724 = vunpack.c.h.b16 %v4363
        %v4725 = vunpack.c.l.b16 %v4364
        %v4726 = vunpack.c.h.b16 %v4364
        %v4727 = vunpack.c.l.b16 %v4365
        %v4728 = vunpack.c.h.b16 %v4365
        %v4729 = vunpack.c.l.b16 %v4366
        %v4730 = vunpack.c.h.b16 %v4366
        %v4731 = vunpack.c.l.b16 %v4367
        %v4732 = vunpack.c.h.b16 %v4367
        %v4733 = vunpack.c.l.b16 %v4368
        %v4734 = vunpack.c.h.b16 %v4368
        %v4735 = vunpack.c.l.b16 %v4369
        %v4736 = vunpack.c.h.b16 %v4369
        %v4737 = vunpack.c.l.b16 %v4370
        %v4738 = vunpack.c.h.b16 %v4370
        %v4739 = vunpack.c.l.b16 %v4371
        %v4740 = vunpack.c.h.b16 %v4371
        %v4741 = vunpack.c.l.b16 %v4372
        %v4742 = vunpack.c.h.b16 %v4372
        %v4743 = vunpack.c.l.b16 %v4373
        %v4744 = vunpack.c.h.b16 %v4373
        %v4745 = vunpack.c.l.b16 %v4374
        %v4746 = vunpack.c.h.b16 %v4374
        %v4747 = vunpack.c.l.b16 %v4375
        %v4748 = vunpack.c.h.b16 %v4375
        %v4749 = vunpack.c.l.b16 %v4376
        %v4750 = vunpack.c.h.b16 %v4376
        %v4751 = vunpack.c.l.b16 %v4377
        %v4752 = vunpack.c.h.b16 %v4377
        %v4753 = vunpack.c.l.b16 %v4378
        %v4754 = vunpack.c.h.b16 %v4378
        %v4755 = vunpack.c.l.b16 %v4379
        %v4756 = vunpack.c.h.b16 %v4379
        %v4757 = vunpack.c.l.b16 %v4380
        %v4758 = vunpack.c.h.b16 %v4380
        %v4759 = vunpack.c.l.b16 %v4381
        %v4760 = vunpack.c.h.b16 %v4381
        %v4761 = vunpack.c.l.b16 %v4382
        %v4762 = vunpack.c.h.b16 %v4382
        %v4763 = vunpack.c.l.b16 %v4383
        %v4764 = vunpack.c.h.b16 %v4383
        %v4765 = vunpack.c.l.b16 %v4384
        %v4766 = vunpack.c.h.b16 %v4384
        %v4767 = vunpack.c.l.b16 %v4385
        %v4768 = vunpack.c.h.b16 %v4385
        %v4769 = vunpack.c.l.b16 %v4386
        %v4770 = vunpack.c.h.b16 %v4386
        %v4771 = vunpack.c.l.b16 %v4387
        %v4772 = vunpack.c.h.b16 %v4387
        %v4773 = vunpack.c.l.b16 %v4388
        %v4774 = vunpack.c.h.b16 %v4388
        %v4775 = vunpack.c.l.b16 %v4389
        %v4776 = vunpack.c.h.b16 %v4389
        %v4777 = vunpack.c.l.b16 %v4390
        %v4778 = vunpack.c.h.b16 %v4390
        %v4779 = vunpack.c.l.b16 %v4391
        %v4780 = vunpack.c.h.b16 %v4391
        %v4781 = vunpack.c.l.b16 %v4392
        %v4782 = vunpack.c.h.b16 %v4392
        %v4783 = vunpack.c.l.b16 %v4393
        %v4784 = vunpack.c.h.b16 %v4393
        %v4785 = vunpack.c.l.b16 %v4394
        %v4786 = vunpack.c.h.b16 %v4394
        %v4787 = vunpack.c.l.b16 %v4395
        %v4788 = vunpack.c.h.b16 %v4395
        %v4789 = vunpack.c.l.b16 %v4396
        %v4790 = vunpack.c.h.b16 %v4396
        %v4791 = vunpack.c.l.b16 %v4397
        %v4792 = vunpack.c.h.b16 %v4397
        %v4793 = vunpack.c.l.b16 %v4398
        %v4794 = vunpack.c.h.b16 %v4398
        %v4795 = vunpack.c.l.b16 %v4399
        %v4796 = vunpack.c.h.b16 %v4399
        %v4797 = vunpack.c.l.b16 %v4400
        %v4798 = vunpack.c.h.b16 %v4400
        %v4799 = vunpack.c.l.b16 %v4401
        %v4800 = vunpack.c.h.b16 %v4401
        %v4801 = vunpack.c.l.b16 %v4402
        %v4802 = vunpack.c.h.b16 %v4402
        %v4803 = vunpack.c.l.b16 %v4403
        %v4804 = vunpack.c.h.b16 %v4403
        %v4805 = vunpack.c.l.b16 %v4404
        %v4806 = vunpack.c.h.b16 %v4404
        %v4807 = vunpack.c.l.b16 %v4405
        %v4808 = vunpack.c.h.b16 %v4405
        %v4809 = vunpack.c.l.b16 %v4406
        %v4810 = vunpack.c.h.b16 %v4406
        %v4811 = vunpack.c.l.b16 %v4407
        %v4812 = vunpack.c.h.b16 %v4407
        %v4813 = vunpack.c.l.b16 %v4408
        %v4814 = vunpack.c.h.b16 %v4408
        %v4815 = vunpack.c.l.b16 %v4409
        %v4816 = vunpack.c.h.b16 %v4409
        %v4817 = vunpack.c.l.b16 %v4410
        %v4818 = vunpack.c.h.b16 %v4410
        %v4819 = vunpack.c.l.b16 %v4411
        %v4820 = vunpack.c.h.b16 %v4411
        %v4821 = vunpack.c.l.b16 %v4412
        %v4822 = vunpack.c.h.b16 %v4412
        %v4823 = vunpack.c.l.b16 %v4413
        %v4824 = vunpack.c.h.b16 %v4413
        %v4825 = vunpack.c.l.b16 %v4414
        %v4826 = vunpack.c.h.b16 %v4414
        %v4827 = vunpack.c.l.b16 %v4415
        %v4828 = vunpack.c.h.b16 %v4415
        %v4829 = vunpack.c.l.b16 %v4416
        %v4830 = vunpack.c.h.b16 %v4416
        %v4831 = vunpack.c.l.b16 %v4417
        %v4832 = vunpack.c.h.b16 %v4417
        %v4833 = vunpack.c.l.b16 %v4418
        %v4834 = vunpack.c.h.b16 %v4418
        %v4835 = vunpack.c.l.b16 %v4419
        %v4836 = vunpack.c.h.b16 %v4419
        %v4837 = vunpack.c.l.b16 %v4420
        %v4838 = vunpack.c.h.b16 %v4420
        %v4839 = vunpack.c.l.b16 %v4421
        %v4840 = vunpack.c.h.b16 %v4421
        %v4841 = vunpack.c.l.b16 %v4422
        %v4842 = vunpack.c.h.b16 %v4422
        %v4843 = vunpack.c.l.b16 %v4423
        %v4844 = vunpack.c.h.b16 %v4423
        %v4845 = vunpack.c.l.b16 %v4424
        %v4846 = vunpack.c.h.b16 %v4424
        %v4847 = vunpack.c.l.b16 %v4425
        %v4848 = vunpack.c.h.b16 %v4425
        %v4849 = vunpack.c.l.b16 %v4426
        %v4850 = vunpack.c.h.b16 %v4426
        %v4851 = vunpack.c.l.b16 %v4427
        %v4852 = vunpack.c.h.b16 %v4427
        %v4853 = vunpack.c.l.b16 %v4428
        %v4854 = vunpack.c.h.b16 %v4428
        %v4855 = vunpack.c.l.b16 %v4429
        %v4856 = vunpack.c.h.b16 %v4429
        %v4857 = vunpack.c.l.b16 %v4430
        %v4858 = vunpack.c.h.b16 %v4430
        %v4859 = vunpack.c.l.b16 %v4431
        %v4860 = vunpack.c.h.b16 %v4431
        %v4861 = vunpack.c.l.b16 %v4432
        %v4862 = vunpack.c.h.b16 %v4432
        %v4863 = vunpack.c.l.b16 %v4433
        %v4864 = vunpack.c.h.b16 %v4433
        %v4865 = vunpack.c.l.b16 %v4434
        %v4866 = vunpack.c.h.b16 %v4434
        %v4867 = vunpack.c.l.b16 %v4435
        %v4868 = vunpack.c.h.b16 %v4435
        %v4869 = vunpack.c.l.b16 %v4436
        %v4870 = vunpack.c.h.b16 %v4436
        %v4871 = vunpack.c.l.b16 %v4437
        %v4872 = vunpack.c.h.b16 %v4437
        %v4873 = vunpack.c.l.b16 %v4438
        %v4874 = vunpack.c.h.b16 %v4438
        %v4875 = vunpack.c.l.b16 %v4439
        %v4876 = vunpack.c.h.b16 %v4439
        %v4877 = vunpack.c.l.b16 %v4440
        %v4878 = vunpack.c.h.b16 %v4440
        %v4879 = vunpack.c.l.b16 %v4441
        %v4880 = vunpack.c.h.b16 %v4441
        %v4881 = vunpack.c.l.b16 %v4442
        %v4882 = vunpack.c.h.b16 %v4442
        %v4883 = vunpack.c.l.b16 %v4443
        %v4884 = vunpack.c.h.b16 %v4443
        %v4885 = vunpack.c.l.b16 %v4444
        %v4886 = vunpack.c.h.b16 %v4444
        %v4887 = vunpack.c.l.b16 %v4445
        %v4888 = vunpack.c.h.b16 %v4445
        %v4889 = vunpack.c.l.b16 %v4446
        %v4890 = vunpack.c.h.b16 %v4446
        %v4891 = vunpack.c.l.b16 %v4447
        %v4892 = vunpack.c.h.b16 %v4447
        %v4893 = vunpack.c.l.b16 %v4448
        %v4894 = vunpack.c.h.b16 %v4448
        %v4895 = vunpack.c.l.b16 %v4449
        %v4896 = vunpack.c.h.b16 %v4449
        %v4897 = vunpack.c.l.b16 %v4450
        %v4898 = vunpack.c.h.b16 %v4450
        %v4899 = vpack.c.b16 %v4659, %v4643
        %v4900 = vpack.c.b16 %v4660, %v4644
        %v4901 = vpack.c.b16 %v4661, %v4645
        %v4902 = vpack.c.b16 %v4662, %v4646
        %v4903 = vpack.c.b16 %v4663, %v4647
        %v4904 = vpack.c.b16 %v4664, %v4648
        %v4905 = vpack.c.b16 %v4665, %v4649
        %v4906 = vpack.c.b16 %v4666, %v4650
        %v4907 = vpack.c.b16 %v4667, %v4651
        %v4908 = vpack.c.b16 %v4668, %v4652
        %v4909 = vpack.c.b16 %v4669, %v4653
        %v4910 = vpack.c.b16 %v4670, %v4654
        %v4911 = vpack.c.b16 %v4671, %v4655
        %v4912 = vpack.c.b16 %v4672, %v4656
        %v4913 = vpack.c.b16 %v4673, %v4657
        %v4914 = vpack.c.b16 %v4674, %v4658
        %v4915 = vpack.c.b16 %v4691, %v4675
        %v4916 = vpack.c.b16 %v4692, %v4676
        %v4917 = vpack.c.b16 %v4693, %v4677
        %v4918 = vpack.c.b16 %v4694, %v4678
        %v4919 = vpack.c.b16 %v4695, %v4679
        %v4920 = vpack.c.b16 %v4696, %v4680
        %v4921 = vpack.c.b16 %v4697, %v4681
        %v4922 = vpack.c.b16 %v4698, %v4682
        %v4923 = vpack.c.b16 %v4699, %v4683
        %v4924 = vpack.c.b16 %v4700, %v4684
        %v4925 = vpack.c.b16 %v4701, %v4685
        %v4926 = vpack.c.b16 %v4702, %v4686
        %v4927 = vpack.c.b16 %v4703, %v4687
        %v4928 = vpack.c.b16 %v4704, %v4688
        %v4929 = vpack.c.b16 %v4705, %v4689
        %v4930 = vpack.c.b16 %v4706, %v4690
        %v4931 = vpack.c.b16 %v4723, %v4707
        %v4932 = vpack.c.b16 %v4724, %v4708
        %v4933 = vpack.c.b16 %v4725, %v4709
        %v4934 = vpack.c.b16 %v4726, %v4710
        %v4935 = vpack.c.b16 %v4727, %v4711
        %v4936 = vpack.c.b16 %v4728, %v4712
        %v4937 = vpack.c.b16 %v4729, %v4713
        %v4938 = vpack.c.b16 %v4730, %v4714
        %v4939 = vpack.c.b16 %v4731, %v4715
        %v4940 = vpack.c.b16 %v4732, %v4716
        %v4941 = vpack.c.b16 %v4733, %v4717
        %v4942 = vpack.c.b16 %v4734, %v4718
        %v4943 = vpack.c.b16 %v4735, %v4719
        %v4944 = vpack.c.b16 %v4736, %v4720
        %v4945 = vpack.c.b16 %v4737, %v4721
        %v4946 = vpack.c.b16 %v4738, %v4722
        %v4947 = vpack.c.b16 %v4755, %v4739
        %v4948 = vpack.c.b16 %v4756, %v4740
        %v4949 = vpack.c.b16 %v4757, %v4741
        %v4950 = vpack.c.b16 %v4758, %v4742
        %v4951 = vpack.c.b16 %v4759, %v4743
        %v4952 = vpack.c.b16 %v4760, %v4744
        %v4953 = vpack.c.b16 %v4761, %v4745
        %v4954 = vpack.c.b16 %v4762, %v4746
        %v4955 = vpack.c.b16 %v4763, %v4747
        %v4956 = vpack.c.b16 %v4764, %v4748
        %v4957 = vpack.c.b16 %v4765, %v4749
        %v4958 = vpack.c.b16 %v4766, %v4750
        %v4959 = vpack.c.b16 %v4767, %v4751
        %v4960 = vpack.c.b16 %v4768, %v4752
        %v4961 = vpack.c.b16 %v4769, %v4753
        %v4962 = vpack.c.b16 %v4770, %v4754
        %v4963 = vpack.c.b16 %v4787, %v4771
        %v4964 = vpack.c.b16 %v4788, %v4772
        %v4965 = vpack.c.b16 %v4789, %v4773
        %v4966 = vpack.c.b16 %v4790, %v4774
        %v4967 = vpack.c.b16 %v4791, %v4775
        %v4968 = vpack.c.b16 %v4792, %v4776
        %v4969 = vpack.c.b16 %v4793, %v4777
        %v4970 = vpack.c.b16 %v4794, %v4778
        %v4971 = vpack.c.b16 %v4795, %v4779
        %v4972 = vpack.c.b16 %v4796, %v4780
        %v4973 = vpack.c.b16 %v4797, %v4781
        %v4974 = vpack.c.b16 %v4798, %v4782
        %v4975 = vpack.c.b16 %v4799, %v4783
        %v4976 = vpack.c.b16 %v4800, %v4784
        %v4977 = vpack.c.b16 %v4801, %v4785
        %v4978 = vpack.c.b16 %v4802, %v4786
        %v4979 = vpack.c.b16 %v4819, %v4803
        %v4980 = vpack.c.b16 %v4820, %v4804
        %v4981 = vpack.c.b16 %v4821, %v4805
        %v4982 = vpack.c.b16 %v4822, %v4806
        %v4983 = vpack.c.b16 %v4823, %v4807
        %v4984 = vpack.c.b16 %v4824, %v4808
        %v4985 = vpack.c.b16 %v4825, %v4809
        %v4986 = vpack.c.b16 %v4826, %v4810
        %v4987 = vpack.c.b16 %v4827, %v4811
        %v4988 = vpack.c.b16 %v4828, %v4812
        %v4989 = vpack.c.b16 %v4829, %v4813
        %v4990 = vpack.c.b16 %v4830, %v4814
        %v4991 = vpack.c.b16 %v4831, %v4815
        %v4992 = vpack.c.b16 %v4832, %v4816
        %v4993 = vpack.c.b16 %v4833, %v4817
        %v4994 = vpack.c.b16 %v4834, %v4818
        %v4995 = vpack.c.b16 %v4851, %v4835
        %v4996 = vpack.c.b16 %v4852, %v4836
        %v4997 = vpack.c.b16 %v4853, %v4837
        %v4998 = vpack.c.b16 %v4854, %v4838
        %v4999 = vpack.c.b16 %v4855, %v4839
        %v5000 = vpack.c.b16 %v4856, %v4840
        %v5001 = vpack.c.b16 %v4857, %v4841
        %v5002 = vpack.c.b16 %v4858, %v4842
        %v5003 = vpack.c.b16 %v4859, %v4843
        %v5004 = vpack.c.b16 %v4860, %v4844
        %v5005 = vpack.c.b16 %v4861, %v4845
        %v5006 = vpack.c.b16 %v4862, %v4846
        %v5007 = vpack.c.b16 %v4863, %v4847
        %v5008 = vpack.c.b16 %v4864, %v4848
        %v5009 = vpack.c.b16 %v4865, %v4849
        %v5010 = vpack.c.b16 %v4866, %v4850
        %v5011 = vpack.c.b16 %v4883, %v4867
        %v5012 = vpack.c.b16 %v4884, %v4868
        %v5013 = vpack.c.b16 %v4885, %v4869
        %v5014 = vpack.c.b16 %v4886, %v4870
        %v5015 = vpack.c.b16 %v4887, %v4871
        %v5016 = vpack.c.b16 %v4888, %v4872
        %v5017 = vpack.c.b16 %v4889, %v4873
        %v5018 = vpack.c.b16 %v4890, %v4874
        %v5019 = vpack.c.b16 %v4891, %v4875
        %v5020 = vpack.c.b16 %v4892, %v4876
        %v5021 = vpack.c.b16 %v4893, %v4877
        %v5022 = vpack.c.b16 %v4894, %v4878
        %v5023 = vpack.c.b16 %v4895, %v4879
        %v5024 = vpack.c.b16 %v4896, %v4880
        %v5025 = vpack.c.b16 %v4897, %v4881
        %v5026 = vpack.c.b16 %v4898, %v4882
        %5155 = vmatprep.subr.bf16.mxu0 %v5012
        %5156 = vmatpush1.bf16.msra.mxu0 %v5011
        %5157 = vmatprep.subr.bf16.mxu0 %v4996
        %5158 = vmatpush1.bf16.msra.mxu0 %v4995
        %5159 = vmatprep.subr.bf16.mxu0 %v4980
        %5160 = vmatpush1.bf16.msra.mxu0 %v4979
        %5161 = vmatprep.subr.bf16.mxu0 %v4964
        %5162 = vmatpush1.bf16.msra.mxu0 %v4963
        %5163 = vmatprep.subr.bf16.mxu0 %v4948
        %5164 = vmatpush1.bf16.msra.mxu0 %v4947
        %5165 = vmatprep.subr.bf16.mxu0 %v4932
        %5166 = vmatpush1.bf16.msra.mxu0 %v4931
        %5167 = vmatprep.subr.bf16.mxu0 %v4916
        %5168 = vmatpush1.bf16.msra.mxu0 %v4915
        %5169 = vmatprep.subr.bf16.mxu0 %v4900
        %5170 = vmatpush1.bf16.msra.mxu0 %v4899
        %5171 = vmatprep.subr.bf16.mxu0 0
        %5172 = vmatpush2.bf16.msra.mxu0 0
        %5173 = vmatprep.subr.bf16.mxu0 0
        %5174 = vmatpush2.bf16.msra.mxu0 0
        %5175 = vmatprep.subr.bf16.mxu0 0
        %5176 = vmatpush2.bf16.msra.mxu0 0
        %5177 = vmatprep.subr.bf16.mxu0 0
        %5178 = vmatpush2.bf16.msra.mxu0 0
        %5179 = vmatprep.subr.bf16.mxu0 0
        %5180 = vmatpush2.bf16.msra.mxu0 0
        %5181 = vmatprep.subr.bf16.mxu0 0
        %5182 = vmatpush2.bf16.msra.mxu0 0
        %5183 = vmatprep.subr.bf16.mxu0 0
        %5184 = vmatpush2.bf16.msra.mxu0 0
        %5185 = vmatprep.subr.bf16.mxu0 0
        %5186 = vmatpush2.bf16.msra.mxu0 0
        %5187 = vmatprep.mubr.bf16.mxu0 0
        %5188 = vmatmul.mubr.bf16.gmra.mxu0 %v4315
        %v5189 = vpop.f32.mrf.mxu0
        %v5190 = vadd.f32 %v4454, %v5189
        %v5191 = vpop.f32.mrf.mxu0
        %v5192 = vadd.f32 %v4458, %v5191
        %v5193 = vpop.f32.mrf.mxu0
        %v5194 = vadd.f32 %v4454, %v5193
        %v5195 = vpop.f32.mrf.mxu0
        %v5196 = vadd.f32 %v4458, %v5195
        %5197 = vmatprep.mubr.bf16.mxu0 0
        %5198 = vmatmul.mubr.bf16.gmra.mxu0 %v4316
        %v5199 = vpop.f32.mrf.mxu0
        %v5200 = vadd.f32 %v4454, %v5199
        %v5201 = vpop.f32.mrf.mxu0
        %v5202 = vadd.f32 %v4458, %v5201
        %v5203 = vpop.f32.mrf.mxu0
        %v5204 = vadd.f32 %v4454, %v5203
        %v5205 = vpop.f32.mrf.mxu0
        %v5206 = vadd.f32 %v4458, %v5205
        %5207 = vmatprep.mubr.bf16.mxu0 0
        %5208 = vmatmul.mubr.bf16.gmra.mxu0 %v4317
        %v5209 = vpop.f32.mrf.mxu0
        %v5210 = vadd.f32 %v4454, %v5209
        %v5211 = vpop.f32.mrf.mxu0
        %v5212 = vadd.f32 %v4458, %v5211
        %v5213 = vpop.f32.mrf.mxu0
        %v5214 = vadd.f32 %v4454, %v5213
        %v5215 = vpop.f32.mrf.mxu0
        %v5216 = vadd.f32 %v4458, %v5215
        %5217 = vmatprep.mubr.bf16.mxu0 0
        %5218 = vmatmul.mubr.bf16.gmra.mxu0 %v4318
        %v5219 = vpop.f32.mrf.mxu0
        %v5220 = vadd.f32 %v4454, %v5219
        %v5221 = vpop.f32.mrf.mxu0
        %v5222 = vadd.f32 %v4458, %v5221
        %v5223 = vpop.f32.mrf.mxu0
        %v5224 = vadd.f32 %v4454, %v5223
        %v5225 = vpop.f32.mrf.mxu0
        %v5226 = vadd.f32 %v4458, %v5225
        %5227 = vmatprep.mubr.bf16.mxu0 0
        %5228 = vmatmul.mubr.bf16.gmra.mxu0 %v4319
        %v5229 = vpop.f32.mrf.mxu0
        %v5230 = vadd.f32 %v4454, %v5229
        %v5231 = vpop.f32.mrf.mxu0
        %v5232 = vadd.f32 %v4458, %v5231
        %v5233 = vpop.f32.mrf.mxu0
        %v5234 = vadd.f32 %v4454, %v5233
        %v5235 = vpop.f32.mrf.mxu0
        %v5236 = vadd.f32 %v4458, %v5235
        %5237 = vmatprep.mubr.bf16.mxu0 0
        %5238 = vmatmul.mubr.bf16.gmra.mxu0 %v4320
        %v5239 = vpop.f32.mrf.mxu0
        %v5240 = vadd.f32 %v4454, %v5239
        %v5241 = vpop.f32.mrf.mxu0
        %v5242 = vadd.f32 %v4458, %v5241
        %v5243 = vpop.f32.mrf.mxu0
        %v5244 = vadd.f32 %v4454, %v5243
        %v5245 = vpop.f32.mrf.mxu0
        %v5246 = vadd.f32 %v4458, %v5245
        %5247 = vmatprep.mubr.bf16.mxu0 0
        %5248 = vmatmul.mubr.bf16.gmra.mxu0 %v4321
        %v5249 = vpop.f32.mrf.mxu0
        %v5250 = vadd.f32 %v4454, %v5249
        %v5251 = vpop.f32.mrf.mxu0
        %v5252 = vadd.f32 %v4458, %v5251
        %v5253 = vpop.f32.mrf.mxu0
        %v5254 = vadd.f32 %v4454, %v5253
        %v5255 = vpop.f32.mrf.mxu0
        %v5256 = vadd.f32 %v4458, %v5255
        %5257 = vmatprep.mubr.bf16.mxu0 0
        %5258 = vmatmul.mubr.bf16.gmra.mxu0 %v4322
        %v5259 = vpop.f32.mrf.mxu0
        %v5260 = vadd.f32 %v4454, %v5259
        %v5261 = vpop.f32.mrf.mxu0
        %v5262 = vadd.f32 %v4458, %v5261
        %v5263 = vpop.f32.mrf.mxu0
        %v5264 = vadd.f32 %v4454, %v5263
        %v5265 = vpop.f32.mrf.mxu0
        %v5266 = vadd.f32 %v4458, %v5265
        %5267 = vdwg.mxu0
        %5268 = vmatprep.subr.bf16.mxu0 %v5014
        %5269 = vmatpush1.bf16.msra.mxu0 %v5013
        %5270 = vmatprep.subr.bf16.mxu0 %v4998
        %5271 = vmatpush1.bf16.msra.mxu0 %v4997
        %5272 = vmatprep.subr.bf16.mxu0 %v4982
        %5273 = vmatpush1.bf16.msra.mxu0 %v4981
        %5274 = vmatprep.subr.bf16.mxu0 %v4966
        %5275 = vmatpush1.bf16.msra.mxu0 %v4965
        %5276 = vmatprep.subr.bf16.mxu0 %v4950
        %5277 = vmatpush1.bf16.msra.mxu0 %v4949
        %5278 = vmatprep.subr.bf16.mxu0 %v4934
        %5279 = vmatpush1.bf16.msra.mxu0 %v4933
        %5280 = vmatprep.subr.bf16.mxu0 %v4918
        %5281 = vmatpush1.bf16.msra.mxu0 %v4917
        %5282 = vmatprep.subr.bf16.mxu0 %v4902
        %5283 = vmatpush1.bf16.msra.mxu0 %v4901
        %5284 = vmatprep.subr.bf16.mxu0 0
        %5285 = vmatpush2.bf16.msra.mxu0 0
        %5286 = vmatprep.subr.bf16.mxu0 0
        %5287 = vmatpush2.bf16.msra.mxu0 0
        %5288 = vmatprep.subr.bf16.mxu0 0
        %5289 = vmatpush2.bf16.msra.mxu0 0
        %5290 = vmatprep.subr.bf16.mxu0 0
        %5291 = vmatpush2.bf16.msra.mxu0 0
        %5292 = vmatprep.subr.bf16.mxu0 0
        %5293 = vmatpush2.bf16.msra.mxu0 0
        %5294 = vmatprep.subr.bf16.mxu0 0
        %5295 = vmatpush2.bf16.msra.mxu0 0
        %5296 = vmatprep.subr.bf16.mxu0 0
        %5297 = vmatpush2.bf16.msra.mxu0 0
        %5298 = vmatprep.subr.bf16.mxu0 0
        %5299 = vmatpush2.bf16.msra.mxu0 0
        %5300 = vmatprep.mubr.bf16.mxu0 0
        %5301 = vmatmul.mubr.bf16.gmra.mxu0 %v4315
        %v5302 = vpop.f32.mrf.mxu0
        %v5303 = vadd.f32 %v4462, %v5302
        %v5304 = vpop.f32.mrf.mxu0
        %v5305 = vadd.f32 %v4466, %v5304
        %v5306 = vpop.f32.mrf.mxu0
        %v5307 = vadd.f32 %v4462, %v5306
        %v5308 = vpop.f32.mrf.mxu0
        %v5309 = vadd.f32 %v4466, %v5308
        %5310 = vmatprep.mubr.bf16.mxu0 0
        %5311 = vmatmul.mubr.bf16.gmra.mxu0 %v4316
        %v5312 = vpop.f32.mrf.mxu0
        %v5313 = vadd.f32 %v4462, %v5312
        %v5314 = vpop.f32.mrf.mxu0
        %v5315 = vadd.f32 %v4466, %v5314
        %v5316 = vpop.f32.mrf.mxu0
        %v5317 = vadd.f32 %v4462, %v5316
        %v5318 = vpop.f32.mrf.mxu0
        %v5319 = vadd.f32 %v4466, %v5318
        %5320 = vmatprep.mubr.bf16.mxu0 0
        %5321 = vmatmul.mubr.bf16.gmra.mxu0 %v4317
        %v5322 = vpop.f32.mrf.mxu0
        %v5323 = vadd.f32 %v4462, %v5322
        %v5324 = vpop.f32.mrf.mxu0
        %v5325 = vadd.f32 %v4466, %v5324
        %v5326 = vpop.f32.mrf.mxu0
        %v5327 = vadd.f32 %v4462, %v5326
        %v5328 = vpop.f32.mrf.mxu0
        %v5329 = vadd.f32 %v4466, %v5328
        %5330 = vmatprep.mubr.bf16.mxu0 0
        %5331 = vmatmul.mubr.bf16.gmra.mxu0 %v4318
        %v5332 = vpop.f32.mrf.mxu0
        %v5333 = vadd.f32 %v4462, %v5332
        %v5334 = vpop.f32.mrf.mxu0
        %v5335 = vadd.f32 %v4466, %v5334
        %v5336 = vpop.f32.mrf.mxu0
        %v5337 = vadd.f32 %v4462, %v5336
        %v5338 = vpop.f32.mrf.mxu0
        %v5339 = vadd.f32 %v4466, %v5338
        %5340 = vmatprep.mubr.bf16.mxu0 0
        %5341 = vmatmul.mubr.bf16.gmra.mxu0 %v4319
        %v5342 = vpop.f32.mrf.mxu0
        %v5343 = vadd.f32 %v4462, %v5342
        %v5344 = vpop.f32.mrf.mxu0
        %v5345 = vadd.f32 %v4466, %v5344
        %v5346 = vpop.f32.mrf.mxu0
        %v5347 = vadd.f32 %v4462, %v5346
        %v5348 = vpop.f32.mrf.mxu0
        %v5349 = vadd.f32 %v4466, %v5348
        %5350 = vmatprep.mubr.bf16.mxu0 0
        %5351 = vmatmul.mubr.bf16.gmra.mxu0 %v4320
        %v5352 = vpop.f32.mrf.mxu0
        %v5353 = vadd.f32 %v4462, %v5352
        %v5354 = vpop.f32.mrf.mxu0
        %v5355 = vadd.f32 %v4466, %v5354
        %v5356 = vpop.f32.mrf.mxu0
        %v5357 = vadd.f32 %v4462, %v5356
        %v5358 = vpop.f32.mrf.mxu0
        %v5359 = vadd.f32 %v4466, %v5358
        %5360 = vmatprep.mubr.bf16.mxu0 0
        %5361 = vmatmul.mubr.bf16.gmra.mxu0 %v4321
        %v5362 = vpop.f32.mrf.mxu0
        %v5363 = vadd.f32 %v4462, %v5362
        %v5364 = vpop.f32.mrf.mxu0
        %v5365 = vadd.f32 %v4466, %v5364
        %v5366 = vpop.f32.mrf.mxu0
        %v5367 = vadd.f32 %v4462, %v5366
        %v5368 = vpop.f32.mrf.mxu0
        %v5369 = vadd.f32 %v4466, %v5368
        %5370 = vmatprep.mubr.bf16.mxu0 0
        %5371 = vmatmul.mubr.bf16.gmra.mxu0 %v4322
        %v5372 = vpop.f32.mrf.mxu0
        %v5373 = vadd.f32 %v4462, %v5372
        %v5374 = vpop.f32.mrf.mxu0
        %v5375 = vadd.f32 %v4466, %v5374
        %v5376 = vpop.f32.mrf.mxu0
        %v5377 = vadd.f32 %v4462, %v5376
        %v5378 = vpop.f32.mrf.mxu0
        %v5379 = vadd.f32 %v4466, %v5378
        %5380 = vdwg.mxu0
        %5381 = vmatprep.subr.bf16.mxu0 %v5016
        %5382 = vmatpush1.bf16.msra.mxu0 %v5015
        %5383 = vmatprep.subr.bf16.mxu0 %v5000
        %5384 = vmatpush1.bf16.msra.mxu0 %v4999
        %5385 = vmatprep.subr.bf16.mxu0 %v4984
        %5386 = vmatpush1.bf16.msra.mxu0 %v4983
        %5387 = vmatprep.subr.bf16.mxu0 %v4968
        %5388 = vmatpush1.bf16.msra.mxu0 %v4967
        %5389 = vmatprep.subr.bf16.mxu0 %v4952
        %5390 = vmatpush1.bf16.msra.mxu0 %v4951
        %5391 = vmatprep.subr.bf16.mxu0 %v4936
        %5392 = vmatpush1.bf16.msra.mxu0 %v4935
        %5393 = vmatprep.subr.bf16.mxu0 %v4920
        %5394 = vmatpush1.bf16.msra.mxu0 %v4919
        %5395 = vmatprep.subr.bf16.mxu0 %v4904
        %5396 = vmatpush1.bf16.msra.mxu0 %v4903
        %5397 = vmatprep.subr.bf16.mxu0 0
        %5398 = vmatpush2.bf16.msra.mxu0 0
        %5399 = vmatprep.subr.bf16.mxu0 0
        %5400 = vmatpush2.bf16.msra.mxu0 0
        %5401 = vmatprep.subr.bf16.mxu0 0
        %5402 = vmatpush2.bf16.msra.mxu0 0
        %5403 = vmatprep.subr.bf16.mxu0 0
        %5404 = vmatpush2.bf16.msra.mxu0 0
        %5405 = vmatprep.subr.bf16.mxu0 0
        %5406 = vmatpush2.bf16.msra.mxu0 0
        %5407 = vmatprep.subr.bf16.mxu0 0
        %5408 = vmatpush2.bf16.msra.mxu0 0
        %5409 = vmatprep.subr.bf16.mxu0 0
        %5410 = vmatpush2.bf16.msra.mxu0 0
        %5411 = vmatprep.subr.bf16.mxu0 0
        %5412 = vmatpush2.bf16.msra.mxu0 0
        %5413 = vmatprep.mubr.bf16.mxu0 0
        %5414 = vmatmul.mubr.bf16.gmra.mxu0 %v4315
        %v5415 = vpop.f32.mrf.mxu0
        %v5416 = vadd.f32 %v4470, %v5415
        %v5417 = vpop.f32.mrf.mxu0
        %v5418 = vadd.f32 %v4474, %v5417
        %v5419 = vpop.f32.mrf.mxu0
        %v5420 = vadd.f32 %v4470, %v5419
        %v5421 = vpop.f32.mrf.mxu0
        %v5422 = vadd.f32 %v4474, %v5421
        %5423 = vmatprep.mubr.bf16.mxu0 0
        %5424 = vmatmul.mubr.bf16.gmra.mxu0 %v4316
        %v5425 = vpop.f32.mrf.mxu0
        %v5426 = vadd.f32 %v4470, %v5425
        %v5427 = vpop.f32.mrf.mxu0
        %v5428 = vadd.f32 %v4474, %v5427
        %v5429 = vpop.f32.mrf.mxu0
        %v5430 = vadd.f32 %v4470, %v5429
        %v5431 = vpop.f32.mrf.mxu0
        %v5432 = vadd.f32 %v4474, %v5431
        %5433 = vmatprep.mubr.bf16.mxu0 0
        %5434 = vmatmul.mubr.bf16.gmra.mxu0 %v4317
        %v5435 = vpop.f32.mrf.mxu0
        %v5436 = vadd.f32 %v4470, %v5435
        %v5437 = vpop.f32.mrf.mxu0
        %v5438 = vadd.f32 %v4474, %v5437
        %v5439 = vpop.f32.mrf.mxu0
        %v5440 = vadd.f32 %v4470, %v5439
        %v5441 = vpop.f32.mrf.mxu0
        %v5442 = vadd.f32 %v4474, %v5441
        %5443 = vmatprep.mubr.bf16.mxu0 0
        %5444 = vmatmul.mubr.bf16.gmra.mxu0 %v4318
        %v5445 = vpop.f32.mrf.mxu0
        %v5446 = vadd.f32 %v4470, %v5445
        %v5447 = vpop.f32.mrf.mxu0
        %v5448 = vadd.f32 %v4474, %v5447
        %v5449 = vpop.f32.mrf.mxu0
        %v5450 = vadd.f32 %v4470, %v5449
        %v5451 = vpop.f32.mrf.mxu0
        %v5452 = vadd.f32 %v4474, %v5451
        %5453 = vmatprep.mubr.bf16.mxu0 0
        %5454 = vmatmul.mubr.bf16.gmra.mxu0 %v4319
        %v5455 = vpop.f32.mrf.mxu0
        %v5456 = vadd.f32 %v4470, %v5455
        %v5457 = vpop.f32.mrf.mxu0
        %v5458 = vadd.f32 %v4474, %v5457
        %v5459 = vpop.f32.mrf.mxu0
        %v5460 = vadd.f32 %v4470, %v5459
        %v5461 = vpop.f32.mrf.mxu0
        %v5462 = vadd.f32 %v4474, %v5461
        %5463 = vmatprep.mubr.bf16.mxu0 0
        %5464 = vmatmul.mubr.bf16.gmra.mxu0 %v4320
        %v5465 = vpop.f32.mrf.mxu0
        %v5466 = vadd.f32 %v4470, %v5465
        %v5467 = vpop.f32.mrf.mxu0
        %v5468 = vadd.f32 %v4474, %v5467
        %v5469 = vpop.f32.mrf.mxu0
        %v5470 = vadd.f32 %v4470, %v5469
        %v5471 = vpop.f32.mrf.mxu0
        %v5472 = vadd.f32 %v4474, %v5471
        %5473 = vmatprep.mubr.bf16.mxu0 0
        %5474 = vmatmul.mubr.bf16.gmra.mxu0 %v4321
        %v5475 = vpop.f32.mrf.mxu0
        %v5476 = vadd.f32 %v4470, %v5475
        %v5477 = vpop.f32.mrf.mxu0
        %v5478 = vadd.f32 %v4474, %v5477
        %v5479 = vpop.f32.mrf.mxu0
        %v5480 = vadd.f32 %v4470, %v5479
        %v5481 = vpop.f32.mrf.mxu0
        %v5482 = vadd.f32 %v4474, %v5481
        %5483 = vmatprep.mubr.bf16.mxu0 0
        %5484 = vmatmul.mubr.bf16.gmra.mxu0 %v4322
        %v5485 = vpop.f32.mrf.mxu0
        %v5486 = vadd.f32 %v4470, %v5485
        %v5487 = vpop.f32.mrf.mxu0
        %v5488 = vadd.f32 %v4474, %v5487
        %v5489 = vpop.f32.mrf.mxu0
        %v5490 = vadd.f32 %v4470, %v5489
        %v5491 = vpop.f32.mrf.mxu0
        %v5492 = vadd.f32 %v4474, %v5491
        %5493 = vdwg.mxu0
        %5494 = vmatprep.subr.bf16.mxu0 %v5018
        %5495 = vmatpush1.bf16.msra.mxu0 %v5017
        %5496 = vmatprep.subr.bf16.mxu0 %v5002
        %5497 = vmatpush1.bf16.msra.mxu0 %v5001
        %5498 = vmatprep.subr.bf16.mxu0 %v4986
        %5499 = vmatpush1.bf16.msra.mxu0 %v4985
        %5500 = vmatprep.subr.bf16.mxu0 %v4970
        %5501 = vmatpush1.bf16.msra.mxu0 %v4969
        %5502 = vmatprep.subr.bf16.mxu0 %v4954
        %5503 = vmatpush1.bf16.msra.mxu0 %v4953
        %5504 = vmatprep.subr.bf16.mxu0 %v4938
        %5505 = vmatpush1.bf16.msra.mxu0 %v4937
        %5506 = vmatprep.subr.bf16.mxu0 %v4922
        %5507 = vmatpush1.bf16.msra.mxu0 %v4921
        %5508 = vmatprep.subr.bf16.mxu0 %v4906
        %5509 = vmatpush1.bf16.msra.mxu0 %v4905
        %5510 = vmatprep.subr.bf16.mxu0 0
        %5511 = vmatpush2.bf16.msra.mxu0 0
        %5512 = vmatprep.subr.bf16.mxu0 0
        %5513 = vmatpush2.bf16.msra.mxu0 0
        %5514 = vmatprep.subr.bf16.mxu0 0
        %5515 = vmatpush2.bf16.msra.mxu0 0
        %5516 = vmatprep.subr.bf16.mxu0 0
        %5517 = vmatpush2.bf16.msra.mxu0 0
        %5518 = vmatprep.subr.bf16.mxu0 0
        %5519 = vmatpush2.bf16.msra.mxu0 0
        %5520 = vmatprep.subr.bf16.mxu0 0
        %5521 = vmatpush2.bf16.msra.mxu0 0
        %5522 = vmatprep.subr.bf16.mxu0 0
        %5523 = vmatpush2.bf16.msra.mxu0 0
        %5524 = vmatprep.subr.bf16.mxu0 0
        %5525 = vmatpush2.bf16.msra.mxu0 0
        %5526 = vmatprep.mubr.bf16.mxu0 0
        %5527 = vmatmul.mubr.bf16.gmra.mxu0 %v4315
        %v5528 = vpop.f32.mrf.mxu0
        %v5529 = vadd.f32 %v4478, %v5528
        %v5530 = vpop.f32.mrf.mxu0
        %v5531 = vadd.f32 %v4482, %v5530
        %v5532 = vpop.f32.mrf.mxu0
        %v5533 = vadd.f32 %v4478, %v5532
        %v5534 = vpop.f32.mrf.mxu0
        %v5535 = vadd.f32 %v4482, %v5534
        %5536 = vmatprep.mubr.bf16.mxu0 0
        %5537 = vmatmul.mubr.bf16.gmra.mxu0 %v4316
        %v5538 = vpop.f32.mrf.mxu0
        %v5539 = vadd.f32 %v4478, %v5538
        %v5540 = vpop.f32.mrf.mxu0
        %v5541 = vadd.f32 %v4482, %v5540
        %v5542 = vpop.f32.mrf.mxu0
        %v5543 = vadd.f32 %v4478, %v5542
        %v5544 = vpop.f32.mrf.mxu0
        %v5545 = vadd.f32 %v4482, %v5544
        %5546 = vmatprep.mubr.bf16.mxu0 0
        %5547 = vmatmul.mubr.bf16.gmra.mxu0 %v4317
        %v5548 = vpop.f32.mrf.mxu0
        %v5549 = vadd.f32 %v4478, %v5548
        %v5550 = vpop.f32.mrf.mxu0
        %v5551 = vadd.f32 %v4482, %v5550
        %v5552 = vpop.f32.mrf.mxu0
        %v5553 = vadd.f32 %v4478, %v5552
        %v5554 = vpop.f32.mrf.mxu0
        %v5555 = vadd.f32 %v4482, %v5554
        %5556 = vmatprep.mubr.bf16.mxu0 0
        %5557 = vmatmul.mubr.bf16.gmra.mxu0 %v4318
        %v5558 = vpop.f32.mrf.mxu0
        %v5559 = vadd.f32 %v4478, %v5558
        %v5560 = vpop.f32.mrf.mxu0
        %v5561 = vadd.f32 %v4482, %v5560
        %v5562 = vpop.f32.mrf.mxu0
        %v5563 = vadd.f32 %v4478, %v5562
        %v5564 = vpop.f32.mrf.mxu0
        %v5565 = vadd.f32 %v4482, %v5564
        %5566 = vmatprep.mubr.bf16.mxu0 0
        %5567 = vmatmul.mubr.bf16.gmra.mxu0 %v4319
        %v5568 = vpop.f32.mrf.mxu0
        %v5569 = vadd.f32 %v4478, %v5568
        %v5570 = vpop.f32.mrf.mxu0
        %v5571 = vadd.f32 %v4482, %v5570
        %v5572 = vpop.f32.mrf.mxu0
        %v5573 = vadd.f32 %v4478, %v5572
        %v5574 = vpop.f32.mrf.mxu0
        %v5575 = vadd.f32 %v4482, %v5574
        %5576 = vmatprep.mubr.bf16.mxu0 0
        %5577 = vmatmul.mubr.bf16.gmra.mxu0 %v4320
        %v5578 = vpop.f32.mrf.mxu0
        %v5579 = vadd.f32 %v4478, %v5578
        %v5580 = vpop.f32.mrf.mxu0
        %v5581 = vadd.f32 %v4482, %v5580
        %v5582 = vpop.f32.mrf.mxu0
        %v5583 = vadd.f32 %v4478, %v5582
        %v5584 = vpop.f32.mrf.mxu0
        %v5585 = vadd.f32 %v4482, %v5584
        %5586 = vmatprep.mubr.bf16.mxu0 0
        %5587 = vmatmul.mubr.bf16.gmra.mxu0 %v4321
        %v5588 = vpop.f32.mrf.mxu0
        %v5589 = vadd.f32 %v4478, %v5588
        %v5590 = vpop.f32.mrf.mxu0
        %v5591 = vadd.f32 %v4482, %v5590
        %v5592 = vpop.f32.mrf.mxu0
        %v5593 = vadd.f32 %v4478, %v5592
        %v5594 = vpop.f32.mrf.mxu0
        %v5595 = vadd.f32 %v4482, %v5594
        %5596 = vmatprep.mubr.bf16.mxu0 0
        %5597 = vmatmul.mubr.bf16.gmra.mxu0 %v4322
        %v5598 = vpop.f32.mrf.mxu0
        %v5599 = vadd.f32 %v4478, %v5598
        %v5600 = vpop.f32.mrf.mxu0
        %v5601 = vadd.f32 %v4482, %v5600
        %v5602 = vpop.f32.mrf.mxu0
        %v5603 = vadd.f32 %v4478, %v5602
        %v5604 = vpop.f32.mrf.mxu0
        %v5605 = vadd.f32 %v4482, %v5604
        %5606 = vdwg.mxu0
        %5607 = vmatprep.subr.bf16.mxu0 %v5020
        %5608 = vmatpush1.bf16.msra.mxu0 %v5019
        %5609 = vmatprep.subr.bf16.mxu0 %v5004
        %5610 = vmatpush1.bf16.msra.mxu0 %v5003
        %5611 = vmatprep.subr.bf16.mxu0 %v4988
        %5612 = vmatpush1.bf16.msra.mxu0 %v4987
        %5613 = vmatprep.subr.bf16.mxu0 %v4972
        %5614 = vmatpush1.bf16.msra.mxu0 %v4971
        %5615 = vmatprep.subr.bf16.mxu0 %v4956
        %5616 = vmatpush1.bf16.msra.mxu0 %v4955
        %5617 = vmatprep.subr.bf16.mxu0 %v4940
        %5618 = vmatpush1.bf16.msra.mxu0 %v4939
        %5619 = vmatprep.subr.bf16.mxu0 %v4924
        %5620 = vmatpush1.bf16.msra.mxu0 %v4923
        %5621 = vmatprep.subr.bf16.mxu0 %v4908
        %5622 = vmatpush1.bf16.msra.mxu0 %v4907
        %5623 = vmatprep.subr.bf16.mxu0 0
        %5624 = vmatpush2.bf16.msra.mxu0 0
        %5625 = vmatprep.subr.bf16.mxu0 0
        %5626 = vmatpush2.bf16.msra.mxu0 0
        %5627 = vmatprep.subr.bf16.mxu0 0
        %5628 = vmatpush2.bf16.msra.mxu0 0
        %5629 = vmatprep.subr.bf16.mxu0 0
        %5630 = vmatpush2.bf16.msra.mxu0 0
        %5631 = vmatprep.subr.bf16.mxu0 0
        %5632 = vmatpush2.bf16.msra.mxu0 0
        %5633 = vmatprep.subr.bf16.mxu0 0
        %5634 = vmatpush2.bf16.msra.mxu0 0
        %5635 = vmatprep.subr.bf16.mxu0 0
        %5636 = vmatpush2.bf16.msra.mxu0 0
        %5637 = vmatprep.subr.bf16.mxu0 0
        %5638 = vmatpush2.bf16.msra.mxu0 0
        %5639 = vmatprep.mubr.bf16.mxu0 0
        %5640 = vmatmul.mubr.bf16.gmra.mxu0 %v4315
        %v5641 = vpop.f32.mrf.mxu0
        %v5642 = vadd.f32 %v4486, %v5641
        %v5643 = vpop.f32.mrf.mxu0
        %v5644 = vadd.f32 %v4490, %v5643
        %v5645 = vpop.f32.mrf.mxu0
        %v5646 = vadd.f32 %v4486, %v5645
        %v5647 = vpop.f32.mrf.mxu0
        %v5648 = vadd.f32 %v4490, %v5647
        %5649 = vmatprep.mubr.bf16.mxu0 0
        %5650 = vmatmul.mubr.bf16.gmra.mxu0 %v4316
        %v5651 = vpop.f32.mrf.mxu0
        %v5652 = vadd.f32 %v4486, %v5651
        %v5653 = vpop.f32.mrf.mxu0
        %v5654 = vadd.f32 %v4490, %v5653
        %v5655 = vpop.f32.mrf.mxu0
        %v5656 = vadd.f32 %v4486, %v5655
        %v5657 = vpop.f32.mrf.mxu0
        %v5658 = vadd.f32 %v4490, %v5657
        %5659 = vmatprep.mubr.bf16.mxu0 0
        %5660 = vmatmul.mubr.bf16.gmra.mxu0 %v4317
        %v5661 = vpop.f32.mrf.mxu0
        %v5662 = vadd.f32 %v4486, %v5661
        %v5663 = vpop.f32.mrf.mxu0
        %v5664 = vadd.f32 %v4490, %v5663
        %v5665 = vpop.f32.mrf.mxu0
        %v5666 = vadd.f32 %v4486, %v5665
        %v5667 = vpop.f32.mrf.mxu0
        %v5668 = vadd.f32 %v4490, %v5667
        %5669 = vmatprep.mubr.bf16.mxu0 0
        %5670 = vmatmul.mubr.bf16.gmra.mxu0 %v4318
        %v5671 = vpop.f32.mrf.mxu0
        %v5672 = vadd.f32 %v4486, %v5671
        %v5673 = vpop.f32.mrf.mxu0
        %v5674 = vadd.f32 %v4490, %v5673
        %v5675 = vpop.f32.mrf.mxu0
        %v5676 = vadd.f32 %v4486, %v5675
        %v5677 = vpop.f32.mrf.mxu0
        %v5678 = vadd.f32 %v4490, %v5677
        %5679 = vmatprep.mubr.bf16.mxu0 0
        %5680 = vmatmul.mubr.bf16.gmra.mxu0 %v4319
        %v5681 = vpop.f32.mrf.mxu0
        %v5682 = vadd.f32 %v4486, %v5681
        %v5683 = vpop.f32.mrf.mxu0
        %v5684 = vadd.f32 %v4490, %v5683
        %v5685 = vpop.f32.mrf.mxu0
        %v5686 = vadd.f32 %v4486, %v5685
        %v5687 = vpop.f32.mrf.mxu0
        %v5688 = vadd.f32 %v4490, %v5687
        %5689 = vmatprep.mubr.bf16.mxu0 0
        %5690 = vmatmul.mubr.bf16.gmra.mxu0 %v4320
        %v5691 = vpop.f32.mrf.mxu0
        %v5692 = vadd.f32 %v4486, %v5691
        %v5693 = vpop.f32.mrf.mxu0
        %v5694 = vadd.f32 %v4490, %v5693
        %v5695 = vpop.f32.mrf.mxu0
        %v5696 = vadd.f32 %v4486, %v5695
        %v5697 = vpop.f32.mrf.mxu0
        %v5698 = vadd.f32 %v4490, %v5697
        %5699 = vmatprep.mubr.bf16.mxu0 0
        %5700 = vmatmul.mubr.bf16.gmra.mxu0 %v4321
        %v5701 = vpop.f32.mrf.mxu0
        %v5702 = vadd.f32 %v4486, %v5701
        %v5703 = vpop.f32.mrf.mxu0
        %v5704 = vadd.f32 %v4490, %v5703
        %v5705 = vpop.f32.mrf.mxu0
        %v5706 = vadd.f32 %v4486, %v5705
        %v5707 = vpop.f32.mrf.mxu0
        %v5708 = vadd.f32 %v4490, %v5707
        %5709 = vmatprep.mubr.bf16.mxu0 0
        %5710 = vmatmul.mubr.bf16.gmra.mxu0 %v4322
        %v5711 = vpop.f32.mrf.mxu0
        %v5712 = vadd.f32 %v4486, %v5711
        %v5713 = vpop.f32.mrf.mxu0
        %v5714 = vadd.f32 %v4490, %v5713
        %v5715 = vpop.f32.mrf.mxu0
        %v5716 = vadd.f32 %v4486, %v5715
        %v5717 = vpop.f32.mrf.mxu0
        %v5718 = vadd.f32 %v4490, %v5717
        %5719 = vdwg.mxu0
        %5720 = vmatprep.subr.bf16.mxu0 %v5022
        %5721 = vmatpush1.bf16.msra.mxu0 %v5021
        %5722 = vmatprep.subr.bf16.mxu0 %v5006
        %5723 = vmatpush1.bf16.msra.mxu0 %v5005
        %5724 = vmatprep.subr.bf16.mxu0 %v4990
        %5725 = vmatpush1.bf16.msra.mxu0 %v4989
        %5726 = vmatprep.subr.bf16.mxu0 %v4974
        %5727 = vmatpush1.bf16.msra.mxu0 %v4973
        %5728 = vmatprep.subr.bf16.mxu0 %v4958
        %5729 = vmatpush1.bf16.msra.mxu0 %v4957
        %5730 = vmatprep.subr.bf16.mxu0 %v4942
        %5731 = vmatpush1.bf16.msra.mxu0 %v4941
        %5732 = vmatprep.subr.bf16.mxu0 %v4926
        %5733 = vmatpush1.bf16.msra.mxu0 %v4925
        %5734 = vmatprep.subr.bf16.mxu0 %v4910
        %5735 = vmatpush1.bf16.msra.mxu0 %v4909
        %5736 = vmatprep.subr.bf16.mxu0 0
        %5737 = vmatpush2.bf16.msra.mxu0 0
        %5738 = vmatprep.subr.bf16.mxu0 0
        %5739 = vmatpush2.bf16.msra.mxu0 0
        %5740 = vmatprep.subr.bf16.mxu0 0
        %5741 = vmatpush2.bf16.msra.mxu0 0
        %5742 = vmatprep.subr.bf16.mxu0 0
        %5743 = vmatpush2.bf16.msra.mxu0 0
        %5744 = vmatprep.subr.bf16.mxu0 0
        %5745 = vmatpush2.bf16.msra.mxu0 0
        %5746 = vmatprep.subr.bf16.mxu0 0
        %5747 = vmatpush2.bf16.msra.mxu0 0
        %5748 = vmatprep.subr.bf16.mxu0 0
        %5749 = vmatpush2.bf16.msra.mxu0 0
        %5750 = vmatprep.subr.bf16.mxu0 0
        %5751 = vmatpush2.bf16.msra.mxu0 0
        %5752 = vmatprep.mubr.bf16.mxu0 0
        %5753 = vmatmul.mubr.bf16.gmra.mxu0 %v4315
        %v5754 = vpop.f32.mrf.mxu0
        %v5755 = vadd.f32 %v4494, %v5754
        %v5756 = vpop.f32.mrf.mxu0
        %v5757 = vadd.f32 %v4498, %v5756
        %v5758 = vpop.f32.mrf.mxu0
        %v5759 = vadd.f32 %v4494, %v5758
        %v5760 = vpop.f32.mrf.mxu0
        %v5761 = vadd.f32 %v4498, %v5760
        %5762 = vmatprep.mubr.bf16.mxu0 0
        %5763 = vmatmul.mubr.bf16.gmra.mxu0 %v4316
        %v5764 = vpop.f32.mrf.mxu0
        %v5765 = vadd.f32 %v4494, %v5764
        %v5766 = vpop.f32.mrf.mxu0
        %v5767 = vadd.f32 %v4498, %v5766
        %v5768 = vpop.f32.mrf.mxu0
        %v5769 = vadd.f32 %v4494, %v5768
        %v5770 = vpop.f32.mrf.mxu0
        %v5771 = vadd.f32 %v4498, %v5770
        %5772 = vmatprep.mubr.bf16.mxu0 0
        %5773 = vmatmul.mubr.bf16.gmra.mxu0 %v4317
        %v5774 = vpop.f32.mrf.mxu0
        %v5775 = vadd.f32 %v4494, %v5774
        %v5776 = vpop.f32.mrf.mxu0
        %v5777 = vadd.f32 %v4498, %v5776
        %v5778 = vpop.f32.mrf.mxu0
        %v5779 = vadd.f32 %v4494, %v5778
        %v5780 = vpop.f32.mrf.mxu0
        %v5781 = vadd.f32 %v4498, %v5780
        %5782 = vmatprep.mubr.bf16.mxu0 0
        %5783 = vmatmul.mubr.bf16.gmra.mxu0 %v4318
        %v5784 = vpop.f32.mrf.mxu0
        %v5785 = vadd.f32 %v4494, %v5784
        %v5786 = vpop.f32.mrf.mxu0
        %v5787 = vadd.f32 %v4498, %v5786
        %v5788 = vpop.f32.mrf.mxu0
        %v5789 = vadd.f32 %v4494, %v5788
        %v5790 = vpop.f32.mrf.mxu0
        %v5791 = vadd.f32 %v4498, %v5790
        %5792 = vmatprep.mubr.bf16.mxu0 0
        %5793 = vmatmul.mubr.bf16.gmra.mxu0 %v4319
        %v5794 = vpop.f32.mrf.mxu0
        %v5795 = vadd.f32 %v4494, %v5794
        %v5796 = vpop.f32.mrf.mxu0
        %v5797 = vadd.f32 %v4498, %v5796
        %v5798 = vpop.f32.mrf.mxu0
        %v5799 = vadd.f32 %v4494, %v5798
        %v5800 = vpop.f32.mrf.mxu0
        %v5801 = vadd.f32 %v4498, %v5800
        %5802 = vmatprep.mubr.bf16.mxu0 0
        %5803 = vmatmul.mubr.bf16.gmra.mxu0 %v4320
        %v5804 = vpop.f32.mrf.mxu0
        %v5805 = vadd.f32 %v4494, %v5804
        %v5806 = vpop.f32.mrf.mxu0
        %v5807 = vadd.f32 %v4498, %v5806
        %v5808 = vpop.f32.mrf.mxu0
        %v5809 = vadd.f32 %v4494, %v5808
        %v5810 = vpop.f32.mrf.mxu0
        %v5811 = vadd.f32 %v4498, %v5810
        %5812 = vmatprep.mubr.bf16.mxu0 0
        %5813 = vmatmul.mubr.bf16.gmra.mxu0 %v4321
        %v5814 = vpop.f32.mrf.mxu0
        %v5815 = vadd.f32 %v4494, %v5814
        %v5816 = vpop.f32.mrf.mxu0
        %v5817 = vadd.f32 %v4498, %v5816
        %v5818 = vpop.f32.mrf.mxu0
        %v5819 = vadd.f32 %v4494, %v5818
        %v5820 = vpop.f32.mrf.mxu0
        %v5821 = vadd.f32 %v4498, %v5820
        %5822 = vmatprep.mubr.bf16.mxu0 0
        %5823 = vmatmul.mubr.bf16.gmra.mxu0 %v4322
        %v5824 = vpop.f32.mrf.mxu0
        %v5825 = vadd.f32 %v4494, %v5824
        %v5826 = vpop.f32.mrf.mxu0
        %v5827 = vadd.f32 %v4498, %v5826
        %v5828 = vpop.f32.mrf.mxu0
        %v5829 = vadd.f32 %v4494, %v5828
        %v5830 = vpop.f32.mrf.mxu0
        %v5831 = vadd.f32 %v4498, %v5830
        %5832 = vdwg.mxu0
        %5833 = vmatprep.subr.bf16.mxu0 %v5024
        %5834 = vmatpush1.bf16.msra.mxu0 %v5023
        %5835 = vmatprep.subr.bf16.mxu0 %v5008
        %5836 = vmatpush1.bf16.msra.mxu0 %v5007
        %5837 = vmatprep.subr.bf16.mxu0 %v4992
        %5838 = vmatpush1.bf16.msra.mxu0 %v4991
        %5839 = vmatprep.subr.bf16.mxu0 %v4976
        %5840 = vmatpush1.bf16.msra.mxu0 %v4975
        %5841 = vmatprep.subr.bf16.mxu0 %v4960
        %5842 = vmatpush1.bf16.msra.mxu0 %v4959
        %5843 = vmatprep.subr.bf16.mxu0 %v4944
        %5844 = vmatpush1.bf16.msra.mxu0 %v4943
        %5845 = vmatprep.subr.bf16.mxu0 %v4928
        %5846 = vmatpush1.bf16.msra.mxu0 %v4927
        %5847 = vmatprep.subr.bf16.mxu0 %v4912
        %5848 = vmatpush1.bf16.msra.mxu0 %v4911
        %5849 = vmatprep.subr.bf16.mxu0 0
        %5850 = vmatpush2.bf16.msra.mxu0 0
        %5851 = vmatprep.subr.bf16.mxu0 0
        %5852 = vmatpush2.bf16.msra.mxu0 0
        %5853 = vmatprep.subr.bf16.mxu0 0
        %5854 = vmatpush2.bf16.msra.mxu0 0
        %5855 = vmatprep.subr.bf16.mxu0 0
        %5856 = vmatpush2.bf16.msra.mxu0 0
        %5857 = vmatprep.subr.bf16.mxu0 0
        %5858 = vmatpush2.bf16.msra.mxu0 0
        %5859 = vmatprep.subr.bf16.mxu0 0
        %5860 = vmatpush2.bf16.msra.mxu0 0
        %5861 = vmatprep.subr.bf16.mxu0 0
        %5862 = vmatpush2.bf16.msra.mxu0 0
        %5863 = vmatprep.subr.bf16.mxu0 0
        %5864 = vmatpush2.bf16.msra.mxu0 0
        %5865 = vmatprep.mubr.bf16.mxu0 0
        %5866 = vmatmul.mubr.bf16.gmra.mxu0 %v4315
        %v5867 = vpop.f32.mrf.mxu0
        %v5868 = vadd.f32 %v4502, %v5867
        %v5869 = vpop.f32.mrf.mxu0
        %v5870 = vadd.f32 %v4506, %v5869
        %v5871 = vpop.f32.mrf.mxu0
        %v5872 = vadd.f32 %v4502, %v5871
        %v5873 = vpop.f32.mrf.mxu0
        %v5874 = vadd.f32 %v4506, %v5873
        %5875 = vmatprep.mubr.bf16.mxu0 0
        %5876 = vmatmul.mubr.bf16.gmra.mxu0 %v4316
        %v5877 = vpop.f32.mrf.mxu0
        %v5878 = vadd.f32 %v4502, %v5877
        %v5879 = vpop.f32.mrf.mxu0
        %v5880 = vadd.f32 %v4506, %v5879
        %v5881 = vpop.f32.mrf.mxu0
        %v5882 = vadd.f32 %v4502, %v5881
        %v5883 = vpop.f32.mrf.mxu0
        %v5884 = vadd.f32 %v4506, %v5883
        %5885 = vmatprep.mubr.bf16.mxu0 0
        %5886 = vmatmul.mubr.bf16.gmra.mxu0 %v4317
        %v5887 = vpop.f32.mrf.mxu0
        %v5888 = vadd.f32 %v4502, %v5887
        %v5889 = vpop.f32.mrf.mxu0
        %v5890 = vadd.f32 %v4506, %v5889
        %v5891 = vpop.f32.mrf.mxu0
        %v5892 = vadd.f32 %v4502, %v5891
        %v5893 = vpop.f32.mrf.mxu0
        %v5894 = vadd.f32 %v4506, %v5893
        %5895 = vmatprep.mubr.bf16.mxu0 0
        %5896 = vmatmul.mubr.bf16.gmra.mxu0 %v4318
        %v5897 = vpop.f32.mrf.mxu0
        %v5898 = vadd.f32 %v4502, %v5897
        %v5899 = vpop.f32.mrf.mxu0
        %v5900 = vadd.f32 %v4506, %v5899
        %v5901 = vpop.f32.mrf.mxu0
        %v5902 = vadd.f32 %v4502, %v5901
        %v5903 = vpop.f32.mrf.mxu0
        %v5904 = vadd.f32 %v4506, %v5903
        %5905 = vmatprep.mubr.bf16.mxu0 0
        %5906 = vmatmul.mubr.bf16.gmra.mxu0 %v4319
        %v5907 = vpop.f32.mrf.mxu0
        %v5908 = vadd.f32 %v4502, %v5907
        %v5909 = vpop.f32.mrf.mxu0
        %v5910 = vadd.f32 %v4506, %v5909
        %v5911 = vpop.f32.mrf.mxu0
        %v5912 = vadd.f32 %v4502, %v5911
        %v5913 = vpop.f32.mrf.mxu0
        %v5914 = vadd.f32 %v4506, %v5913
        %5915 = vmatprep.mubr.bf16.mxu0 0
        %5916 = vmatmul.mubr.bf16.gmra.mxu0 %v4320
        %v5917 = vpop.f32.mrf.mxu0
        %v5918 = vadd.f32 %v4502, %v5917
        %v5919 = vpop.f32.mrf.mxu0
        %v5920 = vadd.f32 %v4506, %v5919
        %v5921 = vpop.f32.mrf.mxu0
        %v5922 = vadd.f32 %v4502, %v5921
        %v5923 = vpop.f32.mrf.mxu0
        %v5924 = vadd.f32 %v4506, %v5923
        %5925 = vmatprep.mubr.bf16.mxu0 0
        %5926 = vmatmul.mubr.bf16.gmra.mxu0 %v4321
        %v5927 = vpop.f32.mrf.mxu0
        %v5928 = vadd.f32 %v4502, %v5927
        %v5929 = vpop.f32.mrf.mxu0
        %v5930 = vadd.f32 %v4506, %v5929
        %v5931 = vpop.f32.mrf.mxu0
        %v5932 = vadd.f32 %v4502, %v5931
        %v5933 = vpop.f32.mrf.mxu0
        %v5934 = vadd.f32 %v4506, %v5933
        %5935 = vmatprep.mubr.bf16.mxu0 0
        %5936 = vmatmul.mubr.bf16.gmra.mxu0 %v4322
        %v5937 = vpop.f32.mrf.mxu0
        %v5938 = vadd.f32 %v4502, %v5937
        %v5939 = vpop.f32.mrf.mxu0
        %v5940 = vadd.f32 %v4506, %v5939
        %v5941 = vpop.f32.mrf.mxu0
        %v5942 = vadd.f32 %v4502, %v5941
        %v5943 = vpop.f32.mrf.mxu0
        %v5944 = vadd.f32 %v4506, %v5943
        %5945 = vdwg.mxu0
        %5946 = vmatprep.subr.bf16.mxu0 %v5026
        %5947 = vmatpush1.bf16.msra.mxu0 %v5025
        %5948 = vmatprep.subr.bf16.mxu0 %v5010
        %5949 = vmatpush1.bf16.msra.mxu0 %v5009
        %5950 = vmatprep.subr.bf16.mxu0 %v4994
        %5951 = vmatpush1.bf16.msra.mxu0 %v4993
        %5952 = vmatprep.subr.bf16.mxu0 %v4978
        %5953 = vmatpush1.bf16.msra.mxu0 %v4977
        %5954 = vmatprep.subr.bf16.mxu0 %v4962
        %5955 = vmatpush1.bf16.msra.mxu0 %v4961
        %5956 = vmatprep.subr.bf16.mxu0 %v4946
        %5957 = vmatpush1.bf16.msra.mxu0 %v4945
        %5958 = vmatprep.subr.bf16.mxu0 %v4930
        %5959 = vmatpush1.bf16.msra.mxu0 %v4929
        %5960 = vmatprep.subr.bf16.mxu0 %v4914
        %5961 = vmatpush1.bf16.msra.mxu0 %v4913
        %5962 = vmatprep.subr.bf16.mxu0 0
        %5963 = vmatpush2.bf16.msra.mxu0 0
        %5964 = vmatprep.subr.bf16.mxu0 0
        %5965 = vmatpush2.bf16.msra.mxu0 0
        %5966 = vmatprep.subr.bf16.mxu0 0
        %5967 = vmatpush2.bf16.msra.mxu0 0
        %5968 = vmatprep.subr.bf16.mxu0 0
        %5969 = vmatpush2.bf16.msra.mxu0 0
        %5970 = vmatprep.subr.bf16.mxu0 0
        %5971 = vmatpush2.bf16.msra.mxu0 0
        %5972 = vmatprep.subr.bf16.mxu0 0
        %5973 = vmatpush2.bf16.msra.mxu0 0
        %5974 = vmatprep.subr.bf16.mxu0 0
        %5975 = vmatpush2.bf16.msra.mxu0 0
        %5976 = vmatprep.subr.bf16.mxu0 0
        %5977 = vmatpush2.bf16.msra.mxu0 0
        %5978 = vmatprep.mubr.bf16.mxu0 0
        %5979 = vmatmul.mubr.bf16.gmra.mxu0 %v4315
        %v5980 = vpop.f32.mrf.mxu0
        %v5981 = vadd.f32 %v4510, %v5980
        %v5982 = vpop.f32.mrf.mxu0
        %v5983 = vadd.f32 %v4514, %v5982
        %v5984 = vpop.f32.mrf.mxu0
        %v5985 = vadd.f32 %v4510, %v5984
        %v5986 = vpop.f32.mrf.mxu0
        %v5987 = vadd.f32 %v4514, %v5986
        %5988 = vmatprep.mubr.bf16.mxu0 0
        %5989 = vmatmul.mubr.bf16.gmra.mxu0 %v4316
        %v5990 = vpop.f32.mrf.mxu0
        %v5991 = vadd.f32 %v4510, %v5990
        %v5992 = vpop.f32.mrf.mxu0
        %v5993 = vadd.f32 %v4514, %v5992
        %v5994 = vpop.f32.mrf.mxu0
        %v5995 = vadd.f32 %v4510, %v5994
        %v5996 = vpop.f32.mrf.mxu0
        %v5997 = vadd.f32 %v4514, %v5996
        %5998 = vmatprep.mubr.bf16.mxu0 0
        %5999 = vmatmul.mubr.bf16.gmra.mxu0 %v4317
        %v6000 = vpop.f32.mrf.mxu0
        %v6001 = vadd.f32 %v4510, %v6000
        %v6002 = vpop.f32.mrf.mxu0
        %v6003 = vadd.f32 %v4514, %v6002
        %v6004 = vpop.f32.mrf.mxu0
        %v6005 = vadd.f32 %v4510, %v6004
        %v6006 = vpop.f32.mrf.mxu0
        %v6007 = vadd.f32 %v4514, %v6006
        %6008 = vmatprep.mubr.bf16.mxu0 0
        %6009 = vmatmul.mubr.bf16.gmra.mxu0 %v4318
        %v6010 = vpop.f32.mrf.mxu0
        %v6011 = vadd.f32 %v4510, %v6010
        %v6012 = vpop.f32.mrf.mxu0
        %v6013 = vadd.f32 %v4514, %v6012
        %v6014 = vpop.f32.mrf.mxu0
        %v6015 = vadd.f32 %v4510, %v6014
        %v6016 = vpop.f32.mrf.mxu0
        %v6017 = vadd.f32 %v4514, %v6016
        %6018 = vmatprep.mubr.bf16.mxu0 0
        %6019 = vmatmul.mubr.bf16.gmra.mxu0 %v4319
        %v6020 = vpop.f32.mrf.mxu0
        %v6021 = vadd.f32 %v4510, %v6020
        %v6022 = vpop.f32.mrf.mxu0
        %v6023 = vadd.f32 %v4514, %v6022
        %v6024 = vpop.f32.mrf.mxu0
        %v6025 = vadd.f32 %v4510, %v6024
        %v6026 = vpop.f32.mrf.mxu0
        %v6027 = vadd.f32 %v4514, %v6026
        %6028 = vmatprep.mubr.bf16.mxu0 0
        %6029 = vmatmul.mubr.bf16.gmra.mxu0 %v4320
        %v6030 = vpop.f32.mrf.mxu0
        %v6031 = vadd.f32 %v4510, %v6030
        %v6032 = vpop.f32.mrf.mxu0
        %v6033 = vadd.f32 %v4514, %v6032
        %v6034 = vpop.f32.mrf.mxu0
        %v6035 = vadd.f32 %v4510, %v6034
        %v6036 = vpop.f32.mrf.mxu0
        %v6037 = vadd.f32 %v4514, %v6036
        %6038 = vmatprep.mubr.bf16.mxu0 0
        %6039 = vmatmul.mubr.bf16.gmra.mxu0 %v4321
        %v6040 = vpop.f32.mrf.mxu0
        %v6041 = vadd.f32 %v4510, %v6040
        %v6042 = vpop.f32.mrf.mxu0
        %v6043 = vadd.f32 %v4514, %v6042
        %v6044 = vpop.f32.mrf.mxu0
        %v6045 = vadd.f32 %v4510, %v6044
        %v6046 = vpop.f32.mrf.mxu0
        %v6047 = vadd.f32 %v4514, %v6046
        %6048 = vmatprep.mubr.bf16.mxu0 0
        %6049 = vmatmul.mubr.bf16.gmra.mxu0 %v4322
        %v6050 = vpop.f32.mrf.mxu0
        %v6051 = vadd.f32 %v4510, %v6050
        %v6052 = vpop.f32.mrf.mxu0
        %v6053 = vadd.f32 %v4514, %v6052
        %v6054 = vpop.f32.mrf.mxu0
        %v6055 = vadd.f32 %v4510, %v6054
        %v6056 = vpop.f32.mrf.mxu0
        %v6057 = vadd.f32 %v4514, %v6056
        %6058 = vdwg.mxu0
        %v6059 = vmax.f32 %v5190, 0.0
        %v6060 = vmax.f32 %v5192, 0.0
        %v6061 = vmax.f32 %v5303, 0.0
        %v6062 = vmax.f32 %v5305, 0.0
        %v6063 = vmax.f32 %v5416, 0.0
        %v6064 = vmax.f32 %v5418, 0.0
        %v6065 = vmax.f32 %v5529, 0.0
        %v6066 = vmax.f32 %v5531, 0.0
        %v6067 = vmax.f32 %v5642, 0.0
        %v6068 = vmax.f32 %v5644, 0.0
        %v6069 = vmax.f32 %v5755, 0.0
        %v6070 = vmax.f32 %v5757, 0.0
        %v6071 = vmax.f32 %v5868, 0.0
        %v6072 = vmax.f32 %v5870, 0.0
        %v6073 = vmax.f32 %v5981, 0.0
        %v6074 = vmax.f32 %v5983, 0.0
        %v6075 = vmax.f32 %v5194, 0.0
        %v6076 = vmax.f32 %v5196, 0.0
        %v6077 = vmax.f32 %v5307, 0.0
        %v6078 = vmax.f32 %v5309, 0.0
        %v6079 = vmax.f32 %v5420, 0.0
        %v6080 = vmax.f32 %v5422, 0.0
        %v6081 = vmax.f32 %v5533, 0.0
        %v6082 = vmax.f32 %v5535, 0.0
        %v6083 = vmax.f32 %v5646, 0.0
        %v6084 = vmax.f32 %v5648, 0.0
        %v6085 = vmax.f32 %v5759, 0.0
        %v6086 = vmax.f32 %v5761, 0.0
        %v6087 = vmax.f32 %v5872, 0.0
        %v6088 = vmax.f32 %v5874, 0.0
        %v6089 = vmax.f32 %v5985, 0.0
        %v6090 = vmax.f32 %v5987, 0.0
        %v6091 = vmax.f32 %v5200, 0.0
        %v6092 = vmax.f32 %v5202, 0.0
        %v6093 = vmax.f32 %v5313, 0.0
        %v6094 = vmax.f32 %v5315, 0.0
        %v6095 = vmax.f32 %v5426, 0.0
        %v6096 = vmax.f32 %v5428, 0.0
        %v6097 = vmax.f32 %v5539, 0.0
        %v6098 = vmax.f32 %v5541, 0.0
        %v6099 = vmax.f32 %v5652, 0.0
        %v6100 = vmax.f32 %v5654, 0.0
        %v6101 = vmax.f32 %v5765, 0.0
        %v6102 = vmax.f32 %v5767, 0.0
        %v6103 = vmax.f32 %v5878, 0.0
        %v6104 = vmax.f32 %v5880, 0.0
        %v6105 = vmax.f32 %v5991, 0.0
        %v6106 = vmax.f32 %v5993, 0.0
        %v6107 = vmax.f32 %v5204, 0.0
        %v6108 = vmax.f32 %v5206, 0.0
        %v6109 = vmax.f32 %v5317, 0.0
        %v6110 = vmax.f32 %v5319, 0.0
        %v6111 = vmax.f32 %v5430, 0.0
        %v6112 = vmax.f32 %v5432, 0.0
        %v6113 = vmax.f32 %v5543, 0.0
        %v6114 = vmax.f32 %v5545, 0.0
        %v6115 = vmax.f32 %v5656, 0.0
        %v6116 = vmax.f32 %v5658, 0.0
        %v6117 = vmax.f32 %v5769, 0.0
        %v6118 = vmax.f32 %v5771, 0.0
        %v6119 = vmax.f32 %v5882, 0.0
        %v6120 = vmax.f32 %v5884, 0.0
        %v6121 = vmax.f32 %v5995, 0.0
        %v6122 = vmax.f32 %v5997, 0.0
        %v6123 = vmax.f32 %v5210, 0.0
        %v6124 = vmax.f32 %v5212, 0.0
        %v6125 = vmax.f32 %v5323, 0.0
        %v6126 = vmax.f32 %v5325, 0.0
        %v6127 = vmax.f32 %v5436, 0.0
        %v6128 = vmax.f32 %v5438, 0.0
        %v6129 = vmax.f32 %v5549, 0.0
        %v6130 = vmax.f32 %v5551, 0.0
        %v6131 = vmax.f32 %v5662, 0.0
        %v6132 = vmax.f32 %v5664, 0.0
        %v6133 = vmax.f32 %v5775, 0.0
        %v6134 = vmax.f32 %v5777, 0.0
        %v6135 = vmax.f32 %v5888, 0.0
        %v6136 = vmax.f32 %v5890, 0.0
        %v6137 = vmax.f32 %v6001, 0.0
        %v6138 = vmax.f32 %v6003, 0.0
        %v6139 = vmax.f32 %v5214, 0.0
        %v6140 = vmax.f32 %v5216, 0.0
        %v6141 = vmax.f32 %v5327, 0.0
        %v6142 = vmax.f32 %v5329, 0.0
        %v6143 = vmax.f32 %v5440, 0.0
        %v6144 = vmax.f32 %v5442, 0.0
        %v6145 = vmax.f32 %v5553, 0.0
        %v6146 = vmax.f32 %v5555, 0.0
        %v6147 = vmax.f32 %v5666, 0.0
        %v6148 = vmax.f32 %v5668, 0.0
        %v6149 = vmax.f32 %v5779, 0.0
        %v6150 = vmax.f32 %v5781, 0.0
        %v6151 = vmax.f32 %v5892, 0.0
        %v6152 = vmax.f32 %v5894, 0.0
        %v6153 = vmax.f32 %v6005, 0.0
        %v6154 = vmax.f32 %v6007, 0.0
        %v6155 = vmax.f32 %v5220, 0.0
        %v6156 = vmax.f32 %v5222, 0.0
        %v6157 = vmax.f32 %v5333, 0.0
        %v6158 = vmax.f32 %v5335, 0.0
        %v6159 = vmax.f32 %v5446, 0.0
        %v6160 = vmax.f32 %v5448, 0.0
        %v6161 = vmax.f32 %v5559, 0.0
        %v6162 = vmax.f32 %v5561, 0.0
        %v6163 = vmax.f32 %v5672, 0.0
        %v6164 = vmax.f32 %v5674, 0.0
        %v6165 = vmax.f32 %v5785, 0.0
        %v6166 = vmax.f32 %v5787, 0.0
        %v6167 = vmax.f32 %v5898, 0.0
        %v6168 = vmax.f32 %v5900, 0.0
        %v6169 = vmax.f32 %v6011, 0.0
        %v6170 = vmax.f32 %v6013, 0.0
        %v6171 = vmax.f32 %v5224, 0.0
        %v6172 = vmax.f32 %v5226, 0.0
        %v6173 = vmax.f32 %v5337, 0.0
        %v6174 = vmax.f32 %v5339, 0.0
        %v6175 = vmax.f32 %v5450, 0.0
        %v6176 = vmax.f32 %v5452, 0.0
        %v6177 = vmax.f32 %v5563, 0.0
        %v6178 = vmax.f32 %v5565, 0.0
        %v6179 = vmax.f32 %v5676, 0.0
        %v6180 = vmax.f32 %v5678, 0.0
        %v6181 = vmax.f32 %v5789, 0.0
        %v6182 = vmax.f32 %v5791, 0.0
        %v6183 = vmax.f32 %v5902, 0.0
        %v6184 = vmax.f32 %v5904, 0.0
        %v6185 = vmax.f32 %v6015, 0.0
        %v6186 = vmax.f32 %v6017, 0.0
        %v6187 = vmax.f32 %v5230, 0.0
        %v6188 = vmax.f32 %v5232, 0.0
        %v6189 = vmax.f32 %v5343, 0.0
        %v6190 = vmax.f32 %v5345, 0.0
        %v6191 = vmax.f32 %v5456, 0.0
        %v6192 = vmax.f32 %v5458, 0.0
        %v6193 = vmax.f32 %v5569, 0.0
        %v6194 = vmax.f32 %v5571, 0.0
        %v6195 = vmax.f32 %v5682, 0.0
        %v6196 = vmax.f32 %v5684, 0.0
        %v6197 = vmax.f32 %v5795, 0.0
        %v6198 = vmax.f32 %v5797, 0.0
        %v6199 = vmax.f32 %v5908, 0.0
        %v6200 = vmax.f32 %v5910, 0.0
        %v6201 = vmax.f32 %v6021, 0.0
        %v6202 = vmax.f32 %v6023, 0.0
        %v6203 = vmax.f32 %v5234, 0.0
        %v6204 = vmax.f32 %v5236, 0.0
        %v6205 = vmax.f32 %v5347, 0.0
        %v6206 = vmax.f32 %v5349, 0.0
        %v6207 = vmax.f32 %v5460, 0.0
        %v6208 = vmax.f32 %v5462, 0.0
        %v6209 = vmax.f32 %v5573, 0.0
        %v6210 = vmax.f32 %v5575, 0.0
        %v6211 = vmax.f32 %v5686, 0.0
        %v6212 = vmax.f32 %v5688, 0.0
        %v6213 = vmax.f32 %v5799, 0.0
        %v6214 = vmax.f32 %v5801, 0.0
        %v6215 = vmax.f32 %v5912, 0.0
        %v6216 = vmax.f32 %v5914, 0.0
        %v6217 = vmax.f32 %v6025, 0.0
        %v6218 = vmax.f32 %v6027, 0.0
        %v6219 = vmax.f32 %v5240, 0.0
        %v6220 = vmax.f32 %v5242, 0.0
        %v6221 = vmax.f32 %v5353, 0.0
        %v6222 = vmax.f32 %v5355, 0.0
        %v6223 = vmax.f32 %v5466, 0.0
        %v6224 = vmax.f32 %v5468, 0.0
        %v6225 = vmax.f32 %v5579, 0.0
        %v6226 = vmax.f32 %v5581, 0.0
        %v6227 = vmax.f32 %v5692, 0.0
        %v6228 = vmax.f32 %v5694, 0.0
        %v6229 = vmax.f32 %v5805, 0.0
        %v6230 = vmax.f32 %v5807, 0.0
        %v6231 = vmax.f32 %v5918, 0.0
        %v6232 = vmax.f32 %v5920, 0.0
        %v6233 = vmax.f32 %v6031, 0.0
        %v6234 = vmax.f32 %v6033, 0.0
        %v6235 = vmax.f32 %v5244, 0.0
        %v6236 = vmax.f32 %v5246, 0.0
        %v6237 = vmax.f32 %v5357, 0.0
        %v6238 = vmax.f32 %v5359, 0.0
        %v6239 = vmax.f32 %v5470, 0.0
        %v6240 = vmax.f32 %v5472, 0.0
        %v6241 = vmax.f32 %v5583, 0.0
        %v6242 = vmax.f32 %v5585, 0.0
        %v6243 = vmax.f32 %v5696, 0.0
        %v6244 = vmax.f32 %v5698, 0.0
        %v6245 = vmax.f32 %v5809, 0.0
        %v6246 = vmax.f32 %v5811, 0.0
        %v6247 = vmax.f32 %v5922, 0.0
        %v6248 = vmax.f32 %v5924, 0.0
        %v6249 = vmax.f32 %v6035, 0.0
        %v6250 = vmax.f32 %v6037, 0.0
        %v6251 = vmax.f32 %v5250, 0.0
        %v6252 = vmax.f32 %v5252, 0.0
        %v6253 = vmax.f32 %v5363, 0.0
        %v6254 = vmax.f32 %v5365, 0.0
        %v6255 = vmax.f32 %v5476, 0.0
        %v6256 = vmax.f32 %v5478, 0.0
        %v6257 = vmax.f32 %v5589, 0.0
        %v6258 = vmax.f32 %v5591, 0.0
        %v6259 = vmax.f32 %v5702, 0.0
        %v6260 = vmax.f32 %v5704, 0.0
        %v6261 = vmax.f32 %v5815, 0.0
        %v6262 = vmax.f32 %v5817, 0.0
        %v6263 = vmax.f32 %v5928, 0.0
        %v6264 = vmax.f32 %v5930, 0.0
        %v6265 = vmax.f32 %v6041, 0.0
        %v6266 = vmax.f32 %v6043, 0.0
        %v6267 = vmax.f32 %v5254, 0.0
        %v6268 = vmax.f32 %v5256, 0.0
        %v6269 = vmax.f32 %v5367, 0.0
        %v6270 = vmax.f32 %v5369, 0.0
        %v6271 = vmax.f32 %v5480, 0.0
        %v6272 = vmax.f32 %v5482, 0.0
        %v6273 = vmax.f32 %v5593, 0.0
        %v6274 = vmax.f32 %v5595, 0.0
        %v6275 = vmax.f32 %v5706, 0.0
        %v6276 = vmax.f32 %v5708, 0.0
        %v6277 = vmax.f32 %v5819, 0.0
        %v6278 = vmax.f32 %v5821, 0.0
        %v6279 = vmax.f32 %v5932, 0.0
        %v6280 = vmax.f32 %v5934, 0.0
        %v6281 = vmax.f32 %v6045, 0.0
        %v6282 = vmax.f32 %v6047, 0.0
        %v6283 = vmax.f32 %v5260, 0.0
        %v6284 = vmax.f32 %v5262, 0.0
        %v6285 = vmax.f32 %v5373, 0.0
        %v6286 = vmax.f32 %v5375, 0.0
        %v6287 = vmax.f32 %v5486, 0.0
        %v6288 = vmax.f32 %v5488, 0.0
        %v6289 = vmax.f32 %v5599, 0.0
        %v6290 = vmax.f32 %v5601, 0.0
        %v6291 = vmax.f32 %v5712, 0.0
        %v6292 = vmax.f32 %v5714, 0.0
        %v6293 = vmax.f32 %v5825, 0.0
        %v6294 = vmax.f32 %v5827, 0.0
        %v6295 = vmax.f32 %v5938, 0.0
        %v6296 = vmax.f32 %v5940, 0.0
        %v6297 = vmax.f32 %v6051, 0.0
        %v6298 = vmax.f32 %v6053, 0.0
        %v6299 = vmax.f32 %v5264, 0.0
        %v6300 = vmax.f32 %v5266, 0.0
        %v6301 = vmax.f32 %v5377, 0.0
        %v6302 = vmax.f32 %v5379, 0.0
        %v6303 = vmax.f32 %v5490, 0.0
        %v6304 = vmax.f32 %v5492, 0.0
        %v6305 = vmax.f32 %v5603, 0.0
        %v6306 = vmax.f32 %v5605, 0.0
        %v6307 = vmax.f32 %v5716, 0.0
        %v6308 = vmax.f32 %v5718, 0.0
        %v6309 = vmax.f32 %v5829, 0.0
        %v6310 = vmax.f32 %v5831, 0.0
        %v6311 = vmax.f32 %v5942, 0.0
        %v6312 = vmax.f32 %v5944, 0.0
        %v6313 = vmax.f32 %v6055, 0.0
        %v6314 = vmax.f32 %v6057, 0.0
        %v6315 = vpack.c.bf16 %v6075, %v6059
        %v6316 = vpack.c.bf16 %v6076, %v6060
        %v6317 = vpack.c.bf16 %v6077, %v6061
        %v6318 = vpack.c.bf16 %v6078, %v6062
        %v6319 = vpack.c.bf16 %v6079, %v6063
        %v6320 = vpack.c.bf16 %v6080, %v6064
        %v6321 = vpack.c.bf16 %v6081, %v6065
        %v6322 = vpack.c.bf16 %v6082, %v6066
        %v6323 = vpack.c.bf16 %v6083, %v6067
        %v6324 = vpack.c.bf16 %v6084, %v6068
        %v6325 = vpack.c.bf16 %v6085, %v6069
        %v6326 = vpack.c.bf16 %v6086, %v6070
        %v6327 = vpack.c.bf16 %v6087, %v6071
        %v6328 = vpack.c.bf16 %v6088, %v6072
        %v6329 = vpack.c.bf16 %v6089, %v6073
        %v6330 = vpack.c.bf16 %v6090, %v6074
        %v6331 = vpack.c.bf16 %v6107, %v6091
        %v6332 = vpack.c.bf16 %v6108, %v6092
        %v6333 = vpack.c.bf16 %v6109, %v6093
        %v6334 = vpack.c.bf16 %v6110, %v6094
        %v6335 = vpack.c.bf16 %v6111, %v6095
        %v6336 = vpack.c.bf16 %v6112, %v6096
        %v6337 = vpack.c.bf16 %v6113, %v6097
        %v6338 = vpack.c.bf16 %v6114, %v6098
        %v6339 = vpack.c.bf16 %v6115, %v6099
        %v6340 = vpack.c.bf16 %v6116, %v6100
        %v6341 = vpack.c.bf16 %v6117, %v6101
        %v6342 = vpack.c.bf16 %v6118, %v6102
        %v6343 = vpack.c.bf16 %v6119, %v6103
        %v6344 = vpack.c.bf16 %v6120, %v6104
        %v6345 = vpack.c.bf16 %v6121, %v6105
        %v6346 = vpack.c.bf16 %v6122, %v6106
        %v6347 = vpack.c.bf16 %v6139, %v6123
        %v6348 = vpack.c.bf16 %v6140, %v6124
        %v6349 = vpack.c.bf16 %v6141, %v6125
        %v6350 = vpack.c.bf16 %v6142, %v6126
        %v6351 = vpack.c.bf16 %v6143, %v6127
        %v6352 = vpack.c.bf16 %v6144, %v6128
        %v6353 = vpack.c.bf16 %v6145, %v6129
        %v6354 = vpack.c.bf16 %v6146, %v6130
        %v6355 = vpack.c.bf16 %v6147, %v6131
        %v6356 = vpack.c.bf16 %v6148, %v6132
        %v6357 = vpack.c.bf16 %v6149, %v6133
        %v6358 = vpack.c.bf16 %v6150, %v6134
        %v6359 = vpack.c.bf16 %v6151, %v6135
        %v6360 = vpack.c.bf16 %v6152, %v6136
        %v6361 = vpack.c.bf16 %v6153, %v6137
        %v6362 = vpack.c.bf16 %v6154, %v6138
        %v6363 = vpack.c.bf16 %v6171, %v6155
        %v6364 = vpack.c.bf16 %v6172, %v6156
        %v6365 = vpack.c.bf16 %v6173, %v6157
        %v6366 = vpack.c.bf16 %v6174, %v6158
        %v6367 = vpack.c.bf16 %v6175, %v6159
        %v6368 = vpack.c.bf16 %v6176, %v6160
        %v6369 = vpack.c.bf16 %v6177, %v6161
        %v6370 = vpack.c.bf16 %v6178, %v6162
        %v6371 = vpack.c.bf16 %v6179, %v6163
        %v6372 = vpack.c.bf16 %v6180, %v6164
        %v6373 = vpack.c.bf16 %v6181, %v6165
        %v6374 = vpack.c.bf16 %v6182, %v6166
        %v6375 = vpack.c.bf16 %v6183, %v6167
        %v6376 = vpack.c.bf16 %v6184, %v6168
        %v6377 = vpack.c.bf16 %v6185, %v6169
        %v6378 = vpack.c.bf16 %v6186, %v6170
        %v6379 = vpack.c.bf16 %v6203, %v6187
        %v6380 = vpack.c.bf16 %v6204, %v6188
        %v6381 = vpack.c.bf16 %v6205, %v6189
        %v6382 = vpack.c.bf16 %v6206, %v6190
        %v6383 = vpack.c.bf16 %v6207, %v6191
        %v6384 = vpack.c.bf16 %v6208, %v6192
        %v6385 = vpack.c.bf16 %v6209, %v6193
        %v6386 = vpack.c.bf16 %v6210, %v6194
        %v6387 = vpack.c.bf16 %v6211, %v6195
        %v6388 = vpack.c.bf16 %v6212, %v6196
        %v6389 = vpack.c.bf16 %v6213, %v6197
        %v6390 = vpack.c.bf16 %v6214, %v6198
        %v6391 = vpack.c.bf16 %v6215, %v6199
        %v6392 = vpack.c.bf16 %v6216, %v6200
        %v6393 = vpack.c.bf16 %v6217, %v6201
        %v6394 = vpack.c.bf16 %v6218, %v6202
        %v6395 = vpack.c.bf16 %v6235, %v6219
        %v6396 = vpack.c.bf16 %v6236, %v6220
        %v6397 = vpack.c.bf16 %v6237, %v6221
        %v6398 = vpack.c.bf16 %v6238, %v6222
        %v6399 = vpack.c.bf16 %v6239, %v6223
        %v6400 = vpack.c.bf16 %v6240, %v6224
        %v6401 = vpack.c.bf16 %v6241, %v6225
        %v6402 = vpack.c.bf16 %v6242, %v6226
        %v6403 = vpack.c.bf16 %v6243, %v6227
        %v6404 = vpack.c.bf16 %v6244, %v6228
        %v6405 = vpack.c.bf16 %v6245, %v6229
        %v6406 = vpack.c.bf16 %v6246, %v6230
        %v6407 = vpack.c.bf16 %v6247, %v6231
        %v6408 = vpack.c.bf16 %v6248, %v6232
        %v6409 = vpack.c.bf16 %v6249, %v6233
        %v6410 = vpack.c.bf16 %v6250, %v6234
        %v6411 = vpack.c.bf16 %v6267, %v6251
        %v6412 = vpack.c.bf16 %v6268, %v6252
        %v6413 = vpack.c.bf16 %v6269, %v6253
        %v6414 = vpack.c.bf16 %v6270, %v6254
        %v6415 = vpack.c.bf16 %v6271, %v6255
        %v6416 = vpack.c.bf16 %v6272, %v6256
        %v6417 = vpack.c.bf16 %v6273, %v6257
        %v6418 = vpack.c.bf16 %v6274, %v6258
        %v6419 = vpack.c.bf16 %v6275, %v6259
        %v6420 = vpack.c.bf16 %v6276, %v6260
        %v6421 = vpack.c.bf16 %v6277, %v6261
        %v6422 = vpack.c.bf16 %v6278, %v6262
        %v6423 = vpack.c.bf16 %v6279, %v6263
        %v6424 = vpack.c.bf16 %v6280, %v6264
        %v6425 = vpack.c.bf16 %v6281, %v6265
        %v6426 = vpack.c.bf16 %v6282, %v6266
        %v6427 = vpack.c.bf16 %v6299, %v6283
        %v6428 = vpack.c.bf16 %v6300, %v6284
        %v6429 = vpack.c.bf16 %v6301, %v6285
        %v6430 = vpack.c.bf16 %v6302, %v6286
        %v6431 = vpack.c.bf16 %v6303, %v6287
        %v6432 = vpack.c.bf16 %v6304, %v6288
        %v6433 = vpack.c.bf16 %v6305, %v6289
        %v6434 = vpack.c.bf16 %v6306, %v6290
        %v6435 = vpack.c.bf16 %v6307, %v6291
        %v6436 = vpack.c.bf16 %v6308, %v6292
        %v6437 = vpack.c.bf16 %v6309, %v6293
        %v6438 = vpack.c.bf16 %v6310, %v6294
        %v6439 = vpack.c.bf16 %v6311, %v6295
        %v6440 = vpack.c.bf16 %v6312, %v6296
        %v6441 = vpack.c.bf16 %v6313, %v6297
        %v6442 = vpack.c.bf16 %v6314, %v6298
        %v6443 = vld [vmem:[%s436] sm:$0xf]
        %v6444 = vld [vmem:[%s436 + $0x4] sm:$0xf]
        %v6445 = vld [vmem:[%s436 + $0x8] sm:$0xf]
        %v6446 = vld [vmem:[%s436 + $0xc] sm:$0xf]
        %v6447 = vld [vmem:[%s436 + $0x10] sm:$0xf]
        %v6448 = vld [vmem:[%s436 + $0x14] sm:$0xf]
        %v6449 = vld [vmem:[%s436 + $0x18] sm:$0xf]
        %v6450 = vld [vmem:[%s436 + $0x1c] sm:$0xf]
        %v6451 = vld [vmem:[%s436 + $0x20] sm:$0xf]
        %v6452 = vld [vmem:[%s436 + $0x24] sm:$0xf]
        %v6453 = vld [vmem:[%s436 + $0x28] sm:$0xf]
        %v6454 = vld [vmem:[%s436 + $0x2c] sm:$0xf]
        %v6455 = vld [vmem:[%s436 + $0x30] sm:$0xf]
        %v6456 = vld [vmem:[%s436 + $0x34] sm:$0xf]
        %v6457 = vld [vmem:[%s436 + $0x38] sm:$0xf]
        %v6458 = vld [vmem:[%s436 + $0x3c] sm:$0xf]
        %v6459 = vld [vmem:[%s436 + $0x40] sm:$0xf]
        %v6460 = vld [vmem:[%s436 + $0x44] sm:$0xf]
        %v6461 = vld [vmem:[%s436 + $0x48] sm:$0xf]
        %v6462 = vld [vmem:[%s436 + $0x4c] sm:$0xf]
        %v6463 = vld [vmem:[%s436 + $0x50] sm:$0xf]
        %v6464 = vld [vmem:[%s436 + $0x54] sm:$0xf]
        %v6465 = vld [vmem:[%s436 + $0x58] sm:$0xf]
        %v6466 = vld [vmem:[%s436 + $0x5c] sm:$0xf]
        %v6467 = vld [vmem:[%s436 + $0x60] sm:$0xf]
        %v6468 = vld [vmem:[%s436 + $0x64] sm:$0xf]
        %v6469 = vld [vmem:[%s436 + $0x68] sm:$0xf]
        %v6470 = vld [vmem:[%s436 + $0x6c] sm:$0xf]
        %v6471 = vld [vmem:[%s436 + $0x70] sm:$0xf]
        %v6472 = vld [vmem:[%s436 + $0x74] sm:$0xf]
        %v6473 = vld [vmem:[%s436 + $0x78] sm:$0xf]
        %v6474 = vld [vmem:[%s436 + $0x7c] sm:$0xf]
        %v6475 = vld [vmem:[%s436 + $0x80] sm:$0xf]
        %v6476 = vld [vmem:[%s436 + $0x84] sm:$0xf]
        %v6477 = vld [vmem:[%s436 + $0x88] sm:$0xf]
        %v6478 = vld [vmem:[%s436 + $0x8c] sm:$0xf]
        %v6479 = vld [vmem:[%s436 + $0x90] sm:$0xf]
        %v6480 = vld [vmem:[%s436 + $0x94] sm:$0xf]
        %v6481 = vld [vmem:[%s436 + $0x98] sm:$0xf]
        %v6482 = vld [vmem:[%s436 + $0x9c] sm:$0xf]
        %v6483 = vld [vmem:[%s436 + $0xa0] sm:$0xf]
        %v6484 = vld [vmem:[%s436 + $0xa4] sm:$0xf]
        %v6485 = vld [vmem:[%s436 + $0xa8] sm:$0xf]
        %v6486 = vld [vmem:[%s436 + $0xac] sm:$0xf]
        %v6487 = vld [vmem:[%s436 + $0xb0] sm:$0xf]
        %v6488 = vld [vmem:[%s436 + $0xb4] sm:$0xf]
        %v6489 = vld [vmem:[%s436 + $0xb8] sm:$0xf]
        %v6490 = vld [vmem:[%s436 + $0xbc] sm:$0xf]
        %v6491 = vld [vmem:[%s436 + $0xc0] sm:$0xf]
        %v6492 = vld [vmem:[%s436 + $0xc4] sm:$0xf]
        %v6493 = vld [vmem:[%s436 + $0xc8] sm:$0xf]
        %v6494 = vld [vmem:[%s436 + $0xcc] sm:$0xf]
        %v6495 = vld [vmem:[%s436 + $0xd0] sm:$0xf]
        %v6496 = vld [vmem:[%s436 + $0xd4] sm:$0xf]
        %v6497 = vld [vmem:[%s436 + $0xd8] sm:$0xf]
        %v6498 = vld [vmem:[%s436 + $0xdc] sm:$0xf]
        %v6499 = vld [vmem:[%s436 + $0xe0] sm:$0xf]
        %v6500 = vld [vmem:[%s436 + $0xe4] sm:$0xf]
        %v6501 = vld [vmem:[%s436 + $0xe8] sm:$0xf]
        %v6502 = vld [vmem:[%s436 + $0xec] sm:$0xf]
        %v6503 = vld [vmem:[%s436 + $0xf0] sm:$0xf]
        %v6504 = vld [vmem:[%s436 + $0xf4] sm:$0xf]
        %v6505 = vld [vmem:[%s436 + $0xf8] sm:$0xf]
        %v6506 = vld [vmem:[%s436 + $0xfc] sm:$0xf]
        %v6507 = vld [vmem:[%s436 + $0x100] sm:$0xf]
        %v6508 = vld [vmem:[%s436 + $0x104] sm:$0xf]
        %v6509 = vld [vmem:[%s436 + $0x108] sm:$0xf]
        %v6510 = vld [vmem:[%s436 + $0x10c] sm:$0xf]
        %v6511 = vld [vmem:[%s436 + $0x110] sm:$0xf]
        %v6512 = vld [vmem:[%s436 + $0x114] sm:$0xf]
        %v6513 = vld [vmem:[%s436 + $0x118] sm:$0xf]
        %v6514 = vld [vmem:[%s436 + $0x11c] sm:$0xf]
        %v6515 = vld [vmem:[%s436 + $0x120] sm:$0xf]
        %v6516 = vld [vmem:[%s436 + $0x124] sm:$0xf]
        %v6517 = vld [vmem:[%s436 + $0x128] sm:$0xf]
        %v6518 = vld [vmem:[%s436 + $0x12c] sm:$0xf]
        %v6519 = vld [vmem:[%s436 + $0x130] sm:$0xf]
        %v6520 = vld [vmem:[%s436 + $0x134] sm:$0xf]
        %v6521 = vld [vmem:[%s436 + $0x138] sm:$0xf]
        %v6522 = vld [vmem:[%s436 + $0x13c] sm:$0xf]
        %v6523 = vld [vmem:[%s436 + $0x140] sm:$0xf]
        %v6524 = vld [vmem:[%s436 + $0x144] sm:$0xf]
        %v6525 = vld [vmem:[%s436 + $0x148] sm:$0xf]
        %v6526 = vld [vmem:[%s436 + $0x14c] sm:$0xf]
        %v6527 = vld [vmem:[%s436 + $0x150] sm:$0xf]
        %v6528 = vld [vmem:[%s436 + $0x154] sm:$0xf]
        %v6529 = vld [vmem:[%s436 + $0x158] sm:$0xf]
        %v6530 = vld [vmem:[%s436 + $0x15c] sm:$0xf]
        %v6531 = vld [vmem:[%s436 + $0x160] sm:$0xf]
        %v6532 = vld [vmem:[%s436 + $0x164] sm:$0xf]
        %v6533 = vld [vmem:[%s436 + $0x168] sm:$0xf]
        %v6534 = vld [vmem:[%s436 + $0x16c] sm:$0xf]
        %v6535 = vld [vmem:[%s436 + $0x170] sm:$0xf]
        %v6536 = vld [vmem:[%s436 + $0x174] sm:$0xf]
        %v6537 = vld [vmem:[%s436 + $0x178] sm:$0xf]
        %v6538 = vld [vmem:[%s436 + $0x17c] sm:$0xf]
        %v6539 = vld [vmem:[%s436 + $0x180] sm:$0xf]
        %v6540 = vld [vmem:[%s436 + $0x184] sm:$0xf]
        %v6541 = vld [vmem:[%s436 + $0x188] sm:$0xf]
        %v6542 = vld [vmem:[%s436 + $0x18c] sm:$0xf]
        %v6543 = vld [vmem:[%s436 + $0x190] sm:$0xf]
        %v6544 = vld [vmem:[%s436 + $0x194] sm:$0xf]
        %v6545 = vld [vmem:[%s436 + $0x198] sm:$0xf]
        %v6546 = vld [vmem:[%s436 + $0x19c] sm:$0xf]
        %v6547 = vld [vmem:[%s436 + $0x1a0] sm:$0xf]
        %v6548 = vld [vmem:[%s436 + $0x1a4] sm:$0xf]
        %v6549 = vld [vmem:[%s436 + $0x1a8] sm:$0xf]
        %v6550 = vld [vmem:[%s436 + $0x1ac] sm:$0xf]
        %v6551 = vld [vmem:[%s436 + $0x1b0] sm:$0xf]
        %v6552 = vld [vmem:[%s436 + $0x1b4] sm:$0xf]
        %v6553 = vld [vmem:[%s436 + $0x1b8] sm:$0xf]
        %v6554 = vld [vmem:[%s436 + $0x1bc] sm:$0xf]
        %v6555 = vld [vmem:[%s436 + $0x1c0] sm:$0xf]
        %v6556 = vld [vmem:[%s436 + $0x1c4] sm:$0xf]
        %v6557 = vld [vmem:[%s436 + $0x1c8] sm:$0xf]
        %v6558 = vld [vmem:[%s436 + $0x1cc] sm:$0xf]
        %v6559 = vld [vmem:[%s436 + $0x1d0] sm:$0xf]
        %v6560 = vld [vmem:[%s436 + $0x1d4] sm:$0xf]
        %v6561 = vld [vmem:[%s436 + $0x1d8] sm:$0xf]
        %v6562 = vld [vmem:[%s436 + $0x1dc] sm:$0xf]
        %v6563 = vld [vmem:[%s436 + $0x1e0] sm:$0xf]
        %v6564 = vld [vmem:[%s436 + $0x1e4] sm:$0xf]
        %v6565 = vld [vmem:[%s436 + $0x1e8] sm:$0xf]
        %v6566 = vld [vmem:[%s436 + $0x1ec] sm:$0xf]
        %v6567 = vld [vmem:[%s436 + $0x1f0] sm:$0xf]
        %v6568 = vld [vmem:[%s436 + $0x1f4] sm:$0xf]
        %v6569 = vld [vmem:[%s436 + $0x1f8] sm:$0xf]
        %v6570 = vld [vmem:[%s436 + $0x1fc] sm:$0xf]
        %v6571 = vld [vmem:[%s436 + $0x200] sm:$0xf]
        %v6572 = vld [vmem:[%s436 + $0x204] sm:$0xf]
        %v6573 = vld [vmem:[%s436 + $0x208] sm:$0xf]
        %v6574 = vld [vmem:[%s436 + $0x20c] sm:$0xf]
        %v6575 = vld [vmem:[%s436 + $0x210] sm:$0xf]
        %v6576 = vld [vmem:[%s436 + $0x214] sm:$0xf]
        %v6577 = vld [vmem:[%s436 + $0x218] sm:$0xf]
        %v6578 = vld [vmem:[%s436 + $0x21c] sm:$0xf]
        %v6579 = vld [vmem:[%s436 + $0x220] sm:$0xf]
        %v6580 = vld [vmem:[%s436 + $0x224] sm:$0xf]
        %v6581 = vld [vmem:[%s436 + $0x228] sm:$0xf]
        %v6582 = vld [vmem:[%s436 + $0x22c] sm:$0xf]
        %v6583 = vld [vmem:[%s436 + $0x230] sm:$0xf]
        %v6584 = vld [vmem:[%s436 + $0x234] sm:$0xf]
        %v6585 = vld [vmem:[%s436 + $0x238] sm:$0xf]
        %v6586 = vld [vmem:[%s436 + $0x23c] sm:$0xf]
        %v6587 = vld [vmem:[%s436 + $0x240] sm:$0xf]
        %v6588 = vld [vmem:[%s436 + $0x244] sm:$0xf]
        %v6589 = vld [vmem:[%s436 + $0x248] sm:$0xf]
        %v6590 = vld [vmem:[%s436 + $0x24c] sm:$0xf]
        %v6591 = vld [vmem:[%s436 + $0x250] sm:$0xf]
        %v6592 = vld [vmem:[%s436 + $0x254] sm:$0xf]
        %v6593 = vld [vmem:[%s436 + $0x258] sm:$0xf]
        %v6594 = vld [vmem:[%s436 + $0x25c] sm:$0xf]
        %v6595 = vld [vmem:[%s436 + $0x260] sm:$0xf]
        %v6596 = vld [vmem:[%s436 + $0x264] sm:$0xf]
        %v6597 = vld [vmem:[%s436 + $0x268] sm:$0xf]
        %v6598 = vld [vmem:[%s436 + $0x26c] sm:$0xf]
        %v6599 = vld [vmem:[%s436 + $0x270] sm:$0xf]
        %v6600 = vld [vmem:[%s436 + $0x274] sm:$0xf]
        %v6601 = vld [vmem:[%s436 + $0x278] sm:$0xf]
        %v6602 = vld [vmem:[%s436 + $0x27c] sm:$0xf]
        %v6603 = vld [vmem:[%s436 + $0x280] sm:$0xf]
        %v6604 = vld [vmem:[%s436 + $0x284] sm:$0xf]
        %v6605 = vld [vmem:[%s436 + $0x288] sm:$0xf]
        %v6606 = vld [vmem:[%s436 + $0x28c] sm:$0xf]
        %v6607 = vld [vmem:[%s436 + $0x290] sm:$0xf]
        %v6608 = vld [vmem:[%s436 + $0x294] sm:$0xf]
        %v6609 = vld [vmem:[%s436 + $0x298] sm:$0xf]
        %v6610 = vld [vmem:[%s436 + $0x29c] sm:$0xf]
        %v6611 = vld [vmem:[%s436 + $0x2a0] sm:$0xf]
        %v6612 = vld [vmem:[%s436 + $0x2a4] sm:$0xf]
        %v6613 = vld [vmem:[%s436 + $0x2a8] sm:$0xf]
        %v6614 = vld [vmem:[%s436 + $0x2ac] sm:$0xf]
        %v6615 = vld [vmem:[%s436 + $0x2b0] sm:$0xf]
        %v6616 = vld [vmem:[%s436 + $0x2b4] sm:$0xf]
        %v6617 = vld [vmem:[%s436 + $0x2b8] sm:$0xf]
        %v6618 = vld [vmem:[%s436 + $0x2bc] sm:$0xf]
        %v6619 = vld [vmem:[%s436 + $0x2c0] sm:$0xf]
        %v6620 = vld [vmem:[%s436 + $0x2c4] sm:$0xf]
        %v6621 = vld [vmem:[%s436 + $0x2c8] sm:$0xf]
        %v6622 = vld [vmem:[%s436 + $0x2cc] sm:$0xf]
        %v6623 = vld [vmem:[%s436 + $0x2d0] sm:$0xf]
        %v6624 = vld [vmem:[%s436 + $0x2d4] sm:$0xf]
        %v6625 = vld [vmem:[%s436 + $0x2d8] sm:$0xf]
        %v6626 = vld [vmem:[%s436 + $0x2dc] sm:$0xf]
        %v6627 = vld [vmem:[%s436 + $0x2e0] sm:$0xf]
        %v6628 = vld [vmem:[%s436 + $0x2e4] sm:$0xf]
        %v6629 = vld [vmem:[%s436 + $0x2e8] sm:$0xf]
        %v6630 = vld [vmem:[%s436 + $0x2ec] sm:$0xf]
        %v6631 = vld [vmem:[%s436 + $0x2f0] sm:$0xf]
        %v6632 = vld [vmem:[%s436 + $0x2f4] sm:$0xf]
        %v6633 = vld [vmem:[%s436 + $0x2f8] sm:$0xf]
        %v6634 = vld [vmem:[%s436 + $0x2fc] sm:$0xf]
        %v6635 = vld [vmem:[%s436 + $0x300] sm:$0xf]
        %v6636 = vld [vmem:[%s436 + $0x304] sm:$0xf]
        %v6637 = vld [vmem:[%s436 + $0x308] sm:$0xf]
        %v6638 = vld [vmem:[%s436 + $0x30c] sm:$0xf]
        %v6639 = vld [vmem:[%s436 + $0x310] sm:$0xf]
        %v6640 = vld [vmem:[%s436 + $0x314] sm:$0xf]
        %v6641 = vld [vmem:[%s436 + $0x318] sm:$0xf]
        %v6642 = vld [vmem:[%s436 + $0x31c] sm:$0xf]
        %v6643 = vld [vmem:[%s436 + $0x320] sm:$0xf]
        %v6644 = vld [vmem:[%s436 + $0x324] sm:$0xf]
        %v6645 = vld [vmem:[%s436 + $0x328] sm:$0xf]
        %v6646 = vld [vmem:[%s436 + $0x32c] sm:$0xf]
        %v6647 = vld [vmem:[%s436 + $0x330] sm:$0xf]
        %v6648 = vld [vmem:[%s436 + $0x334] sm:$0xf]
        %v6649 = vld [vmem:[%s436 + $0x338] sm:$0xf]
        %v6650 = vld [vmem:[%s436 + $0x33c] sm:$0xf]
        %v6651 = vld [vmem:[%s436 + $0x340] sm:$0xf]
        %v6652 = vld [vmem:[%s436 + $0x344] sm:$0xf]
        %v6653 = vld [vmem:[%s436 + $0x348] sm:$0xf]
        %v6654 = vld [vmem:[%s436 + $0x34c] sm:$0xf]
        %v6655 = vld [vmem:[%s436 + $0x350] sm:$0xf]
        %v6656 = vld [vmem:[%s436 + $0x354] sm:$0xf]
        %v6657 = vld [vmem:[%s436 + $0x358] sm:$0xf]
        %v6658 = vld [vmem:[%s436 + $0x35c] sm:$0xf]
        %v6659 = vld [vmem:[%s436 + $0x360] sm:$0xf]
        %v6660 = vld [vmem:[%s436 + $0x364] sm:$0xf]
        %v6661 = vld [vmem:[%s436 + $0x368] sm:$0xf]
        %v6662 = vld [vmem:[%s436 + $0x36c] sm:$0xf]
        %v6663 = vld [vmem:[%s436 + $0x370] sm:$0xf]
        %v6664 = vld [vmem:[%s436 + $0x374] sm:$0xf]
        %v6665 = vld [vmem:[%s436 + $0x378] sm:$0xf]
        %v6666 = vld [vmem:[%s436 + $0x37c] sm:$0xf]
        %v6667 = vld [vmem:[%s436 + $0x380] sm:$0xf]
        %v6668 = vld [vmem:[%s436 + $0x384] sm:$0xf]
        %v6669 = vld [vmem:[%s436 + $0x388] sm:$0xf]
        %v6670 = vld [vmem:[%s436 + $0x38c] sm:$0xf]
        %v6671 = vld [vmem:[%s436 + $0x390] sm:$0xf]
        %v6672 = vld [vmem:[%s436 + $0x394] sm:$0xf]
        %v6673 = vld [vmem:[%s436 + $0x398] sm:$0xf]
        %v6674 = vld [vmem:[%s436 + $0x39c] sm:$0xf]
        %v6675 = vld [vmem:[%s436 + $0x3a0] sm:$0xf]
        %v6676 = vld [vmem:[%s436 + $0x3a4] sm:$0xf]
        %v6677 = vld [vmem:[%s436 + $0x3a8] sm:$0xf]
        %v6678 = vld [vmem:[%s436 + $0x3ac] sm:$0xf]
        %v6679 = vld [vmem:[%s436 + $0x3b0] sm:$0xf]
        %v6680 = vld [vmem:[%s436 + $0x3b4] sm:$0xf]
        %v6681 = vld [vmem:[%s436 + $0x3b8] sm:$0xf]
        %v6682 = vld [vmem:[%s436 + $0x3bc] sm:$0xf]
        %v6683 = vld [vmem:[%s436 + $0x3c0] sm:$0xf]
        %v6684 = vld [vmem:[%s436 + $0x3c4] sm:$0xf]
        %v6685 = vld [vmem:[%s436 + $0x3c8] sm:$0xf]
        %v6686 = vld [vmem:[%s436 + $0x3cc] sm:$0xf]
        %v6687 = vld [vmem:[%s436 + $0x3d0] sm:$0xf]
        %v6688 = vld [vmem:[%s436 + $0x3d4] sm:$0xf]
        %v6689 = vld [vmem:[%s436 + $0x3d8] sm:$0xf]
        %v6690 = vld [vmem:[%s436 + $0x3dc] sm:$0xf]
        %v6691 = vld [vmem:[%s436 + $0x3e0] sm:$0xf]
        %v6692 = vld [vmem:[%s436 + $0x3e4] sm:$0xf]
        %v6693 = vld [vmem:[%s436 + $0x3e8] sm:$0xf]
        %v6694 = vld [vmem:[%s436 + $0x3ec] sm:$0xf]
        %v6695 = vld [vmem:[%s436 + $0x3f0] sm:$0xf]
        %v6696 = vld [vmem:[%s436 + $0x3f4] sm:$0xf]
        %v6697 = vld [vmem:[%s436 + $0x3f8] sm:$0xf]
        %v6698 = vld [vmem:[%s436 + $0x3fc] sm:$0xf]
        %v6699 = vlaneseq
        %v6700 = vshrl.u32 %v6699, 7
        %v6701 = vsub.s32 3, %v6700
        %v6702 = vrot.slane %v565, %v6701
        %v6959 = vunpack.c.l.b16 %v6443
        %v6960 = vunpack.c.l.b16 %v6444
        %v6961 = vunpack.c.l.b16 %v6445
        %v6962 = vunpack.c.l.b16 %v6446
        %v6963 = vunpack.c.l.b16 %v6447
        %v6964 = vunpack.c.l.b16 %v6448
        %v6965 = vunpack.c.l.b16 %v6449
        %v6966 = vunpack.c.l.b16 %v6450
        %v6967 = vunpack.c.l.b16 %v6451
        %v6968 = vunpack.c.l.b16 %v6452
        %v6969 = vunpack.c.l.b16 %v6453
        %v6970 = vunpack.c.l.b16 %v6454
        %v6971 = vunpack.c.l.b16 %v6455
        %v6972 = vunpack.c.l.b16 %v6456
        %v6973 = vunpack.c.l.b16 %v6457
        %v6974 = vunpack.c.l.b16 %v6458
        %v6975 = vunpack.c.l.b16 %v6459
        %v6976 = vunpack.c.l.b16 %v6460
        %v6977 = vunpack.c.l.b16 %v6461
        %v6978 = vunpack.c.l.b16 %v6462
        %v6979 = vunpack.c.l.b16 %v6463
        %v6980 = vunpack.c.l.b16 %v6464
        %v6981 = vunpack.c.l.b16 %v6465
        %v6982 = vunpack.c.l.b16 %v6466
        %v6983 = vunpack.c.l.b16 %v6467
        %v6984 = vunpack.c.l.b16 %v6468
        %v6985 = vunpack.c.l.b16 %v6469
        %v6986 = vunpack.c.l.b16 %v6470
        %v6987 = vunpack.c.l.b16 %v6471
        %v6988 = vunpack.c.l.b16 %v6472
        %v6989 = vunpack.c.l.b16 %v6473
        %v6990 = vunpack.c.l.b16 %v6474
        %v6991 = vunpack.c.l.b16 %v6475
        %v6992 = vunpack.c.l.b16 %v6476
        %v6993 = vunpack.c.l.b16 %v6477
        %v6994 = vunpack.c.l.b16 %v6478
        %v6995 = vunpack.c.l.b16 %v6479
        %v6996 = vunpack.c.l.b16 %v6480
        %v6997 = vunpack.c.l.b16 %v6481
        %v6998 = vunpack.c.l.b16 %v6482
        %v6999 = vunpack.c.l.b16 %v6483
        %v7000 = vunpack.c.l.b16 %v6484
        %v7001 = vunpack.c.l.b16 %v6485
        %v7002 = vunpack.c.l.b16 %v6486
        %v7003 = vunpack.c.l.b16 %v6487
        %v7004 = vunpack.c.l.b16 %v6488
        %v7005 = vunpack.c.l.b16 %v6489
        %v7006 = vunpack.c.l.b16 %v6490
        %v7007 = vunpack.c.l.b16 %v6491
        %v7008 = vunpack.c.l.b16 %v6492
        %v7009 = vunpack.c.l.b16 %v6493
        %v7010 = vunpack.c.l.b16 %v6494
        %v7011 = vunpack.c.l.b16 %v6495
        %v7012 = vunpack.c.l.b16 %v6496
        %v7013 = vunpack.c.l.b16 %v6497
        %v7014 = vunpack.c.l.b16 %v6498
        %v7015 = vunpack.c.l.b16 %v6499
        %v7016 = vunpack.c.l.b16 %v6500
        %v7017 = vunpack.c.l.b16 %v6501
        %v7018 = vunpack.c.l.b16 %v6502
        %v7019 = vunpack.c.l.b16 %v6503
        %v7020 = vunpack.c.l.b16 %v6504
        %v7021 = vunpack.c.l.b16 %v6505
        %v7022 = vunpack.c.l.b16 %v6506
        %v7023 = vunpack.c.l.b16 %v6507
        %v7024 = vunpack.c.l.b16 %v6508
        %v7025 = vunpack.c.l.b16 %v6509
        %v7026 = vunpack.c.l.b16 %v6510
        %v7027 = vunpack.c.l.b16 %v6511
        %v7028 = vunpack.c.l.b16 %v6512
        %v7029 = vunpack.c.l.b16 %v6513
        %v7030 = vunpack.c.l.b16 %v6514
        %v7031 = vunpack.c.l.b16 %v6515
        %v7032 = vunpack.c.l.b16 %v6516
        %v7033 = vunpack.c.l.b16 %v6517
        %v7034 = vunpack.c.l.b16 %v6518
        %v7035 = vunpack.c.l.b16 %v6519
        %v7036 = vunpack.c.l.b16 %v6520
        %v7037 = vunpack.c.l.b16 %v6521
        %v7038 = vunpack.c.l.b16 %v6522
        %v7039 = vunpack.c.l.b16 %v6523
        %v7040 = vunpack.c.l.b16 %v6524
        %v7041 = vunpack.c.l.b16 %v6525
        %v7042 = vunpack.c.l.b16 %v6526
        %v7043 = vunpack.c.l.b16 %v6527
        %v7044 = vunpack.c.l.b16 %v6528
        %v7045 = vunpack.c.l.b16 %v6529
        %v7046 = vunpack.c.l.b16 %v6530
        %v7047 = vunpack.c.l.b16 %v6531
        %v7048 = vunpack.c.l.b16 %v6532
        %v7049 = vunpack.c.l.b16 %v6533
        %v7050 = vunpack.c.l.b16 %v6534
        %v7051 = vunpack.c.l.b16 %v6535
        %v7052 = vunpack.c.l.b16 %v6536
        %v7053 = vunpack.c.l.b16 %v6537
        %v7054 = vunpack.c.l.b16 %v6538
        %v7055 = vunpack.c.l.b16 %v6539
        %v7056 = vunpack.c.l.b16 %v6540
        %v7057 = vunpack.c.l.b16 %v6541
        %v7058 = vunpack.c.l.b16 %v6542
        %v7059 = vunpack.c.l.b16 %v6543
        %v7060 = vunpack.c.l.b16 %v6544
        %v7061 = vunpack.c.l.b16 %v6545
        %v7062 = vunpack.c.l.b16 %v6546
        %v7063 = vunpack.c.l.b16 %v6547
        %v7064 = vunpack.c.l.b16 %v6548
        %v7065 = vunpack.c.l.b16 %v6549
        %v7066 = vunpack.c.l.b16 %v6550
        %v7067 = vunpack.c.l.b16 %v6551
        %v7068 = vunpack.c.l.b16 %v6552
        %v7069 = vunpack.c.l.b16 %v6553
        %v7070 = vunpack.c.l.b16 %v6554
        %v7071 = vunpack.c.l.b16 %v6555
        %v7072 = vunpack.c.l.b16 %v6556
        %v7073 = vunpack.c.l.b16 %v6557
        %v7074 = vunpack.c.l.b16 %v6558
        %v7075 = vunpack.c.l.b16 %v6559
        %v7076 = vunpack.c.l.b16 %v6560
        %v7077 = vunpack.c.l.b16 %v6561
        %v7078 = vunpack.c.l.b16 %v6562
        %v7079 = vunpack.c.l.b16 %v6563
        %v7080 = vunpack.c.l.b16 %v6564
        %v7081 = vunpack.c.l.b16 %v6565
        %v7082 = vunpack.c.l.b16 %v6566
        %v7083 = vunpack.c.l.b16 %v6567
        %v7084 = vunpack.c.l.b16 %v6568
        %v7085 = vunpack.c.l.b16 %v6569
        %v7086 = vunpack.c.l.b16 %v6570
        %v7087 = vunpack.c.l.b16 %v6571
        %v7088 = vunpack.c.l.b16 %v6572
        %v7089 = vunpack.c.l.b16 %v6573
        %v7090 = vunpack.c.l.b16 %v6574
        %v7091 = vunpack.c.l.b16 %v6575
        %v7092 = vunpack.c.l.b16 %v6576
        %v7093 = vunpack.c.l.b16 %v6577
        %v7094 = vunpack.c.l.b16 %v6578
        %v7095 = vunpack.c.l.b16 %v6579
        %v7096 = vunpack.c.l.b16 %v6580
        %v7097 = vunpack.c.l.b16 %v6581
        %v7098 = vunpack.c.l.b16 %v6582
        %v7099 = vunpack.c.l.b16 %v6583
        %v7100 = vunpack.c.l.b16 %v6584
        %v7101 = vunpack.c.l.b16 %v6585
        %v7102 = vunpack.c.l.b16 %v6586
        %v7103 = vunpack.c.l.b16 %v6587
        %v7104 = vunpack.c.l.b16 %v6588
        %v7105 = vunpack.c.l.b16 %v6589
        %v7106 = vunpack.c.l.b16 %v6590
        %v7107 = vunpack.c.l.b16 %v6591
        %v7108 = vunpack.c.l.b16 %v6592
        %v7109 = vunpack.c.l.b16 %v6593
        %v7110 = vunpack.c.l.b16 %v6594
        %v7111 = vunpack.c.l.b16 %v6595
        %v7112 = vunpack.c.l.b16 %v6596
        %v7113 = vunpack.c.l.b16 %v6597
        %v7114 = vunpack.c.l.b16 %v6598
        %v7115 = vunpack.c.l.b16 %v6599
        %v7116 = vunpack.c.l.b16 %v6600
        %v7117 = vunpack.c.l.b16 %v6601
        %v7118 = vunpack.c.l.b16 %v6602
        %v7119 = vunpack.c.l.b16 %v6603
        %v7120 = vunpack.c.l.b16 %v6604
        %v7121 = vunpack.c.l.b16 %v6605
        %v7122 = vunpack.c.l.b16 %v6606
        %v7123 = vunpack.c.l.b16 %v6607
        %v7124 = vunpack.c.l.b16 %v6608
        %v7125 = vunpack.c.l.b16 %v6609
        %v7126 = vunpack.c.l.b16 %v6610
        %v7127 = vunpack.c.l.b16 %v6611
        %v7128 = vunpack.c.l.b16 %v6612
        %v7129 = vunpack.c.l.b16 %v6613
        %v7130 = vunpack.c.l.b16 %v6614
        %v7131 = vunpack.c.l.b16 %v6615
        %v7132 = vunpack.c.l.b16 %v6616
        %v7133 = vunpack.c.l.b16 %v6617
        %v7134 = vunpack.c.l.b16 %v6618
        %v7135 = vunpack.c.l.b16 %v6619
        %v7136 = vunpack.c.l.b16 %v6620
        %v7137 = vunpack.c.l.b16 %v6621
        %v7138 = vunpack.c.l.b16 %v6622
        %v7139 = vunpack.c.l.b16 %v6623
        %v7140 = vunpack.c.l.b16 %v6624
        %v7141 = vunpack.c.l.b16 %v6625
        %v7142 = vunpack.c.l.b16 %v6626
        %v7143 = vunpack.c.l.b16 %v6627
        %v7144 = vunpack.c.l.b16 %v6628
        %v7145 = vunpack.c.l.b16 %v6629
        %v7146 = vunpack.c.l.b16 %v6630
        %v7147 = vunpack.c.l.b16 %v6631
        %v7148 = vunpack.c.l.b16 %v6632
        %v7149 = vunpack.c.l.b16 %v6633
        %v7150 = vunpack.c.l.b16 %v6634
        %v7151 = vunpack.c.l.b16 %v6635
        %v7152 = vunpack.c.l.b16 %v6636
        %v7153 = vunpack.c.l.b16 %v6637
        %v7154 = vunpack.c.l.b16 %v6638
        %v7155 = vunpack.c.l.b16 %v6639
        %v7156 = vunpack.c.l.b16 %v6640
        %v7157 = vunpack.c.l.b16 %v6641
        %v7158 = vunpack.c.l.b16 %v6642
        %v7159 = vunpack.c.l.b16 %v6643
        %v7160 = vunpack.c.l.b16 %v6644
        %v7161 = vunpack.c.l.b16 %v6645
        %v7162 = vunpack.c.l.b16 %v6646
        %v7163 = vunpack.c.l.b16 %v6647
        %v7164 = vunpack.c.l.b16 %v6648
        %v7165 = vunpack.c.l.b16 %v6649
        %v7166 = vunpack.c.l.b16 %v6650
        %v7167 = vunpack.c.l.b16 %v6651
        %v7168 = vunpack.c.l.b16 %v6652
        %v7169 = vunpack.c.l.b16 %v6653
        %v7170 = vunpack.c.l.b16 %v6654
        %v7171 = vunpack.c.l.b16 %v6655
        %v7172 = vunpack.c.l.b16 %v6656
        %v7173 = vunpack.c.l.b16 %v6657
        %v7174 = vunpack.c.l.b16 %v6658
        %v7175 = vunpack.c.l.b16 %v6659
        %v7176 = vunpack.c.l.b16 %v6660
        %v7177 = vunpack.c.l.b16 %v6661
        %v7178 = vunpack.c.l.b16 %v6662
        %v7179 = vunpack.c.l.b16 %v6663
        %v7180 = vunpack.c.l.b16 %v6664
        %v7181 = vunpack.c.l.b16 %v6665
        %v7182 = vunpack.c.l.b16 %v6666
        %v7183 = vunpack.c.l.b16 %v6667
        %v7184 = vunpack.c.l.b16 %v6668
        %v7185 = vunpack.c.l.b16 %v6669
        %v7186 = vunpack.c.l.b16 %v6670
        %v7187 = vunpack.c.l.b16 %v6671
        %v7188 = vunpack.c.l.b16 %v6672
        %v7189 = vunpack.c.l.b16 %v6673
        %v7190 = vunpack.c.l.b16 %v6674
        %v7191 = vunpack.c.l.b16 %v6675
        %v7192 = vunpack.c.l.b16 %v6676
        %v7193 = vunpack.c.l.b16 %v6677
        %v7194 = vunpack.c.l.b16 %v6678
        %v7195 = vunpack.c.l.b16 %v6679
        %v7196 = vunpack.c.l.b16 %v6680
        %v7197 = vunpack.c.l.b16 %v6681
        %v7198 = vunpack.c.l.b16 %v6682
        %v7199 = vunpack.c.l.b16 %v6683
        %v7200 = vunpack.c.l.b16 %v6684
        %v7201 = vunpack.c.l.b16 %v6685
        %v7202 = vunpack.c.l.b16 %v6686
        %v7203 = vunpack.c.l.b16 %v6687
        %v7204 = vunpack.c.l.b16 %v6688
        %v7205 = vunpack.c.l.b16 %v6689
        %v7206 = vunpack.c.l.b16 %v6690
        %v7207 = vunpack.c.l.b16 %v6691
        %v7208 = vunpack.c.l.b16 %v6692
        %v7209 = vunpack.c.l.b16 %v6693
        %v7210 = vunpack.c.l.b16 %v6694
        %v7211 = vunpack.c.l.b16 %v6695
        %v7212 = vunpack.c.l.b16 %v6696
        %v7213 = vunpack.c.l.b16 %v6697
        %v7214 = vunpack.c.l.b16 %v6698
        %v7215 = vpack.c.b16 %v6960, %v6959
        %v7216 = vpack.c.b16 %v6962, %v6961
        %v7217 = vpack.c.b16 %v6964, %v6963
        %v7218 = vpack.c.b16 %v6966, %v6965
        %v7219 = vpack.c.b16 %v6968, %v6967
        %v7220 = vpack.c.b16 %v6970, %v6969
        %v7221 = vpack.c.b16 %v6972, %v6971
        %v7222 = vpack.c.b16 %v6974, %v6973
        %v7223 = vpack.c.b16 %v6976, %v6975
        %v7224 = vpack.c.b16 %v6978, %v6977
        %v7225 = vpack.c.b16 %v6980, %v6979
        %v7226 = vpack.c.b16 %v6982, %v6981
        %v7227 = vpack.c.b16 %v6984, %v6983
        %v7228 = vpack.c.b16 %v6986, %v6985
        %v7229 = vpack.c.b16 %v6988, %v6987
        %v7230 = vpack.c.b16 %v6990, %v6989
        %v7231 = vpack.c.b16 %v6992, %v6991
        %v7232 = vpack.c.b16 %v6994, %v6993
        %v7233 = vpack.c.b16 %v6996, %v6995
        %v7234 = vpack.c.b16 %v6998, %v6997
        %v7235 = vpack.c.b16 %v7000, %v6999
        %v7236 = vpack.c.b16 %v7002, %v7001
        %v7237 = vpack.c.b16 %v7004, %v7003
        %v7238 = vpack.c.b16 %v7006, %v7005
        %v7239 = vpack.c.b16 %v7008, %v7007
        %v7240 = vpack.c.b16 %v7010, %v7009
        %v7241 = vpack.c.b16 %v7012, %v7011
        %v7242 = vpack.c.b16 %v7014, %v7013
        %v7243 = vpack.c.b16 %v7016, %v7015
        %v7244 = vpack.c.b16 %v7018, %v7017
        %v7245 = vpack.c.b16 %v7020, %v7019
        %v7246 = vpack.c.b16 %v7022, %v7021
        %v7247 = vpack.c.b16 %v7024, %v7023
        %v7248 = vpack.c.b16 %v7026, %v7025
        %v7249 = vpack.c.b16 %v7028, %v7027
        %v7250 = vpack.c.b16 %v7030, %v7029
        %v7251 = vpack.c.b16 %v7032, %v7031
        %v7252 = vpack.c.b16 %v7034, %v7033
        %v7253 = vpack.c.b16 %v7036, %v7035
        %v7254 = vpack.c.b16 %v7038, %v7037
        %v7255 = vpack.c.b16 %v7040, %v7039
        %v7256 = vpack.c.b16 %v7042, %v7041
        %v7257 = vpack.c.b16 %v7044, %v7043
        %v7258 = vpack.c.b16 %v7046, %v7045
        %v7259 = vpack.c.b16 %v7048, %v7047
        %v7260 = vpack.c.b16 %v7050, %v7049
        %v7261 = vpack.c.b16 %v7052, %v7051
        %v7262 = vpack.c.b16 %v7054, %v7053
        %v7263 = vpack.c.b16 %v7056, %v7055
        %v7264 = vpack.c.b16 %v7058, %v7057
        %v7265 = vpack.c.b16 %v7060, %v7059
        %v7266 = vpack.c.b16 %v7062, %v7061
        %v7267 = vpack.c.b16 %v7064, %v7063
        %v7268 = vpack.c.b16 %v7066, %v7065
        %v7269 = vpack.c.b16 %v7068, %v7067
        %v7270 = vpack.c.b16 %v7070, %v7069
        %v7271 = vpack.c.b16 %v7072, %v7071
        %v7272 = vpack.c.b16 %v7074, %v7073
        %v7273 = vpack.c.b16 %v7076, %v7075
        %v7274 = vpack.c.b16 %v7078, %v7077
        %v7275 = vpack.c.b16 %v7080, %v7079
        %v7276 = vpack.c.b16 %v7082, %v7081
        %v7277 = vpack.c.b16 %v7084, %v7083
        %v7278 = vpack.c.b16 %v7086, %v7085
        %v7279 = vpack.c.b16 %v7088, %v7087
        %v7280 = vpack.c.b16 %v7090, %v7089
        %v7281 = vpack.c.b16 %v7092, %v7091
        %v7282 = vpack.c.b16 %v7094, %v7093
        %v7283 = vpack.c.b16 %v7096, %v7095
        %v7284 = vpack.c.b16 %v7098, %v7097
        %v7285 = vpack.c.b16 %v7100, %v7099
        %v7286 = vpack.c.b16 %v7102, %v7101
        %v7287 = vpack.c.b16 %v7104, %v7103
        %v7288 = vpack.c.b16 %v7106, %v7105
        %v7289 = vpack.c.b16 %v7108, %v7107
        %v7290 = vpack.c.b16 %v7110, %v7109
        %v7291 = vpack.c.b16 %v7112, %v7111
        %v7292 = vpack.c.b16 %v7114, %v7113
        %v7293 = vpack.c.b16 %v7116, %v7115
        %v7294 = vpack.c.b16 %v7118, %v7117
        %v7295 = vpack.c.b16 %v7120, %v7119
        %v7296 = vpack.c.b16 %v7122, %v7121
        %v7297 = vpack.c.b16 %v7124, %v7123
        %v7298 = vpack.c.b16 %v7126, %v7125
        %v7299 = vpack.c.b16 %v7128, %v7127
        %v7300 = vpack.c.b16 %v7130, %v7129
        %v7301 = vpack.c.b16 %v7132, %v7131
        %v7302 = vpack.c.b16 %v7134, %v7133
        %v7303 = vpack.c.b16 %v7136, %v7135
        %v7304 = vpack.c.b16 %v7138, %v7137
        %v7305 = vpack.c.b16 %v7140, %v7139
        %v7306 = vpack.c.b16 %v7142, %v7141
        %v7307 = vpack.c.b16 %v7144, %v7143
        %v7308 = vpack.c.b16 %v7146, %v7145
        %v7309 = vpack.c.b16 %v7148, %v7147
        %v7310 = vpack.c.b16 %v7150, %v7149
        %v7311 = vpack.c.b16 %v7152, %v7151
        %v7312 = vpack.c.b16 %v7154, %v7153
        %v7313 = vpack.c.b16 %v7156, %v7155
        %v7314 = vpack.c.b16 %v7158, %v7157
        %v7315 = vpack.c.b16 %v7160, %v7159
        %v7316 = vpack.c.b16 %v7162, %v7161
        %v7317 = vpack.c.b16 %v7164, %v7163
        %v7318 = vpack.c.b16 %v7166, %v7165
        %v7319 = vpack.c.b16 %v7168, %v7167
        %v7320 = vpack.c.b16 %v7170, %v7169
        %v7321 = vpack.c.b16 %v7172, %v7171
        %v7322 = vpack.c.b16 %v7174, %v7173
        %v7323 = vpack.c.b16 %v7176, %v7175
        %v7324 = vpack.c.b16 %v7178, %v7177
        %v7325 = vpack.c.b16 %v7180, %v7179
        %v7326 = vpack.c.b16 %v7182, %v7181
        %v7327 = vpack.c.b16 %v7184, %v7183
        %v7328 = vpack.c.b16 %v7186, %v7185
        %v7329 = vpack.c.b16 %v7188, %v7187
        %v7330 = vpack.c.b16 %v7190, %v7189
        %v7331 = vpack.c.b16 %v7192, %v7191
        %v7332 = vpack.c.b16 %v7194, %v7193
        %v7333 = vpack.c.b16 %v7196, %v7195
        %v7334 = vpack.c.b16 %v7198, %v7197
        %v7335 = vpack.c.b16 %v7200, %v7199
        %v7336 = vpack.c.b16 %v7202, %v7201
        %v7337 = vpack.c.b16 %v7204, %v7203
        %v7338 = vpack.c.b16 %v7206, %v7205
        %v7339 = vpack.c.b16 %v7208, %v7207
        %v7340 = vpack.c.b16 %v7210, %v7209
        %v7341 = vpack.c.b16 %v7212, %v7211
        %v7342 = vpack.c.b16 %v7214, %v7213
        %7471 = vmatprep.subr.bf16.mxu0 0
        %7472 = vmatpush1.bf16.msra.mxu0 %v7222
        %7473 = vmatprep.subr.bf16.mxu0 0
        %7474 = vmatpush1.bf16.msra.mxu0 %v7221
        %7475 = vmatprep.subr.bf16.mxu0 0
        %7476 = vmatpush1.bf16.msra.mxu0 %v7220
        %7477 = vmatprep.subr.bf16.mxu0 0
        %7478 = vmatpush1.bf16.msra.mxu0 %v7219
        %7479 = vmatprep.subr.bf16.mxu0 0
        %7480 = vmatpush1.bf16.msra.mxu0 %v7218
        %7481 = vmatprep.subr.bf16.mxu0 0
        %7482 = vmatpush1.bf16.msra.mxu0 %v7217
        %7483 = vmatprep.subr.bf16.mxu0 0
        %7484 = vmatpush1.bf16.msra.mxu0 %v7216
        %7485 = vmatprep.subr.bf16.mxu0 0
        %7486 = vmatpush1.bf16.msra.mxu0 %v7215
        %7487 = vmatprep.subr.bf16.mxu0 0
        %7488 = vmatpush2.bf16.msra.mxu0 %v7230
        %7489 = vmatprep.subr.bf16.mxu0 0
        %7490 = vmatpush2.bf16.msra.mxu0 %v7229
        %7491 = vmatprep.subr.bf16.mxu0 0
        %7492 = vmatpush2.bf16.msra.mxu0 %v7228
        %7493 = vmatprep.subr.bf16.mxu0 0
        %7494 = vmatpush2.bf16.msra.mxu0 %v7227
        %7495 = vmatprep.subr.bf16.mxu0 0
        %7496 = vmatpush2.bf16.msra.mxu0 %v7226
        %7497 = vmatprep.subr.bf16.mxu0 0
        %7498 = vmatpush2.bf16.msra.mxu0 %v7225
        %7499 = vmatprep.subr.bf16.mxu0 0
        %7500 = vmatpush2.bf16.msra.mxu0 %v7224
        %7501 = vmatprep.subr.bf16.mxu0 0
        %7502 = vmatpush2.bf16.msra.mxu0 %v7223
        %7503 = vmatprep.mubr.bf16.mxu0 %v6316
        %7504 = vmatmul.mubr.bf16.gmra.mxu0 %v6315
        %v7505 = vpop.f32.mrf.mxu0
        %v7506 = vadd.f32 %v6702, %v7505
        %v7507 = vpop.f32.mrf.mxu0
        %v7508 = vpop.f32.mrf.mxu0
        %v7509 = vadd.f32 %v6702, %v7508
        %v7510 = vpop.f32.mrf.mxu0
        %7511 = vmatprep.mubr.bf16.mxu0 %v6332
        %7512 = vmatmul.mubr.bf16.gmra.mxu0 %v6331
        %v7513 = vpop.f32.mrf.mxu0
        %v7514 = vadd.f32 %v6702, %v7513
        %v7515 = vpop.f32.mrf.mxu0
        %v7516 = vpop.f32.mrf.mxu0
        %v7517 = vadd.f32 %v6702, %v7516
        %v7518 = vpop.f32.mrf.mxu0
        %7519 = vmatprep.mubr.bf16.mxu0 %v6348
        %7520 = vmatmul.mubr.bf16.gmra.mxu0 %v6347
        %v7521 = vpop.f32.mrf.mxu0
        %v7522 = vadd.f32 %v6702, %v7521
        %v7523 = vpop.f32.mrf.mxu0
        %v7524 = vpop.f32.mrf.mxu0
        %v7525 = vadd.f32 %v6702, %v7524
        %v7526 = vpop.f32.mrf.mxu0
        %7527 = vmatprep.mubr.bf16.mxu0 %v6364
        %7528 = vmatmul.mubr.bf16.gmra.mxu0 %v6363
        %v7529 = vpop.f32.mrf.mxu0
        %v7530 = vadd.f32 %v6702, %v7529
        %v7531 = vpop.f32.mrf.mxu0
        %v7532 = vpop.f32.mrf.mxu0
        %v7533 = vadd.f32 %v6702, %v7532
        %v7534 = vpop.f32.mrf.mxu0
        %7535 = vmatprep.mubr.bf16.mxu0 %v6380
        %7536 = vmatmul.mubr.bf16.gmra.mxu0 %v6379
        %v7537 = vpop.f32.mrf.mxu0
        %v7538 = vadd.f32 %v6702, %v7537
        %v7539 = vpop.f32.mrf.mxu0
        %v7540 = vpop.f32.mrf.mxu0
        %v7541 = vadd.f32 %v6702, %v7540
        %v7542 = vpop.f32.mrf.mxu0
        %7543 = vmatprep.mubr.bf16.mxu0 %v6396
        %7544 = vmatmul.mubr.bf16.gmra.mxu0 %v6395
        %v7545 = vpop.f32.mrf.mxu0
        %v7546 = vadd.f32 %v6702, %v7545
        %v7547 = vpop.f32.mrf.mxu0
        %v7548 = vpop.f32.mrf.mxu0
        %v7549 = vadd.f32 %v6702, %v7548
        %v7550 = vpop.f32.mrf.mxu0
        %7551 = vmatprep.mubr.bf16.mxu0 %v6412
        %7552 = vmatmul.mubr.bf16.gmra.mxu0 %v6411
        %v7553 = vpop.f32.mrf.mxu0
        %v7554 = vadd.f32 %v6702, %v7553
        %v7555 = vpop.f32.mrf.mxu0
        %v7556 = vpop.f32.mrf.mxu0
        %v7557 = vadd.f32 %v6702, %v7556
        %v7558 = vpop.f32.mrf.mxu0
        %7559 = vmatprep.mubr.bf16.mxu0 %v6428
        %7560 = vmatmul.mubr.bf16.gmra.mxu0 %v6427
        %v7561 = vpop.f32.mrf.mxu0
        %v7562 = vadd.f32 %v6702, %v7561
        %v7563 = vpop.f32.mrf.mxu0
        %v7564 = vpop.f32.mrf.mxu0
        %v7565 = vadd.f32 %v6702, %v7564
        %v7566 = vpop.f32.mrf.mxu0
        %7567 = vdwg.mxu0
        %7568 = vmatprep.subr.bf16.mxu0 0
        %7569 = vmatpush1.bf16.msra.mxu0 %v7238
        %7570 = vmatprep.subr.bf16.mxu0 0
        %7571 = vmatpush1.bf16.msra.mxu0 %v7237
        %7572 = vmatprep.subr.bf16.mxu0 0
        %7573 = vmatpush1.bf16.msra.mxu0 %v7236
        %7574 = vmatprep.subr.bf16.mxu0 0
        %7575 = vmatpush1.bf16.msra.mxu0 %v7235
        %7576 = vmatprep.subr.bf16.mxu0 0
        %7577 = vmatpush1.bf16.msra.mxu0 %v7234
        %7578 = vmatprep.subr.bf16.mxu0 0
        %7579 = vmatpush1.bf16.msra.mxu0 %v7233
        %7580 = vmatprep.subr.bf16.mxu0 0
        %7581 = vmatpush1.bf16.msra.mxu0 %v7232
        %7582 = vmatprep.subr.bf16.mxu0 0
        %7583 = vmatpush1.bf16.msra.mxu0 %v7231
        %7584 = vmatprep.subr.bf16.mxu0 0
        %7585 = vmatpush2.bf16.msra.mxu0 %v7246
        %7586 = vmatprep.subr.bf16.mxu0 0
        %7587 = vmatpush2.bf16.msra.mxu0 %v7245
        %7588 = vmatprep.subr.bf16.mxu0 0
        %7589 = vmatpush2.bf16.msra.mxu0 %v7244
        %7590 = vmatprep.subr.bf16.mxu0 0
        %7591 = vmatpush2.bf16.msra.mxu0 %v7243
        %7592 = vmatprep.subr.bf16.mxu0 0
        %7593 = vmatpush2.bf16.msra.mxu0 %v7242
        %7594 = vmatprep.subr.bf16.mxu0 0
        %7595 = vmatpush2.bf16.msra.mxu0 %v7241
        %7596 = vmatprep.subr.bf16.mxu0 0
        %7597 = vmatpush2.bf16.msra.mxu0 %v7240
        %7598 = vmatprep.subr.bf16.mxu0 0
        %7599 = vmatpush2.bf16.msra.mxu0 %v7239
        %7600 = vmatprep.mubr.bf16.mxu0 %v6318
        %7601 = vmatmul.mubr.bf16.gmra.mxu0 %v6317
        %v7602 = vpop.f32.mrf.mxu0
        %v7603 = vadd.f32 %v7506, %v7602
        %v7604 = vpop.f32.mrf.mxu0
        %v7605 = vpop.f32.mrf.mxu0
        %v7606 = vadd.f32 %v7509, %v7605
        %v7607 = vpop.f32.mrf.mxu0
        %7608 = vmatprep.mubr.bf16.mxu0 %v6334
        %7609 = vmatmul.mubr.bf16.gmra.mxu0 %v6333
        %v7610 = vpop.f32.mrf.mxu0
        %v7611 = vadd.f32 %v7514, %v7610
        %v7612 = vpop.f32.mrf.mxu0
        %v7613 = vpop.f32.mrf.mxu0
        %v7614 = vadd.f32 %v7517, %v7613
        %v7615 = vpop.f32.mrf.mxu0
        %7616 = vmatprep.mubr.bf16.mxu0 %v6350
        %7617 = vmatmul.mubr.bf16.gmra.mxu0 %v6349
        %v7618 = vpop.f32.mrf.mxu0
        %v7619 = vadd.f32 %v7522, %v7618
        %v7620 = vpop.f32.mrf.mxu0
        %v7621 = vpop.f32.mrf.mxu0
        %v7622 = vadd.f32 %v7525, %v7621
        %v7623 = vpop.f32.mrf.mxu0
        %7624 = vmatprep.mubr.bf16.mxu0 %v6366
        %7625 = vmatmul.mubr.bf16.gmra.mxu0 %v6365
        %v7626 = vpop.f32.mrf.mxu0
        %v7627 = vadd.f32 %v7530, %v7626
        %v7628 = vpop.f32.mrf.mxu0
        %v7629 = vpop.f32.mrf.mxu0
        %v7630 = vadd.f32 %v7533, %v7629
        %v7631 = vpop.f32.mrf.mxu0
        %7632 = vmatprep.mubr.bf16.mxu0 %v6382
        %7633 = vmatmul.mubr.bf16.gmra.mxu0 %v6381
        %v7634 = vpop.f32.mrf.mxu0
        %v7635 = vadd.f32 %v7538, %v7634
        %v7636 = vpop.f32.mrf.mxu0
        %v7637 = vpop.f32.mrf.mxu0
        %v7638 = vadd.f32 %v7541, %v7637
        %v7639 = vpop.f32.mrf.mxu0
        %7640 = vmatprep.mubr.bf16.mxu0 %v6398
        %7641 = vmatmul.mubr.bf16.gmra.mxu0 %v6397
        %v7642 = vpop.f32.mrf.mxu0
        %v7643 = vadd.f32 %v7546, %v7642
        %v7644 = vpop.f32.mrf.mxu0
        %v7645 = vpop.f32.mrf.mxu0
        %v7646 = vadd.f32 %v7549, %v7645
        %v7647 = vpop.f32.mrf.mxu0
        %7648 = vmatprep.mubr.bf16.mxu0 %v6414
        %7649 = vmatmul.mubr.bf16.gmra.mxu0 %v6413
        %v7650 = vpop.f32.mrf.mxu0
        %v7651 = vadd.f32 %v7554, %v7650
        %v7652 = vpop.f32.mrf.mxu0
        %v7653 = vpop.f32.mrf.mxu0
        %v7654 = vadd.f32 %v7557, %v7653
        %v7655 = vpop.f32.mrf.mxu0
        %7656 = vmatprep.mubr.bf16.mxu0 %v6430
        %7657 = vmatmul.mubr.bf16.gmra.mxu0 %v6429
        %v7658 = vpop.f32.mrf.mxu0
        %v7659 = vadd.f32 %v7562, %v7658
        %v7660 = vpop.f32.mrf.mxu0
        %v7661 = vpop.f32.mrf.mxu0
        %v7662 = vadd.f32 %v7565, %v7661
        %v7663 = vpop.f32.mrf.mxu0
        %7664 = vdwg.mxu0
        %7665 = vmatprep.subr.bf16.mxu0 0
        %7666 = vmatpush1.bf16.msra.mxu0 %v7254
        %7667 = vmatprep.subr.bf16.mxu0 0
        %7668 = vmatpush1.bf16.msra.mxu0 %v7253
        %7669 = vmatprep.subr.bf16.mxu0 0
        %7670 = vmatpush1.bf16.msra.mxu0 %v7252
        %7671 = vmatprep.subr.bf16.mxu0 0
        %7672 = vmatpush1.bf16.msra.mxu0 %v7251
        %7673 = vmatprep.subr.bf16.mxu0 0
        %7674 = vmatpush1.bf16.msra.mxu0 %v7250
        %7675 = vmatprep.subr.bf16.mxu0 0
        %7676 = vmatpush1.bf16.msra.mxu0 %v7249
        %7677 = vmatprep.subr.bf16.mxu0 0
        %7678 = vmatpush1.bf16.msra.mxu0 %v7248
        %7679 = vmatprep.subr.bf16.mxu0 0
        %7680 = vmatpush1.bf16.msra.mxu0 %v7247
        %7681 = vmatprep.subr.bf16.mxu0 0
        %7682 = vmatpush2.bf16.msra.mxu0 %v7262
        %7683 = vmatprep.subr.bf16.mxu0 0
        %7684 = vmatpush2.bf16.msra.mxu0 %v7261
        %7685 = vmatprep.subr.bf16.mxu0 0
        %7686 = vmatpush2.bf16.msra.mxu0 %v7260
        %7687 = vmatprep.subr.bf16.mxu0 0
        %7688 = vmatpush2.bf16.msra.mxu0 %v7259
        %7689 = vmatprep.subr.bf16.mxu0 0
        %7690 = vmatpush2.bf16.msra.mxu0 %v7258
        %7691 = vmatprep.subr.bf16.mxu0 0
        %7692 = vmatpush2.bf16.msra.mxu0 %v7257
        %7693 = vmatprep.subr.bf16.mxu0 0
        %7694 = vmatpush2.bf16.msra.mxu0 %v7256
        %7695 = vmatprep.subr.bf16.mxu0 0
        %7696 = vmatpush2.bf16.msra.mxu0 %v7255
        %7697 = vmatprep.mubr.bf16.mxu0 %v6320
        %7698 = vmatmul.mubr.bf16.gmra.mxu0 %v6319
        %v7699 = vpop.f32.mrf.mxu0
        %v7700 = vadd.f32 %v7603, %v7699
        %v7701 = vpop.f32.mrf.mxu0
        %v7702 = vpop.f32.mrf.mxu0
        %v7703 = vadd.f32 %v7606, %v7702
        %v7704 = vpop.f32.mrf.mxu0
        %7705 = vmatprep.mubr.bf16.mxu0 %v6336
        %7706 = vmatmul.mubr.bf16.gmra.mxu0 %v6335
        %v7707 = vpop.f32.mrf.mxu0
        %v7708 = vadd.f32 %v7611, %v7707
        %v7709 = vpop.f32.mrf.mxu0
        %v7710 = vpop.f32.mrf.mxu0
        %v7711 = vadd.f32 %v7614, %v7710
        %v7712 = vpop.f32.mrf.mxu0
        %7713 = vmatprep.mubr.bf16.mxu0 %v6352
        %7714 = vmatmul.mubr.bf16.gmra.mxu0 %v6351
        %v7715 = vpop.f32.mrf.mxu0
        %v7716 = vadd.f32 %v7619, %v7715
        %v7717 = vpop.f32.mrf.mxu0
        %v7718 = vpop.f32.mrf.mxu0
        %v7719 = vadd.f32 %v7622, %v7718
        %v7720 = vpop.f32.mrf.mxu0
        %7721 = vmatprep.mubr.bf16.mxu0 %v6368
        %7722 = vmatmul.mubr.bf16.gmra.mxu0 %v6367
        %v7723 = vpop.f32.mrf.mxu0
        %v7724 = vadd.f32 %v7627, %v7723
        %v7725 = vpop.f32.mrf.mxu0
        %v7726 = vpop.f32.mrf.mxu0
        %v7727 = vadd.f32 %v7630, %v7726
        %v7728 = vpop.f32.mrf.mxu0
        %7729 = vmatprep.mubr.bf16.mxu0 %v6384
        %7730 = vmatmul.mubr.bf16.gmra.mxu0 %v6383
        %v7731 = vpop.f32.mrf.mxu0
        %v7732 = vadd.f32 %v7635, %v7731
        %v7733 = vpop.f32.mrf.mxu0
        %v7734 = vpop.f32.mrf.mxu0
        %v7735 = vadd.f32 %v7638, %v7734
        %v7736 = vpop.f32.mrf.mxu0
        %7737 = vmatprep.mubr.bf16.mxu0 %v6400
        %7738 = vmatmul.mubr.bf16.gmra.mxu0 %v6399
        %v7739 = vpop.f32.mrf.mxu0
        %v7740 = vadd.f32 %v7643, %v7739
        %v7741 = vpop.f32.mrf.mxu0
        %v7742 = vpop.f32.mrf.mxu0
        %v7743 = vadd.f32 %v7646, %v7742
        %v7744 = vpop.f32.mrf.mxu0
        %7745 = vmatprep.mubr.bf16.mxu0 %v6416
        %7746 = vmatmul.mubr.bf16.gmra.mxu0 %v6415
        %v7747 = vpop.f32.mrf.mxu0
        %v7748 = vadd.f32 %v7651, %v7747
        %v7749 = vpop.f32.mrf.mxu0
        %v7750 = vpop.f32.mrf.mxu0
        %v7751 = vadd.f32 %v7654, %v7750
        %v7752 = vpop.f32.mrf.mxu0
        %7753 = vmatprep.mubr.bf16.mxu0 %v6432
        %7754 = vmatmul.mubr.bf16.gmra.mxu0 %v6431
        %v7755 = vpop.f32.mrf.mxu0
        %v7756 = vadd.f32 %v7659, %v7755
        %v7757 = vpop.f32.mrf.mxu0
        %v7758 = vpop.f32.mrf.mxu0
        %v7759 = vadd.f32 %v7662, %v7758
        %v7760 = vpop.f32.mrf.mxu0
        %7761 = vdwg.mxu0
        %7762 = vmatprep.subr.bf16.mxu0 0
        %7763 = vmatpush1.bf16.msra.mxu0 %v7270
        %7764 = vmatprep.subr.bf16.mxu0 0
        %7765 = vmatpush1.bf16.msra.mxu0 %v7269
        %7766 = vmatprep.subr.bf16.mxu0 0
        %7767 = vmatpush1.bf16.msra.mxu0 %v7268
        %7768 = vmatprep.subr.bf16.mxu0 0
        %7769 = vmatpush1.bf16.msra.mxu0 %v7267
        %7770 = vmatprep.subr.bf16.mxu0 0
        %7771 = vmatpush1.bf16.msra.mxu0 %v7266
        %7772 = vmatprep.subr.bf16.mxu0 0
        %7773 = vmatpush1.bf16.msra.mxu0 %v7265
        %7774 = vmatprep.subr.bf16.mxu0 0
        %7775 = vmatpush1.bf16.msra.mxu0 %v7264
        %7776 = vmatprep.subr.bf16.mxu0 0
        %7777 = vmatpush1.bf16.msra.mxu0 %v7263
        %7778 = vmatprep.subr.bf16.mxu0 0
        %7779 = vmatpush2.bf16.msra.mxu0 %v7278
        %7780 = vmatprep.subr.bf16.mxu0 0
        %7781 = vmatpush2.bf16.msra.mxu0 %v7277
        %7782 = vmatprep.subr.bf16.mxu0 0
        %7783 = vmatpush2.bf16.msra.mxu0 %v7276
        %7784 = vmatprep.subr.bf16.mxu0 0
        %7785 = vmatpush2.bf16.msra.mxu0 %v7275
        %7786 = vmatprep.subr.bf16.mxu0 0
        %7787 = vmatpush2.bf16.msra.mxu0 %v7274
        %7788 = vmatprep.subr.bf16.mxu0 0
        %7789 = vmatpush2.bf16.msra.mxu0 %v7273
        %7790 = vmatprep.subr.bf16.mxu0 0
        %7791 = vmatpush2.bf16.msra.mxu0 %v7272
        %7792 = vmatprep.subr.bf16.mxu0 0
        %7793 = vmatpush2.bf16.msra.mxu0 %v7271
        %7794 = vmatprep.mubr.bf16.mxu0 %v6322
        %7795 = vmatmul.mubr.bf16.gmra.mxu0 %v6321
        %v7796 = vpop.f32.mrf.mxu0
        %v7797 = vadd.f32 %v7700, %v7796
        %v7798 = vpop.f32.mrf.mxu0
        %v7799 = vpop.f32.mrf.mxu0
        %v7800 = vadd.f32 %v7703, %v7799
        %v7801 = vpop.f32.mrf.mxu0
        %7802 = vmatprep.mubr.bf16.mxu0 %v6338
        %7803 = vmatmul.mubr.bf16.gmra.mxu0 %v6337
        %v7804 = vpop.f32.mrf.mxu0
        %v7805 = vadd.f32 %v7708, %v7804
        %v7806 = vpop.f32.mrf.mxu0
        %v7807 = vpop.f32.mrf.mxu0
        %v7808 = vadd.f32 %v7711, %v7807
        %v7809 = vpop.f32.mrf.mxu0
        %7810 = vmatprep.mubr.bf16.mxu0 %v6354
        %7811 = vmatmul.mubr.bf16.gmra.mxu0 %v6353
        %v7812 = vpop.f32.mrf.mxu0
        %v7813 = vadd.f32 %v7716, %v7812
        %v7814 = vpop.f32.mrf.mxu0
        %v7815 = vpop.f32.mrf.mxu0
        %v7816 = vadd.f32 %v7719, %v7815
        %v7817 = vpop.f32.mrf.mxu0
        %7818 = vmatprep.mubr.bf16.mxu0 %v6370
        %7819 = vmatmul.mubr.bf16.gmra.mxu0 %v6369
        %v7820 = vpop.f32.mrf.mxu0
        %v7821 = vadd.f32 %v7724, %v7820
        %v7822 = vpop.f32.mrf.mxu0
        %v7823 = vpop.f32.mrf.mxu0
        %v7824 = vadd.f32 %v7727, %v7823
        %v7825 = vpop.f32.mrf.mxu0
        %7826 = vmatprep.mubr.bf16.mxu0 %v6386
        %7827 = vmatmul.mubr.bf16.gmra.mxu0 %v6385
        %v7828 = vpop.f32.mrf.mxu0
        %v7829 = vadd.f32 %v7732, %v7828
        %v7830 = vpop.f32.mrf.mxu0
        %v7831 = vpop.f32.mrf.mxu0
        %v7832 = vadd.f32 %v7735, %v7831
        %v7833 = vpop.f32.mrf.mxu0
        %7834 = vmatprep.mubr.bf16.mxu0 %v6402
        %7835 = vmatmul.mubr.bf16.gmra.mxu0 %v6401
        %v7836 = vpop.f32.mrf.mxu0
        %v7837 = vadd.f32 %v7740, %v7836
        %v7838 = vpop.f32.mrf.mxu0
        %v7839 = vpop.f32.mrf.mxu0
        %v7840 = vadd.f32 %v7743, %v7839
        %v7841 = vpop.f32.mrf.mxu0
        %7842 = vmatprep.mubr.bf16.mxu0 %v6418
        %7843 = vmatmul.mubr.bf16.gmra.mxu0 %v6417
        %v7844 = vpop.f32.mrf.mxu0
        %v7845 = vadd.f32 %v7748, %v7844
        %v7846 = vpop.f32.mrf.mxu0
        %v7847 = vpop.f32.mrf.mxu0
        %v7848 = vadd.f32 %v7751, %v7847
        %v7849 = vpop.f32.mrf.mxu0
        %7850 = vmatprep.mubr.bf16.mxu0 %v6434
        %7851 = vmatmul.mubr.bf16.gmra.mxu0 %v6433
        %v7852 = vpop.f32.mrf.mxu0
        %v7853 = vadd.f32 %v7756, %v7852
        %v7854 = vpop.f32.mrf.mxu0
        %v7855 = vpop.f32.mrf.mxu0
        %v7856 = vadd.f32 %v7759, %v7855
        %v7857 = vpop.f32.mrf.mxu0
        %7858 = vdwg.mxu0
        %7859 = vmatprep.subr.bf16.mxu0 0
        %7860 = vmatpush1.bf16.msra.mxu0 %v7286
        %7861 = vmatprep.subr.bf16.mxu0 0
        %7862 = vmatpush1.bf16.msra.mxu0 %v7285
        %7863 = vmatprep.subr.bf16.mxu0 0
        %7864 = vmatpush1.bf16.msra.mxu0 %v7284
        %7865 = vmatprep.subr.bf16.mxu0 0
        %7866 = vmatpush1.bf16.msra.mxu0 %v7283
        %7867 = vmatprep.subr.bf16.mxu0 0
        %7868 = vmatpush1.bf16.msra.mxu0 %v7282
        %7869 = vmatprep.subr.bf16.mxu0 0
        %7870 = vmatpush1.bf16.msra.mxu0 %v7281
        %7871 = vmatprep.subr.bf16.mxu0 0
        %7872 = vmatpush1.bf16.msra.mxu0 %v7280
        %7873 = vmatprep.subr.bf16.mxu0 0
        %7874 = vmatpush1.bf16.msra.mxu0 %v7279
        %7875 = vmatprep.subr.bf16.mxu0 0
        %7876 = vmatpush2.bf16.msra.mxu0 %v7294
        %7877 = vmatprep.subr.bf16.mxu0 0
        %7878 = vmatpush2.bf16.msra.mxu0 %v7293
        %7879 = vmatprep.subr.bf16.mxu0 0
        %7880 = vmatpush2.bf16.msra.mxu0 %v7292
        %7881 = vmatprep.subr.bf16.mxu0 0
        %7882 = vmatpush2.bf16.msra.mxu0 %v7291
        %7883 = vmatprep.subr.bf16.mxu0 0
        %7884 = vmatpush2.bf16.msra.mxu0 %v7290
        %7885 = vmatprep.subr.bf16.mxu0 0
        %7886 = vmatpush2.bf16.msra.mxu0 %v7289
        %7887 = vmatprep.subr.bf16.mxu0 0
        %7888 = vmatpush2.bf16.msra.mxu0 %v7288
        %7889 = vmatprep.subr.bf16.mxu0 0
        %7890 = vmatpush2.bf16.msra.mxu0 %v7287
        %7891 = vmatprep.mubr.bf16.mxu0 %v6324
        %7892 = vmatmul.mubr.bf16.gmra.mxu0 %v6323
        %v7893 = vpop.f32.mrf.mxu0
        %v7894 = vadd.f32 %v7797, %v7893
        %v7895 = vpop.f32.mrf.mxu0
        %v7896 = vpop.f32.mrf.mxu0
        %v7897 = vadd.f32 %v7800, %v7896
        %v7898 = vpop.f32.mrf.mxu0
        %7899 = vmatprep.mubr.bf16.mxu0 %v6340
        %7900 = vmatmul.mubr.bf16.gmra.mxu0 %v6339
        %v7901 = vpop.f32.mrf.mxu0
        %v7902 = vadd.f32 %v7805, %v7901
        %v7903 = vpop.f32.mrf.mxu0
        %v7904 = vpop.f32.mrf.mxu0
        %v7905 = vadd.f32 %v7808, %v7904
        %v7906 = vpop.f32.mrf.mxu0
        %7907 = vmatprep.mubr.bf16.mxu0 %v6356
        %7908 = vmatmul.mubr.bf16.gmra.mxu0 %v6355
        %v7909 = vpop.f32.mrf.mxu0
        %v7910 = vadd.f32 %v7813, %v7909
        %v7911 = vpop.f32.mrf.mxu0
        %v7912 = vpop.f32.mrf.mxu0
        %v7913 = vadd.f32 %v7816, %v7912
        %v7914 = vpop.f32.mrf.mxu0
        %7915 = vmatprep.mubr.bf16.mxu0 %v6372
        %7916 = vmatmul.mubr.bf16.gmra.mxu0 %v6371
        %v7917 = vpop.f32.mrf.mxu0
        %v7918 = vadd.f32 %v7821, %v7917
        %v7919 = vpop.f32.mrf.mxu0
        %v7920 = vpop.f32.mrf.mxu0
        %v7921 = vadd.f32 %v7824, %v7920
        %v7922 = vpop.f32.mrf.mxu0
        %7923 = vmatprep.mubr.bf16.mxu0 %v6388
        %7924 = vmatmul.mubr.bf16.gmra.mxu0 %v6387
        %v7925 = vpop.f32.mrf.mxu0
        %v7926 = vadd.f32 %v7829, %v7925
        %v7927 = vpop.f32.mrf.mxu0
        %v7928 = vpop.f32.mrf.mxu0
        %v7929 = vadd.f32 %v7832, %v7928
        %v7930 = vpop.f32.mrf.mxu0
        %7931 = vmatprep.mubr.bf16.mxu0 %v6404
        %7932 = vmatmul.mubr.bf16.gmra.mxu0 %v6403
        %v7933 = vpop.f32.mrf.mxu0
        %v7934 = vadd.f32 %v7837, %v7933
        %v7935 = vpop.f32.mrf.mxu0
        %v7936 = vpop.f32.mrf.mxu0
        %v7937 = vadd.f32 %v7840, %v7936
        %v7938 = vpop.f32.mrf.mxu0
        %7939 = vmatprep.mubr.bf16.mxu0 %v6420
        %7940 = vmatmul.mubr.bf16.gmra.mxu0 %v6419
        %v7941 = vpop.f32.mrf.mxu0
        %v7942 = vadd.f32 %v7845, %v7941
        %v7943 = vpop.f32.mrf.mxu0
        %v7944 = vpop.f32.mrf.mxu0
        %v7945 = vadd.f32 %v7848, %v7944
        %v7946 = vpop.f32.mrf.mxu0
        %7947 = vmatprep.mubr.bf16.mxu0 %v6436
        %7948 = vmatmul.mubr.bf16.gmra.mxu0 %v6435
        %v7949 = vpop.f32.mrf.mxu0
        %v7950 = vadd.f32 %v7853, %v7949
        %v7951 = vpop.f32.mrf.mxu0
        %v7952 = vpop.f32.mrf.mxu0
        %v7953 = vadd.f32 %v7856, %v7952
        %v7954 = vpop.f32.mrf.mxu0
        %7955 = vdwg.mxu0
        %7956 = vmatprep.subr.bf16.mxu0 0
        %7957 = vmatpush1.bf16.msra.mxu0 %v7302
        %7958 = vmatprep.subr.bf16.mxu0 0
        %7959 = vmatpush1.bf16.msra.mxu0 %v7301
        %7960 = vmatprep.subr.bf16.mxu0 0
        %7961 = vmatpush1.bf16.msra.mxu0 %v7300
        %7962 = vmatprep.subr.bf16.mxu0 0
        %7963 = vmatpush1.bf16.msra.mxu0 %v7299
        %7964 = vmatprep.subr.bf16.mxu0 0
        %7965 = vmatpush1.bf16.msra.mxu0 %v7298
        %7966 = vmatprep.subr.bf16.mxu0 0
        %7967 = vmatpush1.bf16.msra.mxu0 %v7297
        %7968 = vmatprep.subr.bf16.mxu0 0
        %7969 = vmatpush1.bf16.msra.mxu0 %v7296
        %7970 = vmatprep.subr.bf16.mxu0 0
        %7971 = vmatpush1.bf16.msra.mxu0 %v7295
        %7972 = vmatprep.subr.bf16.mxu0 0
        %7973 = vmatpush2.bf16.msra.mxu0 %v7310
        %7974 = vmatprep.subr.bf16.mxu0 0
        %7975 = vmatpush2.bf16.msra.mxu0 %v7309
        %7976 = vmatprep.subr.bf16.mxu0 0
        %7977 = vmatpush2.bf16.msra.mxu0 %v7308
        %7978 = vmatprep.subr.bf16.mxu0 0
        %7979 = vmatpush2.bf16.msra.mxu0 %v7307
        %7980 = vmatprep.subr.bf16.mxu0 0
        %7981 = vmatpush2.bf16.msra.mxu0 %v7306
        %7982 = vmatprep.subr.bf16.mxu0 0
        %7983 = vmatpush2.bf16.msra.mxu0 %v7305
        %7984 = vmatprep.subr.bf16.mxu0 0
        %7985 = vmatpush2.bf16.msra.mxu0 %v7304
        %7986 = vmatprep.subr.bf16.mxu0 0
        %7987 = vmatpush2.bf16.msra.mxu0 %v7303
        %7988 = vmatprep.mubr.bf16.mxu0 %v6326
        %7989 = vmatmul.mubr.bf16.gmra.mxu0 %v6325
        %v7990 = vpop.f32.mrf.mxu0
        %v7991 = vadd.f32 %v7894, %v7990
        %v7992 = vpop.f32.mrf.mxu0
        %v7993 = vpop.f32.mrf.mxu0
        %v7994 = vadd.f32 %v7897, %v7993
        %v7995 = vpop.f32.mrf.mxu0
        %7996 = vmatprep.mubr.bf16.mxu0 %v6342
        %7997 = vmatmul.mubr.bf16.gmra.mxu0 %v6341
        %v7998 = vpop.f32.mrf.mxu0
        %v7999 = vadd.f32 %v7902, %v7998
        %v8000 = vpop.f32.mrf.mxu0
        %v8001 = vpop.f32.mrf.mxu0
        %v8002 = vadd.f32 %v7905, %v8001
        %v8003 = vpop.f32.mrf.mxu0
        %8004 = vmatprep.mubr.bf16.mxu0 %v6358
        %8005 = vmatmul.mubr.bf16.gmra.mxu0 %v6357
        %v8006 = vpop.f32.mrf.mxu0
        %v8007 = vadd.f32 %v7910, %v8006
        %v8008 = vpop.f32.mrf.mxu0
        %v8009 = vpop.f32.mrf.mxu0
        %v8010 = vadd.f32 %v7913, %v8009
        %v8011 = vpop.f32.mrf.mxu0
        %8012 = vmatprep.mubr.bf16.mxu0 %v6374
        %8013 = vmatmul.mubr.bf16.gmra.mxu0 %v6373
        %v8014 = vpop.f32.mrf.mxu0
        %v8015 = vadd.f32 %v7918, %v8014
        %v8016 = vpop.f32.mrf.mxu0
        %v8017 = vpop.f32.mrf.mxu0
        %v8018 = vadd.f32 %v7921, %v8017
        %v8019 = vpop.f32.mrf.mxu0
        %8020 = vmatprep.mubr.bf16.mxu0 %v6390
        %8021 = vmatmul.mubr.bf16.gmra.mxu0 %v6389
        %v8022 = vpop.f32.mrf.mxu0
        %v8023 = vadd.f32 %v7926, %v8022
        %v8024 = vpop.f32.mrf.mxu0
        %v8025 = vpop.f32.mrf.mxu0
        %v8026 = vadd.f32 %v7929, %v8025
        %v8027 = vpop.f32.mrf.mxu0
        %8028 = vmatprep.mubr.bf16.mxu0 %v6406
        %8029 = vmatmul.mubr.bf16.gmra.mxu0 %v6405
        %v8030 = vpop.f32.mrf.mxu0
        %v8031 = vadd.f32 %v7934, %v8030
        %v8032 = vpop.f32.mrf.mxu0
        %v8033 = vpop.f32.mrf.mxu0
        %v8034 = vadd.f32 %v7937, %v8033
        %v8035 = vpop.f32.mrf.mxu0
        %8036 = vmatprep.mubr.bf16.mxu0 %v6422
        %8037 = vmatmul.mubr.bf16.gmra.mxu0 %v6421
        %v8038 = vpop.f32.mrf.mxu0
        %v8039 = vadd.f32 %v7942, %v8038
        %v8040 = vpop.f32.mrf.mxu0
        %v8041 = vpop.f32.mrf.mxu0
        %v8042 = vadd.f32 %v7945, %v8041
        %v8043 = vpop.f32.mrf.mxu0
        %8044 = vmatprep.mubr.bf16.mxu0 %v6438
        %8045 = vmatmul.mubr.bf16.gmra.mxu0 %v6437
        %v8046 = vpop.f32.mrf.mxu0
        %v8047 = vadd.f32 %v7950, %v8046
        %v8048 = vpop.f32.mrf.mxu0
        %v8049 = vpop.f32.mrf.mxu0
        %v8050 = vadd.f32 %v7953, %v8049
        %v8051 = vpop.f32.mrf.mxu0
        %8052 = vdwg.mxu0
        %8053 = vmatprep.subr.bf16.mxu0 0
        %8054 = vmatpush1.bf16.msra.mxu0 %v7318
        %8055 = vmatprep.subr.bf16.mxu0 0
        %8056 = vmatpush1.bf16.msra.mxu0 %v7317
        %8057 = vmatprep.subr.bf16.mxu0 0
        %8058 = vmatpush1.bf16.msra.mxu0 %v7316
        %8059 = vmatprep.subr.bf16.mxu0 0
        %8060 = vmatpush1.bf16.msra.mxu0 %v7315
        %8061 = vmatprep.subr.bf16.mxu0 0
        %8062 = vmatpush1.bf16.msra.mxu0 %v7314
        %8063 = vmatprep.subr.bf16.mxu0 0
        %8064 = vmatpush1.bf16.msra.mxu0 %v7313
        %8065 = vmatprep.subr.bf16.mxu0 0
        %8066 = vmatpush1.bf16.msra.mxu0 %v7312
        %8067 = vmatprep.subr.bf16.mxu0 0
        %8068 = vmatpush1.bf16.msra.mxu0 %v7311
        %8069 = vmatprep.subr.bf16.mxu0 0
        %8070 = vmatpush2.bf16.msra.mxu0 %v7326
        %8071 = vmatprep.subr.bf16.mxu0 0
        %8072 = vmatpush2.bf16.msra.mxu0 %v7325
        %8073 = vmatprep.subr.bf16.mxu0 0
        %8074 = vmatpush2.bf16.msra.mxu0 %v7324
        %8075 = vmatprep.subr.bf16.mxu0 0
        %8076 = vmatpush2.bf16.msra.mxu0 %v7323
        %8077 = vmatprep.subr.bf16.mxu0 0
        %8078 = vmatpush2.bf16.msra.mxu0 %v7322
        %8079 = vmatprep.subr.bf16.mxu0 0
        %8080 = vmatpush2.bf16.msra.mxu0 %v7321
        %8081 = vmatprep.subr.bf16.mxu0 0
        %8082 = vmatpush2.bf16.msra.mxu0 %v7320
        %8083 = vmatprep.subr.bf16.mxu0 0
        %8084 = vmatpush2.bf16.msra.mxu0 %v7319
        %8085 = vmatprep.mubr.bf16.mxu0 %v6328
        %8086 = vmatmul.mubr.bf16.gmra.mxu0 %v6327
        %v8087 = vpop.f32.mrf.mxu0
        %v8088 = vadd.f32 %v7991, %v8087
        %v8089 = vpop.f32.mrf.mxu0
        %v8090 = vpop.f32.mrf.mxu0
        %v8091 = vadd.f32 %v7994, %v8090
        %v8092 = vpop.f32.mrf.mxu0
        %8093 = vmatprep.mubr.bf16.mxu0 %v6344
        %8094 = vmatmul.mubr.bf16.gmra.mxu0 %v6343
        %v8095 = vpop.f32.mrf.mxu0
        %v8096 = vadd.f32 %v7999, %v8095
        %v8097 = vpop.f32.mrf.mxu0
        %v8098 = vpop.f32.mrf.mxu0
        %v8099 = vadd.f32 %v8002, %v8098
        %v8100 = vpop.f32.mrf.mxu0
        %8101 = vmatprep.mubr.bf16.mxu0 %v6360
        %8102 = vmatmul.mubr.bf16.gmra.mxu0 %v6359
        %v8103 = vpop.f32.mrf.mxu0
        %v8104 = vadd.f32 %v8007, %v8103
        %v8105 = vpop.f32.mrf.mxu0
        %v8106 = vpop.f32.mrf.mxu0
        %v8107 = vadd.f32 %v8010, %v8106
        %v8108 = vpop.f32.mrf.mxu0
        %8109 = vmatprep.mubr.bf16.mxu0 %v6376
        %8110 = vmatmul.mubr.bf16.gmra.mxu0 %v6375
        %v8111 = vpop.f32.mrf.mxu0
        %v8112 = vadd.f32 %v8015, %v8111
        %v8113 = vpop.f32.mrf.mxu0
        %v8114 = vpop.f32.mrf.mxu0
        %v8115 = vadd.f32 %v8018, %v8114
        %v8116 = vpop.f32.mrf.mxu0
        %8117 = vmatprep.mubr.bf16.mxu0 %v6392
        %8118 = vmatmul.mubr.bf16.gmra.mxu0 %v6391
        %v8119 = vpop.f32.mrf.mxu0
        %v8120 = vadd.f32 %v8023, %v8119
        %v8121 = vpop.f32.mrf.mxu0
        %v8122 = vpop.f32.mrf.mxu0
        %v8123 = vadd.f32 %v8026, %v8122
        %v8124 = vpop.f32.mrf.mxu0
        %8125 = vmatprep.mubr.bf16.mxu0 %v6408
        %8126 = vmatmul.mubr.bf16.gmra.mxu0 %v6407
        %v8127 = vpop.f32.mrf.mxu0
        %v8128 = vadd.f32 %v8031, %v8127
        %v8129 = vpop.f32.mrf.mxu0
        %v8130 = vpop.f32.mrf.mxu0
        %v8131 = vadd.f32 %v8034, %v8130
        %v8132 = vpop.f32.mrf.mxu0
        %8133 = vmatprep.mubr.bf16.mxu0 %v6424
        %8134 = vmatmul.mubr.bf16.gmra.mxu0 %v6423
        %v8135 = vpop.f32.mrf.mxu0
        %v8136 = vadd.f32 %v8039, %v8135
        %v8137 = vpop.f32.mrf.mxu0
        %v8138 = vpop.f32.mrf.mxu0
        %v8139 = vadd.f32 %v8042, %v8138
        %v8140 = vpop.f32.mrf.mxu0
        %8141 = vmatprep.mubr.bf16.mxu0 %v6440
        %8142 = vmatmul.mubr.bf16.gmra.mxu0 %v6439
        %v8143 = vpop.f32.mrf.mxu0
        %v8144 = vadd.f32 %v8047, %v8143
        %v8145 = vpop.f32.mrf.mxu0
        %v8146 = vpop.f32.mrf.mxu0
        %v8147 = vadd.f32 %v8050, %v8146
        %v8148 = vpop.f32.mrf.mxu0
        %8149 = vdwg.mxu0
        %8150 = vmatprep.subr.bf16.mxu0 0
        %8151 = vmatpush1.bf16.msra.mxu0 %v7334
        %8152 = vmatprep.subr.bf16.mxu0 0
        %8153 = vmatpush1.bf16.msra.mxu0 %v7333
        %8154 = vmatprep.subr.bf16.mxu0 0
        %8155 = vmatpush1.bf16.msra.mxu0 %v7332
        %8156 = vmatprep.subr.bf16.mxu0 0
        %8157 = vmatpush1.bf16.msra.mxu0 %v7331
        %8158 = vmatprep.subr.bf16.mxu0 0
        %8159 = vmatpush1.bf16.msra.mxu0 %v7330
        %8160 = vmatprep.subr.bf16.mxu0 0
        %8161 = vmatpush1.bf16.msra.mxu0 %v7329
        %8162 = vmatprep.subr.bf16.mxu0 0
        %8163 = vmatpush1.bf16.msra.mxu0 %v7328
        %8164 = vmatprep.subr.bf16.mxu0 0
        %8165 = vmatpush1.bf16.msra.mxu0 %v7327
        %8166 = vmatprep.subr.bf16.mxu0 0
        %8167 = vmatpush2.bf16.msra.mxu0 %v7342
        %8168 = vmatprep.subr.bf16.mxu0 0
        %8169 = vmatpush2.bf16.msra.mxu0 %v7341
        %8170 = vmatprep.subr.bf16.mxu0 0
        %8171 = vmatpush2.bf16.msra.mxu0 %v7340
        %8172 = vmatprep.subr.bf16.mxu0 0
        %8173 = vmatpush2.bf16.msra.mxu0 %v7339
        %8174 = vmatprep.subr.bf16.mxu0 0
        %8175 = vmatpush2.bf16.msra.mxu0 %v7338
        %8176 = vmatprep.subr.bf16.mxu0 0
        %8177 = vmatpush2.bf16.msra.mxu0 %v7337
        %8178 = vmatprep.subr.bf16.mxu0 0
        %8179 = vmatpush2.bf16.msra.mxu0 %v7336
        %8180 = vmatprep.subr.bf16.mxu0 0
        %8181 = vmatpush2.bf16.msra.mxu0 %v7335
        %8182 = vmatprep.mubr.bf16.mxu0 %v6330
        %8183 = vmatmul.mubr.bf16.gmra.mxu0 %v6329
        %v8184 = vpop.f32.mrf.mxu0
        %v8185 = vadd.f32 %v8088, %v8184
        %v8186 = vpop.f32.mrf.mxu0
        %v8187 = vpop.f32.mrf.mxu0
        %v8188 = vadd.f32 %v8091, %v8187
        %v8189 = vpop.f32.mrf.mxu0
        %8190 = vmatprep.mubr.bf16.mxu0 %v6346
        %8191 = vmatmul.mubr.bf16.gmra.mxu0 %v6345
        %v8192 = vpop.f32.mrf.mxu0
        %v8193 = vadd.f32 %v8096, %v8192
        %v8194 = vpop.f32.mrf.mxu0
        %v8195 = vpop.f32.mrf.mxu0
        %v8196 = vadd.f32 %v8099, %v8195
        %v8197 = vpop.f32.mrf.mxu0
        %8198 = vmatprep.mubr.bf16.mxu0 %v6362
        %8199 = vmatmul.mubr.bf16.gmra.mxu0 %v6361
        %v8200 = vpop.f32.mrf.mxu0
        %v8201 = vadd.f32 %v8104, %v8200
        %v8202 = vpop.f32.mrf.mxu0
        %v8203 = vpop.f32.mrf.mxu0
        %v8204 = vadd.f32 %v8107, %v8203
        %v8205 = vpop.f32.mrf.mxu0
        %8206 = vmatprep.mubr.bf16.mxu0 %v6378
        %8207 = vmatmul.mubr.bf16.gmra.mxu0 %v6377
        %v8208 = vpop.f32.mrf.mxu0
        %v8209 = vadd.f32 %v8112, %v8208
        %v8210 = vpop.f32.mrf.mxu0
        %v8211 = vpop.f32.mrf.mxu0
        %v8212 = vadd.f32 %v8115, %v8211
        %v8213 = vpop.f32.mrf.mxu0
        %8214 = vmatprep.mubr.bf16.mxu0 %v6394
        %8215 = vmatmul.mubr.bf16.gmra.mxu0 %v6393
        %v8216 = vpop.f32.mrf.mxu0
        %v8217 = vadd.f32 %v8120, %v8216
        %v8218 = vpop.f32.mrf.mxu0
        %v8219 = vpop.f32.mrf.mxu0
        %v8220 = vadd.f32 %v8123, %v8219
        %v8221 = vpop.f32.mrf.mxu0
        %8222 = vmatprep.mubr.bf16.mxu0 %v6410
        %8223 = vmatmul.mubr.bf16.gmra.mxu0 %v6409
        %v8224 = vpop.f32.mrf.mxu0
        %v8225 = vadd.f32 %v8128, %v8224
        %v8226 = vpop.f32.mrf.mxu0
        %v8227 = vpop.f32.mrf.mxu0
        %v8228 = vadd.f32 %v8131, %v8227
        %v8229 = vpop.f32.mrf.mxu0
        %8230 = vmatprep.mubr.bf16.mxu0 %v6426
        %8231 = vmatmul.mubr.bf16.gmra.mxu0 %v6425
        %v8232 = vpop.f32.mrf.mxu0
        %v8233 = vadd.f32 %v8136, %v8232
        %v8234 = vpop.f32.mrf.mxu0
        %v8235 = vpop.f32.mrf.mxu0
        %v8236 = vadd.f32 %v8139, %v8235
        %v8237 = vpop.f32.mrf.mxu0
        %8238 = vmatprep.mubr.bf16.mxu0 %v6442
        %8239 = vmatmul.mubr.bf16.gmra.mxu0 %v6441
        %v8240 = vpop.f32.mrf.mxu0
        %v8241 = vadd.f32 %v8144, %v8240
        %v8242 = vpop.f32.mrf.mxu0
        %v8243 = vpop.f32.mrf.mxu0
        %v8244 = vadd.f32 %v8147, %v8243
        %v8245 = vpop.f32.mrf.mxu0
        %8246 = vdwg.mxu0
        %v8247 = vadd.f32 %v4299, %v8185
        %v8248 = vadd.f32 %v4300, %v8188
        %v8249 = vadd.f32 %v4301, %v8193
        %v8250 = vadd.f32 %v4302, %v8196
        %v8251 = vadd.f32 %v4303, %v8201
        %v8252 = vadd.f32 %v4304, %v8204
        %v8253 = vadd.f32 %v4305, %v8209
        %v8254 = vadd.f32 %v4306, %v8212
        %v8255 = vadd.f32 %v4307, %v8217
        %v8256 = vadd.f32 %v4308, %v8220
        %v8257 = vadd.f32 %v4309, %v8225
        %v8258 = vadd.f32 %v4310, %v8228
        %v8259 = vadd.f32 %v4311, %v8233
        %v8260 = vadd.f32 %v4312, %v8236
        %v8261 = vadd.f32 %v4313, %v8241
        %v8262 = vadd.f32 %v4314, %v8244
        %8263 = vadd.xlane.f32.xlu0 %v8247
        %v8264 = vpop.xlane.xlu0 %8263
        %8265 = vadd.xlane.f32.xlu0 %v8248
        %v8266 = vpop.xlane.xlu0 %8265
        %8267 = vadd.xlane.f32.xlu0 %v8249
        %v8268 = vpop.xlane.xlu0 %8267
        %8269 = vadd.xlane.f32.xlu0 %v8250
        %v8270 = vpop.xlane.xlu0 %8269
        %8271 = vadd.xlane.f32.xlu0 %v8251
        %v8272 = vpop.xlane.xlu0 %8271
        %8273 = vadd.xlane.f32.xlu0 %v8252
        %v8274 = vpop.xlane.xlu0 %8273
        %8275 = vadd.xlane.f32.xlu0 %v8253
        %v8276 = vpop.xlane.xlu0 %8275
        %8277 = vadd.xlane.f32.xlu0 %v8254
        %v8278 = vpop.xlane.xlu0 %8277
        %8279 = vadd.xlane.f32.xlu0 %v8255
        %v8280 = vpop.xlane.xlu0 %8279
        %8281 = vadd.xlane.f32.xlu0 %v8256
        %v8282 = vpop.xlane.xlu0 %8281
        %8283 = vadd.xlane.f32.xlu0 %v8257
        %v8284 = vpop.xlane.xlu0 %8283
        %8285 = vadd.xlane.f32.xlu0 %v8258
        %v8286 = vpop.xlane.xlu0 %8285
        %8287 = vadd.xlane.f32.xlu0 %v8259
        %v8288 = vpop.xlane.xlu0 %8287
        %8289 = vadd.xlane.f32.xlu0 %v8260
        %v8290 = vpop.xlane.xlu0 %8289
        %8291 = vadd.xlane.f32.xlu0 %v8261
        %v8292 = vpop.xlane.xlu0 %8291
        %8293 = vadd.xlane.f32.xlu0 %v8262
        %v8294 = vpop.xlane.xlu0 %8293
        %v8295 = vmul.f32 %v8264, %v4130
        %v8296 = vmul.f32 %v8266, %v4130
        %v8297 = vmul.f32 %v8268, %v4130
        %v8298 = vmul.f32 %v8270, %v4130
        %v8299 = vmul.f32 %v8272, %v4130
        %v8300 = vmul.f32 %v8274, %v4130
        %v8301 = vmul.f32 %v8276, %v4130
        %v8302 = vmul.f32 %v8278, %v4130
        %v8303 = vmul.f32 %v8280, %v4130
        %v8304 = vmul.f32 %v8282, %v4130
        %v8305 = vmul.f32 %v8284, %v4130
        %v8306 = vmul.f32 %v8286, %v4130
        %v8307 = vmul.f32 %v8288, %v4130
        %v8308 = vmul.f32 %v8290, %v4130
        %v8309 = vmul.f32 %v8292, %v4130
        %v8310 = vmul.f32 %v8294, %v4130
        %v8311 = vsub.f32 %v8247, %v8295
        %v8312 = vsub.f32 %v8248, %v8296
        %v8313 = vsub.f32 %v8249, %v8297
        %v8314 = vsub.f32 %v8250, %v8298
        %v8315 = vsub.f32 %v8251, %v8299
        %v8316 = vsub.f32 %v8252, %v8300
        %v8317 = vsub.f32 %v8253, %v8301
        %v8318 = vsub.f32 %v8254, %v8302
        %v8319 = vsub.f32 %v8255, %v8303
        %v8320 = vsub.f32 %v8256, %v8304
        %v8321 = vsub.f32 %v8257, %v8305
        %v8322 = vsub.f32 %v8258, %v8306
        %v8323 = vsub.f32 %v8259, %v8307
        %v8324 = vsub.f32 %v8260, %v8308
        %v8325 = vsub.f32 %v8261, %v8309
        %v8326 = vsub.f32 %v8262, %v8310
        %v8327 = vmul.f32 %v8311, %v8311
        %v8328 = vmul.f32 %v8312, %v8312
        %v8329 = vmul.f32 %v8313, %v8313
        %v8330 = vmul.f32 %v8314, %v8314
        %v8331 = vmul.f32 %v8315, %v8315
        %v8332 = vmul.f32 %v8316, %v8316
        %v8333 = vmul.f32 %v8317, %v8317
        %v8334 = vmul.f32 %v8318, %v8318
        %v8335 = vmul.f32 %v8319, %v8319
        %v8336 = vmul.f32 %v8320, %v8320
        %v8337 = vmul.f32 %v8321, %v8321
        %v8338 = vmul.f32 %v8322, %v8322
        %v8339 = vmul.f32 %v8323, %v8323
        %v8340 = vmul.f32 %v8324, %v8324
        %v8341 = vmul.f32 %v8325, %v8325
        %v8342 = vmul.f32 %v8326, %v8326
        %8343 = vadd.xlane.f32.xlu0 %v8327
        %v8344 = vpop.xlane.xlu0 %8343
        %8345 = vadd.xlane.f32.xlu0 %v8328
        %v8346 = vpop.xlane.xlu0 %8345
        %8347 = vadd.xlane.f32.xlu0 %v8329
        %v8348 = vpop.xlane.xlu0 %8347
        %8349 = vadd.xlane.f32.xlu0 %v8330
        %v8350 = vpop.xlane.xlu0 %8349
        %8351 = vadd.xlane.f32.xlu0 %v8331
        %v8352 = vpop.xlane.xlu0 %8351
        %8353 = vadd.xlane.f32.xlu0 %v8332
        %v8354 = vpop.xlane.xlu0 %8353
        %8355 = vadd.xlane.f32.xlu0 %v8333
        %v8356 = vpop.xlane.xlu0 %8355
        %8357 = vadd.xlane.f32.xlu0 %v8334
        %v8358 = vpop.xlane.xlu0 %8357
        %8359 = vadd.xlane.f32.xlu0 %v8335
        %v8360 = vpop.xlane.xlu0 %8359
        %8361 = vadd.xlane.f32.xlu0 %v8336
        %v8362 = vpop.xlane.xlu0 %8361
        %8363 = vadd.xlane.f32.xlu0 %v8337
        %v8364 = vpop.xlane.xlu0 %8363
        %8365 = vadd.xlane.f32.xlu0 %v8338
        %v8366 = vpop.xlane.xlu0 %8365
        %8367 = vadd.xlane.f32.xlu0 %v8339
        %v8368 = vpop.xlane.xlu0 %8367
        %8369 = vadd.xlane.f32.xlu0 %v8340
        %v8370 = vpop.xlane.xlu0 %8369
        %8371 = vadd.xlane.f32.xlu0 %v8341
        %v8372 = vpop.xlane.xlu0 %8371
        %8373 = vadd.xlane.f32.xlu0 %v8342
        %v8374 = vpop.xlane.xlu0 %8373
        %v8375 = vmul.f32 %v8344, %v4130
        %v8376 = vmul.f32 %v8346, %v4130
        %v8377 = vmul.f32 %v8348, %v4130
        %v8378 = vmul.f32 %v8350, %v4130
        %v8379 = vmul.f32 %v8352, %v4130
        %v8380 = vmul.f32 %v8354, %v4130
        %v8381 = vmul.f32 %v8356, %v4130
        %v8382 = vmul.f32 %v8358, %v4130
        %v8383 = vmul.f32 %v8360, %v4130
        %v8384 = vmul.f32 %v8362, %v4130
        %v8385 = vmul.f32 %v8364, %v4130
        %v8386 = vmul.f32 %v8366, %v4130
        %v8387 = vmul.f32 %v8368, %v4130
        %v8388 = vmul.f32 %v8370, %v4130
        %v8389 = vmul.f32 %v8372, %v4130
        %v8390 = vmul.f32 %v8374, %v4130
        %v8391 = vadd.f32 %v8375, 1e-05
        %v8392 = vadd.f32 %v8376, 1e-05
        %v8393 = vadd.f32 %v8377, 1e-05
        %v8394 = vadd.f32 %v8378, 1e-05
        %v8395 = vadd.f32 %v8379, 1e-05
        %v8396 = vadd.f32 %v8380, 1e-05
        %v8397 = vadd.f32 %v8381, 1e-05
        %v8398 = vadd.f32 %v8382, 1e-05
        %v8399 = vadd.f32 %v8383, 1e-05
        %v8400 = vadd.f32 %v8384, 1e-05
        %v8401 = vadd.f32 %v8385, 1e-05
        %v8402 = vadd.f32 %v8386, 1e-05
        %v8403 = vadd.f32 %v8387, 1e-05
        %v8404 = vadd.f32 %v8388, 1e-05
        %v8405 = vadd.f32 %v8389, 1e-05
        %v8406 = vadd.f32 %v8390, 1e-05
        %v8407 = vrsqrt.pop %v8391
        %v8408 = vrsqrt.pop %v8392
        %v8409 = vrsqrt.pop %v8393
        %v8410 = vrsqrt.pop %v8394
        %v8411 = vrsqrt.pop %v8395
        %v8412 = vrsqrt.pop %v8396
        %v8413 = vrsqrt.pop %v8397
        %v8414 = vrsqrt.pop %v8398
        %v8415 = vrsqrt.pop %v8399
        %v8416 = vrsqrt.pop %v8400
        %v8417 = vrsqrt.pop %v8401
        %v8418 = vrsqrt.pop %v8402
        %v8419 = vrsqrt.pop %v8403
        %v8420 = vrsqrt.pop %v8404
        %v8421 = vrsqrt.pop %v8405
        %v8422 = vrsqrt.pop %v8406
        %v8423 = vmul.f32 %v8311, %v8407
        %v8424 = vmul.f32 %v8312, %v8408
        %v8425 = vmul.f32 %v8313, %v8409
        %v8426 = vmul.f32 %v8314, %v8410
        %v8427 = vmul.f32 %v8315, %v8411
        %v8428 = vmul.f32 %v8316, %v8412
        %v8429 = vmul.f32 %v8317, %v8413
        %v8430 = vmul.f32 %v8318, %v8414
        %v8431 = vmul.f32 %v8319, %v8415
        %v8432 = vmul.f32 %v8320, %v8416
        %v8433 = vmul.f32 %v8321, %v8417
        %v8434 = vmul.f32 %v8322, %v8418
        %v8435 = vmul.f32 %v8323, %v8419
        %v8436 = vmul.f32 %v8324, %v8420
        %v8437 = vmul.f32 %v8325, %v8421
        %v8438 = vmul.f32 %v8326, %v8422
        %v8439 = vlaneseq
        %v8440 = vshrl.u32 %v8439, 7
        %v8441 = vsub.s32 6, %v8440
        %v8442 = vrot.slane %v565, %v8441
        %v8443 = vmul.f32 %v8423, %v8442
        %v8444 = vmul.f32 %v8424, %v8442
        %v8445 = vmul.f32 %v8425, %v8442
        %v8446 = vmul.f32 %v8426, %v8442
        %v8447 = vmul.f32 %v8427, %v8442
        %v8448 = vmul.f32 %v8428, %v8442
        %v8449 = vmul.f32 %v8429, %v8442
        %v8450 = vmul.f32 %v8430, %v8442
        %v8451 = vmul.f32 %v8431, %v8442
        %v8452 = vmul.f32 %v8432, %v8442
        %v8453 = vmul.f32 %v8433, %v8442
        %v8454 = vmul.f32 %v8434, %v8442
        %v8455 = vmul.f32 %v8435, %v8442
        %v8456 = vmul.f32 %v8436, %v8442
        %v8457 = vmul.f32 %v8437, %v8442
        %v8458 = vmul.f32 %v8438, %v8442
        %v8459 = vlaneseq
        %v8460 = vshrl.u32 %v8459, 7
        %v8461 = vsub.s32 7, %v8460
        %v8462 = vrot.slane %v565, %v8461
        %v8463 = vadd.f32 %v8443, %v8462
        %v8464 = vadd.f32 %v8444, %v8462
        %v8465 = vadd.f32 %v8445, %v8462
        %v8466 = vadd.f32 %v8446, %v8462
        %v8467 = vadd.f32 %v8447, %v8462
        %v8468 = vadd.f32 %v8448, %v8462
        %v8469 = vadd.f32 %v8449, %v8462
        %v8470 = vadd.f32 %v8450, %v8462
        %v8471 = vadd.f32 %v8451, %v8462
        %v8472 = vadd.f32 %v8452, %v8462
        %v8473 = vadd.f32 %v8453, %v8462
        %v8474 = vadd.f32 %v8454, %v8462
        %v8475 = vadd.f32 %v8455, %v8462
        %v8476 = vadd.f32 %v8456, %v8462
        %v8477 = vadd.f32 %v8457, %v8462
        %v8478 = vadd.f32 %v8458, %v8462
        %8479 = vst [vmem:[#allocation2] sm:$0xff] %v8463
        %8480 = vst [vmem:[#allocation2 + $0x8] sm:$0xff] %v8464
        %8481 = vst [vmem:[#allocation2 + $0x10] sm:$0xff] %v8465
        %8482 = vst [vmem:[#allocation2 + $0x18] sm:$0xff] %v8466
        %8483 = vst [vmem:[#allocation2 + $0x20] sm:$0xff] %v8467
        %8484 = vst [vmem:[#allocation2 + $0x28] sm:$0xff] %v8468
        %8485 = vst [vmem:[#allocation2 + $0x30] sm:$0xff] %v8469
        %8486 = vst [vmem:[#allocation2 + $0x38] sm:$0xff] %v8470
        %8487 = vst [vmem:[#allocation2 + $0x40] sm:$0xff] %v8471
        %8488 = vst [vmem:[#allocation2 + $0x48] sm:$0xff] %v8472
        %8489 = vst [vmem:[#allocation2 + $0x50] sm:$0xff] %v8473
        %8490 = vst [vmem:[#allocation2 + $0x58] sm:$0xff] %v8474
        %8491 = vst [vmem:[#allocation2 + $0x60] sm:$0xff] %v8475
        %8492 = vst [vmem:[#allocation2 + $0x68] sm:$0xff] %v8476
        %8493 = vst [vmem:[#allocation2 + $0x70] sm:$0xff] %v8477
        %8494 = vst [vmem:[#allocation2 + $0x78] sm:$0xff] %v8478
        %p8495 = scmp.eq.s32.totalorder %s26, 1
        // Predicated region
        $region81: #{tpu_custom_call.1} parent=47 // pred_check
          %p8496 = pneg %p8495
        $region82: #{tpu_custom_call.1} parent=47 // pred_check_branch
          %8498 = sbr.rel (%p8496) target = $region84
        $region83: #{tpu_custom_call.1} parent=47 // pred_region
          %8499 = vst [vmem:[#allocation13] sm:$0xff] %v8463
          %8500 = vst [vmem:[#allocation13 + $0x8] sm:$0xff] %v8464
          %8501 = vst [vmem:[#allocation13 + $0x10] sm:$0xff] %v8465
          %8502 = vst [vmem:[#allocation13 + $0x18] sm:$0xff] %v8466
          %8503 = vst [vmem:[#allocation13 + $0x20] sm:$0xff] %v8467
          %8504 = vst [vmem:[#allocation13 + $0x28] sm:$0xff] %v8468
          %8505 = vst [vmem:[#allocation13 + $0x30] sm:$0xff] %v8469
          %8506 = vst [vmem:[#allocation13 + $0x38] sm:$0xff] %v8470
          %8507 = vst [vmem:[#allocation13 + $0x40] sm:$0xff] %v8471
          %8508 = vst [vmem:[#allocation13 + $0x48] sm:$0xff] %v8472
          %8509 = vst [vmem:[#allocation13 + $0x50] sm:$0xff] %v8473
          %8510 = vst [vmem:[#allocation13 + $0x58] sm:$0xff] %v8474
          %8511 = vst [vmem:[#allocation13 + $0x60] sm:$0xff] %v8475
          %8512 = vst [vmem:[#allocation13 + $0x68] sm:$0xff] %v8476
          %8513 = vst [vmem:[#allocation13 + $0x70] sm:$0xff] %v8477
          %8514 = vst [vmem:[#allocation13 + $0x78] sm:$0xff] %v8478
        $region84: #{tpu_custom_call.1} parent=47 // pred_fallthru
          _
        // Predicated region
        $region85: #{tpu_custom_call.1} parent=47 // pred_check
          %p8515 = pneg %p233
        $region86: #{tpu_custom_call.1} parent=47 // pred_check_branch
          %8517 = sbr.rel (%p8515) target = $region88
        $region87: #{tpu_custom_call.1} parent=47 // pred_region
          %s8518 = smul.u32 2, %s25
          %s8520 = ssub.s32 2048, 2048
          %8521 = vsyncadd [#allocation5], %s8520
          %s8522 = smul.addr %s8518, 128
          %s8523 = scalar_lea.hbm %s7, %s8522
          %s8524 = sshll.u32 [#allocation13], 4
          %s8525 = int_to_ptr.vmem [resolvable:$true] %s8524
          %8530 = dma.vmem_to_hbm [thread:$0]  %s8525, 2048, %s8523, [#allocation5], 128, 128, 8
        $region88: #{tpu_custom_call.1} parent=47 // pred_fallthru
          _
        // Predicated region
        $region89: #{tpu_custom_call.1} parent=47 // pred_check
          %p8531 = pneg %p233
        $region90: #{tpu_custom_call.1} parent=47 // pred_check_branch
          %8533 = sbr.rel (%p8531) target = $region92
        $region91: #{tpu_custom_call.1} parent=47 // pred_region
          %8534 = dma.done [#allocation5], 2048
        $region92: #{tpu_custom_call.1} parent=47 // pred_fallthru
          _
      $region48: #{tpu_custom_call.1} parent=5 // pred_fallthru
        _
      %p8535 = scmp.le.s32.totalorder 2, %s16
      // Predicated region
      $region93: #{tpu_custom_call.1} parent=5 // pred_check
        %p8536 = pneg %p8535
      $region94: #{tpu_custom_call.1} parent=5 // pred_check_branch
        %8538 = sbr.rel (%p8536) target = $region96
      $region95: #{tpu_custom_call.1} parent=5 // pred_region
        %s8539 = ssub.s32 %s16, 2
      $region96: #{tpu_custom_call.1} parent=5 // pred_fallthru
        _
    $region6: #{tpu_custom_call.1} parent=1 // loop_footer
      %s20 = sadd.s32 1, %s16
    $region7: #{tpu_custom_call.1} parent=1 // loop_footer_branch
      %15 = sbr.rel target = $region3
    $region8: #{tpu_custom_call.1} parent=1 // loop_exit
      _
    %8540 = vsyncpa [#allocation4], 1
    %s8541 = scalar_lea.sflag [#allocation4], 1
    %8542 = vsyncpa %s8541, 1
    %8543 = vsyncpa [#allocation7], 1
    %8544 = vsyncpa [#allocation5], 1
    %s8545 = scalar_lea.sflag [#allocation5], 1
    %8546 = vsyncpa %s8545, 1

</llo_original>
